<compile_context>
chip_gen: v6e
topology: v6e:2x2x1
jax: 0.10.0
libtpu: 0.0.40
codegen_flags: <defaults>
</compile_context>

<pallas_src>
import functools

import jax
import jax.numpy as jnp
import numpy as np
from jax.experimental import pallas as pl
from jax.experimental.pallas import tpu as pltpu


# ----------------------------------------------------------------------------
# Parameter construction (ConvBNRelu: eval-mode BatchNorm folded into conv).
# ----------------------------------------------------------------------------
def init_conv_bn_relu(key, cin, cout):
    k1, k2, k3, k4, k5, k6 = jax.random.split(key, 6)
    w = 0.1 * jax.random.normal(k1, (3, 3, cin, cout), jnp.float32)
    b = 0.1 * jax.random.normal(k2, (cout,), jnp.float32)
    gamma = 1.0 + 0.1 * jax.random.normal(k3, (cout,), jnp.float32)
    beta = 0.1 * jax.random.normal(k4, (cout,), jnp.float32)
    mean = 0.1 * jax.random.normal(k5, (cout,), jnp.float32)
    var = jax.random.uniform(k6, (cout,), jnp.float32, minval=0.5, maxval=1.5)
    eps = 1e-5
    # Eval-mode BatchNorm folded into the conv:  y = scale*(conv+b) + shift
    scale = gamma / jnp.sqrt(var + eps)
    w_f = w * scale                      # broadcast over out-channel (last) dim
    b_f = (b - mean) * scale + beta
    return w_f, b_f


def make_encoder_params(key, conv_channels, num_blocks, message_length):
    keys = jax.random.split(key, num_blocks + 2)
    layers = []
    cin = 3
    for i in range(num_blocks):
        layers.append(init_conv_bn_relu(keys[i], cin, conv_channels))
        cin = conv_channels
    after = init_conv_bn_relu(keys[num_blocks],
                              conv_channels + 3 + message_length,
                              conv_channels)
    kf1, kf2 = jax.random.split(keys[num_blocks + 1])
    w_final = 0.1 * jax.random.normal(kf1, (1, 1, conv_channels, 3), jnp.float32)
    b_final = 0.1 * jax.random.normal(kf2, (3,), jnp.float32)
    return {"conv_layers": layers, "after_concat": after,
            "final": (w_final, b_final)}


# ----------------------------------------------------------------------------
# Fused encoder kernel (one grid step == one batch element, all in VMEM).
# ----------------------------------------------------------------------------
def _prep_w3x3(w_hwio):
    """(3,3,cin,cout) HWIO -> (9*cin, cout) matmul weight.

    Row ordering is dx-major / dy / ci, matching _im2col3x3 below.
    """
    kh, kw, cin, cout = w_hwio.shape
    return jnp.transpose(w_hwio, (1, 0, 2, 3)).reshape(kh * kw * cin, cout)


def _im2col3x3(xpad_ref, H, W):
    """Build the (H*W, 9*cin) im2col matrix for a stride-1 3x3 SAME conv.

    xpad_ref: (H+2, W+2, cin) zero-padded activation (VMEM scratch ref).
    Column order: dx-major, then dy, then ci  -> matches _prep_w3x3.
    """
    parts = []
    for dx in range(3):
        for dy in range(3):
            p = xpad_ref[dy:dy + H, dx:dx + W, :]           # (H, W, cin)
            parts.append(p.reshape(H * W, p.shape[-1]))     # collapse spatial
    return jnp.concatenate(parts, axis=-1)                  # (H*W, 9*cin)


def _encoder_kernel(*refs, H, W, C, L, num_blocks):
    f32 = jnp.float32
    bf16 = jnp.bfloat16

    # ---- unpack refs: inputs, output, scratch ------------------------------
    img_ref, msg_ref = refs[0], refs[1]
    pos = 2
    conv_w = []
    for _ in range(num_blocks):
        conv_w.append((refs[pos], refs[pos + 1]))
        pos += 2
    w_ac_msg, w_ac_enc, w_ac_img, b_ac = refs[pos:pos + 4]
    pos += 4
    w_fin_t, b_fin = refs[pos], refs[pos + 1]
    pos += 2
    o_ref = refs[pos]
    pos += 1
    pad_img, pad_c, pad_msg = refs[pos:pos + 3]

    # ---- zero the padded scratch borders (SAME padding) --------------------
    # (Zeroed every grid step: scratch is per-core and interiors are rewritten.)
    pad_img[...] = jnp.zeros(pad_img.shape, pad_img.dtype)
    pad_c[...] = jnp.zeros(pad_c.shape, pad_c.dtype)
    pad_msg[...] = jnp.zeros(pad_msg.shape, pad_msg.dtype)

    # ---- image: pad + im2col ONCE (reused by layer 0 and after_concat) -----
    pad_img[1:H + 1, 1:W + 1, :] = img_ref[0]
    col_img = _im2col3x3(pad_img, H, W).astype(bf16)         # (H*W, 27)

    # ---- conv_layers[0]: ConvBNRelu(3 -> C), single MXU matmul -------------
    w0, b0 = conv_w[0]
    act = jnp.dot(col_img, w0[...], preferred_element_type=f32) + b0[...]
    act = jnp.maximum(act, 0.0)                              # (H*W, C) f32

    # ---- conv_layers[1:]: ConvBNRelu(C -> C) --------------------------------
    for i in range(1, num_blocks):
        pad_c[1:H + 1, 1:W + 1, :] = act.reshape(H, W, C)
        col = _im2col3x3(pad_c, H, W).astype(bf16)           # (H*W, 9C)
        wi, bi = conv_w[i]
        act = jnp.dot(col, wi[...], preferred_element_type=f32) + bi[...]
        act = jnp.maximum(act, 0.0)

    # ---- after_concat: conv over concat([msg, enc, img]) as 3 weight groups
    pad_c[1:H + 1, 1:W + 1, :] = act.reshape(H, W, C)
    col_enc = _im2col3x3(pad_c, H, W).astype(bf16)           # (H*W, 9C)

    # spatially-constant message: no HBM broadcast, just a tiny VMEM fill
    pad_msg[1:H + 1, 1:W + 1, :] = jnp.broadcast_to(msg_ref[...], (H, W, L))
    col_msg = _im2col3x3(pad_msg, H, W).astype(bf16)         # (H*W, 9L)

    acc = jnp.dot(col_msg, w_ac_msg[...], preferred_element_type=f32)
    acc = acc + jnp.dot(col_enc, w_ac_enc[...], preferred_element_type=f32)
    acc = acc + jnp.dot(col_img, w_ac_img[...], preferred_element_type=f32)
    h = jnp.maximum(acc + b_ac[...], 0.0)                    # (H*W, C) f32

    # ---- final 1x1 conv, emitted directly NCHW-flat: (3, H*W) lane-dense ---
    out = jnp.dot(w_fin_t[...], h.T, preferred_element_type=f32)   # (3, H*W)
    o_ref[0] = out + b_fin[...]


# ----------------------------------------------------------------------------
# Wrapper: single fused pallas_call.
# ----------------------------------------------------------------------------
def encoder_forward(params, image_nchw, message):
    B = image_nchw.shape[0]
    H, W = image_nchw.shape[2], image_nchw.shape[3]
    C = params["conv_layers"][0][0].shape[-1]
    L = message.shape[1]
    nb = len(params["conv_layers"])
    Hp, Wp = H + 2, W + 2
    f32, bf16 = jnp.float32, jnp.bfloat16

    x_nhwc = jnp.transpose(image_nchw, (0, 2, 3, 1)).astype(f32)   # tiny input transpose
    msg = message.reshape(B, 1, L).astype(f32)

    weight_args, weight_specs = [], []

    def add_weight(arr):
        nd = arr.ndim
        weight_args.append(arr)
        weight_specs.append(pl.BlockSpec(arr.shape,
                                         lambda b, _nd=nd: (0,) * _nd))

    for (w, b) in params["conv_layers"]:
        add_weight(_prep_w3x3(w).astype(bf16))
        add_weight(b.reshape(1, C).astype(f32))

    # after_concat weight split along cin to match concat order [msg, enc, img]
    w_ac, b_ac = params["after_concat"]
    add_weight(_prep_w3x3(w_ac[:, :, :L, :]).astype(bf16))          # message
    add_weight(_prep_w3x3(w_ac[:, :, L:L + C, :]).astype(bf16))     # encoded
    add_weight(_prep_w3x3(w_ac[:, :, L + C:, :]).astype(bf16))      # image
    add_weight(b_ac.reshape(1, C).astype(f32))

    w_fin, b_fin = params["final"]
    add_weight(jnp.transpose(w_fin.reshape(C, 3), (1, 0)).astype(f32))  # (3, C)
    add_weight(b_fin.reshape(3, 1).astype(f32))

    flops = B * 2 * H * W * C * (27 + (nb - 1) * 9 * C + 9 * (L + C + 3) + 3)
    bytes_accessed = int(
        B * (H * W * 3 * 4 + L * 4 + 3 * H * W * 4)
        + sum(int(np.prod(a.shape)) * a.dtype.itemsize for a in weight_args))
    cost = pl.CostEstimate(flops=flops, transcendentals=0,
                           bytes_accessed=bytes_accessed)

    kern = functools.partial(_encoder_kernel, H=H, W=W, C=C, L=L,
                             num_blocks=nb)

    out_flat = pl.pallas_call(
        kern,
        out_shape=jax.ShapeDtypeStruct((B, 3, H * W), f32),
        grid=(B,),
        in_specs=[pl.BlockSpec((1, H, W, 3), lambda b: (b, 0, 0, 0)),
                  pl.BlockSpec((1, 1, L), lambda b: (b, 0, 0))] + weight_specs,
        out_specs=pl.BlockSpec((1, 3, H * W), lambda b: (b, 0, 0)),
        scratch_shapes=[pltpu.VMEM((Hp, Wp, 3), f32),   # padded image
                        pltpu.VMEM((Hp, Wp, C), f32),   # padded activations
                        pltpu.VMEM((Hp, Wp, L), f32)],  # padded message map
        compiler_params=pltpu.CompilerParams(
            dimension_semantics=("parallel",)),
        cost_estimate=cost,
    )(x_nhwc, msg, *weight_args)

    return out_flat.reshape(B, 3, H, W)     # free: already NCHW-flat


# ----------------------------------------------------------------------------
# Pure-JAX f32 reference (for the correctness assert).
# ----------------------------------------------------------------------------
def _conv_ref(x, w, b, relu):
    y = jax.lax.conv_general_dilated(
        x, w, (1, 1), "SAME",
        dimension_numbers=("NHWC", "HWIO", "NHWC")) + b
    return jnp.maximum(y, 0.0) if relu else y


def encoder_ref(params, image_nchw, message):
    x = jnp.transpose(image_nchw, (0, 2, 3, 1)).astype(jnp.float32)
    B, H, W, _ = x.shape
    enc = x
    for (w, b) in params["conv_layers"]:
        enc = _conv_ref(enc, w, b, True)
    msg = jnp.broadcast_to(message[:, None, None, :].astype(jnp.float32),
                           (B, H, W, message.shape[1]))
    concat = jnp.concatenate([msg, enc, x], axis=-1)   # [message, encoded, image]
    h = _conv_ref(concat, params["after_concat"][0],
                  params["after_concat"][1], True)
    out = _conv_ref(h, params["final"][0], params["final"][1], False)
    return jnp.transpose(out, (0, 3, 1, 2))


if __name__ == "__main__":
    # Small config consistent with HiDDenConfiguration
    B, H, W = 2, 16, 16
    conv_channels, num_blocks, message_length = 32, 3, 8

    key = jax.random.PRNGKey(0)
    kp, ki, km = jax.random.split(key, 3)
    params = make_encoder_params(kp, conv_channels, num_blocks, message_length)

    image = jax.random.normal(ki, (B, 3, H, W), jnp.float32)          # NCHW
    message = jax.random.uniform(km, (B, message_length), jnp.float32)

    fwd = jax.jit(encoder_forward)
    out = jax.block_until_ready(fwd(params, image, message))
    assert out.shape == (B, 3, H, W)

    ref = encoder_ref(params, image, message)
    # bf16 MXU operands (f32 accumulation) vs. the pure-f32 XLA reference ->
    # loosened tolerance, as anticipated in the review.
    np.testing.assert_allclose(np.asarray(out), np.asarray(ref),
                               rtol=5e-2, atol=5e-2)
    print("KERNEL_OK")
</pallas_src>

<mosaic_0001>
module attributes {stable_mosaic.version = 11 : i64} {
  func.func @_encoder_kernel(%arg0: i32, %arg1: memref<1x16x16x3xf32, #tpu.memory_space<vmem>>, %arg2: memref<1x1x8xf32, #tpu.memory_space<vmem>>, %arg3: memref<27x32xbf16, #tpu.memory_space<vmem>>, %arg4: memref<1x32xf32, #tpu.memory_space<vmem>>, %arg5: memref<288x32xbf16, #tpu.memory_space<vmem>>, %arg6: memref<1x32xf32, #tpu.memory_space<vmem>>, %arg7: memref<288x32xbf16, #tpu.memory_space<vmem>>, %arg8: memref<1x32xf32, #tpu.memory_space<vmem>>, %arg9: memref<72x32xbf16, #tpu.memory_space<vmem>>, %arg10: memref<288x32xbf16, #tpu.memory_space<vmem>>, %arg11: memref<27x32xbf16, #tpu.memory_space<vmem>>, %arg12: memref<1x32xf32, #tpu.memory_space<vmem>>, %arg13: memref<3x32xf32, #tpu.memory_space<vmem>>, %arg14: memref<3x1xf32, #tpu.memory_space<vmem>>, %arg15: memref<1x3x256xf32, #tpu.memory_space<vmem>>, %arg16: memref<18x18x3xf32, #tpu.memory_space<vmem>>, %arg17: memref<18x18x32xf32, #tpu.memory_space<vmem>>, %arg18: memref<18x18x8xf32, #tpu.memory_space<vmem>>) attributes {dimension_semantics = [#tpu.dimension_semantics<parallel>], iteration_bounds = array<i64: 2>, scalar_prefetch = 0 : i64, scratch_operands = 3 : i64, tpu.core_type = #tpu.core_type<tc>, window_params = [{transform_indices = @transform_0, window_bounds = array<i64: 1, 16, 16, 3>}, {transform_indices = @transform_1, window_bounds = array<i64: 1, 1, 8>}, {pipeline_mode = #tpu.pipeline_mode<synchronous>, transform_indices = @transform_2, window_bounds = array<i64: 27, 32>}, {pipeline_mode = #tpu.pipeline_mode<synchronous>, transform_indices = @transform_3, window_bounds = array<i64: 1, 32>}, {pipeline_mode = #tpu.pipeline_mode<synchronous>, transform_indices = @transform_4, window_bounds = array<i64: 288, 32>}, {pipeline_mode = #tpu.pipeline_mode<synchronous>, transform_indices = @transform_5, window_bounds = array<i64: 1, 32>}, {pipeline_mode = #tpu.pipeline_mode<synchronous>, transform_indices = @transform_6, window_bounds = array<i64: 288, 32>}, {pipeline_mode = #tpu.pipeline_mode<synchronous>, transform_indices = @transform_7, window_bounds = array<i64: 1, 32>}, {pipeline_mode = #tpu.pipeline_mode<synchronous>, transform_indices = @transform_8, window_bounds = array<i64: 72, 32>}, {pipeline_mode = #tpu.pipeline_mode<synchronous>, transform_indices = @transform_9, window_bounds = array<i64: 288, 32>}, {pipeline_mode = #tpu.pipeline_mode<synchronous>, transform_indices = @transform_10, window_bounds = array<i64: 27, 32>}, {pipeline_mode = #tpu.pipeline_mode<synchronous>, transform_indices = @transform_11, window_bounds = array<i64: 1, 32>}, {pipeline_mode = #tpu.pipeline_mode<synchronous>, transform_indices = @transform_12, window_bounds = array<i64: 3, 32>}, {pipeline_mode = #tpu.pipeline_mode<synchronous>, transform_indices = @transform_13, window_bounds = array<i64: 3, 1>}, {transform_indices = @transform_14, window_bounds = array<i64: 1, 3, 256>}]} {
    %cst = arith.constant 0.000000e+00 : f32
    %0 = vector.broadcast %cst : f32 to vector<18x18x3xf32>
    %c0 = arith.constant 0 : index
    %c0_0 = arith.constant 0 : index
    %c0_1 = arith.constant 0 : index
    %1 = vector.load %arg16[%c0, %c0_0, %c0_1] : memref<18x18x3xf32, #tpu.memory_space<vmem>>, vector<18x18x3xf32>
    tpu.vector_store %arg16[%c0, %c0_0, %c0_1], %0 {strides = array<i32>} : memref<18x18x3xf32, #tpu.memory_space<vmem>>, vector<18x18x3xf32>,
    %cst_2 = arith.constant 0.000000e+00 : f32
    %2 = vector.broadcast %cst_2 : f32 to vector<18x18x32xf32>
    %c0_3 = arith.constant 0 : index
    %c0_4 = arith.constant 0 : index
    %c0_5 = arith.constant 0 : index
    %3 = vector.load %arg17[%c0_3, %c0_4, %c0_5] : memref<18x18x32xf32, #tpu.memory_space<vmem>>, vector<18x18x32xf32>
    tpu.vector_store %arg17[%c0_3, %c0_4, %c0_5], %2 {strides = array<i32>} : memref<18x18x32xf32, #tpu.memory_space<vmem>>, vector<18x18x32xf32>,
    %cst_6 = arith.constant 0.000000e+00 : f32
    %4 = vector.broadcast %cst_6 : f32 to vector<18x18x8xf32>
    %c0_7 = arith.constant 0 : index
    %c0_8 = arith.constant 0 : index
    %c0_9 = arith.constant 0 : index
    %5 = vector.load %arg18[%c0_7, %c0_8, %c0_9] : memref<18x18x8xf32, #tpu.memory_space<vmem>>, vector<18x18x8xf32>
    tpu.vector_store %arg18[%c0_7, %c0_8, %c0_9], %4 {strides = array<i32>} : memref<18x18x8xf32, #tpu.memory_space<vmem>>, vector<18x18x8xf32>,
    %c0_10 = arith.constant 0 : index
    %c0_11 = arith.constant 0 : index
    %c0_12 = arith.constant 0 : index
    %c0_13 = arith.constant 0 : index
    %6 = vector.load %arg1[%c0_10, %c0_11, %c0_12, %c0_13] : memref<1x16x16x3xf32, #tpu.memory_space<vmem>>, vector<1x16x16x3xf32>
    %7 = vector.shape_cast %6 : vector<1x16x16x3xf32> to vector<16x16x3xf32>
    %c1 = arith.constant 1 : index
    %c1_14 = arith.constant 1 : index
    %c0_15 = arith.constant 0 : index
    %8 = vector.load %arg16[%c1, %c1_14, %c0_15] : memref<18x18x3xf32, #tpu.memory_space<vmem>>, vector<16x16x3xf32>
    tpu.vector_store %arg16[%c1, %c1_14, %c0_15], %7 {strides = array<i32>} : memref<18x18x3xf32, #tpu.memory_space<vmem>>, vector<16x16x3xf32>,
    %c0_16 = arith.constant 0 : index
    %c0_17 = arith.constant 0 : index
    %c0_18 = arith.constant 0 : index
    %9 = vector.load %arg16[%c0_16, %c0_17, %c0_18] : memref<18x18x3xf32, #tpu.memory_space<vmem>>, vector<16x16x3xf32>
    %10 = vector.shape_cast %9 : vector<16x16x3xf32> to vector<256x3xf32>
    %c1_19 = arith.constant 1 : index
    %c0_20 = arith.constant 0 : index
    %c0_21 = arith.constant 0 : index
    %11 = vector.load %arg16[%c1_19, %c0_20, %c0_21] : memref<18x18x3xf32, #tpu.memory_space<vmem>>, vector<16x16x3xf32>
    %12 = vector.shape_cast %11 : vector<16x16x3xf32> to vector<256x3xf32>
    %c2 = arith.constant 2 : index
    %c0_22 = arith.constant 0 : index
    %c0_23 = arith.constant 0 : index
    %13 = vector.load %arg16[%c2, %c0_22, %c0_23] : memref<18x18x3xf32, #tpu.memory_space<vmem>>, vector<16x16x3xf32>
    %14 = vector.shape_cast %13 : vector<16x16x3xf32> to vector<256x3xf32>
    %c0_24 = arith.constant 0 : index
    %c1_25 = arith.constant 1 : index
    %c0_26 = arith.constant 0 : index
    %15 = vector.load %arg16[%c0_24, %c1_25, %c0_26] : memref<18x18x3xf32, #tpu.memory_space<vmem>>, vector<16x16x3xf32>
    %16 = vector.shape_cast %15 : vector<16x16x3xf32> to vector<256x3xf32>
    %c1_27 = arith.constant 1 : index
    %c1_28 = arith.constant 1 : index
    %c0_29 = arith.constant 0 : index
    %17 = vector.load %arg16[%c1_27, %c1_28, %c0_29] : memref<18x18x3xf32, #tpu.memory_space<vmem>>, vector<16x16x3xf32>
    %18 = vector.shape_cast %17 : vector<16x16x3xf32> to vector<256x3xf32>
    %c2_30 = arith.constant 2 : index
    %c1_31 = arith.constant 1 : index
    %c0_32 = arith.constant 0 : index
    %19 = vector.load %arg16[%c2_30, %c1_31, %c0_32] : memref<18x18x3xf32, #tpu.memory_space<vmem>>, vector<16x16x3xf32>
    %20 = vector.shape_cast %19 : vector<16x16x3xf32> to vector<256x3xf32>
    %c0_33 = arith.constant 0 : index
    %c2_34 = arith.constant 2 : index
    %c0_35 = arith.constant 0 : index
    %21 = vector.load %arg16[%c0_33, %c2_34, %c0_35] : memref<18x18x3xf32, #tpu.memory_space<vmem>>, vector<16x16x3xf32>
    %22 = vector.shape_cast %21 : vector<16x16x3xf32> to vector<256x3xf32>
    %c1_36 = arith.constant 1 : index
    %c2_37 = arith.constant 2 : index
    %c0_38 = arith.constant 0 : index
    %23 = vector.load %arg16[%c1_36, %c2_37, %c0_38] : memref<18x18x3xf32, #tpu.memory_space<vmem>>, vector<16x16x3xf32>
    %24 = vector.shape_cast %23 : vector<16x16x3xf32> to vector<256x3xf32>
    %c2_39 = arith.constant 2 : index
    %c2_40 = arith.constant 2 : index
    %c0_41 = arith.constant 0 : index
    %25 = vector.load %arg16[%c2_39, %c2_40, %c0_41] : memref<18x18x3xf32, #tpu.memory_space<vmem>>, vector<16x16x3xf32>
    %26 = vector.shape_cast %25 : vector<16x16x3xf32> to vector<256x3xf32>
    %27 = tpu.concatenate %10, %12, %14, %16, %18, %20, %22, %24, %26 in 1 : vector<256x3xf32>, vector<256x3xf32>, vector<256x3xf32>, vector<256x3xf32>, vector<256x3xf32>, vector<256x3xf32>, vector<256x3xf32>, vector<256x3xf32>, vector<256x3xf32> -> vector<256x27xf32>
    %28 = arith.truncf %27 : vector<256x27xf32> to vector<256x27xbf16>
    %c0_42 = arith.constant 0 : index
    %c0_43 = arith.constant 0 : index
    %29 = vector.load %arg3[%c0_42, %c0_43] : memref<27x32xbf16, #tpu.memory_space<vmem>>, vector<27x32xbf16>
    %cst_44 = arith.constant dense<0.000000e+00> : vector<256x32xf32>
    %30 = tpu.matmul %28, %29, %cst_44 {dimension_numbers = #tpu.dot_dimension_numbers<[1], [0], [0], [1], [0, 0, 1, 1], [], []>} : vector<256x27xbf16>, vector<27x32xbf16>, vector<256x32xf32> -> vector<256x32xf32>
    %c0_45 = arith.constant 0 : index
    %c0_46 = arith.constant 0 : index
    %31 = vector.load %arg4[%c0_45, %c0_46] : memref<1x32xf32, #tpu.memory_space<vmem>>, vector<1x32xf32>
    %32 = vector.broadcast %31 : vector<1x32xf32> to vector<256x32xf32>
    %33 = arith.addf %30, %32 : vector<256x32xf32>
    %cst_47 = arith.constant 0.000000e+00 : f32
    %34 = vector.broadcast %cst_47 : f32 to vector<256x32xf32>
    %35 = arith.maximumf %33, %34 : vector<256x32xf32>
    %36 = vector.shape_cast %35 : vector<256x32xf32> to vector<16x16x32xf32>
    %c1_48 = arith.constant 1 : index
    %c1_49 = arith.constant 1 : index
    %c0_50 = arith.constant 0 : index
    %37 = vector.load %arg17[%c1_48, %c1_49, %c0_50] : memref<18x18x32xf32, #tpu.memory_space<vmem>>, vector<16x16x32xf32>
    tpu.vector_store %arg17[%c1_48, %c1_49, %c0_50], %36 {strides = array<i32>} : memref<18x18x32xf32, #tpu.memory_space<vmem>>, vector<16x16x32xf32>,
    %c0_51 = arith.constant 0 : index
    %c0_52 = arith.constant 0 : index
    %c0_53 = arith.constant 0 : index
    %38 = vector.load %arg17[%c0_51, %c0_52, %c0_53] : memref<18x18x32xf32, #tpu.memory_space<vmem>>, vector<16x16x32xf32>
    %39 = vector.shape_cast %38 : vector<16x16x32xf32> to vector<256x32xf32>
    %c1_54 = arith.constant 1 : index
    %c0_55 = arith.constant 0 : index
    %c0_56 = arith.constant 0 : index
    %40 = vector.load %arg17[%c1_54, %c0_55, %c0_56] : memref<18x18x32xf32, #tpu.memory_space<vmem>>, vector<16x16x32xf32>
    %41 = vector.shape_cast %40 : vector<16x16x32xf32> to vector<256x32xf32>
    %c2_57 = arith.constant 2 : index
    %c0_58 = arith.constant 0 : index
    %c0_59 = arith.constant 0 : index
    %42 = vector.load %arg17[%c2_57, %c0_58, %c0_59] : memref<18x18x32xf32, #tpu.memory_space<vmem>>, vector<16x16x32xf32>
    %43 = vector.shape_cast %42 : vector<16x16x32xf32> to vector<256x32xf32>
    %c0_60 = arith.constant 0 : index
    %c1_61 = arith.constant 1 : index
    %c0_62 = arith.constant 0 : index
    %44 = vector.load %arg17[%c0_60, %c1_61, %c0_62] : memref<18x18x32xf32, #tpu.memory_space<vmem>>, vector<16x16x32xf32>
    %45 = vector.shape_cast %44 : vector<16x16x32xf32> to vector<256x32xf32>
    %c1_63 = arith.constant 1 : index
    %c1_64 = arith.constant 1 : index
    %c0_65 = arith.constant 0 : index
    %46 = vector.load %arg17[%c1_63, %c1_64, %c0_65] : memref<18x18x32xf32, #tpu.memory_space<vmem>>, vector<16x16x32xf32>
    %47 = vector.shape_cast %46 : vector<16x16x32xf32> to vector<256x32xf32>
    %c2_66 = arith.constant 2 : index
    %c1_67 = arith.constant 1 : index
    %c0_68 = arith.constant 0 : index
    %48 = vector.load %arg17[%c2_66, %c1_67, %c0_68] : memref<18x18x32xf32, #tpu.memory_space<vmem>>, vector<16x16x32xf32>
    %49 = vector.shape_cast %48 : vector<16x16x32xf32> to vector<256x32xf32>
    %c0_69 = arith.constant 0 : index
    %c2_70 = arith.constant 2 : index
    %c0_71 = arith.constant 0 : index
    %50 = vector.load %arg17[%c0_69, %c2_70, %c0_71] : memref<18x18x32xf32, #tpu.memory_space<vmem>>, vector<16x16x32xf32>
    %51 = vector.shape_cast %50 : vector<16x16x32xf32> to vector<256x32xf32>
    %c1_72 = arith.constant 1 : index
    %c2_73 = arith.constant 2 : index
    %c0_74 = arith.constant 0 : index
    %52 = vector.load %arg17[%c1_72, %c2_73, %c0_74] : memref<18x18x32xf32, #tpu.memory_space<vmem>>, vector<16x16x32xf32>
    %53 = vector.shape_cast %52 : vector<16x16x32xf32> to vector<256x32xf32>
    %c2_75 = arith.constant 2 : index
    %c2_76 = arith.constant 2 : index
    %c0_77 = arith.constant 0 : index
    %54 = vector.load %arg17[%c2_75, %c2_76, %c0_77] : memref<18x18x32xf32, #tpu.memory_space<vmem>>, vector<16x16x32xf32>
    %55 = vector.shape_cast %54 : vector<16x16x32xf32> to vector<256x32xf32>
    %56 = tpu.concatenate %39, %41, %43, %45, %47, %49, %51, %53, %55 in 1 : vector<256x32xf32>, vector<256x32xf32>, vector<256x32xf32>, vector<256x32xf32>, vector<256x32xf32>, vector<256x32xf32>, vector<256x32xf32>, vector<256x32xf32>, vector<256x32xf32> -> vector<256x288xf32>
    %57 = arith.truncf %56 : vector<256x288xf32> to vector<256x288xbf16>
    %c0_78 = arith.constant 0 : index
    %c0_79 = arith.constant 0 : index
    %58 = vector.load %arg5[%c0_78, %c0_79] : memref<288x32xbf16, #tpu.memory_space<vmem>>, vector<288x32xbf16>
    %cst_80 = arith.constant dense<0.000000e+00> : vector<256x32xf32>
    %59 = tpu.matmul %57, %58, %cst_80 {dimension_numbers = #tpu.dot_dimension_numbers<[1], [0], [0], [1], [0, 0, 1, 1], [], []>} : vector<256x288xbf16>, vector<288x32xbf16>, vector<256x32xf32> -> vector<256x32xf32>
    %c0_81 = arith.constant 0 : index
    %c0_82 = arith.constant 0 : index
    %60 = vector.load %arg6[%c0_81, %c0_82] : memref<1x32xf32, #tpu.memory_space<vmem>>, vector<1x32xf32>
    %61 = vector.broadcast %60 : vector<1x32xf32> to vector<256x32xf32>
    %62 = arith.addf %59, %61 : vector<256x32xf32>
    %cst_83 = arith.constant 0.000000e+00 : f32
    %63 = vector.broadcast %cst_83 : f32 to vector<256x32xf32>
    %64 = arith.maximumf %62, %63 : vector<256x32xf32>
    %65 = vector.shape_cast %64 : vector<256x32xf32> to vector<16x16x32xf32>
    %c1_84 = arith.constant 1 : index
    %c1_85 = arith.constant 1 : index
    %c0_86 = arith.constant 0 : index
    %66 = vector.load %arg17[%c1_84, %c1_85, %c0_86] : memref<18x18x32xf32, #tpu.memory_space<vmem>>, vector<16x16x32xf32>
    tpu.vector_store %arg17[%c1_84, %c1_85, %c0_86], %65 {strides = array<i32>} : memref<18x18x32xf32, #tpu.memory_space<vmem>>, vector<16x16x32xf32>,
    %c0_87 = arith.constant 0 : index
    %c0_88 = arith.constant 0 : index
    %c0_89 = arith.constant 0 : index
    %67 = vector.load %arg17[%c0_87, %c0_88, %c0_89] : memref<18x18x32xf32, #tpu.memory_space<vmem>>, vector<16x16x32xf32>
    %68 = vector.shape_cast %67 : vector<16x16x32xf32> to vector<256x32xf32>
    %c1_90 = arith.constant 1 : index
    %c0_91 = arith.constant 0 : index
    %c0_92 = arith.constant 0 : index
    %69 = vector.load %arg17[%c1_90, %c0_91, %c0_92] : memref<18x18x32xf32, #tpu.memory_space<vmem>>, vector<16x16x32xf32>
    %70 = vector.shape_cast %69 : vector<16x16x32xf32> to vector<256x32xf32>
    %c2_93 = arith.constant 2 : index
    %c0_94 = arith.constant 0 : index
    %c0_95 = arith.constant 0 : index
    %71 = vector.load %arg17[%c2_93, %c0_94, %c0_95] : memref<18x18x32xf32, #tpu.memory_space<vmem>>, vector<16x16x32xf32>
    %72 = vector.shape_cast %71 : vector<16x16x32xf32> to vector<256x32xf32>
    %c0_96 = arith.constant 0 : index
    %c1_97 = arith.constant 1 : index
    %c0_98 = arith.constant 0 : index
    %73 = vector.load %arg17[%c0_96, %c1_97, %c0_98] : memref<18x18x32xf32, #tpu.memory_space<vmem>>, vector<16x16x32xf32>
    %74 = vector.shape_cast %73 : vector<16x16x32xf32> to vector<256x32xf32>
    %c1_99 = arith.constant 1 : index
    %c1_100 = arith.constant 1 : index
    %c0_101 = arith.constant 0 : index
    %75 = vector.load %arg17[%c1_99, %c1_100, %c0_101] : memref<18x18x32xf32, #tpu.memory_space<vmem>>, vector<16x16x32xf32>
    %76 = vector.shape_cast %75 : vector<16x16x32xf32> to vector<256x32xf32>
    %c2_102 = arith.constant 2 : index
    %c1_103 = arith.constant 1 : index
    %c0_104 = arith.constant 0 : index
    %77 = vector.load %arg17[%c2_102, %c1_103, %c0_104] : memref<18x18x32xf32, #tpu.memory_space<vmem>>, vector<16x16x32xf32>
    %78 = vector.shape_cast %77 : vector<16x16x32xf32> to vector<256x32xf32>
    %c0_105 = arith.constant 0 : index
    %c2_106 = arith.constant 2 : index
    %c0_107 = arith.constant 0 : index
    %79 = vector.load %arg17[%c0_105, %c2_106, %c0_107] : memref<18x18x32xf32, #tpu.memory_space<vmem>>, vector<16x16x32xf32>
    %80 = vector.shape_cast %79 : vector<16x16x32xf32> to vector<256x32xf32>
    %c1_108 = arith.constant 1 : index
    %c2_109 = arith.constant 2 : index
    %c0_110 = arith.constant 0 : index
    %81 = vector.load %arg17[%c1_108, %c2_109, %c0_110] : memref<18x18x32xf32, #tpu.memory_space<vmem>>, vector<16x16x32xf32>
    %82 = vector.shape_cast %81 : vector<16x16x32xf32> to vector<256x32xf32>
    %c2_111 = arith.constant 2 : index
    %c2_112 = arith.constant 2 : index
    %c0_113 = arith.constant 0 : index
    %83 = vector.load %arg17[%c2_111, %c2_112, %c0_113] : memref<18x18x32xf32, #tpu.memory_space<vmem>>, vector<16x16x32xf32>
    %84 = vector.shape_cast %83 : vector<16x16x32xf32> to vector<256x32xf32>
    %85 = tpu.concatenate %68, %70, %72, %74, %76, %78, %80, %82, %84 in 1 : vector<256x32xf32>, vector<256x32xf32>, vector<256x32xf32>, vector<256x32xf32>, vector<256x32xf32>, vector<256x32xf32>, vector<256x32xf32>, vector<256x32xf32>, vector<256x32xf32> -> vector<256x288xf32>
    %86 = arith.truncf %85 : vector<256x288xf32> to vector<256x288xbf16>
    %c0_114 = arith.constant 0 : index
    %c0_115 = arith.constant 0 : index
    %87 = vector.load %arg7[%c0_114, %c0_115] : memref<288x32xbf16, #tpu.memory_space<vmem>>, vector<288x32xbf16>
    %cst_116 = arith.constant dense<0.000000e+00> : vector<256x32xf32>
    %88 = tpu.matmul %86, %87, %cst_116 {dimension_numbers = #tpu.dot_dimension_numbers<[1], [0], [0], [1], [0, 0, 1, 1], [], []>} : vector<256x288xbf16>, vector<288x32xbf16>, vector<256x32xf32> -> vector<256x32xf32>
    %c0_117 = arith.constant 0 : index
    %c0_118 = arith.constant 0 : index
    %89 = vector.load %arg8[%c0_117, %c0_118] : memref<1x32xf32, #tpu.memory_space<vmem>>, vector<1x32xf32>
    %90 = vector.broadcast %89 : vector<1x32xf32> to vector<256x32xf32>
    %91 = arith.addf %88, %90 : vector<256x32xf32>
    %cst_119 = arith.constant 0.000000e+00 : f32
    %92 = vector.broadcast %cst_119 : f32 to vector<256x32xf32>
    %93 = arith.maximumf %91, %92 : vector<256x32xf32>
    %94 = vector.shape_cast %93 : vector<256x32xf32> to vector<16x16x32xf32>
    %c1_120 = arith.constant 1 : index
    %c1_121 = arith.constant 1 : index
    %c0_122 = arith.constant 0 : index
    %95 = vector.load %arg17[%c1_120, %c1_121, %c0_122] : memref<18x18x32xf32, #tpu.memory_space<vmem>>, vector<16x16x32xf32>
    tpu.vector_store %arg17[%c1_120, %c1_121, %c0_122], %94 {strides = array<i32>} : memref<18x18x32xf32, #tpu.memory_space<vmem>>, vector<16x16x32xf32>,
    %c0_123 = arith.constant 0 : index
    %c0_124 = arith.constant 0 : index
    %c0_125 = arith.constant 0 : index
    %96 = vector.load %arg17[%c0_123, %c0_124, %c0_125] : memref<18x18x32xf32, #tpu.memory_space<vmem>>, vector<16x16x32xf32>
    %97 = vector.shape_cast %96 : vector<16x16x32xf32> to vector<256x32xf32>
    %c1_126 = arith.constant 1 : index
    %c0_127 = arith.constant 0 : index
    %c0_128 = arith.constant 0 : index
    %98 = vector.load %arg17[%c1_126, %c0_127, %c0_128] : memref<18x18x32xf32, #tpu.memory_space<vmem>>, vector<16x16x32xf32>
    %99 = vector.shape_cast %98 : vector<16x16x32xf32> to vector<256x32xf32>
    %c2_129 = arith.constant 2 : index
    %c0_130 = arith.constant 0 : index
    %c0_131 = arith.constant 0 : index
    %100 = vector.load %arg17[%c2_129, %c0_130, %c0_131] : memref<18x18x32xf32, #tpu.memory_space<vmem>>, vector<16x16x32xf32>
    %101 = vector.shape_cast %100 : vector<16x16x32xf32> to vector<256x32xf32>
    %c0_132 = arith.constant 0 : index
    %c1_133 = arith.constant 1 : index
    %c0_134 = arith.constant 0 : index
    %102 = vector.load %arg17[%c0_132, %c1_133, %c0_134] : memref<18x18x32xf32, #tpu.memory_space<vmem>>, vector<16x16x32xf32>
    %103 = vector.shape_cast %102 : vector<16x16x32xf32> to vector<256x32xf32>
    %c1_135 = arith.constant 1 : index
    %c1_136 = arith.constant 1 : index
    %c0_137 = arith.constant 0 : index
    %104 = vector.load %arg17[%c1_135, %c1_136, %c0_137] : memref<18x18x32xf32, #tpu.memory_space<vmem>>, vector<16x16x32xf32>
    %105 = vector.shape_cast %104 : vector<16x16x32xf32> to vector<256x32xf32>
    %c2_138 = arith.constant 2 : index
    %c1_139 = arith.constant 1 : index
    %c0_140 = arith.constant 0 : index
    %106 = vector.load %arg17[%c2_138, %c1_139, %c0_140] : memref<18x18x32xf32, #tpu.memory_space<vmem>>, vector<16x16x32xf32>
    %107 = vector.shape_cast %106 : vector<16x16x32xf32> to vector<256x32xf32>
    %c0_141 = arith.constant 0 : index
    %c2_142 = arith.constant 2 : index
    %c0_143 = arith.constant 0 : index
    %108 = vector.load %arg17[%c0_141, %c2_142, %c0_143] : memref<18x18x32xf32, #tpu.memory_space<vmem>>, vector<16x16x32xf32>
    %109 = vector.shape_cast %108 : vector<16x16x32xf32> to vector<256x32xf32>
    %c1_144 = arith.constant 1 : index
    %c2_145 = arith.constant 2 : index
    %c0_146 = arith.constant 0 : index
    %110 = vector.load %arg17[%c1_144, %c2_145, %c0_146] : memref<18x18x32xf32, #tpu.memory_space<vmem>>, vector<16x16x32xf32>
    %111 = vector.shape_cast %110 : vector<16x16x32xf32> to vector<256x32xf32>
    %c2_147 = arith.constant 2 : index
    %c2_148 = arith.constant 2 : index
    %c0_149 = arith.constant 0 : index
    %112 = vector.load %arg17[%c2_147, %c2_148, %c0_149] : memref<18x18x32xf32, #tpu.memory_space<vmem>>, vector<16x16x32xf32>
    %113 = vector.shape_cast %112 : vector<16x16x32xf32> to vector<256x32xf32>
    %114 = tpu.concatenate %97, %99, %101, %103, %105, %107, %109, %111, %113 in 1 : vector<256x32xf32>, vector<256x32xf32>, vector<256x32xf32>, vector<256x32xf32>, vector<256x32xf32>, vector<256x32xf32>, vector<256x32xf32>, vector<256x32xf32>, vector<256x32xf32> -> vector<256x288xf32>
    %115 = arith.truncf %114 : vector<256x288xf32> to vector<256x288xbf16>
    %c0_150 = arith.constant 0 : index
    %c0_151 = arith.constant 0 : index
    %c0_152 = arith.constant 0 : index
    %116 = vector.load %arg2[%c0_150, %c0_151, %c0_152] : memref<1x1x8xf32, #tpu.memory_space<vmem>>, vector<1x1x8xf32>
    %117 = vector.shape_cast %116 : vector<1x1x8xf32> to vector<1x1x8xf32>
    %118 = vector.broadcast %117 : vector<1x1x8xf32> to vector<16x16x8xf32>
    %c1_153 = arith.constant 1 : index
    %c1_154 = arith.constant 1 : index
    %c0_155 = arith.constant 0 : index
    %119 = vector.load %arg18[%c1_153, %c1_154, %c0_155] : memref<18x18x8xf32, #tpu.memory_space<vmem>>, vector<16x16x8xf32>
    tpu.vector_store %arg18[%c1_153, %c1_154, %c0_155], %118 {strides = array<i32>} : memref<18x18x8xf32, #tpu.memory_space<vmem>>, vector<16x16x8xf32>,
    %c0_156 = arith.constant 0 : index
    %c0_157 = arith.constant 0 : index
    %c0_158 = arith.constant 0 : index
    %120 = vector.load %arg18[%c0_156, %c0_157, %c0_158] : memref<18x18x8xf32, #tpu.memory_space<vmem>>, vector<16x16x8xf32>
    %121 = vector.shape_cast %120 : vector<16x16x8xf32> to vector<256x8xf32>
    %c1_159 = arith.constant 1 : index
    %c0_160 = arith.constant 0 : index
    %c0_161 = arith.constant 0 : index
    %122 = vector.load %arg18[%c1_159, %c0_160, %c0_161] : memref<18x18x8xf32, #tpu.memory_space<vmem>>, vector<16x16x8xf32>
    %123 = vector.shape_cast %122 : vector<16x16x8xf32> to vector<256x8xf32>
    %c2_162 = arith.constant 2 : index
    %c0_163 = arith.constant 0 : index
    %c0_164 = arith.constant 0 : index
    %124 = vector.load %arg18[%c2_162, %c0_163, %c0_164] : memref<18x18x8xf32, #tpu.memory_space<vmem>>, vector<16x16x8xf32>
    %125 = vector.shape_cast %124 : vector<16x16x8xf32> to vector<256x8xf32>
    %c0_165 = arith.constant 0 : index
    %c1_166 = arith.constant 1 : index
    %c0_167 = arith.constant 0 : index
    %126 = vector.load %arg18[%c0_165, %c1_166, %c0_167] : memref<18x18x8xf32, #tpu.memory_space<vmem>>, vector<16x16x8xf32>
    %127 = vector.shape_cast %126 : vector<16x16x8xf32> to vector<256x8xf32>
    %c1_168 = arith.constant 1 : index
    %c1_169 = arith.constant 1 : index
    %c0_170 = arith.constant 0 : index
    %128 = vector.load %arg18[%c1_168, %c1_169, %c0_170] : memref<18x18x8xf32, #tpu.memory_space<vmem>>, vector<16x16x8xf32>
    %129 = vector.shape_cast %128 : vector<16x16x8xf32> to vector<256x8xf32>
    %c2_171 = arith.constant 2 : index
    %c1_172 = arith.constant 1 : index
    %c0_173 = arith.constant 0 : index
    %130 = vector.load %arg18[%c2_171, %c1_172, %c0_173] : memref<18x18x8xf32, #tpu.memory_space<vmem>>, vector<16x16x8xf32>
    %131 = vector.shape_cast %130 : vector<16x16x8xf32> to vector<256x8xf32>
    %c0_174 = arith.constant 0 : index
    %c2_175 = arith.constant 2 : index
    %c0_176 = arith.constant 0 : index
    %132 = vector.load %arg18[%c0_174, %c2_175, %c0_176] : memref<18x18x8xf32, #tpu.memory_space<vmem>>, vector<16x16x8xf32>
    %133 = vector.shape_cast %132 : vector<16x16x8xf32> to vector<256x8xf32>
    %c1_177 = arith.constant 1 : index
    %c2_178 = arith.constant 2 : index
    %c0_179 = arith.constant 0 : index
    %134 = vector.load %arg18[%c1_177, %c2_178, %c0_179] : memref<18x18x8xf32, #tpu.memory_space<vmem>>, vector<16x16x8xf32>
    %135 = vector.shape_cast %134 : vector<16x16x8xf32> to vector<256x8xf32>
    %c2_180 = arith.constant 2 : index
    %c2_181 = arith.constant 2 : index
    %c0_182 = arith.constant 0 : index
    %136 = vector.load %arg18[%c2_180, %c2_181, %c0_182] : memref<18x18x8xf32, #tpu.memory_space<vmem>>, vector<16x16x8xf32>
    %137 = vector.shape_cast %136 : vector<16x16x8xf32> to vector<256x8xf32>
    %138 = tpu.concatenate %121, %123, %125, %127, %129, %131, %133, %135, %137 in 1 : vector<256x8xf32>, vector<256x8xf32>, vector<256x8xf32>, vector<256x8xf32>, vector<256x8xf32>, vector<256x8xf32>, vector<256x8xf32>, vector<256x8xf32>, vector<256x8xf32> -> vector<256x72xf32>
    %139 = arith.truncf %138 : vector<256x72xf32> to vector<256x72xbf16>
    %c0_183 = arith.constant 0 : index
    %c0_184 = arith.constant 0 : index
    %140 = vector.load %arg9[%c0_183, %c0_184] : memref<72x32xbf16, #tpu.memory_space<vmem>>, vector<72x32xbf16>
    %cst_185 = arith.constant dense<0.000000e+00> : vector<256x32xf32>
    %141 = tpu.matmul %139, %140, %cst_185 {dimension_numbers = #tpu.dot_dimension_numbers<[1], [0], [0], [1], [0, 0, 1, 1], [], []>} : vector<256x72xbf16>, vector<72x32xbf16>, vector<256x32xf32> -> vector<256x32xf32>
    %c0_186 = arith.constant 0 : index
    %c0_187 = arith.constant 0 : index
    %142 = vector.load %arg10[%c0_186, %c0_187] : memref<288x32xbf16, #tpu.memory_space<vmem>>, vector<288x32xbf16>
    %cst_188 = arith.constant dense<0.000000e+00> : vector<256x32xf32>
    %143 = tpu.matmul %115, %142, %cst_188 {dimension_numbers = #tpu.dot_dimension_numbers<[1], [0], [0], [1], [0, 0, 1, 1], [], []>} : vector<256x288xbf16>, vector<288x32xbf16>, vector<256x32xf32> -> vector<256x32xf32>
    %144 = arith.addf %141, %143 : vector<256x32xf32>
    %c0_189 = arith.constant 0 : index
    %c0_190 = arith.constant 0 : index
    %145 = vector.load %arg11[%c0_189, %c0_190] : memref<27x32xbf16, #tpu.memory_space<vmem>>, vector<27x32xbf16>
    %cst_191 = arith.constant dense<0.000000e+00> : vector<256x32xf32>
    %146 = tpu.matmul %28, %145, %cst_191 {dimension_numbers = #tpu.dot_dimension_numbers<[1], [0], [0], [1], [0, 0, 1, 1], [], []>} : vector<256x27xbf16>, vector<27x32xbf16>, vector<256x32xf32> -> vector<256x32xf32>
    %147 = arith.addf %144, %146 : vector<256x32xf32>
    %c0_192 = arith.constant 0 : index
    %c0_193 = arith.constant 0 : index
    %148 = vector.load %arg12[%c0_192, %c0_193] : memref<1x32xf32, #tpu.memory_space<vmem>>, vector<1x32xf32>
    %149 = vector.broadcast %148 : vector<1x32xf32> to vector<256x32xf32>
    %150 = arith.addf %147, %149 : vector<256x32xf32>
    %cst_194 = arith.constant 0.000000e+00 : f32
    %151 = vector.broadcast %cst_194 : f32 to vector<256x32xf32>
    %152 = arith.maximumf %150, %151 : vector<256x32xf32>
    %c0_195 = arith.constant 0 : index
    %c0_196 = arith.constant 0 : index
    %153 = vector.load %arg13[%c0_195, %c0_196] : memref<3x32xf32, #tpu.memory_space<vmem>>, vector<3x32xf32>
    %154 = tpu.transpose %152, [1, 0] : vector<256x32xf32> -> vector<32x256xf32>
    %cst_197 = arith.constant dense<0.000000e+00> : vector<3x256xf32>
    %155 = tpu.matmul %153, %154, %cst_197 {dimension_numbers = #tpu.dot_dimension_numbers<[1], [0], [0], [1], [0, 0, 1, 1], [], []>} : vector<3x32xf32>, vector<32x256xf32>, vector<3x256xf32> -> vector<3x256xf32>
    %c0_198 = arith.constant 0 : index
    %c0_199 = arith.constant 0 : index
    %156 = vector.load %arg14[%c0_198, %c0_199] : memref<3x1xf32, #tpu.memory_space<vmem>>, vector<3x1xf32>
    %157 = vector.broadcast %156 : vector<3x1xf32> to vector<3x256xf32>
    %158 = arith.addf %155, %157 : vector<3x256xf32>
    %c0_200 = arith.constant 0 : index
    %c0_201 = arith.constant 0 : index
    %c0_202 = arith.constant 0 : index
    %159 = vector.load %arg15[%c0_200, %c0_201, %c0_202] : memref<1x3x256xf32, #tpu.memory_space<vmem>>, vector<1x3x256xf32>
    %160 = vector.shape_cast %159 : vector<1x3x256xf32> to vector<3x256xf32>
    %161 = vector.shape_cast %158 : vector<3x256xf32> to vector<1x3x256xf32>
    tpu.vector_store %arg15[%c0_200, %c0_201, %c0_202], %161 {strides = array<i32>} : memref<1x3x256xf32, #tpu.memory_space<vmem>>, vector<1x3x256xf32>,
    return
  }
  func.func @transform_0(%arg0: i32) -> (i32, i32, i32, i32) {
    %c0_i32 = arith.constant 0 : i32
    %c0_i32_0 = arith.constant 0 : i32
    %c0_i32_1 = arith.constant 0 : i32
    %c0_i32_2 = arith.constant 0 : i32
    return %arg0, %c0_i32, %c0_i32_0, %c0_i32_1 : i32, i32, i32, i32
  }
  func.func @transform_1(%arg0: i32) -> (i32, i32, i32) {
    %c0_i32 = arith.constant 0 : i32
    %c0_i32_0 = arith.constant 0 : i32
    %c0_i32_1 = arith.constant 0 : i32
    return %arg0, %c0_i32, %c0_i32_0 : i32, i32, i32
  }
  func.func @transform_2(%arg0: i32) -> (i32, i32) {
    %c0_i32 = arith.constant 0 : i32
    %c0_i32_0 = arith.constant 0 : i32
    %c0_i32_1 = arith.constant 0 : i32
    return %c0_i32, %c0_i32_0 : i32, i32
  }
  func.func @transform_3(%arg0: i32) -> (i32, i32) {
    %c0_i32 = arith.constant 0 : i32
    %c0_i32_0 = arith.constant 0 : i32
    %c0_i32_1 = arith.constant 0 : i32
    return %c0_i32, %c0_i32_0 : i32, i32
  }
  func.func @transform_4(%arg0: i32) -> (i32, i32) {
    %c0_i32 = arith.constant 0 : i32
    %c0_i32_0 = arith.constant 0 : i32
    %c0_i32_1 = arith.constant 0 : i32
    return %c0_i32, %c0_i32_0 : i32, i32
  }
  func.func @transform_5(%arg0: i32) -> (i32, i32) {
    %c0_i32 = arith.constant 0 : i32
    %c0_i32_0 = arith.constant 0 : i32
    %c0_i32_1 = arith.constant 0 : i32
    return %c0_i32, %c0_i32_0 : i32, i32
  }
  func.func @transform_6(%arg0: i32) -> (i32, i32) {
    %c0_i32 = arith.constant 0 : i32
    %c0_i32_0 = arith.constant 0 : i32
    %c0_i32_1 = arith.constant 0 : i32
    return %c0_i32, %c0_i32_0 : i32, i32
  }
  func.func @transform_7(%arg0: i32) -> (i32, i32) {
    %c0_i32 = arith.constant 0 : i32
    %c0_i32_0 = arith.constant 0 : i32
    %c0_i32_1 = arith.constant 0 : i32
    return %c0_i32, %c0_i32_0 : i32, i32
  }
  func.func @transform_8(%arg0: i32) -> (i32, i32) {
    %c0_i32 = arith.constant 0 : i32
    %c0_i32_0 = arith.constant 0 : i32
    %c0_i32_1 = arith.constant 0 : i32
    return %c0_i32, %c0_i32_0 : i32, i32
  }
  func.func @transform_9(%arg0: i32) -> (i32, i32) {
    %c0_i32 = arith.constant 0 : i32
    %c0_i32_0 = arith.constant 0 : i32
    %c0_i32_1 = arith.constant 0 : i32
    return %c0_i32, %c0_i32_0 : i32, i32
  }
  func.func @transform_10(%arg0: i32) -> (i32, i32) {
    %c0_i32 = arith.constant 0 : i32
    %c0_i32_0 = arith.constant 0 : i32
    %c0_i32_1 = arith.constant 0 : i32
    return %c0_i32, %c0_i32_0 : i32, i32
  }
  func.func @transform_11(%arg0: i32) -> (i32, i32) {
    %c0_i32 = arith.constant 0 : i32
    %c0_i32_0 = arith.constant 0 : i32
    %c0_i32_1 = arith.constant 0 : i32
    return %c0_i32, %c0_i32_0 : i32, i32
  }
  func.func @transform_12(%arg0: i32) -> (i32, i32) {
    %c0_i32 = arith.constant 0 : i32
    %c0_i32_0 = arith.constant 0 : i32
    %c0_i32_1 = arith.constant 0 : i32
    return %c0_i32, %c0_i32_0 : i32, i32
  }
  func.func @transform_13(%arg0: i32) -> (i32, i32) {
    %c0_i32 = arith.constant 0 : i32
    %c0_i32_0 = arith.constant 0 : i32
    %c0_i32_1 = arith.constant 0 : i32
    return %c0_i32, %c0_i32_0 : i32, i32
  }
  func.func @transform_14(%arg0: i32) -> (i32, i32, i32) {
    %c0_i32 = arith.constant 0 : i32
    %c0_i32_0 = arith.constant 0 : i32
    %c0_i32_1 = arith.constant 0 : i32
    return %arg0, %c0_i32, %c0_i32_0 : i32, i32, i32
  }
}

</mosaic_0001>

<llo_original>
// kernel: encoder_forward.1
$region0: #{encoder_forward.1}
  #allocation0 [shape = 'u32[]', space=smem, size = 0x4, offset = 0x4, fixed_abs, tag = 'smem constant byte address 0x4 - core index']
  #allocation1 [shape = 'u32[144,128]{1,0:T(1,128)}', space=vmem, size = 0x12000, scoped, tag = 'internal scratch']
  #allocation2 [shape = 'f32[18,18,3]{2,1,0:T(8,128)}', space=vmem, size = 0x36000, scoped, tag = 'scratch operand']
  #allocation3 [shape = 'f32[18,18,32]{2,1,0:T(8,128)}', space=vmem, size = 0x36000, scoped, tag = 'scratch operand']
  #allocation4 [shape = 'f32[18,18,8]{2,1,0:T(8,128)}', space=vmem, size = 0x36000, scoped, tag = 'scratch operand']
  %s0 = inlined_call_operand.vmem [shape: f32[2,16,16,3], index: 0, kind: input, shape index: {}]
  %s1 = inlined_call_operand.vmem [shape: f32[2,1,8], index: 1, kind: input, shape index: {}]
  %s2 = inlined_call_operand.vmem [shape: bf16[27,32], index: 2, kind: input, shape index: {}]
  %s3 = inlined_call_operand.vmem [shape: f32[1,32], index: 3, kind: input, shape index: {}]
  %s4 = inlined_call_operand.vmem [shape: bf16[288,32], index: 4, kind: input, shape index: {}]
  %s5 = inlined_call_operand.vmem [shape: f32[1,32], index: 5, kind: input, shape index: {}]
  %s6 = inlined_call_operand.vmem [shape: bf16[288,32], index: 6, kind: input, shape index: {}]
  %s7 = inlined_call_operand.vmem [shape: f32[1,32], index: 7, kind: input, shape index: {}]
  %s8 = inlined_call_operand.vmem [shape: bf16[72,32], index: 8, kind: input, shape index: {}]
  %s9 = inlined_call_operand.vmem [shape: bf16[288,32], index: 9, kind: input, shape index: {}]
  %s10 = inlined_call_operand.vmem [shape: bf16[27,32], index: 10, kind: input, shape index: {}]
  %s11 = inlined_call_operand.vmem [shape: f32[1,32], index: 11, kind: input, shape index: {}]
  %s12 = inlined_call_operand.vmem [shape: f32[3,32], index: 12, kind: input, shape index: {}]
  %s13 = inlined_call_operand.vmem [shape: f32[3,1], index: 13, kind: input, shape index: {}]
  %s14 = inlined_call_operand.vmem [shape: f32[2,3,256], index: 14, kind: output, shape index: {}]
  %s15 = sld [smem:[#allocation0]]
  $region89: #{encoder_forward.1} parent=0
    _
  %s17 = ssub.s32 1, %s15
  %s18 = scalar_select 0, %s17, %s15
  loop: start=0, step=1, limit=4
  $region2: #{encoder_forward.1} parent=0 // loop_pre_header
    _
  $region3: #{encoder_forward.1} parent=0 // loop_header
    %s20 = sphi 0, %s24
    %p21 = scmp.ge.s32.totalorder %s20, 4
    %s30 = sphi 0, %s32
    %s33 = sphi 0, %s30
    %s34 = sphi 0, %s33
    %s50 = sphi 0, %s34
    %s56 = sphi 0, %s58
    %s59 = sphi 0, %s56
    %s60 = sphi 0, %s59
    %s76 = sphi 0, %s60
    %s80 = sphi 0, %s80
    %s82 = sphi 0, %s80
    %s83 = sphi 0, %s82
    %s97 = sphi 0, %s83
    %s101 = sphi 0, %s101
    %s103 = sphi 0, %s101
    %s104 = sphi 0, %s103
    %s118 = sphi 0, %s104
    %s122 = sphi 0, %s122
    %s124 = sphi 0, %s122
    %s125 = sphi 0, %s124
    %s139 = sphi 0, %s125
    %s143 = sphi 0, %s143
    %s145 = sphi 0, %s143
    %s146 = sphi 0, %s145
    %s160 = sphi 0, %s146
    %s164 = sphi 0, %s164
    %s166 = sphi 0, %s164
    %s167 = sphi 0, %s166
    %s181 = sphi 0, %s167
    %s185 = sphi 0, %s185
    %s187 = sphi 0, %s185
    %s188 = sphi 0, %s187
    %s202 = sphi 0, %s188
    %s206 = sphi 0, %s206
    %s208 = sphi 0, %s206
    %s209 = sphi 0, %s208
    %s223 = sphi 0, %s209
    %s227 = sphi 0, %s227
    %s229 = sphi 0, %s227
    %s230 = sphi 0, %s229
    %s244 = sphi 0, %s230
    %s248 = sphi 0, %s248
    %s250 = sphi 0, %s248
    %s251 = sphi 0, %s250
    %s265 = sphi 0, %s251
    %s269 = sphi 0, %s269
    %s271 = sphi 0, %s269
    %s272 = sphi 0, %s271
    %s286 = sphi 0, %s272
    %s290 = sphi 0, %s290
    %s292 = sphi 0, %s290
    %s293 = sphi 0, %s292
    %s307 = sphi 0, %s293
    %s311 = sphi 0, %s311
    %s313 = sphi 0, %s311
    %s314 = sphi 0, %s313
    %s328 = sphi 0, %s314
    %s334 = sphi 0, %s336
    %s337 = sphi 0, %s334
    %s338 = sphi 0, %s337
    %s354 = sphi 0, %s338
  $region4: #{encoder_forward.1} parent=0 // loop_header_branch
    %23 = sbr.rel (%p21) target = $region8
  $region5: #{encoder_forward.1} parent=0 // loop_body
    %s25 = ssub.s32 %s20, 1
    %s26 = ssub.s32 %s20, 2
    %s27 = sadd.s32 %s20, 1
    %s28 = ssub.s32 %s20, %s27
    %p29 = scmp.eq.s32.totalorder %s28, 0
    %s31 = sadd.s32 %s30, 1
    %s32 = scalar_select %p29, %s30, %s31
    %p35 = pneg %p29
    %p36 = scmp.eq.s32.totalorder %s20, 1
    %p37 = por %p35, %p36
    %p38 = scmp.ne.s32.totalorder %s30, %s33
    %p39 = scmp.eq.s32.totalorder %s20, 0
    %p40 = por %p38, %p39
    %p41 = scmp.ne.s32.totalorder %s30, %s33
    %p42 = scmp.eq.s32.totalorder %s25, 1
    %p43 = por %p41, %p42
    %p44 = scmp.ne.s32.totalorder %s33, %s34
    %p45 = scmp.eq.s32.totalorder %s25, 0
    %p46 = por %p44, %p45
    %p47 = scmp.ne.s32.totalorder %s33, %s34
    %p48 = scmp.eq.s32.totalorder %s26, 1
    %p49 = por %p47, %p48
    %p51 = scmp.ne.s32.totalorder %s34, %s50
    %p52 = scmp.eq.s32.totalorder %s26, 0
    %p53 = por %p51, %p52
    %s54 = ssub.s32 %s20, %s27
    %p55 = scmp.eq.s32.totalorder %s54, 0
    %s57 = sadd.s32 %s56, 1
    %s58 = scalar_select %p55, %s56, %s57
    %p61 = pneg %p55
    %p62 = scmp.eq.s32.totalorder %s20, 1
    %p63 = por %p61, %p62
    %p64 = scmp.ne.s32.totalorder %s56, %s59
    %p65 = scmp.eq.s32.totalorder %s20, 0
    %p66 = por %p64, %p65
    %p67 = scmp.ne.s32.totalorder %s56, %s59
    %p68 = scmp.eq.s32.totalorder %s25, 1
    %p69 = por %p67, %p68
    %p70 = scmp.ne.s32.totalorder %s59, %s60
    %p71 = scmp.eq.s32.totalorder %s25, 0
    %p72 = por %p70, %p71
    %p73 = scmp.ne.s32.totalorder %s59, %s60
    %p74 = scmp.eq.s32.totalorder %s26, 1
    %p75 = por %p73, %p74
    %p77 = scmp.ne.s32.totalorder %s60, %s76
    %p78 = scmp.eq.s32.totalorder %s26, 0
    %p79 = por %p77, %p78
    %s81 = sadd.s32 %s80, 1
    %p84 = scmp.eq.s32.totalorder %s20, 1
    %p85 = scmp.ne.s32.totalorder %s80, %s82
    %p86 = scmp.eq.s32.totalorder %s20, 0
    %p87 = por %p85, %p86
    %p88 = scmp.ne.s32.totalorder %s80, %s82
    %p89 = scmp.eq.s32.totalorder %s25, 1
    %p90 = por %p88, %p89
    %p91 = scmp.ne.s32.totalorder %s82, %s83
    %p92 = scmp.eq.s32.totalorder %s25, 0
    %p93 = por %p91, %p92
    %p94 = scmp.ne.s32.totalorder %s82, %s83
    %p95 = scmp.eq.s32.totalorder %s26, 1
    %p96 = por %p94, %p95
    %p98 = scmp.ne.s32.totalorder %s83, %s97
    %p99 = scmp.eq.s32.totalorder %s26, 0
    %p100 = por %p98, %p99
    %s102 = sadd.s32 %s101, 1
    %p105 = scmp.eq.s32.totalorder %s20, 1
    %p106 = scmp.ne.s32.totalorder %s101, %s103
    %p107 = scmp.eq.s32.totalorder %s20, 0
    %p108 = por %p106, %p107
    %p109 = scmp.ne.s32.totalorder %s101, %s103
    %p110 = scmp.eq.s32.totalorder %s25, 1
    %p111 = por %p109, %p110
    %p112 = scmp.ne.s32.totalorder %s103, %s104
    %p113 = scmp.eq.s32.totalorder %s25, 0
    %p114 = por %p112, %p113
    %p115 = scmp.ne.s32.totalorder %s103, %s104
    %p116 = scmp.eq.s32.totalorder %s26, 1
    %p117 = por %p115, %p116
    %p119 = scmp.ne.s32.totalorder %s104, %s118
    %p120 = scmp.eq.s32.totalorder %s26, 0
    %p121 = por %p119, %p120
    %s123 = sadd.s32 %s122, 1
    %p126 = scmp.eq.s32.totalorder %s20, 1
    %p127 = scmp.ne.s32.totalorder %s122, %s124
    %p128 = scmp.eq.s32.totalorder %s20, 0
    %p129 = por %p127, %p128
    %p130 = scmp.ne.s32.totalorder %s122, %s124
    %p131 = scmp.eq.s32.totalorder %s25, 1
    %p132 = por %p130, %p131
    %p133 = scmp.ne.s32.totalorder %s124, %s125
    %p134 = scmp.eq.s32.totalorder %s25, 0
    %p135 = por %p133, %p134
    %p136 = scmp.ne.s32.totalorder %s124, %s125
    %p137 = scmp.eq.s32.totalorder %s26, 1
    %p138 = por %p136, %p137
    %p140 = scmp.ne.s32.totalorder %s125, %s139
    %p141 = scmp.eq.s32.totalorder %s26, 0
    %p142 = por %p140, %p141
    %s144 = sadd.s32 %s143, 1
    %p147 = scmp.eq.s32.totalorder %s20, 1
    %p148 = scmp.ne.s32.totalorder %s143, %s145
    %p149 = scmp.eq.s32.totalorder %s20, 0
    %p150 = por %p148, %p149
    %p151 = scmp.ne.s32.totalorder %s143, %s145
    %p152 = scmp.eq.s32.totalorder %s25, 1
    %p153 = por %p151, %p152
    %p154 = scmp.ne.s32.totalorder %s145, %s146
    %p155 = scmp.eq.s32.totalorder %s25, 0
    %p156 = por %p154, %p155
    %p157 = scmp.ne.s32.totalorder %s145, %s146
    %p158 = scmp.eq.s32.totalorder %s26, 1
    %p159 = por %p157, %p158
    %p161 = scmp.ne.s32.totalorder %s146, %s160
    %p162 = scmp.eq.s32.totalorder %s26, 0
    %p163 = por %p161, %p162
    %s165 = sadd.s32 %s164, 1
    %p168 = scmp.eq.s32.totalorder %s20, 1
    %p169 = scmp.ne.s32.totalorder %s164, %s166
    %p170 = scmp.eq.s32.totalorder %s20, 0
    %p171 = por %p169, %p170
    %p172 = scmp.ne.s32.totalorder %s164, %s166
    %p173 = scmp.eq.s32.totalorder %s25, 1
    %p174 = por %p172, %p173
    %p175 = scmp.ne.s32.totalorder %s166, %s167
    %p176 = scmp.eq.s32.totalorder %s25, 0
    %p177 = por %p175, %p176
    %p178 = scmp.ne.s32.totalorder %s166, %s167
    %p179 = scmp.eq.s32.totalorder %s26, 1
    %p180 = por %p178, %p179
    %p182 = scmp.ne.s32.totalorder %s167, %s181
    %p183 = scmp.eq.s32.totalorder %s26, 0
    %p184 = por %p182, %p183
    %s186 = sadd.s32 %s185, 1
    %p189 = scmp.eq.s32.totalorder %s20, 1
    %p190 = scmp.ne.s32.totalorder %s185, %s187
    %p191 = scmp.eq.s32.totalorder %s20, 0
    %p192 = por %p190, %p191
    %p193 = scmp.ne.s32.totalorder %s185, %s187
    %p194 = scmp.eq.s32.totalorder %s25, 1
    %p195 = por %p193, %p194
    %p196 = scmp.ne.s32.totalorder %s187, %s188
    %p197 = scmp.eq.s32.totalorder %s25, 0
    %p198 = por %p196, %p197
    %p199 = scmp.ne.s32.totalorder %s187, %s188
    %p200 = scmp.eq.s32.totalorder %s26, 1
    %p201 = por %p199, %p200
    %p203 = scmp.ne.s32.totalorder %s188, %s202
    %p204 = scmp.eq.s32.totalorder %s26, 0
    %p205 = por %p203, %p204
    %s207 = sadd.s32 %s206, 1
    %p210 = scmp.eq.s32.totalorder %s20, 1
    %p211 = scmp.ne.s32.totalorder %s206, %s208
    %p212 = scmp.eq.s32.totalorder %s20, 0
    %p213 = por %p211, %p212
    %p214 = scmp.ne.s32.totalorder %s206, %s208
    %p215 = scmp.eq.s32.totalorder %s25, 1
    %p216 = por %p214, %p215
    %p217 = scmp.ne.s32.totalorder %s208, %s209
    %p218 = scmp.eq.s32.totalorder %s25, 0
    %p219 = por %p217, %p218
    %p220 = scmp.ne.s32.totalorder %s208, %s209
    %p221 = scmp.eq.s32.totalorder %s26, 1
    %p222 = por %p220, %p221
    %p224 = scmp.ne.s32.totalorder %s209, %s223
    %p225 = scmp.eq.s32.totalorder %s26, 0
    %p226 = por %p224, %p225
    %s228 = sadd.s32 %s227, 1
    %p231 = scmp.eq.s32.totalorder %s20, 1
    %p232 = scmp.ne.s32.totalorder %s227, %s229
    %p233 = scmp.eq.s32.totalorder %s20, 0
    %p234 = por %p232, %p233
    %p235 = scmp.ne.s32.totalorder %s227, %s229
    %p236 = scmp.eq.s32.totalorder %s25, 1
    %p237 = por %p235, %p236
    %p238 = scmp.ne.s32.totalorder %s229, %s230
    %p239 = scmp.eq.s32.totalorder %s25, 0
    %p240 = por %p238, %p239
    %p241 = scmp.ne.s32.totalorder %s229, %s230
    %p242 = scmp.eq.s32.totalorder %s26, 1
    %p243 = por %p241, %p242
    %p245 = scmp.ne.s32.totalorder %s230, %s244
    %p246 = scmp.eq.s32.totalorder %s26, 0
    %p247 = por %p245, %p246
    %s249 = sadd.s32 %s248, 1
    %p252 = scmp.eq.s32.totalorder %s20, 1
    %p253 = scmp.ne.s32.totalorder %s248, %s250
    %p254 = scmp.eq.s32.totalorder %s20, 0
    %p255 = por %p253, %p254
    %p256 = scmp.ne.s32.totalorder %s248, %s250
    %p257 = scmp.eq.s32.totalorder %s25, 1
    %p258 = por %p256, %p257
    %p259 = scmp.ne.s32.totalorder %s250, %s251
    %p260 = scmp.eq.s32.totalorder %s25, 0
    %p261 = por %p259, %p260
    %p262 = scmp.ne.s32.totalorder %s250, %s251
    %p263 = scmp.eq.s32.totalorder %s26, 1
    %p264 = por %p262, %p263
    %p266 = scmp.ne.s32.totalorder %s251, %s265
    %p267 = scmp.eq.s32.totalorder %s26, 0
    %p268 = por %p266, %p267
    %s270 = sadd.s32 %s269, 1
    %p273 = scmp.eq.s32.totalorder %s20, 1
    %p274 = scmp.ne.s32.totalorder %s269, %s271
    %p275 = scmp.eq.s32.totalorder %s20, 0
    %p276 = por %p274, %p275
    %p277 = scmp.ne.s32.totalorder %s269, %s271
    %p278 = scmp.eq.s32.totalorder %s25, 1
    %p279 = por %p277, %p278
    %p280 = scmp.ne.s32.totalorder %s271, %s272
    %p281 = scmp.eq.s32.totalorder %s25, 0
    %p282 = por %p280, %p281
    %p283 = scmp.ne.s32.totalorder %s271, %s272
    %p284 = scmp.eq.s32.totalorder %s26, 1
    %p285 = por %p283, %p284
    %p287 = scmp.ne.s32.totalorder %s272, %s286
    %p288 = scmp.eq.s32.totalorder %s26, 0
    %p289 = por %p287, %p288
    %s291 = sadd.s32 %s290, 1
    %p294 = scmp.eq.s32.totalorder %s20, 1
    %p295 = scmp.ne.s32.totalorder %s290, %s292
    %p296 = scmp.eq.s32.totalorder %s20, 0
    %p297 = por %p295, %p296
    %p298 = scmp.ne.s32.totalorder %s290, %s292
    %p299 = scmp.eq.s32.totalorder %s25, 1
    %p300 = por %p298, %p299
    %p301 = scmp.ne.s32.totalorder %s292, %s293
    %p302 = scmp.eq.s32.totalorder %s25, 0
    %p303 = por %p301, %p302
    %p304 = scmp.ne.s32.totalorder %s292, %s293
    %p305 = scmp.eq.s32.totalorder %s26, 1
    %p306 = por %p304, %p305
    %p308 = scmp.ne.s32.totalorder %s293, %s307
    %p309 = scmp.eq.s32.totalorder %s26, 0
    %p310 = por %p308, %p309
    %s312 = sadd.s32 %s311, 1
    %p315 = scmp.eq.s32.totalorder %s20, 1
    %p316 = scmp.ne.s32.totalorder %s311, %s313
    %p317 = scmp.eq.s32.totalorder %s20, 0
    %p318 = por %p316, %p317
    %p319 = scmp.ne.s32.totalorder %s311, %s313
    %p320 = scmp.eq.s32.totalorder %s25, 1
    %p321 = por %p319, %p320
    %p322 = scmp.ne.s32.totalorder %s313, %s314
    %p323 = scmp.eq.s32.totalorder %s25, 0
    %p324 = por %p322, %p323
    %p325 = scmp.ne.s32.totalorder %s313, %s314
    %p326 = scmp.eq.s32.totalorder %s26, 1
    %p327 = por %p325, %p326
    %p329 = scmp.ne.s32.totalorder %s314, %s328
    %p330 = scmp.eq.s32.totalorder %s26, 0
    %p331 = por %p329, %p330
    %s332 = ssub.s32 %s20, %s27
    %p333 = scmp.eq.s32.totalorder %s332, 0
    %s335 = sadd.s32 %s334, 1
    %s336 = scalar_select %p333, %s334, %s335
    %p339 = pneg %p333
    %p340 = scmp.eq.s32.totalorder %s20, 1
    %p341 = por %p339, %p340
    %p342 = scmp.ne.s32.totalorder %s334, %s337
    %p343 = scmp.eq.s32.totalorder %s20, 0
    %p344 = por %p342, %p343
    %p345 = scmp.ne.s32.totalorder %s334, %s337
    %p346 = scmp.eq.s32.totalorder %s25, 1
    %p347 = por %p345, %p346
    %p348 = scmp.ne.s32.totalorder %s337, %s338
    %p349 = scmp.eq.s32.totalorder %s25, 0
    %p350 = por %p348, %p349
    %p351 = scmp.ne.s32.totalorder %s337, %s338
    %p352 = scmp.eq.s32.totalorder %s26, 1
    %p353 = por %p351, %p352
    %p355 = scmp.ne.s32.totalorder %s338, %s354
    %p356 = scmp.eq.s32.totalorder %s26, 0
    %p357 = por %p355, %p356
    %p358 = scmp.le.s32.totalorder 1, %s20
    %p359 = scmp.lt.s32.totalorder %s20, 3
    %p360 = pnand %p358, %p359
    %p361 = pneg %p360
    // Predicated region
    $region9: #{encoder_forward.1} parent=5 // pred_check
      _
    $region10: #{encoder_forward.1} parent=5 // pred_check_branch
      %363 = sbr.rel (%p360) target = $region12
    $region11: #{encoder_forward.1} parent=5 // pred_region
      %s364 = ssub.s32 %s20, 1
      // Predicated region
      $region13: #{encoder_forward.1} parent=11 // pred_check
        %p365 = pneg %p93
      $region14: #{encoder_forward.1} parent=11 // pred_check_branch
        %367 = sbr.rel (%p365) target = $region16
      $region15: #{encoder_forward.1} parent=11 // pred_region
        _
      $region16: #{encoder_forward.1} parent=11 // pred_fallthru
        _
      // Predicated region
      $region17: #{encoder_forward.1} parent=11 // pred_check
        %p368 = pneg %p114
      $region18: #{encoder_forward.1} parent=11 // pred_check_branch
        %370 = sbr.rel (%p368) target = $region20
      $region19: #{encoder_forward.1} parent=11 // pred_region
        _
      $region20: #{encoder_forward.1} parent=11 // pred_fallthru
        _
      // Predicated region
      $region21: #{encoder_forward.1} parent=11 // pred_check
        %p371 = pneg %p135
      $region22: #{encoder_forward.1} parent=11 // pred_check_branch
        %373 = sbr.rel (%p371) target = $region24
      $region23: #{encoder_forward.1} parent=11 // pred_region
        _
      $region24: #{encoder_forward.1} parent=11 // pred_fallthru
        _
      // Predicated region
      $region25: #{encoder_forward.1} parent=11 // pred_check
        %p374 = pneg %p156
      $region26: #{encoder_forward.1} parent=11 // pred_check_branch
        %376 = sbr.rel (%p374) target = $region28
      $region27: #{encoder_forward.1} parent=11 // pred_region
        _
      $region28: #{encoder_forward.1} parent=11 // pred_fallthru
        _
      // Predicated region
      $region29: #{encoder_forward.1} parent=11 // pred_check
        %p377 = pneg %p177
      $region30: #{encoder_forward.1} parent=11 // pred_check_branch
        %379 = sbr.rel (%p377) target = $region32
      $region31: #{encoder_forward.1} parent=11 // pred_region
        _
      $region32: #{encoder_forward.1} parent=11 // pred_fallthru
        _
      // Predicated region
      $region33: #{encoder_forward.1} parent=11 // pred_check
        %p380 = pneg %p198
      $region34: #{encoder_forward.1} parent=11 // pred_check_branch
        %382 = sbr.rel (%p380) target = $region36
      $region35: #{encoder_forward.1} parent=11 // pred_region
        _
      $region36: #{encoder_forward.1} parent=11 // pred_fallthru
        _
      // Predicated region
      $region37: #{encoder_forward.1} parent=11 // pred_check
        %p383 = pneg %p219
      $region38: #{encoder_forward.1} parent=11 // pred_check_branch
        %385 = sbr.rel (%p383) target = $region40
      $region39: #{encoder_forward.1} parent=11 // pred_region
        _
      $region40: #{encoder_forward.1} parent=11 // pred_fallthru
        _
      // Predicated region
      $region41: #{encoder_forward.1} parent=11 // pred_check
        %p386 = pneg %p240
      $region42: #{encoder_forward.1} parent=11 // pred_check_branch
        %388 = sbr.rel (%p386) target = $region44
      $region43: #{encoder_forward.1} parent=11 // pred_region
        _
      $region44: #{encoder_forward.1} parent=11 // pred_fallthru
        _
      // Predicated region
      $region45: #{encoder_forward.1} parent=11 // pred_check
        %p389 = pneg %p261
      $region46: #{encoder_forward.1} parent=11 // pred_check_branch
        %391 = sbr.rel (%p389) target = $region48
      $region47: #{encoder_forward.1} parent=11 // pred_region
        _
      $region48: #{encoder_forward.1} parent=11 // pred_fallthru
        _
      // Predicated region
      $region49: #{encoder_forward.1} parent=11 // pred_check
        %p392 = pneg %p282
      $region50: #{encoder_forward.1} parent=11 // pred_check_branch
        %394 = sbr.rel (%p392) target = $region52
      $region51: #{encoder_forward.1} parent=11 // pred_region
        _
      $region52: #{encoder_forward.1} parent=11 // pred_fallthru
        _
      // Predicated region
      $region53: #{encoder_forward.1} parent=11 // pred_check
        %p395 = pneg %p303
      $region54: #{encoder_forward.1} parent=11 // pred_check_branch
        %397 = sbr.rel (%p395) target = $region56
      $region55: #{encoder_forward.1} parent=11 // pred_region
        _
      $region56: #{encoder_forward.1} parent=11 // pred_fallthru
        _
      // Predicated region
      $region57: #{encoder_forward.1} parent=11 // pred_check
        %p398 = pneg %p324
      $region58: #{encoder_forward.1} parent=11 // pred_check_branch
        %400 = sbr.rel (%p398) target = $region60
      $region59: #{encoder_forward.1} parent=11 // pred_region
        _
      $region60: #{encoder_forward.1} parent=11 // pred_fallthru
        _
    $region12: #{encoder_forward.1} parent=5 // pred_fallthru
      _
    %p401 = scmp.lt.s32.totalorder %s20, 2
    // Predicated region
    $region61: #{encoder_forward.1} parent=5 // pred_check
      %p402 = pneg %p401
    $region62: #{encoder_forward.1} parent=5 // pred_check_branch
      %404 = sbr.rel (%p402) target = $region64
    $region63: #{encoder_forward.1} parent=5 // pred_region
      // Predicated region
      $region65: #{encoder_forward.1} parent=63 // pred_check
        %p405 = pneg %p40
      $region66: #{encoder_forward.1} parent=63 // pred_check_branch
        %407 = sbr.rel (%p405) target = $region68
      $region67: #{encoder_forward.1} parent=63 // pred_region
        %p408 = scmp.lt.s32.totalorder %s20, 1
        %s409 = scalar_select %p408, %s20, 1
        %s410 = smul.addr %s409, 32
        %s411 = smul.addr %s410, 8
        %s412 = scalar_lea.vmem %s0, %s411
      $region68: #{encoder_forward.1} parent=63 // pred_fallthru
        _
      // Predicated region
      $region69: #{encoder_forward.1} parent=63 // pred_check
        %p413 = pneg %p66
      $region70: #{encoder_forward.1} parent=63 // pred_check_branch
        %415 = sbr.rel (%p413) target = $region72
      $region71: #{encoder_forward.1} parent=63 // pred_region
        %p416 = scmp.lt.s32.totalorder %s20, 1
        %s417 = scalar_select %p416, %s20, 1
        %s418 = scalar_lea.vmem %s1, %s417
      $region72: #{encoder_forward.1} parent=63 // pred_fallthru
        _
    $region64: #{encoder_forward.1} parent=5 // pred_fallthru
      _
    %p419 = scmp.le.s32.totalorder 1, %s20
    %p420 = scmp.lt.s32.totalorder %s20, 3
    %p421 = pnand %p419, %p420
    %p422 = pneg %p421
    // Predicated region
    $region73: #{encoder_forward.1} parent=5 // pred_check
      _
    $region74: #{encoder_forward.1} parent=5 // pred_check_branch
      %424 = sbr.rel (%p421) target = $region76
    $region75: #{encoder_forward.1} parent=5 // pred_region
      %s425 = ssub.s32 %s20, 1
      %p426 = scmp.lt.s32.totalorder %s25, 1
      %s427 = scalar_select %p426, %s25, 1
      %s428 = smul.addr %s427, 32
      %s429 = smul.addr %s428, 8
      %s430 = scalar_lea.vmem %s0, %s429
      %p431 = pneg %p46
      %p432 = pneg %p43
      %p433 = scmp.lt.s32.totalorder %s25, 1
      %s434 = scalar_select %p433, %s25, 1
      %s435 = scalar_lea.vmem %s1, %s434
      %p436 = pneg %p72
      %p437 = pneg %p69
      %p438 = pneg %p93
      %p439 = pneg %p90
      %p440 = pneg %p114
      %p441 = pneg %p111
      %p442 = pneg %p135
      %p443 = pneg %p132
      %p444 = pneg %p156
      %p445 = pneg %p153
      %p446 = pneg %p177
      %p447 = pneg %p174
      %p448 = pneg %p198
      %p449 = pneg %p195
      %p450 = pneg %p219
      %p451 = pneg %p216
      %p452 = pneg %p240
      %p453 = pneg %p237
      %p454 = pneg %p261
      %p455 = pneg %p258
      %p456 = pneg %p282
      %p457 = pneg %p279
      %p458 = pneg %p303
      %p459 = pneg %p300
      %p460 = pneg %p324
      %p461 = pneg %p321
      %p462 = pneg %p350
      %p463 = pneg %p347
      %p464 = scmp.lt.s32.totalorder %s25, 1
      %s465 = scalar_select %p464, %s25, 1
      %s466 = smul.addr %s465, 2
      %s467 = smul.addr %s466, 4
      %s468 = scalar_lea.vmem %s14, %s467
      %p469 = scmp.lt.s32.totalorder %s25, 1
      %s470 = scalar_select %p469, %s25, 1
      %s471 = smul.addr %s470, 32
      %s472 = smul.addr %s471, 8
      %s473 = scalar_lea.vmem %s0, %s472
      %p474 = scmp.lt.s32.totalorder %s25, 1
      %s475 = scalar_select %p474, %s25, 1
      %s476 = scalar_lea.vmem %s1, %s475
      %p477 = scmp.lt.s32.totalorder %s25, 1
      %s478 = scalar_select %p477, %s25, 1
      %s479 = smul.addr %s478, 2
      %s480 = smul.addr %s479, 4
      %s481 = scalar_lea.vmem %s14, %s480
      %vm483 = vcmask 23552
      %484 = vst.msk [vmem:[#allocation2] sm:$0xff] %vm483, 0.0
      %485 = vst.msk [vmem:[#allocation2 + $0x8] sm:$0xff] %vm483, 0.0
      %vm486 = vcmask 17408
      %487 = vst.msk [vmem:[#allocation2 + $0x10] sm:$0x3] %vm486, 0.0
      %488 = vst.msk [vmem:[#allocation2 + $0x18] sm:$0xff] %vm483, 0.0
      %489 = vst.msk [vmem:[#allocation2 + $0x20] sm:$0xff] %vm483, 0.0
      %490 = vst.msk [vmem:[#allocation2 + $0x28] sm:$0x3] %vm486, 0.0
      %491 = vst.msk [vmem:[#allocation2 + $0x30] sm:$0xff] %vm483, 0.0
      %492 = vst.msk [vmem:[#allocation2 + $0x38] sm:$0xff] %vm483, 0.0
      %493 = vst.msk [vmem:[#allocation2 + $0x40] sm:$0x3] %vm486, 0.0
      %494 = vst.msk [vmem:[#allocation2 + $0x48] sm:$0xff] %vm483, 0.0
      %495 = vst.msk [vmem:[#allocation2 + $0x50] sm:$0xff] %vm483, 0.0
      %496 = vst.msk [vmem:[#allocation2 + $0x58] sm:$0x3] %vm486, 0.0
      %497 = vst.msk [vmem:[#allocation2 + $0x60] sm:$0xff] %vm483, 0.0
      %498 = vst.msk [vmem:[#allocation2 + $0x68] sm:$0xff] %vm483, 0.0
      %499 = vst.msk [vmem:[#allocation2 + $0x70] sm:$0x3] %vm486, 0.0
      %500 = vst.msk [vmem:[#allocation2 + $0x78] sm:$0xff] %vm483, 0.0
      %501 = vst.msk [vmem:[#allocation2 + $0x80] sm:$0xff] %vm483, 0.0
      %502 = vst.msk [vmem:[#allocation2 + $0x88] sm:$0x3] %vm486, 0.0
      %503 = vst.msk [vmem:[#allocation2 + $0x90] sm:$0xff] %vm483, 0.0
      %504 = vst.msk [vmem:[#allocation2 + $0x98] sm:$0xff] %vm483, 0.0
      %505 = vst.msk [vmem:[#allocation2 + $0xa0] sm:$0x3] %vm486, 0.0
      %506 = vst.msk [vmem:[#allocation2 + $0xa8] sm:$0xff] %vm483, 0.0
      %507 = vst.msk [vmem:[#allocation2 + $0xb0] sm:$0xff] %vm483, 0.0
      %508 = vst.msk [vmem:[#allocation2 + $0xb8] sm:$0x3] %vm486, 0.0
      %509 = vst.msk [vmem:[#allocation2 + $0xc0] sm:$0xff] %vm483, 0.0
      %510 = vst.msk [vmem:[#allocation2 + $0xc8] sm:$0xff] %vm483, 0.0
      %511 = vst.msk [vmem:[#allocation2 + $0xd0] sm:$0x3] %vm486, 0.0
      %512 = vst.msk [vmem:[#allocation2 + $0xd8] sm:$0xff] %vm483, 0.0
      %513 = vst.msk [vmem:[#allocation2 + $0xe0] sm:$0xff] %vm483, 0.0
      %514 = vst.msk [vmem:[#allocation2 + $0xe8] sm:$0x3] %vm486, 0.0
      %515 = vst.msk [vmem:[#allocation2 + $0xf0] sm:$0xff] %vm483, 0.0
      %516 = vst.msk [vmem:[#allocation2 + $0xf8] sm:$0xff] %vm483, 0.0
      %517 = vst.msk [vmem:[#allocation2 + $0x100] sm:$0x3] %vm486, 0.0
      %518 = vst.msk [vmem:[#allocation2 + $0x108] sm:$0xff] %vm483, 0.0
      %519 = vst.msk [vmem:[#allocation2 + $0x110] sm:$0xff] %vm483, 0.0
      %520 = vst.msk [vmem:[#allocation2 + $0x118] sm:$0x3] %vm486, 0.0
      %521 = vst.msk [vmem:[#allocation2 + $0x120] sm:$0xff] %vm483, 0.0
      %522 = vst.msk [vmem:[#allocation2 + $0x128] sm:$0xff] %vm483, 0.0
      %523 = vst.msk [vmem:[#allocation2 + $0x130] sm:$0x3] %vm486, 0.0
      %524 = vst.msk [vmem:[#allocation2 + $0x138] sm:$0xff] %vm483, 0.0
      %525 = vst.msk [vmem:[#allocation2 + $0x140] sm:$0xff] %vm483, 0.0
      %526 = vst.msk [vmem:[#allocation2 + $0x148] sm:$0x3] %vm486, 0.0
      %527 = vst.msk [vmem:[#allocation2 + $0x150] sm:$0xff] %vm483, 0.0
      %528 = vst.msk [vmem:[#allocation2 + $0x158] sm:$0xff] %vm483, 0.0
      %529 = vst.msk [vmem:[#allocation2 + $0x160] sm:$0x3] %vm486, 0.0
      %530 = vst.msk [vmem:[#allocation2 + $0x168] sm:$0xff] %vm483, 0.0
      %531 = vst.msk [vmem:[#allocation2 + $0x170] sm:$0xff] %vm483, 0.0
      %532 = vst.msk [vmem:[#allocation2 + $0x178] sm:$0x3] %vm486, 0.0
      %533 = vst.msk [vmem:[#allocation2 + $0x180] sm:$0xff] %vm483, 0.0
      %534 = vst.msk [vmem:[#allocation2 + $0x188] sm:$0xff] %vm483, 0.0
      %535 = vst.msk [vmem:[#allocation2 + $0x190] sm:$0x3] %vm486, 0.0
      %536 = vst.msk [vmem:[#allocation2 + $0x198] sm:$0xff] %vm483, 0.0
      %537 = vst.msk [vmem:[#allocation2 + $0x1a0] sm:$0xff] %vm483, 0.0
      %538 = vst.msk [vmem:[#allocation2 + $0x1a8] sm:$0x3] %vm486, 0.0
      %vm539 = vcmask 261120
      %540 = vst.msk [vmem:[#allocation3] sm:$0xff] %vm539, 0.0
      %541 = vst.msk [vmem:[#allocation3 + $0x8] sm:$0xff] %vm539, 0.0
      %vm542 = vcmask 254976
      %543 = vst.msk [vmem:[#allocation3 + $0x10] sm:$0x3] %vm542, 0.0
      %544 = vst.msk [vmem:[#allocation3 + $0x18] sm:$0xff] %vm539, 0.0
      %545 = vst.msk [vmem:[#allocation3 + $0x20] sm:$0xff] %vm539, 0.0
      %546 = vst.msk [vmem:[#allocation3 + $0x28] sm:$0x3] %vm542, 0.0
      %547 = vst.msk [vmem:[#allocation3 + $0x30] sm:$0xff] %vm539, 0.0
      %548 = vst.msk [vmem:[#allocation3 + $0x38] sm:$0xff] %vm539, 0.0
      %549 = vst.msk [vmem:[#allocation3 + $0x40] sm:$0x3] %vm542, 0.0
      %550 = vst.msk [vmem:[#allocation3 + $0x48] sm:$0xff] %vm539, 0.0
      %551 = vst.msk [vmem:[#allocation3 + $0x50] sm:$0xff] %vm539, 0.0
      %552 = vst.msk [vmem:[#allocation3 + $0x58] sm:$0x3] %vm542, 0.0
      %553 = vst.msk [vmem:[#allocation3 + $0x60] sm:$0xff] %vm539, 0.0
      %554 = vst.msk [vmem:[#allocation3 + $0x68] sm:$0xff] %vm539, 0.0
      %555 = vst.msk [vmem:[#allocation3 + $0x70] sm:$0x3] %vm542, 0.0
      %556 = vst.msk [vmem:[#allocation3 + $0x78] sm:$0xff] %vm539, 0.0
      %557 = vst.msk [vmem:[#allocation3 + $0x80] sm:$0xff] %vm539, 0.0
      %558 = vst.msk [vmem:[#allocation3 + $0x88] sm:$0x3] %vm542, 0.0
      %559 = vst.msk [vmem:[#allocation3 + $0x90] sm:$0xff] %vm539, 0.0
      %560 = vst.msk [vmem:[#allocation3 + $0x98] sm:$0xff] %vm539, 0.0
      %561 = vst.msk [vmem:[#allocation3 + $0xa0] sm:$0x3] %vm542, 0.0
      %562 = vst.msk [vmem:[#allocation3 + $0xa8] sm:$0xff] %vm539, 0.0
      %563 = vst.msk [vmem:[#allocation3 + $0xb0] sm:$0xff] %vm539, 0.0
      %564 = vst.msk [vmem:[#allocation3 + $0xb8] sm:$0x3] %vm542, 0.0
      %565 = vst.msk [vmem:[#allocation3 + $0xc0] sm:$0xff] %vm539, 0.0
      %566 = vst.msk [vmem:[#allocation3 + $0xc8] sm:$0xff] %vm539, 0.0
      %567 = vst.msk [vmem:[#allocation3 + $0xd0] sm:$0x3] %vm542, 0.0
      %568 = vst.msk [vmem:[#allocation3 + $0xd8] sm:$0xff] %vm539, 0.0
      %569 = vst.msk [vmem:[#allocation3 + $0xe0] sm:$0xff] %vm539, 0.0
      %570 = vst.msk [vmem:[#allocation3 + $0xe8] sm:$0x3] %vm542, 0.0
      %571 = vst.msk [vmem:[#allocation3 + $0xf0] sm:$0xff] %vm539, 0.0
      %572 = vst.msk [vmem:[#allocation3 + $0xf8] sm:$0xff] %vm539, 0.0
      %573 = vst.msk [vmem:[#allocation3 + $0x100] sm:$0x3] %vm542, 0.0
      %574 = vst.msk [vmem:[#allocation3 + $0x108] sm:$0xff] %vm539, 0.0
      %575 = vst.msk [vmem:[#allocation3 + $0x110] sm:$0xff] %vm539, 0.0
      %576 = vst.msk [vmem:[#allocation3 + $0x118] sm:$0x3] %vm542, 0.0
      %577 = vst.msk [vmem:[#allocation3 + $0x120] sm:$0xff] %vm539, 0.0
      %578 = vst.msk [vmem:[#allocation3 + $0x128] sm:$0xff] %vm539, 0.0
      %579 = vst.msk [vmem:[#allocation3 + $0x130] sm:$0x3] %vm542, 0.0
      %580 = vst.msk [vmem:[#allocation3 + $0x138] sm:$0xff] %vm539, 0.0
      %581 = vst.msk [vmem:[#allocation3 + $0x140] sm:$0xff] %vm539, 0.0
      %582 = vst.msk [vmem:[#allocation3 + $0x148] sm:$0x3] %vm542, 0.0
      %583 = vst.msk [vmem:[#allocation3 + $0x150] sm:$0xff] %vm539, 0.0
      %584 = vst.msk [vmem:[#allocation3 + $0x158] sm:$0xff] %vm539, 0.0
      %585 = vst.msk [vmem:[#allocation3 + $0x160] sm:$0x3] %vm542, 0.0
      %586 = vst.msk [vmem:[#allocation3 + $0x168] sm:$0xff] %vm539, 0.0
      %587 = vst.msk [vmem:[#allocation3 + $0x170] sm:$0xff] %vm539, 0.0
      %588 = vst.msk [vmem:[#allocation3 + $0x178] sm:$0x3] %vm542, 0.0
      %589 = vst.msk [vmem:[#allocation3 + $0x180] sm:$0xff] %vm539, 0.0
      %590 = vst.msk [vmem:[#allocation3 + $0x188] sm:$0xff] %vm539, 0.0
      %591 = vst.msk [vmem:[#allocation3 + $0x190] sm:$0x3] %vm542, 0.0
      %592 = vst.msk [vmem:[#allocation3 + $0x198] sm:$0xff] %vm539, 0.0
      %593 = vst.msk [vmem:[#allocation3 + $0x1a0] sm:$0xff] %vm539, 0.0
      %594 = vst.msk [vmem:[#allocation3 + $0x1a8] sm:$0x3] %vm542, 0.0
      %vm595 = vcmask 64512
      %596 = vst.msk [vmem:[#allocation4] sm:$0xff] %vm595, 0.0
      %597 = vst.msk [vmem:[#allocation4 + $0x8] sm:$0xff] %vm595, 0.0
      %vm598 = vcmask 58368
      %599 = vst.msk [vmem:[#allocation4 + $0x10] sm:$0x3] %vm598, 0.0
      %600 = vst.msk [vmem:[#allocation4 + $0x18] sm:$0xff] %vm595, 0.0
      %601 = vst.msk [vmem:[#allocation4 + $0x20] sm:$0xff] %vm595, 0.0
      %602 = vst.msk [vmem:[#allocation4 + $0x28] sm:$0x3] %vm598, 0.0
      %603 = vst.msk [vmem:[#allocation4 + $0x30] sm:$0xff] %vm595, 0.0
      %604 = vst.msk [vmem:[#allocation4 + $0x38] sm:$0xff] %vm595, 0.0
      %605 = vst.msk [vmem:[#allocation4 + $0x40] sm:$0x3] %vm598, 0.0
      %606 = vst.msk [vmem:[#allocation4 + $0x48] sm:$0xff] %vm595, 0.0
      %607 = vst.msk [vmem:[#allocation4 + $0x50] sm:$0xff] %vm595, 0.0
      %608 = vst.msk [vmem:[#allocation4 + $0x58] sm:$0x3] %vm598, 0.0
      %609 = vst.msk [vmem:[#allocation4 + $0x60] sm:$0xff] %vm595, 0.0
      %610 = vst.msk [vmem:[#allocation4 + $0x68] sm:$0xff] %vm595, 0.0
      %611 = vst.msk [vmem:[#allocation4 + $0x70] sm:$0x3] %vm598, 0.0
      %612 = vst.msk [vmem:[#allocation4 + $0x78] sm:$0xff] %vm595, 0.0
      %613 = vst.msk [vmem:[#allocation4 + $0x80] sm:$0xff] %vm595, 0.0
      %614 = vst.msk [vmem:[#allocation4 + $0x88] sm:$0x3] %vm598, 0.0
      %615 = vst.msk [vmem:[#allocation4 + $0x90] sm:$0xff] %vm595, 0.0
      %616 = vst.msk [vmem:[#allocation4 + $0x98] sm:$0xff] %vm595, 0.0
      %617 = vst.msk [vmem:[#allocation4 + $0xa0] sm:$0x3] %vm598, 0.0
      %618 = vst.msk [vmem:[#allocation4 + $0xa8] sm:$0xff] %vm595, 0.0
      %619 = vst.msk [vmem:[#allocation4 + $0xb0] sm:$0xff] %vm595, 0.0
      %620 = vst.msk [vmem:[#allocation4 + $0xb8] sm:$0x3] %vm598, 0.0
      %621 = vst.msk [vmem:[#allocation4 + $0xc0] sm:$0xff] %vm595, 0.0
      %622 = vst.msk [vmem:[#allocation4 + $0xc8] sm:$0xff] %vm595, 0.0
      %623 = vst.msk [vmem:[#allocation4 + $0xd0] sm:$0x3] %vm598, 0.0
      %624 = vst.msk [vmem:[#allocation4 + $0xd8] sm:$0xff] %vm595, 0.0
      %625 = vst.msk [vmem:[#allocation4 + $0xe0] sm:$0xff] %vm595, 0.0
      %626 = vst.msk [vmem:[#allocation4 + $0xe8] sm:$0x3] %vm598, 0.0
      %627 = vst.msk [vmem:[#allocation4 + $0xf0] sm:$0xff] %vm595, 0.0
      %628 = vst.msk [vmem:[#allocation4 + $0xf8] sm:$0xff] %vm595, 0.0
      %629 = vst.msk [vmem:[#allocation4 + $0x100] sm:$0x3] %vm598, 0.0
      %630 = vst.msk [vmem:[#allocation4 + $0x108] sm:$0xff] %vm595, 0.0
      %631 = vst.msk [vmem:[#allocation4 + $0x110] sm:$0xff] %vm595, 0.0
      %632 = vst.msk [vmem:[#allocation4 + $0x118] sm:$0x3] %vm598, 0.0
      %633 = vst.msk [vmem:[#allocation4 + $0x120] sm:$0xff] %vm595, 0.0
      %634 = vst.msk [vmem:[#allocation4 + $0x128] sm:$0xff] %vm595, 0.0
      %635 = vst.msk [vmem:[#allocation4 + $0x130] sm:$0x3] %vm598, 0.0
      %636 = vst.msk [vmem:[#allocation4 + $0x138] sm:$0xff] %vm595, 0.0
      %637 = vst.msk [vmem:[#allocation4 + $0x140] sm:$0xff] %vm595, 0.0
      %638 = vst.msk [vmem:[#allocation4 + $0x148] sm:$0x3] %vm598, 0.0
      %639 = vst.msk [vmem:[#allocation4 + $0x150] sm:$0xff] %vm595, 0.0
      %640 = vst.msk [vmem:[#allocation4 + $0x158] sm:$0xff] %vm595, 0.0
      %641 = vst.msk [vmem:[#allocation4 + $0x160] sm:$0x3] %vm598, 0.0
      %642 = vst.msk [vmem:[#allocation4 + $0x168] sm:$0xff] %vm595, 0.0
      %643 = vst.msk [vmem:[#allocation4 + $0x170] sm:$0xff] %vm595, 0.0
      %644 = vst.msk [vmem:[#allocation4 + $0x178] sm:$0x3] %vm598, 0.0
      %645 = vst.msk [vmem:[#allocation4 + $0x180] sm:$0xff] %vm595, 0.0
      %646 = vst.msk [vmem:[#allocation4 + $0x188] sm:$0xff] %vm595, 0.0
      %647 = vst.msk [vmem:[#allocation4 + $0x190] sm:$0x3] %vm598, 0.0
      %648 = vst.msk [vmem:[#allocation4 + $0x198] sm:$0xff] %vm595, 0.0
      %649 = vst.msk [vmem:[#allocation4 + $0x1a0] sm:$0xff] %vm595, 0.0
      %650 = vst.msk [vmem:[#allocation4 + $0x1a8] sm:$0x3] %vm598, 0.0
      %v651 = vld [vmem:[%s473] sm:$0xff]
      %v652 = vld [vmem:[%s473 + $0x8] sm:$0xff]
      %v653 = vld [vmem:[%s473 + $0x10] sm:$0xff]
      %v654 = vld [vmem:[%s473 + $0x18] sm:$0xff]
      %v655 = vld [vmem:[%s473 + $0x20] sm:$0xff]
      %v656 = vld [vmem:[%s473 + $0x28] sm:$0xff]
      %v657 = vld [vmem:[%s473 + $0x30] sm:$0xff]
      %v658 = vld [vmem:[%s473 + $0x38] sm:$0xff]
      %v659 = vld [vmem:[%s473 + $0x40] sm:$0xff]
      %v660 = vld [vmem:[%s473 + $0x48] sm:$0xff]
      %v661 = vld [vmem:[%s473 + $0x50] sm:$0xff]
      %v662 = vld [vmem:[%s473 + $0x58] sm:$0xff]
      %v663 = vld [vmem:[%s473 + $0x60] sm:$0xff]
      %v664 = vld [vmem:[%s473 + $0x68] sm:$0xff]
      %v665 = vld [vmem:[%s473 + $0x70] sm:$0xff]
      %v666 = vld [vmem:[%s473 + $0x78] sm:$0xff]
      %v667 = vld [vmem:[%s473 + $0x80] sm:$0xff]
      %v668 = vld [vmem:[%s473 + $0x88] sm:$0xff]
      %v669 = vld [vmem:[%s473 + $0x90] sm:$0xff]
      %v670 = vld [vmem:[%s473 + $0x98] sm:$0xff]
      %v671 = vld [vmem:[%s473 + $0xa0] sm:$0xff]
      %v672 = vld [vmem:[%s473 + $0xa8] sm:$0xff]
      %v673 = vld [vmem:[%s473 + $0xb0] sm:$0xff]
      %v674 = vld [vmem:[%s473 + $0xb8] sm:$0xff]
      %v675 = vld [vmem:[%s473 + $0xc0] sm:$0xff]
      %v676 = vld [vmem:[%s473 + $0xc8] sm:$0xff]
      %v677 = vld [vmem:[%s473 + $0xd0] sm:$0xff]
      %v678 = vld [vmem:[%s473 + $0xd8] sm:$0xff]
      %v679 = vld [vmem:[%s473 + $0xe0] sm:$0xff]
      %v680 = vld [vmem:[%s473 + $0xe8] sm:$0xff]
      %v681 = vld [vmem:[%s473 + $0xf0] sm:$0xff]
      %v682 = vld [vmem:[%s473 + $0xf8] sm:$0xff]
      %s683 = scalar_lea.vmem [#allocation2], 24
      %684 = vst.msk [vmem:[%s683 + $0x1] sm:$0xff] %vm483, %v651
      %685 = vst.msk [vmem:[%s683 + $0x9] sm:$0xff] %vm483, %v652
      %686 = vst.msk [vmem:[%s683 + $0x19] sm:$0xff] %vm483, %v653
      %687 = vst.msk [vmem:[%s683 + $0x21] sm:$0xff] %vm483, %v654
      %688 = vst.msk [vmem:[%s683 + $0x31] sm:$0xff] %vm483, %v655
      %689 = vst.msk [vmem:[%s683 + $0x39] sm:$0xff] %vm483, %v656
      %690 = vst.msk [vmem:[%s683 + $0x49] sm:$0xff] %vm483, %v657
      %691 = vst.msk [vmem:[%s683 + $0x51] sm:$0xff] %vm483, %v658
      %692 = vst.msk [vmem:[%s683 + $0x61] sm:$0xff] %vm483, %v659
      %693 = vst.msk [vmem:[%s683 + $0x69] sm:$0xff] %vm483, %v660
      %694 = vst.msk [vmem:[%s683 + $0x79] sm:$0xff] %vm483, %v661
      %695 = vst.msk [vmem:[%s683 + $0x81] sm:$0xff] %vm483, %v662
      %696 = vst.msk [vmem:[%s683 + $0x91] sm:$0xff] %vm483, %v663
      %697 = vst.msk [vmem:[%s683 + $0x99] sm:$0xff] %vm483, %v664
      %698 = vst.msk [vmem:[%s683 + $0xa9] sm:$0xff] %vm483, %v665
      %699 = vst.msk [vmem:[%s683 + $0xb1] sm:$0xff] %vm483, %v666
      %700 = vst.msk [vmem:[%s683 + $0xc1] sm:$0xff] %vm483, %v667
      %701 = vst.msk [vmem:[%s683 + $0xc9] sm:$0xff] %vm483, %v668
      %702 = vst.msk [vmem:[%s683 + $0xd9] sm:$0xff] %vm483, %v669
      %703 = vst.msk [vmem:[%s683 + $0xe1] sm:$0xff] %vm483, %v670
      %704 = vst.msk [vmem:[%s683 + $0xf1] sm:$0xff] %vm483, %v671
      %705 = vst.msk [vmem:[%s683 + $0xf9] sm:$0xff] %vm483, %v672
      %706 = vst.msk [vmem:[%s683 + $0x109] sm:$0xff] %vm483, %v673
      %707 = vst.msk [vmem:[%s683 + $0x111] sm:$0xff] %vm483, %v674
      %708 = vst.msk [vmem:[%s683 + $0x121] sm:$0xff] %vm483, %v675
      %709 = vst.msk [vmem:[%s683 + $0x129] sm:$0xff] %vm483, %v676
      %710 = vst.msk [vmem:[%s683 + $0x139] sm:$0xff] %vm483, %v677
      %711 = vst.msk [vmem:[%s683 + $0x141] sm:$0xff] %vm483, %v678
      %712 = vst.msk [vmem:[%s683 + $0x151] sm:$0xff] %vm483, %v679
      %713 = vst.msk [vmem:[%s683 + $0x159] sm:$0xff] %vm483, %v680
      %714 = vst.msk [vmem:[%s683 + $0x169] sm:$0xff] %vm483, %v681
      %715 = vst.msk [vmem:[%s683 + $0x171] sm:$0xff] %vm483, %v682
      %v716 = vld [vmem:[#allocation2] sm:$0xff]
      %v717 = vld [vmem:[#allocation2 + $0x8] sm:$0xff]
      %v718 = vld [vmem:[#allocation2 + $0x18] sm:$0xff]
      %v719 = vld [vmem:[#allocation2 + $0x20] sm:$0xff]
      %v720 = vld [vmem:[#allocation2 + $0x30] sm:$0xff]
      %v721 = vld [vmem:[#allocation2 + $0x38] sm:$0xff]
      %v722 = vld [vmem:[#allocation2 + $0x48] sm:$0xff]
      %v723 = vld [vmem:[#allocation2 + $0x50] sm:$0xff]
      %v724 = vld [vmem:[#allocation2 + $0x60] sm:$0xff]
      %v725 = vld [vmem:[#allocation2 + $0x68] sm:$0xff]
      %v726 = vld [vmem:[#allocation2 + $0x78] sm:$0xff]
      %v727 = vld [vmem:[#allocation2 + $0x80] sm:$0xff]
      %v728 = vld [vmem:[#allocation2 + $0x90] sm:$0xff]
      %v729 = vld [vmem:[#allocation2 + $0x98] sm:$0xff]
      %v730 = vld [vmem:[#allocation2 + $0xa8] sm:$0xff]
      %v731 = vld [vmem:[#allocation2 + $0xb0] sm:$0xff]
      %v732 = vld [vmem:[#allocation2 + $0xc0] sm:$0xff]
      %v733 = vld [vmem:[#allocation2 + $0xc8] sm:$0xff]
      %v734 = vld [vmem:[#allocation2 + $0xd8] sm:$0xff]
      %v735 = vld [vmem:[#allocation2 + $0xe0] sm:$0xff]
      %v736 = vld [vmem:[#allocation2 + $0xf0] sm:$0xff]
      %v737 = vld [vmem:[#allocation2 + $0xf8] sm:$0xff]
      %v738 = vld [vmem:[#allocation2 + $0x108] sm:$0xff]
      %v739 = vld [vmem:[#allocation2 + $0x110] sm:$0xff]
      %v740 = vld [vmem:[#allocation2 + $0x120] sm:$0xff]
      %v741 = vld [vmem:[#allocation2 + $0x128] sm:$0xff]
      %v742 = vld [vmem:[#allocation2 + $0x138] sm:$0xff]
      %v743 = vld [vmem:[#allocation2 + $0x140] sm:$0xff]
      %v744 = vld [vmem:[#allocation2 + $0x150] sm:$0xff]
      %v745 = vld [vmem:[#allocation2 + $0x158] sm:$0xff]
      %v746 = vld [vmem:[#allocation2 + $0x168] sm:$0xff]
      %v747 = vld [vmem:[#allocation2 + $0x170] sm:$0xff]
      %v748 = vld [vmem:[%s683] sm:$0xff]
      %v749 = vld [vmem:[%s683 + $0x8] sm:$0xff]
      %v750 = vld [vmem:[%s683 + $0x18] sm:$0xff]
      %v751 = vld [vmem:[%s683 + $0x20] sm:$0xff]
      %v752 = vld [vmem:[%s683 + $0x30] sm:$0xff]
      %v753 = vld [vmem:[%s683 + $0x38] sm:$0xff]
      %v754 = vld [vmem:[%s683 + $0x48] sm:$0xff]
      %v755 = vld [vmem:[%s683 + $0x50] sm:$0xff]
      %v756 = vld [vmem:[%s683 + $0x60] sm:$0xff]
      %v757 = vld [vmem:[%s683 + $0x68] sm:$0xff]
      %v758 = vld [vmem:[%s683 + $0x78] sm:$0xff]
      %v759 = vld [vmem:[%s683 + $0x80] sm:$0xff]
      %v760 = vld [vmem:[%s683 + $0x90] sm:$0xff]
      %v761 = vld [vmem:[%s683 + $0x98] sm:$0xff]
      %v762 = vld [vmem:[%s683 + $0xa8] sm:$0xff]
      %v763 = vld [vmem:[%s683 + $0xb0] sm:$0xff]
      %v764 = vld [vmem:[%s683 + $0xc0] sm:$0xff]
      %v765 = vld [vmem:[%s683 + $0xc8] sm:$0xff]
      %v766 = vld [vmem:[%s683 + $0xd8] sm:$0xff]
      %v767 = vld [vmem:[%s683 + $0xe0] sm:$0xff]
      %v768 = vld [vmem:[%s683 + $0xf0] sm:$0xff]
      %v769 = vld [vmem:[%s683 + $0xf8] sm:$0xff]
      %v770 = vld [vmem:[%s683 + $0x108] sm:$0xff]
      %v771 = vld [vmem:[%s683 + $0x110] sm:$0xff]
      %v772 = vld [vmem:[%s683 + $0x120] sm:$0xff]
      %v773 = vld [vmem:[%s683 + $0x128] sm:$0xff]
      %v774 = vld [vmem:[%s683 + $0x138] sm:$0xff]
      %v775 = vld [vmem:[%s683 + $0x140] sm:$0xff]
      %v776 = vld [vmem:[%s683 + $0x150] sm:$0xff]
      %v777 = vld [vmem:[%s683 + $0x158] sm:$0xff]
      %v778 = vld [vmem:[%s683 + $0x168] sm:$0xff]
      %v779 = vld [vmem:[%s683 + $0x170] sm:$0xff]
      %s780 = scalar_lea.vmem [#allocation2], 48
      %v781 = vld [vmem:[%s780] sm:$0xff]
      %v782 = vld [vmem:[%s780 + $0x8] sm:$0xff]
      %v783 = vld [vmem:[%s780 + $0x18] sm:$0xff]
      %v784 = vld [vmem:[%s780 + $0x20] sm:$0xff]
      %v785 = vld [vmem:[%s780 + $0x30] sm:$0xff]
      %v786 = vld [vmem:[%s780 + $0x38] sm:$0xff]
      %v787 = vld [vmem:[%s780 + $0x48] sm:$0xff]
      %v788 = vld [vmem:[%s780 + $0x50] sm:$0xff]
      %v789 = vld [vmem:[%s780 + $0x60] sm:$0xff]
      %v790 = vld [vmem:[%s780 + $0x68] sm:$0xff]
      %v791 = vld [vmem:[%s780 + $0x78] sm:$0xff]
      %v792 = vld [vmem:[%s780 + $0x80] sm:$0xff]
      %v793 = vld [vmem:[%s780 + $0x90] sm:$0xff]
      %v794 = vld [vmem:[%s780 + $0x98] sm:$0xff]
      %v795 = vld [vmem:[%s780 + $0xa8] sm:$0xff]
      %v796 = vld [vmem:[%s780 + $0xb0] sm:$0xff]
      %v797 = vld [vmem:[%s780 + $0xc0] sm:$0xff]
      %v798 = vld [vmem:[%s780 + $0xc8] sm:$0xff]
      %v799 = vld [vmem:[%s780 + $0xd8] sm:$0xff]
      %v800 = vld [vmem:[%s780 + $0xe0] sm:$0xff]
      %v801 = vld [vmem:[%s780 + $0xf0] sm:$0xff]
      %v802 = vld [vmem:[%s780 + $0xf8] sm:$0xff]
      %v803 = vld [vmem:[%s780 + $0x108] sm:$0xff]
      %v804 = vld [vmem:[%s780 + $0x110] sm:$0xff]
      %v805 = vld [vmem:[%s780 + $0x120] sm:$0xff]
      %v806 = vld [vmem:[%s780 + $0x128] sm:$0xff]
      %v807 = vld [vmem:[%s780 + $0x138] sm:$0xff]
      %v808 = vld [vmem:[%s780 + $0x140] sm:$0xff]
      %v809 = vld [vmem:[%s780 + $0x150] sm:$0xff]
      %v810 = vld [vmem:[%s780 + $0x158] sm:$0xff]
      %v811 = vld [vmem:[%s780 + $0x168] sm:$0xff]
      %v812 = vld [vmem:[%s780 + $0x170] sm:$0xff]
      %v813 = vld [vmem:[#allocation2 + $0x1] sm:$0xff]
      %v814 = vld [vmem:[#allocation2 + $0x9] sm:$0xff]
      %v815 = vld [vmem:[#allocation2 + $0x19] sm:$0xff]
      %v816 = vld [vmem:[#allocation2 + $0x21] sm:$0xff]
      %v817 = vld [vmem:[#allocation2 + $0x31] sm:$0xff]
      %v818 = vld [vmem:[#allocation2 + $0x39] sm:$0xff]
      %v819 = vld [vmem:[#allocation2 + $0x49] sm:$0xff]
      %v820 = vld [vmem:[#allocation2 + $0x51] sm:$0xff]
      %v821 = vld [vmem:[#allocation2 + $0x61] sm:$0xff]
      %v822 = vld [vmem:[#allocation2 + $0x69] sm:$0xff]
      %v823 = vld [vmem:[#allocation2 + $0x79] sm:$0xff]
      %v824 = vld [vmem:[#allocation2 + $0x81] sm:$0xff]
      %v825 = vld [vmem:[#allocation2 + $0x91] sm:$0xff]
      %v826 = vld [vmem:[#allocation2 + $0x99] sm:$0xff]
      %v827 = vld [vmem:[#allocation2 + $0xa9] sm:$0xff]
      %v828 = vld [vmem:[#allocation2 + $0xb1] sm:$0xff]
      %v829 = vld [vmem:[#allocation2 + $0xc1] sm:$0xff]
      %v830 = vld [vmem:[#allocation2 + $0xc9] sm:$0xff]
      %v831 = vld [vmem:[#allocation2 + $0xd9] sm:$0xff]
      %v832 = vld [vmem:[#allocation2 + $0xe1] sm:$0xff]
      %v833 = vld [vmem:[#allocation2 + $0xf1] sm:$0xff]
      %v834 = vld [vmem:[#allocation2 + $0xf9] sm:$0xff]
      %v835 = vld [vmem:[#allocation2 + $0x109] sm:$0xff]
      %v836 = vld [vmem:[#allocation2 + $0x111] sm:$0xff]
      %v837 = vld [vmem:[#allocation2 + $0x121] sm:$0xff]
      %v838 = vld [vmem:[#allocation2 + $0x129] sm:$0xff]
      %v839 = vld [vmem:[#allocation2 + $0x139] sm:$0xff]
      %v840 = vld [vmem:[#allocation2 + $0x141] sm:$0xff]
      %v841 = vld [vmem:[#allocation2 + $0x151] sm:$0xff]
      %v842 = vld [vmem:[#allocation2 + $0x159] sm:$0xff]
      %v843 = vld [vmem:[#allocation2 + $0x169] sm:$0xff]
      %v844 = vld [vmem:[#allocation2 + $0x171] sm:$0xff]
      %v845 = vld [vmem:[%s683 + $0x1] sm:$0xff]
      %v846 = vld [vmem:[%s683 + $0x9] sm:$0xff]
      %v847 = vld [vmem:[%s683 + $0x19] sm:$0xff]
      %v848 = vld [vmem:[%s683 + $0x21] sm:$0xff]
      %v849 = vld [vmem:[%s683 + $0x31] sm:$0xff]
      %v850 = vld [vmem:[%s683 + $0x39] sm:$0xff]
      %v851 = vld [vmem:[%s683 + $0x49] sm:$0xff]
      %v852 = vld [vmem:[%s683 + $0x51] sm:$0xff]
      %v853 = vld [vmem:[%s683 + $0x61] sm:$0xff]
      %v854 = vld [vmem:[%s683 + $0x69] sm:$0xff]
      %v855 = vld [vmem:[%s683 + $0x79] sm:$0xff]
      %v856 = vld [vmem:[%s683 + $0x81] sm:$0xff]
      %v857 = vld [vmem:[%s683 + $0x91] sm:$0xff]
      %v858 = vld [vmem:[%s683 + $0x99] sm:$0xff]
      %v859 = vld [vmem:[%s683 + $0xa9] sm:$0xff]
      %v860 = vld [vmem:[%s683 + $0xb1] sm:$0xff]
      %v861 = vld [vmem:[%s683 + $0xc1] sm:$0xff]
      %v862 = vld [vmem:[%s683 + $0xc9] sm:$0xff]
      %v863 = vld [vmem:[%s683 + $0xd9] sm:$0xff]
      %v864 = vld [vmem:[%s683 + $0xe1] sm:$0xff]
      %v865 = vld [vmem:[%s683 + $0xf1] sm:$0xff]
      %v866 = vld [vmem:[%s683 + $0xf9] sm:$0xff]
      %v867 = vld [vmem:[%s683 + $0x109] sm:$0xff]
      %v868 = vld [vmem:[%s683 + $0x111] sm:$0xff]
      %v869 = vld [vmem:[%s683 + $0x121] sm:$0xff]
      %v870 = vld [vmem:[%s683 + $0x129] sm:$0xff]
      %v871 = vld [vmem:[%s683 + $0x139] sm:$0xff]
      %v872 = vld [vmem:[%s683 + $0x141] sm:$0xff]
      %v873 = vld [vmem:[%s683 + $0x151] sm:$0xff]
      %v874 = vld [vmem:[%s683 + $0x159] sm:$0xff]
      %v875 = vld [vmem:[%s683 + $0x169] sm:$0xff]
      %v876 = vld [vmem:[%s683 + $0x171] sm:$0xff]
      %v877 = vld [vmem:[%s780 + $0x1] sm:$0xff]
      %v878 = vld [vmem:[%s780 + $0x9] sm:$0xff]
      %v879 = vld [vmem:[%s780 + $0x19] sm:$0xff]
      %v880 = vld [vmem:[%s780 + $0x21] sm:$0xff]
      %v881 = vld [vmem:[%s780 + $0x31] sm:$0xff]
      %v882 = vld [vmem:[%s780 + $0x39] sm:$0xff]
      %v883 = vld [vmem:[%s780 + $0x49] sm:$0xff]
      %v884 = vld [vmem:[%s780 + $0x51] sm:$0xff]
      %v885 = vld [vmem:[%s780 + $0x61] sm:$0xff]
      %v886 = vld [vmem:[%s780 + $0x69] sm:$0xff]
      %v887 = vld [vmem:[%s780 + $0x79] sm:$0xff]
      %v888 = vld [vmem:[%s780 + $0x81] sm:$0xff]
      %v889 = vld [vmem:[%s780 + $0x91] sm:$0xff]
      %v890 = vld [vmem:[%s780 + $0x99] sm:$0xff]
      %v891 = vld [vmem:[%s780 + $0xa9] sm:$0xff]
      %v892 = vld [vmem:[%s780 + $0xb1] sm:$0xff]
      %v893 = vld [vmem:[%s780 + $0xc1] sm:$0xff]
      %v894 = vld [vmem:[%s780 + $0xc9] sm:$0xff]
      %v895 = vld [vmem:[%s780 + $0xd9] sm:$0xff]
      %v896 = vld [vmem:[%s780 + $0xe1] sm:$0xff]
      %v897 = vld [vmem:[%s780 + $0xf1] sm:$0xff]
      %v898 = vld [vmem:[%s780 + $0xf9] sm:$0xff]
      %v899 = vld [vmem:[%s780 + $0x109] sm:$0xff]
      %v900 = vld [vmem:[%s780 + $0x111] sm:$0xff]
      %v901 = vld [vmem:[%s780 + $0x121] sm:$0xff]
      %v902 = vld [vmem:[%s780 + $0x129] sm:$0xff]
      %v903 = vld [vmem:[%s780 + $0x139] sm:$0xff]
      %v904 = vld [vmem:[%s780 + $0x141] sm:$0xff]
      %v905 = vld [vmem:[%s780 + $0x151] sm:$0xff]
      %v906 = vld [vmem:[%s780 + $0x159] sm:$0xff]
      %v907 = vld [vmem:[%s780 + $0x169] sm:$0xff]
      %v908 = vld [vmem:[%s780 + $0x171] sm:$0xff]
      %v909 = vld [vmem:[#allocation2 + $0x2] sm:$0xff]
      %v910 = vld [vmem:[#allocation2 + $0xa] sm:$0xff]
      %v911 = vld [vmem:[#allocation2 + $0x1a] sm:$0xff]
      %v912 = vld [vmem:[#allocation2 + $0x22] sm:$0xff]
      %v913 = vld [vmem:[#allocation2 + $0x32] sm:$0xff]
      %v914 = vld [vmem:[#allocation2 + $0x3a] sm:$0xff]
      %v915 = vld [vmem:[#allocation2 + $0x4a] sm:$0xff]
      %v916 = vld [vmem:[#allocation2 + $0x52] sm:$0xff]
      %v917 = vld [vmem:[#allocation2 + $0x62] sm:$0xff]
      %v918 = vld [vmem:[#allocation2 + $0x6a] sm:$0xff]
      %v919 = vld [vmem:[#allocation2 + $0x7a] sm:$0xff]
      %v920 = vld [vmem:[#allocation2 + $0x82] sm:$0xff]
      %v921 = vld [vmem:[#allocation2 + $0x92] sm:$0xff]
      %v922 = vld [vmem:[#allocation2 + $0x9a] sm:$0xff]
      %v923 = vld [vmem:[#allocation2 + $0xaa] sm:$0xff]
      %v924 = vld [vmem:[#allocation2 + $0xb2] sm:$0xff]
      %v925 = vld [vmem:[#allocation2 + $0xc2] sm:$0xff]
      %v926 = vld [vmem:[#allocation2 + $0xca] sm:$0xff]
      %v927 = vld [vmem:[#allocation2 + $0xda] sm:$0xff]
      %v928 = vld [vmem:[#allocation2 + $0xe2] sm:$0xff]
      %v929 = vld [vmem:[#allocation2 + $0xf2] sm:$0xff]
      %v930 = vld [vmem:[#allocation2 + $0xfa] sm:$0xff]
      %v931 = vld [vmem:[#allocation2 + $0x10a] sm:$0xff]
      %v932 = vld [vmem:[#allocation2 + $0x112] sm:$0xff]
      %v933 = vld [vmem:[#allocation2 + $0x122] sm:$0xff]
      %v934 = vld [vmem:[#allocation2 + $0x12a] sm:$0xff]
      %v935 = vld [vmem:[#allocation2 + $0x13a] sm:$0xff]
      %v936 = vld [vmem:[#allocation2 + $0x142] sm:$0xff]
      %v937 = vld [vmem:[#allocation2 + $0x152] sm:$0xff]
      %v938 = vld [vmem:[#allocation2 + $0x15a] sm:$0xff]
      %v939 = vld [vmem:[#allocation2 + $0x16a] sm:$0xff]
      %v940 = vld [vmem:[#allocation2 + $0x172] sm:$0xff]
      %v941 = vld [vmem:[%s683 + $0x2] sm:$0xff]
      %v942 = vld [vmem:[%s683 + $0xa] sm:$0xff]
      %v943 = vld [vmem:[%s683 + $0x1a] sm:$0xff]
      %v944 = vld [vmem:[%s683 + $0x22] sm:$0xff]
      %v945 = vld [vmem:[%s683 + $0x32] sm:$0xff]
      %v946 = vld [vmem:[%s683 + $0x3a] sm:$0xff]
      %v947 = vld [vmem:[%s683 + $0x4a] sm:$0xff]
      %v948 = vld [vmem:[%s683 + $0x52] sm:$0xff]
      %v949 = vld [vmem:[%s683 + $0x62] sm:$0xff]
      %v950 = vld [vmem:[%s683 + $0x6a] sm:$0xff]
      %v951 = vld [vmem:[%s683 + $0x7a] sm:$0xff]
      %v952 = vld [vmem:[%s683 + $0x82] sm:$0xff]
      %v953 = vld [vmem:[%s683 + $0x92] sm:$0xff]
      %v954 = vld [vmem:[%s683 + $0x9a] sm:$0xff]
      %v955 = vld [vmem:[%s683 + $0xaa] sm:$0xff]
      %v956 = vld [vmem:[%s683 + $0xb2] sm:$0xff]
      %v957 = vld [vmem:[%s683 + $0xc2] sm:$0xff]
      %v958 = vld [vmem:[%s683 + $0xca] sm:$0xff]
      %v959 = vld [vmem:[%s683 + $0xda] sm:$0xff]
      %v960 = vld [vmem:[%s683 + $0xe2] sm:$0xff]
      %v961 = vld [vmem:[%s683 + $0xf2] sm:$0xff]
      %v962 = vld [vmem:[%s683 + $0xfa] sm:$0xff]
      %v963 = vld [vmem:[%s683 + $0x10a] sm:$0xff]
      %v964 = vld [vmem:[%s683 + $0x112] sm:$0xff]
      %v965 = vld [vmem:[%s683 + $0x122] sm:$0xff]
      %v966 = vld [vmem:[%s683 + $0x12a] sm:$0xff]
      %v967 = vld [vmem:[%s683 + $0x13a] sm:$0xff]
      %v968 = vld [vmem:[%s683 + $0x142] sm:$0xff]
      %v969 = vld [vmem:[%s683 + $0x152] sm:$0xff]
      %v970 = vld [vmem:[%s683 + $0x15a] sm:$0xff]
      %v971 = vld [vmem:[%s683 + $0x16a] sm:$0xff]
      %v972 = vld [vmem:[%s683 + $0x172] sm:$0xff]
      %v973 = vld [vmem:[%s780 + $0x2] sm:$0xff]
      %v974 = vld [vmem:[%s780 + $0xa] sm:$0xff]
      %v975 = vld [vmem:[%s780 + $0x1a] sm:$0xff]
      %v976 = vld [vmem:[%s780 + $0x22] sm:$0xff]
      %v977 = vld [vmem:[%s780 + $0x32] sm:$0xff]
      %v978 = vld [vmem:[%s780 + $0x3a] sm:$0xff]
      %v979 = vld [vmem:[%s780 + $0x4a] sm:$0xff]
      %v980 = vld [vmem:[%s780 + $0x52] sm:$0xff]
      %v981 = vld [vmem:[%s780 + $0x62] sm:$0xff]
      %v982 = vld [vmem:[%s780 + $0x6a] sm:$0xff]
      %v983 = vld [vmem:[%s780 + $0x7a] sm:$0xff]
      %v984 = vld [vmem:[%s780 + $0x82] sm:$0xff]
      %v985 = vld [vmem:[%s780 + $0x92] sm:$0xff]
      %v986 = vld [vmem:[%s780 + $0x9a] sm:$0xff]
      %v987 = vld [vmem:[%s780 + $0xaa] sm:$0xff]
      %v988 = vld [vmem:[%s780 + $0xb2] sm:$0xff]
      %v989 = vld [vmem:[%s780 + $0xc2] sm:$0xff]
      %v990 = vld [vmem:[%s780 + $0xca] sm:$0xff]
      %v991 = vld [vmem:[%s780 + $0xda] sm:$0xff]
      %v992 = vld [vmem:[%s780 + $0xe2] sm:$0xff]
      %v993 = vld [vmem:[%s780 + $0xf2] sm:$0xff]
      %v994 = vld [vmem:[%s780 + $0xfa] sm:$0xff]
      %v995 = vld [vmem:[%s780 + $0x10a] sm:$0xff]
      %v996 = vld [vmem:[%s780 + $0x112] sm:$0xff]
      %v997 = vld [vmem:[%s780 + $0x122] sm:$0xff]
      %v998 = vld [vmem:[%s780 + $0x12a] sm:$0xff]
      %v999 = vld [vmem:[%s780 + $0x13a] sm:$0xff]
      %v1000 = vld [vmem:[%s780 + $0x142] sm:$0xff]
      %v1001 = vld [vmem:[%s780 + $0x152] sm:$0xff]
      %v1002 = vld [vmem:[%s780 + $0x15a] sm:$0xff]
      %v1003 = vld [vmem:[%s780 + $0x16a] sm:$0xff]
      %v1004 = vld [vmem:[%s780 + $0x172] sm:$0xff]
      %1037 = vrot.lane.b32.xlu0 %v748, 3
      %v1038 = vpop.permute.xlu0 %1037
      %1039 = vrot.lane.b32.xlu0 %v749, 3
      %v1040 = vpop.permute.xlu0 %1039
      %1041 = vrot.lane.b32.xlu0 %v750, 3
      %v1042 = vpop.permute.xlu0 %1041
      %1043 = vrot.lane.b32.xlu0 %v751, 3
      %v1044 = vpop.permute.xlu0 %1043
      %1045 = vrot.lane.b32.xlu0 %v752, 3
      %v1046 = vpop.permute.xlu0 %1045
      %1047 = vrot.lane.b32.xlu0 %v753, 3
      %v1048 = vpop.permute.xlu0 %1047
      %1049 = vrot.lane.b32.xlu0 %v754, 3
      %v1050 = vpop.permute.xlu0 %1049
      %1051 = vrot.lane.b32.xlu0 %v755, 3
      %v1052 = vpop.permute.xlu0 %1051
      %1053 = vrot.lane.b32.xlu0 %v756, 3
      %v1054 = vpop.permute.xlu0 %1053
      %1055 = vrot.lane.b32.xlu0 %v757, 3
      %v1056 = vpop.permute.xlu0 %1055
      %1057 = vrot.lane.b32.xlu0 %v758, 3
      %v1058 = vpop.permute.xlu0 %1057
      %1059 = vrot.lane.b32.xlu0 %v759, 3
      %v1060 = vpop.permute.xlu0 %1059
      %1061 = vrot.lane.b32.xlu0 %v760, 3
      %v1062 = vpop.permute.xlu0 %1061
      %1063 = vrot.lane.b32.xlu0 %v761, 3
      %v1064 = vpop.permute.xlu0 %1063
      %1065 = vrot.lane.b32.xlu0 %v762, 3
      %v1066 = vpop.permute.xlu0 %1065
      %1067 = vrot.lane.b32.xlu0 %v763, 3
      %v1068 = vpop.permute.xlu0 %1067
      %1069 = vrot.lane.b32.xlu0 %v764, 3
      %v1070 = vpop.permute.xlu0 %1069
      %1071 = vrot.lane.b32.xlu0 %v765, 3
      %v1072 = vpop.permute.xlu0 %1071
      %1073 = vrot.lane.b32.xlu0 %v766, 3
      %v1074 = vpop.permute.xlu0 %1073
      %1075 = vrot.lane.b32.xlu0 %v767, 3
      %v1076 = vpop.permute.xlu0 %1075
      %1077 = vrot.lane.b32.xlu0 %v768, 3
      %v1078 = vpop.permute.xlu0 %1077
      %1079 = vrot.lane.b32.xlu0 %v769, 3
      %v1080 = vpop.permute.xlu0 %1079
      %1081 = vrot.lane.b32.xlu0 %v770, 3
      %v1082 = vpop.permute.xlu0 %1081
      %1083 = vrot.lane.b32.xlu0 %v771, 3
      %v1084 = vpop.permute.xlu0 %1083
      %1085 = vrot.lane.b32.xlu0 %v772, 3
      %v1086 = vpop.permute.xlu0 %1085
      %1087 = vrot.lane.b32.xlu0 %v773, 3
      %v1088 = vpop.permute.xlu0 %1087
      %1089 = vrot.lane.b32.xlu0 %v774, 3
      %v1090 = vpop.permute.xlu0 %1089
      %1091 = vrot.lane.b32.xlu0 %v775, 3
      %v1092 = vpop.permute.xlu0 %1091
      %1093 = vrot.lane.b32.xlu0 %v776, 3
      %v1094 = vpop.permute.xlu0 %1093
      %1095 = vrot.lane.b32.xlu0 %v777, 3
      %v1096 = vpop.permute.xlu0 %1095
      %1097 = vrot.lane.b32.xlu0 %v778, 3
      %v1098 = vpop.permute.xlu0 %1097
      %1099 = vrot.lane.b32.xlu0 %v779, 3
      %v1100 = vpop.permute.xlu0 %1099
      %1165 = vrot.lane.b32.xlu0 %v781, 6
      %v1166 = vpop.permute.xlu0 %1165
      %1167 = vrot.lane.b32.xlu0 %v782, 6
      %v1168 = vpop.permute.xlu0 %1167
      %1169 = vrot.lane.b32.xlu0 %v783, 6
      %v1170 = vpop.permute.xlu0 %1169
      %1171 = vrot.lane.b32.xlu0 %v784, 6
      %v1172 = vpop.permute.xlu0 %1171
      %1173 = vrot.lane.b32.xlu0 %v785, 6
      %v1174 = vpop.permute.xlu0 %1173
      %1175 = vrot.lane.b32.xlu0 %v786, 6
      %v1176 = vpop.permute.xlu0 %1175
      %1177 = vrot.lane.b32.xlu0 %v787, 6
      %v1178 = vpop.permute.xlu0 %1177
      %1179 = vrot.lane.b32.xlu0 %v788, 6
      %v1180 = vpop.permute.xlu0 %1179
      %1181 = vrot.lane.b32.xlu0 %v789, 6
      %v1182 = vpop.permute.xlu0 %1181
      %1183 = vrot.lane.b32.xlu0 %v790, 6
      %v1184 = vpop.permute.xlu0 %1183
      %1185 = vrot.lane.b32.xlu0 %v791, 6
      %v1186 = vpop.permute.xlu0 %1185
      %1187 = vrot.lane.b32.xlu0 %v792, 6
      %v1188 = vpop.permute.xlu0 %1187
      %1189 = vrot.lane.b32.xlu0 %v793, 6
      %v1190 = vpop.permute.xlu0 %1189
      %1191 = vrot.lane.b32.xlu0 %v794, 6
      %v1192 = vpop.permute.xlu0 %1191
      %1193 = vrot.lane.b32.xlu0 %v795, 6
      %v1194 = vpop.permute.xlu0 %1193
      %1195 = vrot.lane.b32.xlu0 %v796, 6
      %v1196 = vpop.permute.xlu0 %1195
      %1197 = vrot.lane.b32.xlu0 %v797, 6
      %v1198 = vpop.permute.xlu0 %1197
      %1199 = vrot.lane.b32.xlu0 %v798, 6
      %v1200 = vpop.permute.xlu0 %1199
      %1201 = vrot.lane.b32.xlu0 %v799, 6
      %v1202 = vpop.permute.xlu0 %1201
      %1203 = vrot.lane.b32.xlu0 %v800, 6
      %v1204 = vpop.permute.xlu0 %1203
      %1205 = vrot.lane.b32.xlu0 %v801, 6
      %v1206 = vpop.permute.xlu0 %1205
      %1207 = vrot.lane.b32.xlu0 %v802, 6
      %v1208 = vpop.permute.xlu0 %1207
      %1209 = vrot.lane.b32.xlu0 %v803, 6
      %v1210 = vpop.permute.xlu0 %1209
      %1211 = vrot.lane.b32.xlu0 %v804, 6
      %v1212 = vpop.permute.xlu0 %1211
      %1213 = vrot.lane.b32.xlu0 %v805, 6
      %v1214 = vpop.permute.xlu0 %1213
      %1215 = vrot.lane.b32.xlu0 %v806, 6
      %v1216 = vpop.permute.xlu0 %1215
      %1217 = vrot.lane.b32.xlu0 %v807, 6
      %v1218 = vpop.permute.xlu0 %1217
      %1219 = vrot.lane.b32.xlu0 %v808, 6
      %v1220 = vpop.permute.xlu0 %1219
      %1221 = vrot.lane.b32.xlu0 %v809, 6
      %v1222 = vpop.permute.xlu0 %1221
      %1223 = vrot.lane.b32.xlu0 %v810, 6
      %v1224 = vpop.permute.xlu0 %1223
      %1225 = vrot.lane.b32.xlu0 %v811, 6
      %v1226 = vpop.permute.xlu0 %1225
      %1227 = vrot.lane.b32.xlu0 %v812, 6
      %v1228 = vpop.permute.xlu0 %1227
      %1293 = vrot.lane.b32.xlu0 %v813, 9
      %v1294 = vpop.permute.xlu0 %1293
      %1295 = vrot.lane.b32.xlu0 %v814, 9
      %v1296 = vpop.permute.xlu0 %1295
      %1297 = vrot.lane.b32.xlu0 %v815, 9
      %v1298 = vpop.permute.xlu0 %1297
      %1299 = vrot.lane.b32.xlu0 %v816, 9
      %v1300 = vpop.permute.xlu0 %1299
      %1301 = vrot.lane.b32.xlu0 %v817, 9
      %v1302 = vpop.permute.xlu0 %1301
      %1303 = vrot.lane.b32.xlu0 %v818, 9
      %v1304 = vpop.permute.xlu0 %1303
      %1305 = vrot.lane.b32.xlu0 %v819, 9
      %v1306 = vpop.permute.xlu0 %1305
      %1307 = vrot.lane.b32.xlu0 %v820, 9
      %v1308 = vpop.permute.xlu0 %1307
      %1309 = vrot.lane.b32.xlu0 %v821, 9
      %v1310 = vpop.permute.xlu0 %1309
      %1311 = vrot.lane.b32.xlu0 %v822, 9
      %v1312 = vpop.permute.xlu0 %1311
      %1313 = vrot.lane.b32.xlu0 %v823, 9
      %v1314 = vpop.permute.xlu0 %1313
      %1315 = vrot.lane.b32.xlu0 %v824, 9
      %v1316 = vpop.permute.xlu0 %1315
      %1317 = vrot.lane.b32.xlu0 %v825, 9
      %v1318 = vpop.permute.xlu0 %1317
      %1319 = vrot.lane.b32.xlu0 %v826, 9
      %v1320 = vpop.permute.xlu0 %1319
      %1321 = vrot.lane.b32.xlu0 %v827, 9
      %v1322 = vpop.permute.xlu0 %1321
      %1323 = vrot.lane.b32.xlu0 %v828, 9
      %v1324 = vpop.permute.xlu0 %1323
      %1325 = vrot.lane.b32.xlu0 %v829, 9
      %v1326 = vpop.permute.xlu0 %1325
      %1327 = vrot.lane.b32.xlu0 %v830, 9
      %v1328 = vpop.permute.xlu0 %1327
      %1329 = vrot.lane.b32.xlu0 %v831, 9
      %v1330 = vpop.permute.xlu0 %1329
      %1331 = vrot.lane.b32.xlu0 %v832, 9
      %v1332 = vpop.permute.xlu0 %1331
      %1333 = vrot.lane.b32.xlu0 %v833, 9
      %v1334 = vpop.permute.xlu0 %1333
      %1335 = vrot.lane.b32.xlu0 %v834, 9
      %v1336 = vpop.permute.xlu0 %1335
      %1337 = vrot.lane.b32.xlu0 %v835, 9
      %v1338 = vpop.permute.xlu0 %1337
      %1339 = vrot.lane.b32.xlu0 %v836, 9
      %v1340 = vpop.permute.xlu0 %1339
      %1341 = vrot.lane.b32.xlu0 %v837, 9
      %v1342 = vpop.permute.xlu0 %1341
      %1343 = vrot.lane.b32.xlu0 %v838, 9
      %v1344 = vpop.permute.xlu0 %1343
      %1345 = vrot.lane.b32.xlu0 %v839, 9
      %v1346 = vpop.permute.xlu0 %1345
      %1347 = vrot.lane.b32.xlu0 %v840, 9
      %v1348 = vpop.permute.xlu0 %1347
      %1349 = vrot.lane.b32.xlu0 %v841, 9
      %v1350 = vpop.permute.xlu0 %1349
      %1351 = vrot.lane.b32.xlu0 %v842, 9
      %v1352 = vpop.permute.xlu0 %1351
      %1353 = vrot.lane.b32.xlu0 %v843, 9
      %v1354 = vpop.permute.xlu0 %1353
      %1355 = vrot.lane.b32.xlu0 %v844, 9
      %v1356 = vpop.permute.xlu0 %1355
      %1421 = vrot.lane.b32.xlu0 %v845, 12
      %v1422 = vpop.permute.xlu0 %1421
      %1423 = vrot.lane.b32.xlu0 %v846, 12
      %v1424 = vpop.permute.xlu0 %1423
      %1425 = vrot.lane.b32.xlu0 %v847, 12
      %v1426 = vpop.permute.xlu0 %1425
      %1427 = vrot.lane.b32.xlu0 %v848, 12
      %v1428 = vpop.permute.xlu0 %1427
      %1429 = vrot.lane.b32.xlu0 %v849, 12
      %v1430 = vpop.permute.xlu0 %1429
      %1431 = vrot.lane.b32.xlu0 %v850, 12
      %v1432 = vpop.permute.xlu0 %1431
      %1433 = vrot.lane.b32.xlu0 %v851, 12
      %v1434 = vpop.permute.xlu0 %1433
      %1435 = vrot.lane.b32.xlu0 %v852, 12
      %v1436 = vpop.permute.xlu0 %1435
      %1437 = vrot.lane.b32.xlu0 %v853, 12
      %v1438 = vpop.permute.xlu0 %1437
      %1439 = vrot.lane.b32.xlu0 %v854, 12
      %v1440 = vpop.permute.xlu0 %1439
      %1441 = vrot.lane.b32.xlu0 %v855, 12
      %v1442 = vpop.permute.xlu0 %1441
      %1443 = vrot.lane.b32.xlu0 %v856, 12
      %v1444 = vpop.permute.xlu0 %1443
      %1445 = vrot.lane.b32.xlu0 %v857, 12
      %v1446 = vpop.permute.xlu0 %1445
      %1447 = vrot.lane.b32.xlu0 %v858, 12
      %v1448 = vpop.permute.xlu0 %1447
      %1449 = vrot.lane.b32.xlu0 %v859, 12
      %v1450 = vpop.permute.xlu0 %1449
      %1451 = vrot.lane.b32.xlu0 %v860, 12
      %v1452 = vpop.permute.xlu0 %1451
      %1453 = vrot.lane.b32.xlu0 %v861, 12
      %v1454 = vpop.permute.xlu0 %1453
      %1455 = vrot.lane.b32.xlu0 %v862, 12
      %v1456 = vpop.permute.xlu0 %1455
      %1457 = vrot.lane.b32.xlu0 %v863, 12
      %v1458 = vpop.permute.xlu0 %1457
      %1459 = vrot.lane.b32.xlu0 %v864, 12
      %v1460 = vpop.permute.xlu0 %1459
      %1461 = vrot.lane.b32.xlu0 %v865, 12
      %v1462 = vpop.permute.xlu0 %1461
      %1463 = vrot.lane.b32.xlu0 %v866, 12
      %v1464 = vpop.permute.xlu0 %1463
      %1465 = vrot.lane.b32.xlu0 %v867, 12
      %v1466 = vpop.permute.xlu0 %1465
      %1467 = vrot.lane.b32.xlu0 %v868, 12
      %v1468 = vpop.permute.xlu0 %1467
      %1469 = vrot.lane.b32.xlu0 %v869, 12
      %v1470 = vpop.permute.xlu0 %1469
      %1471 = vrot.lane.b32.xlu0 %v870, 12
      %v1472 = vpop.permute.xlu0 %1471
      %1473 = vrot.lane.b32.xlu0 %v871, 12
      %v1474 = vpop.permute.xlu0 %1473
      %1475 = vrot.lane.b32.xlu0 %v872, 12
      %v1476 = vpop.permute.xlu0 %1475
      %1477 = vrot.lane.b32.xlu0 %v873, 12
      %v1478 = vpop.permute.xlu0 %1477
      %1479 = vrot.lane.b32.xlu0 %v874, 12
      %v1480 = vpop.permute.xlu0 %1479
      %1481 = vrot.lane.b32.xlu0 %v875, 12
      %v1482 = vpop.permute.xlu0 %1481
      %1483 = vrot.lane.b32.xlu0 %v876, 12
      %v1484 = vpop.permute.xlu0 %1483
      %1549 = vrot.lane.b32.xlu0 %v877, 15
      %v1550 = vpop.permute.xlu0 %1549
      %1551 = vrot.lane.b32.xlu0 %v878, 15
      %v1552 = vpop.permute.xlu0 %1551
      %1553 = vrot.lane.b32.xlu0 %v879, 15
      %v1554 = vpop.permute.xlu0 %1553
      %1555 = vrot.lane.b32.xlu0 %v880, 15
      %v1556 = vpop.permute.xlu0 %1555
      %1557 = vrot.lane.b32.xlu0 %v881, 15
      %v1558 = vpop.permute.xlu0 %1557
      %1559 = vrot.lane.b32.xlu0 %v882, 15
      %v1560 = vpop.permute.xlu0 %1559
      %1561 = vrot.lane.b32.xlu0 %v883, 15
      %v1562 = vpop.permute.xlu0 %1561
      %1563 = vrot.lane.b32.xlu0 %v884, 15
      %v1564 = vpop.permute.xlu0 %1563
      %1565 = vrot.lane.b32.xlu0 %v885, 15
      %v1566 = vpop.permute.xlu0 %1565
      %1567 = vrot.lane.b32.xlu0 %v886, 15
      %v1568 = vpop.permute.xlu0 %1567
      %1569 = vrot.lane.b32.xlu0 %v887, 15
      %v1570 = vpop.permute.xlu0 %1569
      %1571 = vrot.lane.b32.xlu0 %v888, 15
      %v1572 = vpop.permute.xlu0 %1571
      %1573 = vrot.lane.b32.xlu0 %v889, 15
      %v1574 = vpop.permute.xlu0 %1573
      %1575 = vrot.lane.b32.xlu0 %v890, 15
      %v1576 = vpop.permute.xlu0 %1575
      %1577 = vrot.lane.b32.xlu0 %v891, 15
      %v1578 = vpop.permute.xlu0 %1577
      %1579 = vrot.lane.b32.xlu0 %v892, 15
      %v1580 = vpop.permute.xlu0 %1579
      %1581 = vrot.lane.b32.xlu0 %v893, 15
      %v1582 = vpop.permute.xlu0 %1581
      %1583 = vrot.lane.b32.xlu0 %v894, 15
      %v1584 = vpop.permute.xlu0 %1583
      %1585 = vrot.lane.b32.xlu0 %v895, 15
      %v1586 = vpop.permute.xlu0 %1585
      %1587 = vrot.lane.b32.xlu0 %v896, 15
      %v1588 = vpop.permute.xlu0 %1587
      %1589 = vrot.lane.b32.xlu0 %v897, 15
      %v1590 = vpop.permute.xlu0 %1589
      %1591 = vrot.lane.b32.xlu0 %v898, 15
      %v1592 = vpop.permute.xlu0 %1591
      %1593 = vrot.lane.b32.xlu0 %v899, 15
      %v1594 = vpop.permute.xlu0 %1593
      %1595 = vrot.lane.b32.xlu0 %v900, 15
      %v1596 = vpop.permute.xlu0 %1595
      %1597 = vrot.lane.b32.xlu0 %v901, 15
      %v1598 = vpop.permute.xlu0 %1597
      %1599 = vrot.lane.b32.xlu0 %v902, 15
      %v1600 = vpop.permute.xlu0 %1599
      %1601 = vrot.lane.b32.xlu0 %v903, 15
      %v1602 = vpop.permute.xlu0 %1601
      %1603 = vrot.lane.b32.xlu0 %v904, 15
      %v1604 = vpop.permute.xlu0 %1603
      %1605 = vrot.lane.b32.xlu0 %v905, 15
      %v1606 = vpop.permute.xlu0 %1605
      %1607 = vrot.lane.b32.xlu0 %v906, 15
      %v1608 = vpop.permute.xlu0 %1607
      %1609 = vrot.lane.b32.xlu0 %v907, 15
      %v1610 = vpop.permute.xlu0 %1609
      %1611 = vrot.lane.b32.xlu0 %v908, 15
      %v1612 = vpop.permute.xlu0 %1611
      %1677 = vrot.lane.b32.xlu0 %v909, 18
      %v1678 = vpop.permute.xlu0 %1677
      %1679 = vrot.lane.b32.xlu0 %v910, 18
      %v1680 = vpop.permute.xlu0 %1679
      %1681 = vrot.lane.b32.xlu0 %v911, 18
      %v1682 = vpop.permute.xlu0 %1681
      %1683 = vrot.lane.b32.xlu0 %v912, 18
      %v1684 = vpop.permute.xlu0 %1683
      %1685 = vrot.lane.b32.xlu0 %v913, 18
      %v1686 = vpop.permute.xlu0 %1685
      %1687 = vrot.lane.b32.xlu0 %v914, 18
      %v1688 = vpop.permute.xlu0 %1687
      %1689 = vrot.lane.b32.xlu0 %v915, 18
      %v1690 = vpop.permute.xlu0 %1689
      %1691 = vrot.lane.b32.xlu0 %v916, 18
      %v1692 = vpop.permute.xlu0 %1691
      %1693 = vrot.lane.b32.xlu0 %v917, 18
      %v1694 = vpop.permute.xlu0 %1693
      %1695 = vrot.lane.b32.xlu0 %v918, 18
      %v1696 = vpop.permute.xlu0 %1695
      %1697 = vrot.lane.b32.xlu0 %v919, 18
      %v1698 = vpop.permute.xlu0 %1697
      %1699 = vrot.lane.b32.xlu0 %v920, 18
      %v1700 = vpop.permute.xlu0 %1699
      %1701 = vrot.lane.b32.xlu0 %v921, 18
      %v1702 = vpop.permute.xlu0 %1701
      %1703 = vrot.lane.b32.xlu0 %v922, 18
      %v1704 = vpop.permute.xlu0 %1703
      %1705 = vrot.lane.b32.xlu0 %v923, 18
      %v1706 = vpop.permute.xlu0 %1705
      %1707 = vrot.lane.b32.xlu0 %v924, 18
      %v1708 = vpop.permute.xlu0 %1707
      %1709 = vrot.lane.b32.xlu0 %v925, 18
      %v1710 = vpop.permute.xlu0 %1709
      %1711 = vrot.lane.b32.xlu0 %v926, 18
      %v1712 = vpop.permute.xlu0 %1711
      %1713 = vrot.lane.b32.xlu0 %v927, 18
      %v1714 = vpop.permute.xlu0 %1713
      %1715 = vrot.lane.b32.xlu0 %v928, 18
      %v1716 = vpop.permute.xlu0 %1715
      %1717 = vrot.lane.b32.xlu0 %v929, 18
      %v1718 = vpop.permute.xlu0 %1717
      %1719 = vrot.lane.b32.xlu0 %v930, 18
      %v1720 = vpop.permute.xlu0 %1719
      %1721 = vrot.lane.b32.xlu0 %v931, 18
      %v1722 = vpop.permute.xlu0 %1721
      %1723 = vrot.lane.b32.xlu0 %v932, 18
      %v1724 = vpop.permute.xlu0 %1723
      %1725 = vrot.lane.b32.xlu0 %v933, 18
      %v1726 = vpop.permute.xlu0 %1725
      %1727 = vrot.lane.b32.xlu0 %v934, 18
      %v1728 = vpop.permute.xlu0 %1727
      %1729 = vrot.lane.b32.xlu0 %v935, 18
      %v1730 = vpop.permute.xlu0 %1729
      %1731 = vrot.lane.b32.xlu0 %v936, 18
      %v1732 = vpop.permute.xlu0 %1731
      %1733 = vrot.lane.b32.xlu0 %v937, 18
      %v1734 = vpop.permute.xlu0 %1733
      %1735 = vrot.lane.b32.xlu0 %v938, 18
      %v1736 = vpop.permute.xlu0 %1735
      %1737 = vrot.lane.b32.xlu0 %v939, 18
      %v1738 = vpop.permute.xlu0 %1737
      %1739 = vrot.lane.b32.xlu0 %v940, 18
      %v1740 = vpop.permute.xlu0 %1739
      %1805 = vrot.lane.b32.xlu0 %v941, 21
      %v1806 = vpop.permute.xlu0 %1805
      %1807 = vrot.lane.b32.xlu0 %v942, 21
      %v1808 = vpop.permute.xlu0 %1807
      %1809 = vrot.lane.b32.xlu0 %v943, 21
      %v1810 = vpop.permute.xlu0 %1809
      %1811 = vrot.lane.b32.xlu0 %v944, 21
      %v1812 = vpop.permute.xlu0 %1811
      %1813 = vrot.lane.b32.xlu0 %v945, 21
      %v1814 = vpop.permute.xlu0 %1813
      %1815 = vrot.lane.b32.xlu0 %v946, 21
      %v1816 = vpop.permute.xlu0 %1815
      %1817 = vrot.lane.b32.xlu0 %v947, 21
      %v1818 = vpop.permute.xlu0 %1817
      %1819 = vrot.lane.b32.xlu0 %v948, 21
      %v1820 = vpop.permute.xlu0 %1819
      %1821 = vrot.lane.b32.xlu0 %v949, 21
      %v1822 = vpop.permute.xlu0 %1821
      %1823 = vrot.lane.b32.xlu0 %v950, 21
      %v1824 = vpop.permute.xlu0 %1823
      %1825 = vrot.lane.b32.xlu0 %v951, 21
      %v1826 = vpop.permute.xlu0 %1825
      %1827 = vrot.lane.b32.xlu0 %v952, 21
      %v1828 = vpop.permute.xlu0 %1827
      %1829 = vrot.lane.b32.xlu0 %v953, 21
      %v1830 = vpop.permute.xlu0 %1829
      %1831 = vrot.lane.b32.xlu0 %v954, 21
      %v1832 = vpop.permute.xlu0 %1831
      %1833 = vrot.lane.b32.xlu0 %v955, 21
      %v1834 = vpop.permute.xlu0 %1833
      %1835 = vrot.lane.b32.xlu0 %v956, 21
      %v1836 = vpop.permute.xlu0 %1835
      %1837 = vrot.lane.b32.xlu0 %v957, 21
      %v1838 = vpop.permute.xlu0 %1837
      %1839 = vrot.lane.b32.xlu0 %v958, 21
      %v1840 = vpop.permute.xlu0 %1839
      %1841 = vrot.lane.b32.xlu0 %v959, 21
      %v1842 = vpop.permute.xlu0 %1841
      %1843 = vrot.lane.b32.xlu0 %v960, 21
      %v1844 = vpop.permute.xlu0 %1843
      %1845 = vrot.lane.b32.xlu0 %v961, 21
      %v1846 = vpop.permute.xlu0 %1845
      %1847 = vrot.lane.b32.xlu0 %v962, 21
      %v1848 = vpop.permute.xlu0 %1847
      %1849 = vrot.lane.b32.xlu0 %v963, 21
      %v1850 = vpop.permute.xlu0 %1849
      %1851 = vrot.lane.b32.xlu0 %v964, 21
      %v1852 = vpop.permute.xlu0 %1851
      %1853 = vrot.lane.b32.xlu0 %v965, 21
      %v1854 = vpop.permute.xlu0 %1853
      %1855 = vrot.lane.b32.xlu0 %v966, 21
      %v1856 = vpop.permute.xlu0 %1855
      %1857 = vrot.lane.b32.xlu0 %v967, 21
      %v1858 = vpop.permute.xlu0 %1857
      %1859 = vrot.lane.b32.xlu0 %v968, 21
      %v1860 = vpop.permute.xlu0 %1859
      %1861 = vrot.lane.b32.xlu0 %v969, 21
      %v1862 = vpop.permute.xlu0 %1861
      %1863 = vrot.lane.b32.xlu0 %v970, 21
      %v1864 = vpop.permute.xlu0 %1863
      %1865 = vrot.lane.b32.xlu0 %v971, 21
      %v1866 = vpop.permute.xlu0 %1865
      %1867 = vrot.lane.b32.xlu0 %v972, 21
      %v1868 = vpop.permute.xlu0 %1867
      %1933 = vrot.lane.b32.xlu0 %v973, 24
      %v1934 = vpop.permute.xlu0 %1933
      %1935 = vrot.lane.b32.xlu0 %v974, 24
      %v1936 = vpop.permute.xlu0 %1935
      %1937 = vrot.lane.b32.xlu0 %v975, 24
      %v1938 = vpop.permute.xlu0 %1937
      %1939 = vrot.lane.b32.xlu0 %v976, 24
      %v1940 = vpop.permute.xlu0 %1939
      %1941 = vrot.lane.b32.xlu0 %v977, 24
      %v1942 = vpop.permute.xlu0 %1941
      %1943 = vrot.lane.b32.xlu0 %v978, 24
      %v1944 = vpop.permute.xlu0 %1943
      %1945 = vrot.lane.b32.xlu0 %v979, 24
      %v1946 = vpop.permute.xlu0 %1945
      %1947 = vrot.lane.b32.xlu0 %v980, 24
      %v1948 = vpop.permute.xlu0 %1947
      %1949 = vrot.lane.b32.xlu0 %v981, 24
      %v1950 = vpop.permute.xlu0 %1949
      %1951 = vrot.lane.b32.xlu0 %v982, 24
      %v1952 = vpop.permute.xlu0 %1951
      %1953 = vrot.lane.b32.xlu0 %v983, 24
      %v1954 = vpop.permute.xlu0 %1953
      %1955 = vrot.lane.b32.xlu0 %v984, 24
      %v1956 = vpop.permute.xlu0 %1955
      %1957 = vrot.lane.b32.xlu0 %v985, 24
      %v1958 = vpop.permute.xlu0 %1957
      %1959 = vrot.lane.b32.xlu0 %v986, 24
      %v1960 = vpop.permute.xlu0 %1959
      %1961 = vrot.lane.b32.xlu0 %v987, 24
      %v1962 = vpop.permute.xlu0 %1961
      %1963 = vrot.lane.b32.xlu0 %v988, 24
      %v1964 = vpop.permute.xlu0 %1963
      %1965 = vrot.lane.b32.xlu0 %v989, 24
      %v1966 = vpop.permute.xlu0 %1965
      %1967 = vrot.lane.b32.xlu0 %v990, 24
      %v1968 = vpop.permute.xlu0 %1967
      %1969 = vrot.lane.b32.xlu0 %v991, 24
      %v1970 = vpop.permute.xlu0 %1969
      %1971 = vrot.lane.b32.xlu0 %v992, 24
      %v1972 = vpop.permute.xlu0 %1971
      %1973 = vrot.lane.b32.xlu0 %v993, 24
      %v1974 = vpop.permute.xlu0 %1973
      %1975 = vrot.lane.b32.xlu0 %v994, 24
      %v1976 = vpop.permute.xlu0 %1975
      %1977 = vrot.lane.b32.xlu0 %v995, 24
      %v1978 = vpop.permute.xlu0 %1977
      %1979 = vrot.lane.b32.xlu0 %v996, 24
      %v1980 = vpop.permute.xlu0 %1979
      %1981 = vrot.lane.b32.xlu0 %v997, 24
      %v1982 = vpop.permute.xlu0 %1981
      %1983 = vrot.lane.b32.xlu0 %v998, 24
      %v1984 = vpop.permute.xlu0 %1983
      %1985 = vrot.lane.b32.xlu0 %v999, 24
      %v1986 = vpop.permute.xlu0 %1985
      %1987 = vrot.lane.b32.xlu0 %v1000, 24
      %v1988 = vpop.permute.xlu0 %1987
      %1989 = vrot.lane.b32.xlu0 %v1001, 24
      %v1990 = vpop.permute.xlu0 %1989
      %1991 = vrot.lane.b32.xlu0 %v1002, 24
      %v1992 = vpop.permute.xlu0 %1991
      %1993 = vrot.lane.b32.xlu0 %v1003, 24
      %v1994 = vpop.permute.xlu0 %1993
      %1995 = vrot.lane.b32.xlu0 %v1004, 24
      %v1996 = vpop.permute.xlu0 %1995
      %v2029 = vsel %vm483, %v716, %v1038
      %v2030 = vsel %vm483, %v717, %v1040
      %v2031 = vsel %vm483, %v718, %v1042
      %v2032 = vsel %vm483, %v719, %v1044
      %v2033 = vsel %vm483, %v720, %v1046
      %v2034 = vsel %vm483, %v721, %v1048
      %v2035 = vsel %vm483, %v722, %v1050
      %v2036 = vsel %vm483, %v723, %v1052
      %v2037 = vsel %vm483, %v724, %v1054
      %v2038 = vsel %vm483, %v725, %v1056
      %v2039 = vsel %vm483, %v726, %v1058
      %v2040 = vsel %vm483, %v727, %v1060
      %v2041 = vsel %vm483, %v728, %v1062
      %v2042 = vsel %vm483, %v729, %v1064
      %v2043 = vsel %vm483, %v730, %v1066
      %v2044 = vsel %vm483, %v731, %v1068
      %v2045 = vsel %vm483, %v732, %v1070
      %v2046 = vsel %vm483, %v733, %v1072
      %v2047 = vsel %vm483, %v734, %v1074
      %v2048 = vsel %vm483, %v735, %v1076
      %v2049 = vsel %vm483, %v736, %v1078
      %v2050 = vsel %vm483, %v737, %v1080
      %v2051 = vsel %vm483, %v738, %v1082
      %v2052 = vsel %vm483, %v739, %v1084
      %v2053 = vsel %vm483, %v740, %v1086
      %v2054 = vsel %vm483, %v741, %v1088
      %v2055 = vsel %vm483, %v742, %v1090
      %v2056 = vsel %vm483, %v743, %v1092
      %v2057 = vsel %vm483, %v744, %v1094
      %v2058 = vsel %vm483, %v745, %v1096
      %v2059 = vsel %vm483, %v746, %v1098
      %v2060 = vsel %vm483, %v747, %v1100
      %vm2061 = vcmask 48128
      %v2062 = vsel %vm2061, %v2029, %v1166
      %v2063 = vsel %vm2061, %v2030, %v1168
      %v2064 = vsel %vm2061, %v2031, %v1170
      %v2065 = vsel %vm2061, %v2032, %v1172
      %v2066 = vsel %vm2061, %v2033, %v1174
      %v2067 = vsel %vm2061, %v2034, %v1176
      %v2068 = vsel %vm2061, %v2035, %v1178
      %v2069 = vsel %vm2061, %v2036, %v1180
      %v2070 = vsel %vm2061, %v2037, %v1182
      %v2071 = vsel %vm2061, %v2038, %v1184
      %v2072 = vsel %vm2061, %v2039, %v1186
      %v2073 = vsel %vm2061, %v2040, %v1188
      %v2074 = vsel %vm2061, %v2041, %v1190
      %v2075 = vsel %vm2061, %v2042, %v1192
      %v2076 = vsel %vm2061, %v2043, %v1194
      %v2077 = vsel %vm2061, %v2044, %v1196
      %v2078 = vsel %vm2061, %v2045, %v1198
      %v2079 = vsel %vm2061, %v2046, %v1200
      %v2080 = vsel %vm2061, %v2047, %v1202
      %v2081 = vsel %vm2061, %v2048, %v1204
      %v2082 = vsel %vm2061, %v2049, %v1206
      %v2083 = vsel %vm2061, %v2050, %v1208
      %v2084 = vsel %vm2061, %v2051, %v1210
      %v2085 = vsel %vm2061, %v2052, %v1212
      %v2086 = vsel %vm2061, %v2053, %v1214
      %v2087 = vsel %vm2061, %v2054, %v1216
      %v2088 = vsel %vm2061, %v2055, %v1218
      %v2089 = vsel %vm2061, %v2056, %v1220
      %v2090 = vsel %vm2061, %v2057, %v1222
      %v2091 = vsel %vm2061, %v2058, %v1224
      %v2092 = vsel %vm2061, %v2059, %v1226
      %v2093 = vsel %vm2061, %v2060, %v1228
      %vm2094 = vcmask 72704
      %v2095 = vsel %vm2094, %v2062, %v1294
      %v2096 = vsel %vm2094, %v2063, %v1296
      %v2097 = vsel %vm2094, %v2064, %v1298
      %v2098 = vsel %vm2094, %v2065, %v1300
      %v2099 = vsel %vm2094, %v2066, %v1302
      %v2100 = vsel %vm2094, %v2067, %v1304
      %v2101 = vsel %vm2094, %v2068, %v1306
      %v2102 = vsel %vm2094, %v2069, %v1308
      %v2103 = vsel %vm2094, %v2070, %v1310
      %v2104 = vsel %vm2094, %v2071, %v1312
      %v2105 = vsel %vm2094, %v2072, %v1314
      %v2106 = vsel %vm2094, %v2073, %v1316
      %v2107 = vsel %vm2094, %v2074, %v1318
      %v2108 = vsel %vm2094, %v2075, %v1320
      %v2109 = vsel %vm2094, %v2076, %v1322
      %v2110 = vsel %vm2094, %v2077, %v1324
      %v2111 = vsel %vm2094, %v2078, %v1326
      %v2112 = vsel %vm2094, %v2079, %v1328
      %v2113 = vsel %vm2094, %v2080, %v1330
      %v2114 = vsel %vm2094, %v2081, %v1332
      %v2115 = vsel %vm2094, %v2082, %v1334
      %v2116 = vsel %vm2094, %v2083, %v1336
      %v2117 = vsel %vm2094, %v2084, %v1338
      %v2118 = vsel %vm2094, %v2085, %v1340
      %v2119 = vsel %vm2094, %v2086, %v1342
      %v2120 = vsel %vm2094, %v2087, %v1344
      %v2121 = vsel %vm2094, %v2088, %v1346
      %v2122 = vsel %vm2094, %v2089, %v1348
      %v2123 = vsel %vm2094, %v2090, %v1350
      %v2124 = vsel %vm2094, %v2091, %v1352
      %v2125 = vsel %vm2094, %v2092, %v1354
      %v2126 = vsel %vm2094, %v2093, %v1356
      %vm2127 = vcmask 97280
      %v2128 = vsel %vm2127, %v2095, %v1422
      %v2129 = vsel %vm2127, %v2096, %v1424
      %v2130 = vsel %vm2127, %v2097, %v1426
      %v2131 = vsel %vm2127, %v2098, %v1428
      %v2132 = vsel %vm2127, %v2099, %v1430
      %v2133 = vsel %vm2127, %v2100, %v1432
      %v2134 = vsel %vm2127, %v2101, %v1434
      %v2135 = vsel %vm2127, %v2102, %v1436
      %v2136 = vsel %vm2127, %v2103, %v1438
      %v2137 = vsel %vm2127, %v2104, %v1440
      %v2138 = vsel %vm2127, %v2105, %v1442
      %v2139 = vsel %vm2127, %v2106, %v1444
      %v2140 = vsel %vm2127, %v2107, %v1446
      %v2141 = vsel %vm2127, %v2108, %v1448
      %v2142 = vsel %vm2127, %v2109, %v1450
      %v2143 = vsel %vm2127, %v2110, %v1452
      %v2144 = vsel %vm2127, %v2111, %v1454
      %v2145 = vsel %vm2127, %v2112, %v1456
      %v2146 = vsel %vm2127, %v2113, %v1458
      %v2147 = vsel %vm2127, %v2114, %v1460
      %v2148 = vsel %vm2127, %v2115, %v1462
      %v2149 = vsel %vm2127, %v2116, %v1464
      %v2150 = vsel %vm2127, %v2117, %v1466
      %v2151 = vsel %vm2127, %v2118, %v1468
      %v2152 = vsel %vm2127, %v2119, %v1470
      %v2153 = vsel %vm2127, %v2120, %v1472
      %v2154 = vsel %vm2127, %v2121, %v1474
      %v2155 = vsel %vm2127, %v2122, %v1476
      %v2156 = vsel %vm2127, %v2123, %v1478
      %v2157 = vsel %vm2127, %v2124, %v1480
      %v2158 = vsel %vm2127, %v2125, %v1482
      %v2159 = vsel %vm2127, %v2126, %v1484
      %vm2160 = vcmask 121856
      %v2161 = vsel %vm2160, %v2128, %v1550
      %v2162 = vsel %vm2160, %v2129, %v1552
      %v2163 = vsel %vm2160, %v2130, %v1554
      %v2164 = vsel %vm2160, %v2131, %v1556
      %v2165 = vsel %vm2160, %v2132, %v1558
      %v2166 = vsel %vm2160, %v2133, %v1560
      %v2167 = vsel %vm2160, %v2134, %v1562
      %v2168 = vsel %vm2160, %v2135, %v1564
      %v2169 = vsel %vm2160, %v2136, %v1566
      %v2170 = vsel %vm2160, %v2137, %v1568
      %v2171 = vsel %vm2160, %v2138, %v1570
      %v2172 = vsel %vm2160, %v2139, %v1572
      %v2173 = vsel %vm2160, %v2140, %v1574
      %v2174 = vsel %vm2160, %v2141, %v1576
      %v2175 = vsel %vm2160, %v2142, %v1578
      %v2176 = vsel %vm2160, %v2143, %v1580
      %v2177 = vsel %vm2160, %v2144, %v1582
      %v2178 = vsel %vm2160, %v2145, %v1584
      %v2179 = vsel %vm2160, %v2146, %v1586
      %v2180 = vsel %vm2160, %v2147, %v1588
      %v2181 = vsel %vm2160, %v2148, %v1590
      %v2182 = vsel %vm2160, %v2149, %v1592
      %v2183 = vsel %vm2160, %v2150, %v1594
      %v2184 = vsel %vm2160, %v2151, %v1596
      %v2185 = vsel %vm2160, %v2152, %v1598
      %v2186 = vsel %vm2160, %v2153, %v1600
      %v2187 = vsel %vm2160, %v2154, %v1602
      %v2188 = vsel %vm2160, %v2155, %v1604
      %v2189 = vsel %vm2160, %v2156, %v1606
      %v2190 = vsel %vm2160, %v2157, %v1608
      %v2191 = vsel %vm2160, %v2158, %v1610
      %v2192 = vsel %vm2160, %v2159, %v1612
      %vm2193 = vcmask 146432
      %v2194 = vsel %vm2193, %v2161, %v1678
      %v2195 = vsel %vm2193, %v2162, %v1680
      %v2196 = vsel %vm2193, %v2163, %v1682
      %v2197 = vsel %vm2193, %v2164, %v1684
      %v2198 = vsel %vm2193, %v2165, %v1686
      %v2199 = vsel %vm2193, %v2166, %v1688
      %v2200 = vsel %vm2193, %v2167, %v1690
      %v2201 = vsel %vm2193, %v2168, %v1692
      %v2202 = vsel %vm2193, %v2169, %v1694
      %v2203 = vsel %vm2193, %v2170, %v1696
      %v2204 = vsel %vm2193, %v2171, %v1698
      %v2205 = vsel %vm2193, %v2172, %v1700
      %v2206 = vsel %vm2193, %v2173, %v1702
      %v2207 = vsel %vm2193, %v2174, %v1704
      %v2208 = vsel %vm2193, %v2175, %v1706
      %v2209 = vsel %vm2193, %v2176, %v1708
      %v2210 = vsel %vm2193, %v2177, %v1710
      %v2211 = vsel %vm2193, %v2178, %v1712
      %v2212 = vsel %vm2193, %v2179, %v1714
      %v2213 = vsel %vm2193, %v2180, %v1716
      %v2214 = vsel %vm2193, %v2181, %v1718
      %v2215 = vsel %vm2193, %v2182, %v1720
      %v2216 = vsel %vm2193, %v2183, %v1722
      %v2217 = vsel %vm2193, %v2184, %v1724
      %v2218 = vsel %vm2193, %v2185, %v1726
      %v2219 = vsel %vm2193, %v2186, %v1728
      %v2220 = vsel %vm2193, %v2187, %v1730
      %v2221 = vsel %vm2193, %v2188, %v1732
      %v2222 = vsel %vm2193, %v2189, %v1734
      %v2223 = vsel %vm2193, %v2190, %v1736
      %v2224 = vsel %vm2193, %v2191, %v1738
      %v2225 = vsel %vm2193, %v2192, %v1740
      %vm2226 = vcmask 171008
      %v2227 = vsel %vm2226, %v2194, %v1806
      %v2228 = vsel %vm2226, %v2195, %v1808
      %v2229 = vsel %vm2226, %v2196, %v1810
      %v2230 = vsel %vm2226, %v2197, %v1812
      %v2231 = vsel %vm2226, %v2198, %v1814
      %v2232 = vsel %vm2226, %v2199, %v1816
      %v2233 = vsel %vm2226, %v2200, %v1818
      %v2234 = vsel %vm2226, %v2201, %v1820
      %v2235 = vsel %vm2226, %v2202, %v1822
      %v2236 = vsel %vm2226, %v2203, %v1824
      %v2237 = vsel %vm2226, %v2204, %v1826
      %v2238 = vsel %vm2226, %v2205, %v1828
      %v2239 = vsel %vm2226, %v2206, %v1830
      %v2240 = vsel %vm2226, %v2207, %v1832
      %v2241 = vsel %vm2226, %v2208, %v1834
      %v2242 = vsel %vm2226, %v2209, %v1836
      %v2243 = vsel %vm2226, %v2210, %v1838
      %v2244 = vsel %vm2226, %v2211, %v1840
      %v2245 = vsel %vm2226, %v2212, %v1842
      %v2246 = vsel %vm2226, %v2213, %v1844
      %v2247 = vsel %vm2226, %v2214, %v1846
      %v2248 = vsel %vm2226, %v2215, %v1848
      %v2249 = vsel %vm2226, %v2216, %v1850
      %v2250 = vsel %vm2226, %v2217, %v1852
      %v2251 = vsel %vm2226, %v2218, %v1854
      %v2252 = vsel %vm2226, %v2219, %v1856
      %v2253 = vsel %vm2226, %v2220, %v1858
      %v2254 = vsel %vm2226, %v2221, %v1860
      %v2255 = vsel %vm2226, %v2222, %v1862
      %v2256 = vsel %vm2226, %v2223, %v1864
      %v2257 = vsel %vm2226, %v2224, %v1866
      %v2258 = vsel %vm2226, %v2225, %v1868
      %vm2259 = vcmask 195584
      %v2260 = vsel %vm2259, %v2227, %v1934
      %v2261 = vsel %vm2259, %v2228, %v1936
      %v2262 = vsel %vm2259, %v2229, %v1938
      %v2263 = vsel %vm2259, %v2230, %v1940
      %v2264 = vsel %vm2259, %v2231, %v1942
      %v2265 = vsel %vm2259, %v2232, %v1944
      %v2266 = vsel %vm2259, %v2233, %v1946
      %v2267 = vsel %vm2259, %v2234, %v1948
      %v2268 = vsel %vm2259, %v2235, %v1950
      %v2269 = vsel %vm2259, %v2236, %v1952
      %v2270 = vsel %vm2259, %v2237, %v1954
      %v2271 = vsel %vm2259, %v2238, %v1956
      %v2272 = vsel %vm2259, %v2239, %v1958
      %v2273 = vsel %vm2259, %v2240, %v1960
      %v2274 = vsel %vm2259, %v2241, %v1962
      %v2275 = vsel %vm2259, %v2242, %v1964
      %v2276 = vsel %vm2259, %v2243, %v1966
      %v2277 = vsel %vm2259, %v2244, %v1968
      %v2278 = vsel %vm2259, %v2245, %v1970
      %v2279 = vsel %vm2259, %v2246, %v1972
      %v2280 = vsel %vm2259, %v2247, %v1974
      %v2281 = vsel %vm2259, %v2248, %v1976
      %v2282 = vsel %vm2259, %v2249, %v1978
      %v2283 = vsel %vm2259, %v2250, %v1980
      %v2284 = vsel %vm2259, %v2251, %v1982
      %v2285 = vsel %vm2259, %v2252, %v1984
      %v2286 = vsel %vm2259, %v2253, %v1986
      %v2287 = vsel %vm2259, %v2254, %v1988
      %v2288 = vsel %vm2259, %v2255, %v1990
      %v2289 = vsel %vm2259, %v2256, %v1992
      %v2290 = vsel %vm2259, %v2257, %v1994
      %v2291 = vsel %vm2259, %v2258, %v1996
      %v2292 = vpack.c.bf16 %v2261, %v2260
      %v2293 = vpack.c.bf16 %v2263, %v2262
      %v2294 = vpack.c.bf16 %v2265, %v2264
      %v2295 = vpack.c.bf16 %v2267, %v2266
      %v2296 = vpack.c.bf16 %v2269, %v2268
      %v2297 = vpack.c.bf16 %v2271, %v2270
      %v2298 = vpack.c.bf16 %v2273, %v2272
      %v2299 = vpack.c.bf16 %v2275, %v2274
      %v2300 = vpack.c.bf16 %v2277, %v2276
      %v2301 = vpack.c.bf16 %v2279, %v2278
      %v2302 = vpack.c.bf16 %v2281, %v2280
      %v2303 = vpack.c.bf16 %v2283, %v2282
      %v2304 = vpack.c.bf16 %v2285, %v2284
      %v2305 = vpack.c.bf16 %v2287, %v2286
      %v2306 = vpack.c.bf16 %v2289, %v2288
      %v2307 = vpack.c.bf16 %v2291, %v2290
      %v2308 = vld [vmem:[%s2] sm:$0xf]
      %v2309 = vld [vmem:[%s2 + $0x4] sm:$0xf]
      %v2310 = vld [vmem:[%s2 + $0x8] sm:$0xf]
      %v2311 = vld [vmem:[%s2 + $0xc] sm:$0x3]
      %v2312 = vld [vmem:[%s3] sm:$0x1]
      %v2314 = vlaneseq
      %v2315 = vshrl.u32 %v2314, 7
      %v2316 = vsub.s32 0, %v2315
      %v2317 = vrot.slane %v2312, %v2316
      %v2323 = vunpack.c.l.b16 %v2308
      %v2324 = vunpack.c.l.b16 %v2309
      %v2325 = vunpack.c.l.b16 %v2310
      %v2326 = vunpack.c.l.b16 %v2311
      %v2327 = vpack.c.b16 %v2324, %v2323
      %v2328 = vpack.c.b16 %v2326, %v2325
      %vm2330 = vcmask 220160
      %v2332 = vsel %vm2330, %v2292, 0
      %v2335 = vsel %vm2330, %v2293, 0
      %v2338 = vsel %vm2330, %v2294, 0
      %v2341 = vsel %vm2330, %v2295, 0
      %v2344 = vsel %vm2330, %v2296, 0
      %v2347 = vsel %vm2330, %v2297, 0
      %v2350 = vsel %vm2330, %v2298, 0
      %v2353 = vsel %vm2330, %v2299, 0
      %v2356 = vsel %vm2330, %v2300, 0
      %v2359 = vsel %vm2330, %v2301, 0
      %v2362 = vsel %vm2330, %v2302, 0
      %v2365 = vsel %vm2330, %v2303, 0
      %v2368 = vsel %vm2330, %v2304, 0
      %v2371 = vsel %vm2330, %v2305, 0
      %v2374 = vsel %vm2330, %v2306, 0
      %v2377 = vsel %vm2330, %v2307, 0
      %vm2379 = vcmask 1044480
      %vm2380 = vcmask 1045504
      %v2381 = vsel %vm2379, 4294967295, 65535
      %v2382 = vsel %vm2380, %v2381, 0
      %v2384 = vand.u32 %v2328, %v2382
      %2386 = vmatprep.subr.bf16.mxu0 0
      %2387 = vmatpush1.bf16.msra.mxu0 0
      %2388 = vmatprep.subr.bf16.mxu0 0
      %2389 = vmatpush1.bf16.msra.mxu0 0
      %2390 = vmatprep.subr.bf16.mxu0 0
      %2391 = vmatpush1.bf16.msra.mxu0 0
      %2392 = vmatprep.subr.bf16.mxu0 0
      %2393 = vmatpush1.bf16.msra.mxu0 0
      %2394 = vmatprep.subr.bf16.mxu0 0
      %2395 = vmatpush1.bf16.msra.mxu0 0
      %2396 = vmatprep.subr.bf16.mxu0 0
      %2397 = vmatpush1.bf16.msra.mxu0 0
      %2398 = vmatprep.subr.bf16.mxu0 0
      %2399 = vmatpush1.bf16.msra.mxu0 %v2384
      %2400 = vmatprep.subr.bf16.mxu0 0
      %2401 = vmatpush1.bf16.msra.mxu0 %v2327
      %2402 = vmatprep.subr.bf16.mxu0 0
      %2403 = vmatpush2.bf16.msra.mxu0 0
      %2404 = vmatprep.subr.bf16.mxu0 0
      %2405 = vmatpush2.bf16.msra.mxu0 0
      %2406 = vmatprep.subr.bf16.mxu0 0
      %2407 = vmatpush2.bf16.msra.mxu0 0
      %2408 = vmatprep.subr.bf16.mxu0 0
      %2409 = vmatpush2.bf16.msra.mxu0 0
      %2410 = vmatprep.subr.bf16.mxu0 0
      %2411 = vmatpush2.bf16.msra.mxu0 0
      %2412 = vmatprep.subr.bf16.mxu0 0
      %2413 = vmatpush2.bf16.msra.mxu0 0
      %2414 = vmatprep.subr.bf16.mxu0 0
      %2415 = vmatpush2.bf16.msra.mxu0 0
      %2416 = vmatprep.subr.bf16.mxu0 0
      %2417 = vmatpush2.bf16.msra.mxu0 0
      %2418 = vmatprep.mubr.bf16.mxu0 0
      %2419 = vmatmul.mubr.bf16.gmra.mxu0 %v2332
      %v2420 = vpop.f32.mrf.mxu0
      %v2421 = vadd.f32 %v2317, %v2420
      %v2422 = vpop.f32.mrf.mxu0
      %v2423 = vpop.f32.mrf.mxu0
      %v2424 = vadd.f32 %v2317, %v2423
      %v2425 = vpop.f32.mrf.mxu0
      %2426 = vmatprep.mubr.bf16.mxu0 0
      %2427 = vmatmul.mubr.bf16.gmra.mxu0 %v2335
      %v2428 = vpop.f32.mrf.mxu0
      %v2429 = vadd.f32 %v2317, %v2428
      %v2430 = vpop.f32.mrf.mxu0
      %v2431 = vpop.f32.mrf.mxu0
      %v2432 = vadd.f32 %v2317, %v2431
      %v2433 = vpop.f32.mrf.mxu0
      %2434 = vmatprep.mubr.bf16.mxu0 0
      %2435 = vmatmul.mubr.bf16.gmra.mxu0 %v2338
      %v2436 = vpop.f32.mrf.mxu0
      %v2437 = vadd.f32 %v2317, %v2436
      %v2438 = vpop.f32.mrf.mxu0
      %v2439 = vpop.f32.mrf.mxu0
      %v2440 = vadd.f32 %v2317, %v2439
      %v2441 = vpop.f32.mrf.mxu0
      %2442 = vmatprep.mubr.bf16.mxu0 0
      %2443 = vmatmul.mubr.bf16.gmra.mxu0 %v2341
      %v2444 = vpop.f32.mrf.mxu0
      %v2445 = vadd.f32 %v2317, %v2444
      %v2446 = vpop.f32.mrf.mxu0
      %v2447 = vpop.f32.mrf.mxu0
      %v2448 = vadd.f32 %v2317, %v2447
      %v2449 = vpop.f32.mrf.mxu0
      %2450 = vmatprep.mubr.bf16.mxu0 0
      %2451 = vmatmul.mubr.bf16.gmra.mxu0 %v2344
      %v2452 = vpop.f32.mrf.mxu0
      %v2453 = vadd.f32 %v2317, %v2452
      %v2454 = vpop.f32.mrf.mxu0
      %v2455 = vpop.f32.mrf.mxu0
      %v2456 = vadd.f32 %v2317, %v2455
      %v2457 = vpop.f32.mrf.mxu0
      %2458 = vmatprep.mubr.bf16.mxu0 0
      %2459 = vmatmul.mubr.bf16.gmra.mxu0 %v2347
      %v2460 = vpop.f32.mrf.mxu0
      %v2461 = vadd.f32 %v2317, %v2460
      %v2462 = vpop.f32.mrf.mxu0
      %v2463 = vpop.f32.mrf.mxu0
      %v2464 = vadd.f32 %v2317, %v2463
      %v2465 = vpop.f32.mrf.mxu0
      %2466 = vmatprep.mubr.bf16.mxu0 0
      %2467 = vmatmul.mubr.bf16.gmra.mxu0 %v2350
      %v2468 = vpop.f32.mrf.mxu0
      %v2469 = vadd.f32 %v2317, %v2468
      %v2470 = vpop.f32.mrf.mxu0
      %v2471 = vpop.f32.mrf.mxu0
      %v2472 = vadd.f32 %v2317, %v2471
      %v2473 = vpop.f32.mrf.mxu0
      %2474 = vmatprep.mubr.bf16.mxu0 0
      %2475 = vmatmul.mubr.bf16.gmra.mxu0 %v2353
      %v2476 = vpop.f32.mrf.mxu0
      %v2477 = vadd.f32 %v2317, %v2476
      %v2478 = vpop.f32.mrf.mxu0
      %v2479 = vpop.f32.mrf.mxu0
      %v2480 = vadd.f32 %v2317, %v2479
      %v2481 = vpop.f32.mrf.mxu0
      %2482 = vmatprep.mubr.bf16.mxu0 0
      %2483 = vmatmul.mubr.bf16.gmra.mxu0 %v2356
      %v2484 = vpop.f32.mrf.mxu0
      %v2485 = vadd.f32 %v2317, %v2484
      %v2486 = vpop.f32.mrf.mxu0
      %v2487 = vpop.f32.mrf.mxu0
      %v2488 = vadd.f32 %v2317, %v2487
      %v2489 = vpop.f32.mrf.mxu0
      %2490 = vmatprep.mubr.bf16.mxu0 0
      %2491 = vmatmul.mubr.bf16.gmra.mxu0 %v2359
      %v2492 = vpop.f32.mrf.mxu0
      %v2493 = vadd.f32 %v2317, %v2492
      %v2494 = vpop.f32.mrf.mxu0
      %v2495 = vpop.f32.mrf.mxu0
      %v2496 = vadd.f32 %v2317, %v2495
      %v2497 = vpop.f32.mrf.mxu0
      %2498 = vmatprep.mubr.bf16.mxu0 0
      %2499 = vmatmul.mubr.bf16.gmra.mxu0 %v2362
      %v2500 = vpop.f32.mrf.mxu0
      %v2501 = vadd.f32 %v2317, %v2500
      %v2502 = vpop.f32.mrf.mxu0
      %v2503 = vpop.f32.mrf.mxu0
      %v2504 = vadd.f32 %v2317, %v2503
      %v2505 = vpop.f32.mrf.mxu0
      %2506 = vmatprep.mubr.bf16.mxu0 0
      %2507 = vmatmul.mubr.bf16.gmra.mxu0 %v2365
      %v2508 = vpop.f32.mrf.mxu0
      %v2509 = vadd.f32 %v2317, %v2508
      %v2510 = vpop.f32.mrf.mxu0
      %v2511 = vpop.f32.mrf.mxu0
      %v2512 = vadd.f32 %v2317, %v2511
      %v2513 = vpop.f32.mrf.mxu0
      %2514 = vmatprep.mubr.bf16.mxu0 0
      %2515 = vmatmul.mubr.bf16.gmra.mxu0 %v2368
      %v2516 = vpop.f32.mrf.mxu0
      %v2517 = vadd.f32 %v2317, %v2516
      %v2518 = vpop.f32.mrf.mxu0
      %v2519 = vpop.f32.mrf.mxu0
      %v2520 = vadd.f32 %v2317, %v2519
      %v2521 = vpop.f32.mrf.mxu0
      %2522 = vmatprep.mubr.bf16.mxu0 0
      %2523 = vmatmul.mubr.bf16.gmra.mxu0 %v2371
      %v2524 = vpop.f32.mrf.mxu0
      %v2525 = vadd.f32 %v2317, %v2524
      %v2526 = vpop.f32.mrf.mxu0
      %v2527 = vpop.f32.mrf.mxu0
      %v2528 = vadd.f32 %v2317, %v2527
      %v2529 = vpop.f32.mrf.mxu0
      %2530 = vmatprep.mubr.bf16.mxu0 0
      %2531 = vmatmul.mubr.bf16.gmra.mxu0 %v2374
      %v2532 = vpop.f32.mrf.mxu0
      %v2533 = vadd.f32 %v2317, %v2532
      %v2534 = vpop.f32.mrf.mxu0
      %v2535 = vpop.f32.mrf.mxu0
      %v2536 = vadd.f32 %v2317, %v2535
      %v2537 = vpop.f32.mrf.mxu0
      %2538 = vmatprep.mubr.bf16.mxu0 0
      %2539 = vmatmul.mubr.bf16.gmra.mxu0 %v2377
      %v2540 = vpop.f32.mrf.mxu0
      %v2541 = vadd.f32 %v2317, %v2540
      %v2542 = vpop.f32.mrf.mxu0
      %v2543 = vpop.f32.mrf.mxu0
      %v2544 = vadd.f32 %v2317, %v2543
      %v2545 = vpop.f32.mrf.mxu0
      %2546 = vdwg.mxu0
      %v2547 = vmax.f32 %v2421, 0.0
      %v2548 = vmax.f32 %v2424, 0.0
      %v2549 = vmax.f32 %v2429, 0.0
      %v2550 = vmax.f32 %v2432, 0.0
      %v2551 = vmax.f32 %v2437, 0.0
      %v2552 = vmax.f32 %v2440, 0.0
      %v2553 = vmax.f32 %v2445, 0.0
      %v2554 = vmax.f32 %v2448, 0.0
      %v2555 = vmax.f32 %v2453, 0.0
      %v2556 = vmax.f32 %v2456, 0.0
      %v2557 = vmax.f32 %v2461, 0.0
      %v2558 = vmax.f32 %v2464, 0.0
      %v2559 = vmax.f32 %v2469, 0.0
      %v2560 = vmax.f32 %v2472, 0.0
      %v2561 = vmax.f32 %v2477, 0.0
      %v2562 = vmax.f32 %v2480, 0.0
      %v2563 = vmax.f32 %v2485, 0.0
      %v2564 = vmax.f32 %v2488, 0.0
      %v2565 = vmax.f32 %v2493, 0.0
      %v2566 = vmax.f32 %v2496, 0.0
      %v2567 = vmax.f32 %v2501, 0.0
      %v2568 = vmax.f32 %v2504, 0.0
      %v2569 = vmax.f32 %v2509, 0.0
      %v2570 = vmax.f32 %v2512, 0.0
      %v2571 = vmax.f32 %v2517, 0.0
      %v2572 = vmax.f32 %v2520, 0.0
      %v2573 = vmax.f32 %v2525, 0.0
      %v2574 = vmax.f32 %v2528, 0.0
      %v2575 = vmax.f32 %v2533, 0.0
      %v2576 = vmax.f32 %v2536, 0.0
      %v2577 = vmax.f32 %v2541, 0.0
      %v2578 = vmax.f32 %v2544, 0.0
      %s2579 = scalar_lea.vmem [#allocation3], 24
      %2580 = vst.msk [vmem:[%s2579 + $0x1] sm:$0xff] %vm539, %v2547
      %2581 = vst.msk [vmem:[%s2579 + $0x9] sm:$0xff] %vm539, %v2548
      %2582 = vst.msk [vmem:[%s2579 + $0x19] sm:$0xff] %vm539, %v2549
      %2583 = vst.msk [vmem:[%s2579 + $0x21] sm:$0xff] %vm539, %v2550
      %2584 = vst.msk [vmem:[%s2579 + $0x31] sm:$0xff] %vm539, %v2551
      %2585 = vst.msk [vmem:[%s2579 + $0x39] sm:$0xff] %vm539, %v2552
      %2586 = vst.msk [vmem:[%s2579 + $0x49] sm:$0xff] %vm539, %v2553
      %2587 = vst.msk [vmem:[%s2579 + $0x51] sm:$0xff] %vm539, %v2554
      %2588 = vst.msk [vmem:[%s2579 + $0x61] sm:$0xff] %vm539, %v2555
      %2589 = vst.msk [vmem:[%s2579 + $0x69] sm:$0xff] %vm539, %v2556
      %2590 = vst.msk [vmem:[%s2579 + $0x79] sm:$0xff] %vm539, %v2557
      %2591 = vst.msk [vmem:[%s2579 + $0x81] sm:$0xff] %vm539, %v2558
      %2592 = vst.msk [vmem:[%s2579 + $0x91] sm:$0xff] %vm539, %v2559
      %2593 = vst.msk [vmem:[%s2579 + $0x99] sm:$0xff] %vm539, %v2560
      %2594 = vst.msk [vmem:[%s2579 + $0xa9] sm:$0xff] %vm539, %v2561
      %2595 = vst.msk [vmem:[%s2579 + $0xb1] sm:$0xff] %vm539, %v2562
      %2596 = vst.msk [vmem:[%s2579 + $0xc1] sm:$0xff] %vm539, %v2563
      %2597 = vst.msk [vmem:[%s2579 + $0xc9] sm:$0xff] %vm539, %v2564
      %2598 = vst.msk [vmem:[%s2579 + $0xd9] sm:$0xff] %vm539, %v2565
      %2599 = vst.msk [vmem:[%s2579 + $0xe1] sm:$0xff] %vm539, %v2566
      %2600 = vst.msk [vmem:[%s2579 + $0xf1] sm:$0xff] %vm539, %v2567
      %2601 = vst.msk [vmem:[%s2579 + $0xf9] sm:$0xff] %vm539, %v2568
      %2602 = vst.msk [vmem:[%s2579 + $0x109] sm:$0xff] %vm539, %v2569
      %2603 = vst.msk [vmem:[%s2579 + $0x111] sm:$0xff] %vm539, %v2570
      %2604 = vst.msk [vmem:[%s2579 + $0x121] sm:$0xff] %vm539, %v2571
      %2605 = vst.msk [vmem:[%s2579 + $0x129] sm:$0xff] %vm539, %v2572
      %2606 = vst.msk [vmem:[%s2579 + $0x139] sm:$0xff] %vm539, %v2573
      %2607 = vst.msk [vmem:[%s2579 + $0x141] sm:$0xff] %vm539, %v2574
      %2608 = vst.msk [vmem:[%s2579 + $0x151] sm:$0xff] %vm539, %v2575
      %2609 = vst.msk [vmem:[%s2579 + $0x159] sm:$0xff] %vm539, %v2576
      %2610 = vst.msk [vmem:[%s2579 + $0x169] sm:$0xff] %vm539, %v2577
      %2611 = vst.msk [vmem:[%s2579 + $0x171] sm:$0xff] %vm539, %v2578
      %v2612 = vld [vmem:[#allocation3] sm:$0xff]
      %v2613 = vld [vmem:[#allocation3 + $0x8] sm:$0xff]
      %v2614 = vld [vmem:[#allocation3 + $0x18] sm:$0xff]
      %v2615 = vld [vmem:[#allocation3 + $0x20] sm:$0xff]
      %v2616 = vld [vmem:[#allocation3 + $0x30] sm:$0xff]
      %v2617 = vld [vmem:[#allocation3 + $0x38] sm:$0xff]
      %v2618 = vld [vmem:[#allocation3 + $0x48] sm:$0xff]
      %v2619 = vld [vmem:[#allocation3 + $0x50] sm:$0xff]
      %v2620 = vld [vmem:[#allocation3 + $0x60] sm:$0xff]
      %v2621 = vld [vmem:[#allocation3 + $0x68] sm:$0xff]
      %v2622 = vld [vmem:[#allocation3 + $0x78] sm:$0xff]
      %v2623 = vld [vmem:[#allocation3 + $0x80] sm:$0xff]
      %v2624 = vld [vmem:[#allocation3 + $0x90] sm:$0xff]
      %v2625 = vld [vmem:[#allocation3 + $0x98] sm:$0xff]
      %v2626 = vld [vmem:[#allocation3 + $0xa8] sm:$0xff]
      %v2627 = vld [vmem:[#allocation3 + $0xb0] sm:$0xff]
      %v2628 = vld [vmem:[#allocation3 + $0xc0] sm:$0xff]
      %v2629 = vld [vmem:[#allocation3 + $0xc8] sm:$0xff]
      %v2630 = vld [vmem:[#allocation3 + $0xd8] sm:$0xff]
      %v2631 = vld [vmem:[#allocation3 + $0xe0] sm:$0xff]
      %v2632 = vld [vmem:[#allocation3 + $0xf0] sm:$0xff]
      %v2633 = vld [vmem:[#allocation3 + $0xf8] sm:$0xff]
      %v2634 = vld [vmem:[#allocation3 + $0x108] sm:$0xff]
      %v2635 = vld [vmem:[#allocation3 + $0x110] sm:$0xff]
      %v2636 = vld [vmem:[#allocation3 + $0x120] sm:$0xff]
      %v2637 = vld [vmem:[#allocation3 + $0x128] sm:$0xff]
      %v2638 = vld [vmem:[#allocation3 + $0x138] sm:$0xff]
      %v2639 = vld [vmem:[#allocation3 + $0x140] sm:$0xff]
      %v2640 = vld [vmem:[#allocation3 + $0x150] sm:$0xff]
      %v2641 = vld [vmem:[#allocation3 + $0x158] sm:$0xff]
      %v2642 = vld [vmem:[#allocation3 + $0x168] sm:$0xff]
      %v2643 = vld [vmem:[#allocation3 + $0x170] sm:$0xff]
      %v2644 = vld [vmem:[%s2579] sm:$0xff]
      %v2645 = vld [vmem:[%s2579 + $0x8] sm:$0xff]
      %v2646 = vld [vmem:[%s2579 + $0x18] sm:$0xff]
      %v2647 = vld [vmem:[%s2579 + $0x20] sm:$0xff]
      %v2648 = vld [vmem:[%s2579 + $0x30] sm:$0xff]
      %v2649 = vld [vmem:[%s2579 + $0x38] sm:$0xff]
      %v2650 = vld [vmem:[%s2579 + $0x48] sm:$0xff]
      %v2651 = vld [vmem:[%s2579 + $0x50] sm:$0xff]
      %v2652 = vld [vmem:[%s2579 + $0x60] sm:$0xff]
      %v2653 = vld [vmem:[%s2579 + $0x68] sm:$0xff]
      %v2654 = vld [vmem:[%s2579 + $0x78] sm:$0xff]
      %v2655 = vld [vmem:[%s2579 + $0x80] sm:$0xff]
      %v2656 = vld [vmem:[%s2579 + $0x90] sm:$0xff]
      %v2657 = vld [vmem:[%s2579 + $0x98] sm:$0xff]
      %v2658 = vld [vmem:[%s2579 + $0xa8] sm:$0xff]
      %v2659 = vld [vmem:[%s2579 + $0xb0] sm:$0xff]
      %v2660 = vld [vmem:[%s2579 + $0xc0] sm:$0xff]
      %v2661 = vld [vmem:[%s2579 + $0xc8] sm:$0xff]
      %v2662 = vld [vmem:[%s2579 + $0xd8] sm:$0xff]
      %v2663 = vld [vmem:[%s2579 + $0xe0] sm:$0xff]
      %v2664 = vld [vmem:[%s2579 + $0xf0] sm:$0xff]
      %v2665 = vld [vmem:[%s2579 + $0xf8] sm:$0xff]
      %v2666 = vld [vmem:[%s2579 + $0x108] sm:$0xff]
      %v2667 = vld [vmem:[%s2579 + $0x110] sm:$0xff]
      %v2668 = vld [vmem:[%s2579 + $0x120] sm:$0xff]
      %v2669 = vld [vmem:[%s2579 + $0x128] sm:$0xff]
      %v2670 = vld [vmem:[%s2579 + $0x138] sm:$0xff]
      %v2671 = vld [vmem:[%s2579 + $0x140] sm:$0xff]
      %v2672 = vld [vmem:[%s2579 + $0x150] sm:$0xff]
      %v2673 = vld [vmem:[%s2579 + $0x158] sm:$0xff]
      %v2674 = vld [vmem:[%s2579 + $0x168] sm:$0xff]
      %v2675 = vld [vmem:[%s2579 + $0x170] sm:$0xff]
      %s2676 = scalar_lea.vmem [#allocation3], 48
      %v2677 = vld [vmem:[%s2676] sm:$0xff]
      %v2678 = vld [vmem:[%s2676 + $0x8] sm:$0xff]
      %v2679 = vld [vmem:[%s2676 + $0x18] sm:$0xff]
      %v2680 = vld [vmem:[%s2676 + $0x20] sm:$0xff]
      %v2681 = vld [vmem:[%s2676 + $0x30] sm:$0xff]
      %v2682 = vld [vmem:[%s2676 + $0x38] sm:$0xff]
      %v2683 = vld [vmem:[%s2676 + $0x48] sm:$0xff]
      %v2684 = vld [vmem:[%s2676 + $0x50] sm:$0xff]
      %v2685 = vld [vmem:[%s2676 + $0x60] sm:$0xff]
      %v2686 = vld [vmem:[%s2676 + $0x68] sm:$0xff]
      %v2687 = vld [vmem:[%s2676 + $0x78] sm:$0xff]
      %v2688 = vld [vmem:[%s2676 + $0x80] sm:$0xff]
      %v2689 = vld [vmem:[%s2676 + $0x90] sm:$0xff]
      %v2690 = vld [vmem:[%s2676 + $0x98] sm:$0xff]
      %v2691 = vld [vmem:[%s2676 + $0xa8] sm:$0xff]
      %v2692 = vld [vmem:[%s2676 + $0xb0] sm:$0xff]
      %v2693 = vld [vmem:[%s2676 + $0xc0] sm:$0xff]
      %v2694 = vld [vmem:[%s2676 + $0xc8] sm:$0xff]
      %v2695 = vld [vmem:[%s2676 + $0xd8] sm:$0xff]
      %v2696 = vld [vmem:[%s2676 + $0xe0] sm:$0xff]
      %v2697 = vld [vmem:[%s2676 + $0xf0] sm:$0xff]
      %v2698 = vld [vmem:[%s2676 + $0xf8] sm:$0xff]
      %v2699 = vld [vmem:[%s2676 + $0x108] sm:$0xff]
      %v2700 = vld [vmem:[%s2676 + $0x110] sm:$0xff]
      %v2701 = vld [vmem:[%s2676 + $0x120] sm:$0xff]
      %v2702 = vld [vmem:[%s2676 + $0x128] sm:$0xff]
      %v2703 = vld [vmem:[%s2676 + $0x138] sm:$0xff]
      %v2704 = vld [vmem:[%s2676 + $0x140] sm:$0xff]
      %v2705 = vld [vmem:[%s2676 + $0x150] sm:$0xff]
      %v2706 = vld [vmem:[%s2676 + $0x158] sm:$0xff]
      %v2707 = vld [vmem:[%s2676 + $0x168] sm:$0xff]
      %v2708 = vld [vmem:[%s2676 + $0x170] sm:$0xff]
      %v2709 = vld [vmem:[#allocation3 + $0x1] sm:$0xff]
      %v2710 = vld [vmem:[#allocation3 + $0x9] sm:$0xff]
      %v2711 = vld [vmem:[#allocation3 + $0x19] sm:$0xff]
      %v2712 = vld [vmem:[#allocation3 + $0x21] sm:$0xff]
      %v2713 = vld [vmem:[#allocation3 + $0x31] sm:$0xff]
      %v2714 = vld [vmem:[#allocation3 + $0x39] sm:$0xff]
      %v2715 = vld [vmem:[#allocation3 + $0x49] sm:$0xff]
      %v2716 = vld [vmem:[#allocation3 + $0x51] sm:$0xff]
      %v2717 = vld [vmem:[#allocation3 + $0x61] sm:$0xff]
      %v2718 = vld [vmem:[#allocation3 + $0x69] sm:$0xff]
      %v2719 = vld [vmem:[#allocation3 + $0x79] sm:$0xff]
      %v2720 = vld [vmem:[#allocation3 + $0x81] sm:$0xff]
      %v2721 = vld [vmem:[#allocation3 + $0x91] sm:$0xff]
      %v2722 = vld [vmem:[#allocation3 + $0x99] sm:$0xff]
      %v2723 = vld [vmem:[#allocation3 + $0xa9] sm:$0xff]
      %v2724 = vld [vmem:[#allocation3 + $0xb1] sm:$0xff]
      %v2725 = vld [vmem:[#allocation3 + $0xc1] sm:$0xff]
      %v2726 = vld [vmem:[#allocation3 + $0xc9] sm:$0xff]
      %v2727 = vld [vmem:[#allocation3 + $0xd9] sm:$0xff]
      %v2728 = vld [vmem:[#allocation3 + $0xe1] sm:$0xff]
      %v2729 = vld [vmem:[#allocation3 + $0xf1] sm:$0xff]
      %v2730 = vld [vmem:[#allocation3 + $0xf9] sm:$0xff]
      %v2731 = vld [vmem:[#allocation3 + $0x109] sm:$0xff]
      %v2732 = vld [vmem:[#allocation3 + $0x111] sm:$0xff]
      %v2733 = vld [vmem:[#allocation3 + $0x121] sm:$0xff]
      %v2734 = vld [vmem:[#allocation3 + $0x129] sm:$0xff]
      %v2735 = vld [vmem:[#allocation3 + $0x139] sm:$0xff]
      %v2736 = vld [vmem:[#allocation3 + $0x141] sm:$0xff]
      %v2737 = vld [vmem:[#allocation3 + $0x151] sm:$0xff]
      %v2738 = vld [vmem:[#allocation3 + $0x159] sm:$0xff]
      %v2739 = vld [vmem:[#allocation3 + $0x169] sm:$0xff]
      %v2740 = vld [vmem:[#allocation3 + $0x171] sm:$0xff]
      %v2741 = vld [vmem:[%s2579 + $0x1] sm:$0xff]
      %v2742 = vld [vmem:[%s2579 + $0x9] sm:$0xff]
      %v2743 = vld [vmem:[%s2579 + $0x19] sm:$0xff]
      %v2744 = vld [vmem:[%s2579 + $0x21] sm:$0xff]
      %v2745 = vld [vmem:[%s2579 + $0x31] sm:$0xff]
      %v2746 = vld [vmem:[%s2579 + $0x39] sm:$0xff]
      %v2747 = vld [vmem:[%s2579 + $0x49] sm:$0xff]
      %v2748 = vld [vmem:[%s2579 + $0x51] sm:$0xff]
      %v2749 = vld [vmem:[%s2579 + $0x61] sm:$0xff]
      %v2750 = vld [vmem:[%s2579 + $0x69] sm:$0xff]
      %v2751 = vld [vmem:[%s2579 + $0x79] sm:$0xff]
      %v2752 = vld [vmem:[%s2579 + $0x81] sm:$0xff]
      %v2753 = vld [vmem:[%s2579 + $0x91] sm:$0xff]
      %v2754 = vld [vmem:[%s2579 + $0x99] sm:$0xff]
      %v2755 = vld [vmem:[%s2579 + $0xa9] sm:$0xff]
      %v2756 = vld [vmem:[%s2579 + $0xb1] sm:$0xff]
      %v2757 = vld [vmem:[%s2579 + $0xc1] sm:$0xff]
      %v2758 = vld [vmem:[%s2579 + $0xc9] sm:$0xff]
      %v2759 = vld [vmem:[%s2579 + $0xd9] sm:$0xff]
      %v2760 = vld [vmem:[%s2579 + $0xe1] sm:$0xff]
      %v2761 = vld [vmem:[%s2579 + $0xf1] sm:$0xff]
      %v2762 = vld [vmem:[%s2579 + $0xf9] sm:$0xff]
      %v2763 = vld [vmem:[%s2579 + $0x109] sm:$0xff]
      %v2764 = vld [vmem:[%s2579 + $0x111] sm:$0xff]
      %v2765 = vld [vmem:[%s2579 + $0x121] sm:$0xff]
      %v2766 = vld [vmem:[%s2579 + $0x129] sm:$0xff]
      %v2767 = vld [vmem:[%s2579 + $0x139] sm:$0xff]
      %v2768 = vld [vmem:[%s2579 + $0x141] sm:$0xff]
      %v2769 = vld [vmem:[%s2579 + $0x151] sm:$0xff]
      %v2770 = vld [vmem:[%s2579 + $0x159] sm:$0xff]
      %v2771 = vld [vmem:[%s2579 + $0x169] sm:$0xff]
      %v2772 = vld [vmem:[%s2579 + $0x171] sm:$0xff]
      %v2773 = vld [vmem:[%s2676 + $0x1] sm:$0xff]
      %v2774 = vld [vmem:[%s2676 + $0x9] sm:$0xff]
      %v2775 = vld [vmem:[%s2676 + $0x19] sm:$0xff]
      %v2776 = vld [vmem:[%s2676 + $0x21] sm:$0xff]
      %v2777 = vld [vmem:[%s2676 + $0x31] sm:$0xff]
      %v2778 = vld [vmem:[%s2676 + $0x39] sm:$0xff]
      %v2779 = vld [vmem:[%s2676 + $0x49] sm:$0xff]
      %v2780 = vld [vmem:[%s2676 + $0x51] sm:$0xff]
      %v2781 = vld [vmem:[%s2676 + $0x61] sm:$0xff]
      %v2782 = vld [vmem:[%s2676 + $0x69] sm:$0xff]
      %v2783 = vld [vmem:[%s2676 + $0x79] sm:$0xff]
      %v2784 = vld [vmem:[%s2676 + $0x81] sm:$0xff]
      %v2785 = vld [vmem:[%s2676 + $0x91] sm:$0xff]
      %v2786 = vld [vmem:[%s2676 + $0x99] sm:$0xff]
      %v2787 = vld [vmem:[%s2676 + $0xa9] sm:$0xff]
      %v2788 = vld [vmem:[%s2676 + $0xb1] sm:$0xff]
      %v2789 = vld [vmem:[%s2676 + $0xc1] sm:$0xff]
      %v2790 = vld [vmem:[%s2676 + $0xc9] sm:$0xff]
      %v2791 = vld [vmem:[%s2676 + $0xd9] sm:$0xff]
      %v2792 = vld [vmem:[%s2676 + $0xe1] sm:$0xff]
      %v2793 = vld [vmem:[%s2676 + $0xf1] sm:$0xff]
      %v2794 = vld [vmem:[%s2676 + $0xf9] sm:$0xff]
      %v2795 = vld [vmem:[%s2676 + $0x109] sm:$0xff]
      %v2796 = vld [vmem:[%s2676 + $0x111] sm:$0xff]
      %v2797 = vld [vmem:[%s2676 + $0x121] sm:$0xff]
      %v2798 = vld [vmem:[%s2676 + $0x129] sm:$0xff]
      %v2799 = vld [vmem:[%s2676 + $0x139] sm:$0xff]
      %v2800 = vld [vmem:[%s2676 + $0x141] sm:$0xff]
      %v2801 = vld [vmem:[%s2676 + $0x151] sm:$0xff]
      %v2802 = vld [vmem:[%s2676 + $0x159] sm:$0xff]
      %v2803 = vld [vmem:[%s2676 + $0x169] sm:$0xff]
      %v2804 = vld [vmem:[%s2676 + $0x171] sm:$0xff]
      %v2805 = vld [vmem:[#allocation3 + $0x2] sm:$0xff]
      %v2806 = vld [vmem:[#allocation3 + $0xa] sm:$0xff]
      %v2807 = vld [vmem:[#allocation3 + $0x1a] sm:$0xff]
      %v2808 = vld [vmem:[#allocation3 + $0x22] sm:$0xff]
      %v2809 = vld [vmem:[#allocation3 + $0x32] sm:$0xff]
      %v2810 = vld [vmem:[#allocation3 + $0x3a] sm:$0xff]
      %v2811 = vld [vmem:[#allocation3 + $0x4a] sm:$0xff]
      %v2812 = vld [vmem:[#allocation3 + $0x52] sm:$0xff]
      %v2813 = vld [vmem:[#allocation3 + $0x62] sm:$0xff]
      %v2814 = vld [vmem:[#allocation3 + $0x6a] sm:$0xff]
      %v2815 = vld [vmem:[#allocation3 + $0x7a] sm:$0xff]
      %v2816 = vld [vmem:[#allocation3 + $0x82] sm:$0xff]
      %v2817 = vld [vmem:[#allocation3 + $0x92] sm:$0xff]
      %v2818 = vld [vmem:[#allocation3 + $0x9a] sm:$0xff]
      %v2819 = vld [vmem:[#allocation3 + $0xaa] sm:$0xff]
      %v2820 = vld [vmem:[#allocation3 + $0xb2] sm:$0xff]
      %v2821 = vld [vmem:[#allocation3 + $0xc2] sm:$0xff]
      %v2822 = vld [vmem:[#allocation3 + $0xca] sm:$0xff]
      %v2823 = vld [vmem:[#allocation3 + $0xda] sm:$0xff]
      %v2824 = vld [vmem:[#allocation3 + $0xe2] sm:$0xff]
      %v2825 = vld [vmem:[#allocation3 + $0xf2] sm:$0xff]
      %v2826 = vld [vmem:[#allocation3 + $0xfa] sm:$0xff]
      %v2827 = vld [vmem:[#allocation3 + $0x10a] sm:$0xff]
      %v2828 = vld [vmem:[#allocation3 + $0x112] sm:$0xff]
      %v2829 = vld [vmem:[#allocation3 + $0x122] sm:$0xff]
      %v2830 = vld [vmem:[#allocation3 + $0x12a] sm:$0xff]
      %v2831 = vld [vmem:[#allocation3 + $0x13a] sm:$0xff]
      %v2832 = vld [vmem:[#allocation3 + $0x142] sm:$0xff]
      %v2833 = vld [vmem:[#allocation3 + $0x152] sm:$0xff]
      %v2834 = vld [vmem:[#allocation3 + $0x15a] sm:$0xff]
      %v2835 = vld [vmem:[#allocation3 + $0x16a] sm:$0xff]
      %v2836 = vld [vmem:[#allocation3 + $0x172] sm:$0xff]
      %v2837 = vld [vmem:[%s2579 + $0x2] sm:$0xff]
      %v2838 = vld [vmem:[%s2579 + $0xa] sm:$0xff]
      %v2839 = vld [vmem:[%s2579 + $0x1a] sm:$0xff]
      %v2840 = vld [vmem:[%s2579 + $0x22] sm:$0xff]
      %v2841 = vld [vmem:[%s2579 + $0x32] sm:$0xff]
      %v2842 = vld [vmem:[%s2579 + $0x3a] sm:$0xff]
      %v2843 = vld [vmem:[%s2579 + $0x4a] sm:$0xff]
      %v2844 = vld [vmem:[%s2579 + $0x52] sm:$0xff]
      %v2845 = vld [vmem:[%s2579 + $0x62] sm:$0xff]
      %v2846 = vld [vmem:[%s2579 + $0x6a] sm:$0xff]
      %v2847 = vld [vmem:[%s2579 + $0x7a] sm:$0xff]
      %v2848 = vld [vmem:[%s2579 + $0x82] sm:$0xff]
      %v2849 = vld [vmem:[%s2579 + $0x92] sm:$0xff]
      %v2850 = vld [vmem:[%s2579 + $0x9a] sm:$0xff]
      %v2851 = vld [vmem:[%s2579 + $0xaa] sm:$0xff]
      %v2852 = vld [vmem:[%s2579 + $0xb2] sm:$0xff]
      %v2853 = vld [vmem:[%s2579 + $0xc2] sm:$0xff]
      %v2854 = vld [vmem:[%s2579 + $0xca] sm:$0xff]
      %v2855 = vld [vmem:[%s2579 + $0xda] sm:$0xff]
      %v2856 = vld [vmem:[%s2579 + $0xe2] sm:$0xff]
      %v2857 = vld [vmem:[%s2579 + $0xf2] sm:$0xff]
      %v2858 = vld [vmem:[%s2579 + $0xfa] sm:$0xff]
      %v2859 = vld [vmem:[%s2579 + $0x10a] sm:$0xff]
      %v2860 = vld [vmem:[%s2579 + $0x112] sm:$0xff]
      %v2861 = vld [vmem:[%s2579 + $0x122] sm:$0xff]
      %v2862 = vld [vmem:[%s2579 + $0x12a] sm:$0xff]
      %v2863 = vld [vmem:[%s2579 + $0x13a] sm:$0xff]
      %v2864 = vld [vmem:[%s2579 + $0x142] sm:$0xff]
      %v2865 = vld [vmem:[%s2579 + $0x152] sm:$0xff]
      %v2866 = vld [vmem:[%s2579 + $0x15a] sm:$0xff]
      %v2867 = vld [vmem:[%s2579 + $0x16a] sm:$0xff]
      %v2868 = vld [vmem:[%s2579 + $0x172] sm:$0xff]
      %v2869 = vld [vmem:[%s2676 + $0x2] sm:$0xff]
      %v2870 = vld [vmem:[%s2676 + $0xa] sm:$0xff]
      %v2871 = vld [vmem:[%s2676 + $0x1a] sm:$0xff]
      %v2872 = vld [vmem:[%s2676 + $0x22] sm:$0xff]
      %v2873 = vld [vmem:[%s2676 + $0x32] sm:$0xff]
      %v2874 = vld [vmem:[%s2676 + $0x3a] sm:$0xff]
      %v2875 = vld [vmem:[%s2676 + $0x4a] sm:$0xff]
      %v2876 = vld [vmem:[%s2676 + $0x52] sm:$0xff]
      %v2877 = vld [vmem:[%s2676 + $0x62] sm:$0xff]
      %v2878 = vld [vmem:[%s2676 + $0x6a] sm:$0xff]
      %v2879 = vld [vmem:[%s2676 + $0x7a] sm:$0xff]
      %v2880 = vld [vmem:[%s2676 + $0x82] sm:$0xff]
      %v2881 = vld [vmem:[%s2676 + $0x92] sm:$0xff]
      %v2882 = vld [vmem:[%s2676 + $0x9a] sm:$0xff]
      %v2883 = vld [vmem:[%s2676 + $0xaa] sm:$0xff]
      %v2884 = vld [vmem:[%s2676 + $0xb2] sm:$0xff]
      %v2885 = vld [vmem:[%s2676 + $0xc2] sm:$0xff]
      %v2886 = vld [vmem:[%s2676 + $0xca] sm:$0xff]
      %v2887 = vld [vmem:[%s2676 + $0xda] sm:$0xff]
      %v2888 = vld [vmem:[%s2676 + $0xe2] sm:$0xff]
      %v2889 = vld [vmem:[%s2676 + $0xf2] sm:$0xff]
      %v2890 = vld [vmem:[%s2676 + $0xfa] sm:$0xff]
      %v2891 = vld [vmem:[%s2676 + $0x10a] sm:$0xff]
      %v2892 = vld [vmem:[%s2676 + $0x112] sm:$0xff]
      %v2893 = vld [vmem:[%s2676 + $0x122] sm:$0xff]
      %v2894 = vld [vmem:[%s2676 + $0x12a] sm:$0xff]
      %v2895 = vld [vmem:[%s2676 + $0x13a] sm:$0xff]
      %v2896 = vld [vmem:[%s2676 + $0x142] sm:$0xff]
      %v2897 = vld [vmem:[%s2676 + $0x152] sm:$0xff]
      %v2898 = vld [vmem:[%s2676 + $0x15a] sm:$0xff]
      %v2899 = vld [vmem:[%s2676 + $0x16a] sm:$0xff]
      %v2900 = vld [vmem:[%s2676 + $0x172] sm:$0xff]
      %2933 = vrot.lane.b32.xlu0 %v2644, 32
      %v2934 = vpop.permute.xlu0 %2933
      %2935 = vrot.lane.b32.xlu0 %v2645, 32
      %v2936 = vpop.permute.xlu0 %2935
      %2937 = vrot.lane.b32.xlu0 %v2646, 32
      %v2938 = vpop.permute.xlu0 %2937
      %2939 = vrot.lane.b32.xlu0 %v2647, 32
      %v2940 = vpop.permute.xlu0 %2939
      %2941 = vrot.lane.b32.xlu0 %v2648, 32
      %v2942 = vpop.permute.xlu0 %2941
      %2943 = vrot.lane.b32.xlu0 %v2649, 32
      %v2944 = vpop.permute.xlu0 %2943
      %2945 = vrot.lane.b32.xlu0 %v2650, 32
      %v2946 = vpop.permute.xlu0 %2945
      %2947 = vrot.lane.b32.xlu0 %v2651, 32
      %v2948 = vpop.permute.xlu0 %2947
      %2949 = vrot.lane.b32.xlu0 %v2652, 32
      %v2950 = vpop.permute.xlu0 %2949
      %2951 = vrot.lane.b32.xlu0 %v2653, 32
      %v2952 = vpop.permute.xlu0 %2951
      %2953 = vrot.lane.b32.xlu0 %v2654, 32
      %v2954 = vpop.permute.xlu0 %2953
      %2955 = vrot.lane.b32.xlu0 %v2655, 32
      %v2956 = vpop.permute.xlu0 %2955
      %2957 = vrot.lane.b32.xlu0 %v2656, 32
      %v2958 = vpop.permute.xlu0 %2957
      %2959 = vrot.lane.b32.xlu0 %v2657, 32
      %v2960 = vpop.permute.xlu0 %2959
      %2961 = vrot.lane.b32.xlu0 %v2658, 32
      %v2962 = vpop.permute.xlu0 %2961
      %2963 = vrot.lane.b32.xlu0 %v2659, 32
      %v2964 = vpop.permute.xlu0 %2963
      %2965 = vrot.lane.b32.xlu0 %v2660, 32
      %v2966 = vpop.permute.xlu0 %2965
      %2967 = vrot.lane.b32.xlu0 %v2661, 32
      %v2968 = vpop.permute.xlu0 %2967
      %2969 = vrot.lane.b32.xlu0 %v2662, 32
      %v2970 = vpop.permute.xlu0 %2969
      %2971 = vrot.lane.b32.xlu0 %v2663, 32
      %v2972 = vpop.permute.xlu0 %2971
      %2973 = vrot.lane.b32.xlu0 %v2664, 32
      %v2974 = vpop.permute.xlu0 %2973
      %2975 = vrot.lane.b32.xlu0 %v2665, 32
      %v2976 = vpop.permute.xlu0 %2975
      %2977 = vrot.lane.b32.xlu0 %v2666, 32
      %v2978 = vpop.permute.xlu0 %2977
      %2979 = vrot.lane.b32.xlu0 %v2667, 32
      %v2980 = vpop.permute.xlu0 %2979
      %2981 = vrot.lane.b32.xlu0 %v2668, 32
      %v2982 = vpop.permute.xlu0 %2981
      %2983 = vrot.lane.b32.xlu0 %v2669, 32
      %v2984 = vpop.permute.xlu0 %2983
      %2985 = vrot.lane.b32.xlu0 %v2670, 32
      %v2986 = vpop.permute.xlu0 %2985
      %2987 = vrot.lane.b32.xlu0 %v2671, 32
      %v2988 = vpop.permute.xlu0 %2987
      %2989 = vrot.lane.b32.xlu0 %v2672, 32
      %v2990 = vpop.permute.xlu0 %2989
      %2991 = vrot.lane.b32.xlu0 %v2673, 32
      %v2992 = vpop.permute.xlu0 %2991
      %2993 = vrot.lane.b32.xlu0 %v2674, 32
      %v2994 = vpop.permute.xlu0 %2993
      %2995 = vrot.lane.b32.xlu0 %v2675, 32
      %v2996 = vpop.permute.xlu0 %2995
      %3061 = vrot.lane.b32.xlu0 %v2677, 64
      %v3062 = vpop.permute.xlu0 %3061
      %3063 = vrot.lane.b32.xlu0 %v2678, 64
      %v3064 = vpop.permute.xlu0 %3063
      %3065 = vrot.lane.b32.xlu0 %v2679, 64
      %v3066 = vpop.permute.xlu0 %3065
      %3067 = vrot.lane.b32.xlu0 %v2680, 64
      %v3068 = vpop.permute.xlu0 %3067
      %3069 = vrot.lane.b32.xlu0 %v2681, 64
      %v3070 = vpop.permute.xlu0 %3069
      %3071 = vrot.lane.b32.xlu0 %v2682, 64
      %v3072 = vpop.permute.xlu0 %3071
      %3073 = vrot.lane.b32.xlu0 %v2683, 64
      %v3074 = vpop.permute.xlu0 %3073
      %3075 = vrot.lane.b32.xlu0 %v2684, 64
      %v3076 = vpop.permute.xlu0 %3075
      %3077 = vrot.lane.b32.xlu0 %v2685, 64
      %v3078 = vpop.permute.xlu0 %3077
      %3079 = vrot.lane.b32.xlu0 %v2686, 64
      %v3080 = vpop.permute.xlu0 %3079
      %3081 = vrot.lane.b32.xlu0 %v2687, 64
      %v3082 = vpop.permute.xlu0 %3081
      %3083 = vrot.lane.b32.xlu0 %v2688, 64
      %v3084 = vpop.permute.xlu0 %3083
      %3085 = vrot.lane.b32.xlu0 %v2689, 64
      %v3086 = vpop.permute.xlu0 %3085
      %3087 = vrot.lane.b32.xlu0 %v2690, 64
      %v3088 = vpop.permute.xlu0 %3087
      %3089 = vrot.lane.b32.xlu0 %v2691, 64
      %v3090 = vpop.permute.xlu0 %3089
      %3091 = vrot.lane.b32.xlu0 %v2692, 64
      %v3092 = vpop.permute.xlu0 %3091
      %3093 = vrot.lane.b32.xlu0 %v2693, 64
      %v3094 = vpop.permute.xlu0 %3093
      %3095 = vrot.lane.b32.xlu0 %v2694, 64
      %v3096 = vpop.permute.xlu0 %3095
      %3097 = vrot.lane.b32.xlu0 %v2695, 64
      %v3098 = vpop.permute.xlu0 %3097
      %3099 = vrot.lane.b32.xlu0 %v2696, 64
      %v3100 = vpop.permute.xlu0 %3099
      %3101 = vrot.lane.b32.xlu0 %v2697, 64
      %v3102 = vpop.permute.xlu0 %3101
      %3103 = vrot.lane.b32.xlu0 %v2698, 64
      %v3104 = vpop.permute.xlu0 %3103
      %3105 = vrot.lane.b32.xlu0 %v2699, 64
      %v3106 = vpop.permute.xlu0 %3105
      %3107 = vrot.lane.b32.xlu0 %v2700, 64
      %v3108 = vpop.permute.xlu0 %3107
      %3109 = vrot.lane.b32.xlu0 %v2701, 64
      %v3110 = vpop.permute.xlu0 %3109
      %3111 = vrot.lane.b32.xlu0 %v2702, 64
      %v3112 = vpop.permute.xlu0 %3111
      %3113 = vrot.lane.b32.xlu0 %v2703, 64
      %v3114 = vpop.permute.xlu0 %3113
      %3115 = vrot.lane.b32.xlu0 %v2704, 64
      %v3116 = vpop.permute.xlu0 %3115
      %3117 = vrot.lane.b32.xlu0 %v2705, 64
      %v3118 = vpop.permute.xlu0 %3117
      %3119 = vrot.lane.b32.xlu0 %v2706, 64
      %v3120 = vpop.permute.xlu0 %3119
      %3121 = vrot.lane.b32.xlu0 %v2707, 64
      %v3122 = vpop.permute.xlu0 %3121
      %3123 = vrot.lane.b32.xlu0 %v2708, 64
      %v3124 = vpop.permute.xlu0 %3123
      %3189 = vrot.lane.b32.xlu0 %v2709, 96
      %v3190 = vpop.permute.xlu0 %3189
      %3191 = vrot.lane.b32.xlu0 %v2710, 96
      %v3192 = vpop.permute.xlu0 %3191
      %3193 = vrot.lane.b32.xlu0 %v2711, 96
      %v3194 = vpop.permute.xlu0 %3193
      %3195 = vrot.lane.b32.xlu0 %v2712, 96
      %v3196 = vpop.permute.xlu0 %3195
      %3197 = vrot.lane.b32.xlu0 %v2713, 96
      %v3198 = vpop.permute.xlu0 %3197
      %3199 = vrot.lane.b32.xlu0 %v2714, 96
      %v3200 = vpop.permute.xlu0 %3199
      %3201 = vrot.lane.b32.xlu0 %v2715, 96
      %v3202 = vpop.permute.xlu0 %3201
      %3203 = vrot.lane.b32.xlu0 %v2716, 96
      %v3204 = vpop.permute.xlu0 %3203
      %3205 = vrot.lane.b32.xlu0 %v2717, 96
      %v3206 = vpop.permute.xlu0 %3205
      %3207 = vrot.lane.b32.xlu0 %v2718, 96
      %v3208 = vpop.permute.xlu0 %3207
      %3209 = vrot.lane.b32.xlu0 %v2719, 96
      %v3210 = vpop.permute.xlu0 %3209
      %3211 = vrot.lane.b32.xlu0 %v2720, 96
      %v3212 = vpop.permute.xlu0 %3211
      %3213 = vrot.lane.b32.xlu0 %v2721, 96
      %v3214 = vpop.permute.xlu0 %3213
      %3215 = vrot.lane.b32.xlu0 %v2722, 96
      %v3216 = vpop.permute.xlu0 %3215
      %3217 = vrot.lane.b32.xlu0 %v2723, 96
      %v3218 = vpop.permute.xlu0 %3217
      %3219 = vrot.lane.b32.xlu0 %v2724, 96
      %v3220 = vpop.permute.xlu0 %3219
      %3221 = vrot.lane.b32.xlu0 %v2725, 96
      %v3222 = vpop.permute.xlu0 %3221
      %3223 = vrot.lane.b32.xlu0 %v2726, 96
      %v3224 = vpop.permute.xlu0 %3223
      %3225 = vrot.lane.b32.xlu0 %v2727, 96
      %v3226 = vpop.permute.xlu0 %3225
      %3227 = vrot.lane.b32.xlu0 %v2728, 96
      %v3228 = vpop.permute.xlu0 %3227
      %3229 = vrot.lane.b32.xlu0 %v2729, 96
      %v3230 = vpop.permute.xlu0 %3229
      %3231 = vrot.lane.b32.xlu0 %v2730, 96
      %v3232 = vpop.permute.xlu0 %3231
      %3233 = vrot.lane.b32.xlu0 %v2731, 96
      %v3234 = vpop.permute.xlu0 %3233
      %3235 = vrot.lane.b32.xlu0 %v2732, 96
      %v3236 = vpop.permute.xlu0 %3235
      %3237 = vrot.lane.b32.xlu0 %v2733, 96
      %v3238 = vpop.permute.xlu0 %3237
      %3239 = vrot.lane.b32.xlu0 %v2734, 96
      %v3240 = vpop.permute.xlu0 %3239
      %3241 = vrot.lane.b32.xlu0 %v2735, 96
      %v3242 = vpop.permute.xlu0 %3241
      %3243 = vrot.lane.b32.xlu0 %v2736, 96
      %v3244 = vpop.permute.xlu0 %3243
      %3245 = vrot.lane.b32.xlu0 %v2737, 96
      %v3246 = vpop.permute.xlu0 %3245
      %3247 = vrot.lane.b32.xlu0 %v2738, 96
      %v3248 = vpop.permute.xlu0 %3247
      %3249 = vrot.lane.b32.xlu0 %v2739, 96
      %v3250 = vpop.permute.xlu0 %3249
      %3251 = vrot.lane.b32.xlu0 %v2740, 96
      %v3252 = vpop.permute.xlu0 %3251
      %3317 = vrot.lane.b32.xlu0 %v2773, 32
      %v3318 = vpop.permute.xlu0 %3317
      %3319 = vrot.lane.b32.xlu0 %v2774, 32
      %v3320 = vpop.permute.xlu0 %3319
      %3321 = vrot.lane.b32.xlu0 %v2775, 32
      %v3322 = vpop.permute.xlu0 %3321
      %3323 = vrot.lane.b32.xlu0 %v2776, 32
      %v3324 = vpop.permute.xlu0 %3323
      %3325 = vrot.lane.b32.xlu0 %v2777, 32
      %v3326 = vpop.permute.xlu0 %3325
      %3327 = vrot.lane.b32.xlu0 %v2778, 32
      %v3328 = vpop.permute.xlu0 %3327
      %3329 = vrot.lane.b32.xlu0 %v2779, 32
      %v3330 = vpop.permute.xlu0 %3329
      %3331 = vrot.lane.b32.xlu0 %v2780, 32
      %v3332 = vpop.permute.xlu0 %3331
      %3333 = vrot.lane.b32.xlu0 %v2781, 32
      %v3334 = vpop.permute.xlu0 %3333
      %3335 = vrot.lane.b32.xlu0 %v2782, 32
      %v3336 = vpop.permute.xlu0 %3335
      %3337 = vrot.lane.b32.xlu0 %v2783, 32
      %v3338 = vpop.permute.xlu0 %3337
      %3339 = vrot.lane.b32.xlu0 %v2784, 32
      %v3340 = vpop.permute.xlu0 %3339
      %3341 = vrot.lane.b32.xlu0 %v2785, 32
      %v3342 = vpop.permute.xlu0 %3341
      %3343 = vrot.lane.b32.xlu0 %v2786, 32
      %v3344 = vpop.permute.xlu0 %3343
      %3345 = vrot.lane.b32.xlu0 %v2787, 32
      %v3346 = vpop.permute.xlu0 %3345
      %3347 = vrot.lane.b32.xlu0 %v2788, 32
      %v3348 = vpop.permute.xlu0 %3347
      %3349 = vrot.lane.b32.xlu0 %v2789, 32
      %v3350 = vpop.permute.xlu0 %3349
      %3351 = vrot.lane.b32.xlu0 %v2790, 32
      %v3352 = vpop.permute.xlu0 %3351
      %3353 = vrot.lane.b32.xlu0 %v2791, 32
      %v3354 = vpop.permute.xlu0 %3353
      %3355 = vrot.lane.b32.xlu0 %v2792, 32
      %v3356 = vpop.permute.xlu0 %3355
      %3357 = vrot.lane.b32.xlu0 %v2793, 32
      %v3358 = vpop.permute.xlu0 %3357
      %3359 = vrot.lane.b32.xlu0 %v2794, 32
      %v3360 = vpop.permute.xlu0 %3359
      %3361 = vrot.lane.b32.xlu0 %v2795, 32
      %v3362 = vpop.permute.xlu0 %3361
      %3363 = vrot.lane.b32.xlu0 %v2796, 32
      %v3364 = vpop.permute.xlu0 %3363
      %3365 = vrot.lane.b32.xlu0 %v2797, 32
      %v3366 = vpop.permute.xlu0 %3365
      %3367 = vrot.lane.b32.xlu0 %v2798, 32
      %v3368 = vpop.permute.xlu0 %3367
      %3369 = vrot.lane.b32.xlu0 %v2799, 32
      %v3370 = vpop.permute.xlu0 %3369
      %3371 = vrot.lane.b32.xlu0 %v2800, 32
      %v3372 = vpop.permute.xlu0 %3371
      %3373 = vrot.lane.b32.xlu0 %v2801, 32
      %v3374 = vpop.permute.xlu0 %3373
      %3375 = vrot.lane.b32.xlu0 %v2802, 32
      %v3376 = vpop.permute.xlu0 %3375
      %3377 = vrot.lane.b32.xlu0 %v2803, 32
      %v3378 = vpop.permute.xlu0 %3377
      %3379 = vrot.lane.b32.xlu0 %v2804, 32
      %v3380 = vpop.permute.xlu0 %3379
      %3445 = vrot.lane.b32.xlu0 %v2805, 64
      %v3446 = vpop.permute.xlu0 %3445
      %3447 = vrot.lane.b32.xlu0 %v2806, 64
      %v3448 = vpop.permute.xlu0 %3447
      %3449 = vrot.lane.b32.xlu0 %v2807, 64
      %v3450 = vpop.permute.xlu0 %3449
      %3451 = vrot.lane.b32.xlu0 %v2808, 64
      %v3452 = vpop.permute.xlu0 %3451
      %3453 = vrot.lane.b32.xlu0 %v2809, 64
      %v3454 = vpop.permute.xlu0 %3453
      %3455 = vrot.lane.b32.xlu0 %v2810, 64
      %v3456 = vpop.permute.xlu0 %3455
      %3457 = vrot.lane.b32.xlu0 %v2811, 64
      %v3458 = vpop.permute.xlu0 %3457
      %3459 = vrot.lane.b32.xlu0 %v2812, 64
      %v3460 = vpop.permute.xlu0 %3459
      %3461 = vrot.lane.b32.xlu0 %v2813, 64
      %v3462 = vpop.permute.xlu0 %3461
      %3463 = vrot.lane.b32.xlu0 %v2814, 64
      %v3464 = vpop.permute.xlu0 %3463
      %3465 = vrot.lane.b32.xlu0 %v2815, 64
      %v3466 = vpop.permute.xlu0 %3465
      %3467 = vrot.lane.b32.xlu0 %v2816, 64
      %v3468 = vpop.permute.xlu0 %3467
      %3469 = vrot.lane.b32.xlu0 %v2817, 64
      %v3470 = vpop.permute.xlu0 %3469
      %3471 = vrot.lane.b32.xlu0 %v2818, 64
      %v3472 = vpop.permute.xlu0 %3471
      %3473 = vrot.lane.b32.xlu0 %v2819, 64
      %v3474 = vpop.permute.xlu0 %3473
      %3475 = vrot.lane.b32.xlu0 %v2820, 64
      %v3476 = vpop.permute.xlu0 %3475
      %3477 = vrot.lane.b32.xlu0 %v2821, 64
      %v3478 = vpop.permute.xlu0 %3477
      %3479 = vrot.lane.b32.xlu0 %v2822, 64
      %v3480 = vpop.permute.xlu0 %3479
      %3481 = vrot.lane.b32.xlu0 %v2823, 64
      %v3482 = vpop.permute.xlu0 %3481
      %3483 = vrot.lane.b32.xlu0 %v2824, 64
      %v3484 = vpop.permute.xlu0 %3483
      %3485 = vrot.lane.b32.xlu0 %v2825, 64
      %v3486 = vpop.permute.xlu0 %3485
      %3487 = vrot.lane.b32.xlu0 %v2826, 64
      %v3488 = vpop.permute.xlu0 %3487
      %3489 = vrot.lane.b32.xlu0 %v2827, 64
      %v3490 = vpop.permute.xlu0 %3489
      %3491 = vrot.lane.b32.xlu0 %v2828, 64
      %v3492 = vpop.permute.xlu0 %3491
      %3493 = vrot.lane.b32.xlu0 %v2829, 64
      %v3494 = vpop.permute.xlu0 %3493
      %3495 = vrot.lane.b32.xlu0 %v2830, 64
      %v3496 = vpop.permute.xlu0 %3495
      %3497 = vrot.lane.b32.xlu0 %v2831, 64
      %v3498 = vpop.permute.xlu0 %3497
      %3499 = vrot.lane.b32.xlu0 %v2832, 64
      %v3500 = vpop.permute.xlu0 %3499
      %3501 = vrot.lane.b32.xlu0 %v2833, 64
      %v3502 = vpop.permute.xlu0 %3501
      %3503 = vrot.lane.b32.xlu0 %v2834, 64
      %v3504 = vpop.permute.xlu0 %3503
      %3505 = vrot.lane.b32.xlu0 %v2835, 64
      %v3506 = vpop.permute.xlu0 %3505
      %3507 = vrot.lane.b32.xlu0 %v2836, 64
      %v3508 = vpop.permute.xlu0 %3507
      %3573 = vrot.lane.b32.xlu0 %v2837, 96
      %v3574 = vpop.permute.xlu0 %3573
      %3575 = vrot.lane.b32.xlu0 %v2838, 96
      %v3576 = vpop.permute.xlu0 %3575
      %3577 = vrot.lane.b32.xlu0 %v2839, 96
      %v3578 = vpop.permute.xlu0 %3577
      %3579 = vrot.lane.b32.xlu0 %v2840, 96
      %v3580 = vpop.permute.xlu0 %3579
      %3581 = vrot.lane.b32.xlu0 %v2841, 96
      %v3582 = vpop.permute.xlu0 %3581
      %3583 = vrot.lane.b32.xlu0 %v2842, 96
      %v3584 = vpop.permute.xlu0 %3583
      %3585 = vrot.lane.b32.xlu0 %v2843, 96
      %v3586 = vpop.permute.xlu0 %3585
      %3587 = vrot.lane.b32.xlu0 %v2844, 96
      %v3588 = vpop.permute.xlu0 %3587
      %3589 = vrot.lane.b32.xlu0 %v2845, 96
      %v3590 = vpop.permute.xlu0 %3589
      %3591 = vrot.lane.b32.xlu0 %v2846, 96
      %v3592 = vpop.permute.xlu0 %3591
      %3593 = vrot.lane.b32.xlu0 %v2847, 96
      %v3594 = vpop.permute.xlu0 %3593
      %3595 = vrot.lane.b32.xlu0 %v2848, 96
      %v3596 = vpop.permute.xlu0 %3595
      %3597 = vrot.lane.b32.xlu0 %v2849, 96
      %v3598 = vpop.permute.xlu0 %3597
      %3599 = vrot.lane.b32.xlu0 %v2850, 96
      %v3600 = vpop.permute.xlu0 %3599
      %3601 = vrot.lane.b32.xlu0 %v2851, 96
      %v3602 = vpop.permute.xlu0 %3601
      %3603 = vrot.lane.b32.xlu0 %v2852, 96
      %v3604 = vpop.permute.xlu0 %3603
      %3605 = vrot.lane.b32.xlu0 %v2853, 96
      %v3606 = vpop.permute.xlu0 %3605
      %3607 = vrot.lane.b32.xlu0 %v2854, 96
      %v3608 = vpop.permute.xlu0 %3607
      %3609 = vrot.lane.b32.xlu0 %v2855, 96
      %v3610 = vpop.permute.xlu0 %3609
      %3611 = vrot.lane.b32.xlu0 %v2856, 96
      %v3612 = vpop.permute.xlu0 %3611
      %3613 = vrot.lane.b32.xlu0 %v2857, 96
      %v3614 = vpop.permute.xlu0 %3613
      %3615 = vrot.lane.b32.xlu0 %v2858, 96
      %v3616 = vpop.permute.xlu0 %3615
      %3617 = vrot.lane.b32.xlu0 %v2859, 96
      %v3618 = vpop.permute.xlu0 %3617
      %3619 = vrot.lane.b32.xlu0 %v2860, 96
      %v3620 = vpop.permute.xlu0 %3619
      %3621 = vrot.lane.b32.xlu0 %v2861, 96
      %v3622 = vpop.permute.xlu0 %3621
      %3623 = vrot.lane.b32.xlu0 %v2862, 96
      %v3624 = vpop.permute.xlu0 %3623
      %3625 = vrot.lane.b32.xlu0 %v2863, 96
      %v3626 = vpop.permute.xlu0 %3625
      %3627 = vrot.lane.b32.xlu0 %v2864, 96
      %v3628 = vpop.permute.xlu0 %3627
      %3629 = vrot.lane.b32.xlu0 %v2865, 96
      %v3630 = vpop.permute.xlu0 %3629
      %3631 = vrot.lane.b32.xlu0 %v2866, 96
      %v3632 = vpop.permute.xlu0 %3631
      %3633 = vrot.lane.b32.xlu0 %v2867, 96
      %v3634 = vpop.permute.xlu0 %3633
      %3635 = vrot.lane.b32.xlu0 %v2868, 96
      %v3636 = vpop.permute.xlu0 %3635
      %v3669 = vsel %vm539, %v2612, %v2934
      %v3670 = vsel %vm539, %v2613, %v2936
      %v3671 = vsel %vm539, %v2614, %v2938
      %v3672 = vsel %vm539, %v2615, %v2940
      %v3673 = vsel %vm539, %v2616, %v2942
      %v3674 = vsel %vm539, %v2617, %v2944
      %v3675 = vsel %vm539, %v2618, %v2946
      %v3676 = vsel %vm539, %v2619, %v2948
      %v3677 = vsel %vm539, %v2620, %v2950
      %v3678 = vsel %vm539, %v2621, %v2952
      %v3679 = vsel %vm539, %v2622, %v2954
      %v3680 = vsel %vm539, %v2623, %v2956
      %v3681 = vsel %vm539, %v2624, %v2958
      %v3682 = vsel %vm539, %v2625, %v2960
      %v3683 = vsel %vm539, %v2626, %v2962
      %v3684 = vsel %vm539, %v2627, %v2964
      %v3685 = vsel %vm539, %v2628, %v2966
      %v3686 = vsel %vm539, %v2629, %v2968
      %v3687 = vsel %vm539, %v2630, %v2970
      %v3688 = vsel %vm539, %v2631, %v2972
      %v3689 = vsel %vm539, %v2632, %v2974
      %v3690 = vsel %vm539, %v2633, %v2976
      %v3691 = vsel %vm539, %v2634, %v2978
      %v3692 = vsel %vm539, %v2635, %v2980
      %v3693 = vsel %vm539, %v2636, %v2982
      %v3694 = vsel %vm539, %v2637, %v2984
      %v3695 = vsel %vm539, %v2638, %v2986
      %v3696 = vsel %vm539, %v2639, %v2988
      %v3697 = vsel %vm539, %v2640, %v2990
      %v3698 = vsel %vm539, %v2641, %v2992
      %v3699 = vsel %vm539, %v2642, %v2994
      %v3700 = vsel %vm539, %v2643, %v2996
      %vm3701 = vcmask 523264
      %v3702 = vsel %vm3701, %v3669, %v3062
      %v3703 = vsel %vm3701, %v3670, %v3064
      %v3704 = vsel %vm3701, %v3671, %v3066
      %v3705 = vsel %vm3701, %v3672, %v3068
      %v3706 = vsel %vm3701, %v3673, %v3070
      %v3707 = vsel %vm3701, %v3674, %v3072
      %v3708 = vsel %vm3701, %v3675, %v3074
      %v3709 = vsel %vm3701, %v3676, %v3076
      %v3710 = vsel %vm3701, %v3677, %v3078
      %v3711 = vsel %vm3701, %v3678, %v3080
      %v3712 = vsel %vm3701, %v3679, %v3082
      %v3713 = vsel %vm3701, %v3680, %v3084
      %v3714 = vsel %vm3701, %v3681, %v3086
      %v3715 = vsel %vm3701, %v3682, %v3088
      %v3716 = vsel %vm3701, %v3683, %v3090
      %v3717 = vsel %vm3701, %v3684, %v3092
      %v3718 = vsel %vm3701, %v3685, %v3094
      %v3719 = vsel %vm3701, %v3686, %v3096
      %v3720 = vsel %vm3701, %v3687, %v3098
      %v3721 = vsel %vm3701, %v3688, %v3100
      %v3722 = vsel %vm3701, %v3689, %v3102
      %v3723 = vsel %vm3701, %v3690, %v3104
      %v3724 = vsel %vm3701, %v3691, %v3106
      %v3725 = vsel %vm3701, %v3692, %v3108
      %v3726 = vsel %vm3701, %v3693, %v3110
      %v3727 = vsel %vm3701, %v3694, %v3112
      %v3728 = vsel %vm3701, %v3695, %v3114
      %v3729 = vsel %vm3701, %v3696, %v3116
      %v3730 = vsel %vm3701, %v3697, %v3118
      %v3731 = vsel %vm3701, %v3698, %v3120
      %v3732 = vsel %vm3701, %v3699, %v3122
      %v3733 = vsel %vm3701, %v3700, %v3124
      %vm3734 = vcmask 785408
      %v3735 = vsel %vm3734, %v3702, %v3190
      %v3736 = vsel %vm3734, %v3703, %v3192
      %v3737 = vsel %vm3734, %v3704, %v3194
      %v3738 = vsel %vm3734, %v3705, %v3196
      %v3739 = vsel %vm3734, %v3706, %v3198
      %v3740 = vsel %vm3734, %v3707, %v3200
      %v3741 = vsel %vm3734, %v3708, %v3202
      %v3742 = vsel %vm3734, %v3709, %v3204
      %v3743 = vsel %vm3734, %v3710, %v3206
      %v3744 = vsel %vm3734, %v3711, %v3208
      %v3745 = vsel %vm3734, %v3712, %v3210
      %v3746 = vsel %vm3734, %v3713, %v3212
      %v3747 = vsel %vm3734, %v3714, %v3214
      %v3748 = vsel %vm3734, %v3715, %v3216
      %v3749 = vsel %vm3734, %v3716, %v3218
      %v3750 = vsel %vm3734, %v3717, %v3220
      %v3751 = vsel %vm3734, %v3718, %v3222
      %v3752 = vsel %vm3734, %v3719, %v3224
      %v3753 = vsel %vm3734, %v3720, %v3226
      %v3754 = vsel %vm3734, %v3721, %v3228
      %v3755 = vsel %vm3734, %v3722, %v3230
      %v3756 = vsel %vm3734, %v3723, %v3232
      %v3757 = vsel %vm3734, %v3724, %v3234
      %v3758 = vsel %vm3734, %v3725, %v3236
      %v3759 = vsel %vm3734, %v3726, %v3238
      %v3760 = vsel %vm3734, %v3727, %v3240
      %v3761 = vsel %vm3734, %v3728, %v3242
      %v3762 = vsel %vm3734, %v3729, %v3244
      %v3763 = vsel %vm3734, %v3730, %v3246
      %v3764 = vsel %vm3734, %v3731, %v3248
      %v3765 = vsel %vm3734, %v3732, %v3250
      %v3766 = vsel %vm3734, %v3733, %v3252
      %v3767 = vsel %vm539, %v2741, %v3318
      %v3768 = vsel %vm539, %v2742, %v3320
      %v3769 = vsel %vm539, %v2743, %v3322
      %v3770 = vsel %vm539, %v2744, %v3324
      %v3771 = vsel %vm539, %v2745, %v3326
      %v3772 = vsel %vm539, %v2746, %v3328
      %v3773 = vsel %vm539, %v2747, %v3330
      %v3774 = vsel %vm539, %v2748, %v3332
      %v3775 = vsel %vm539, %v2749, %v3334
      %v3776 = vsel %vm539, %v2750, %v3336
      %v3777 = vsel %vm539, %v2751, %v3338
      %v3778 = vsel %vm539, %v2752, %v3340
      %v3779 = vsel %vm539, %v2753, %v3342
      %v3780 = vsel %vm539, %v2754, %v3344
      %v3781 = vsel %vm539, %v2755, %v3346
      %v3782 = vsel %vm539, %v2756, %v3348
      %v3783 = vsel %vm539, %v2757, %v3350
      %v3784 = vsel %vm539, %v2758, %v3352
      %v3785 = vsel %vm539, %v2759, %v3354
      %v3786 = vsel %vm539, %v2760, %v3356
      %v3787 = vsel %vm539, %v2761, %v3358
      %v3788 = vsel %vm539, %v2762, %v3360
      %v3789 = vsel %vm539, %v2763, %v3362
      %v3790 = vsel %vm539, %v2764, %v3364
      %v3791 = vsel %vm539, %v2765, %v3366
      %v3792 = vsel %vm539, %v2766, %v3368
      %v3793 = vsel %vm539, %v2767, %v3370
      %v3794 = vsel %vm539, %v2768, %v3372
      %v3795 = vsel %vm539, %v2769, %v3374
      %v3796 = vsel %vm539, %v2770, %v3376
      %v3797 = vsel %vm539, %v2771, %v3378
      %v3798 = vsel %vm539, %v2772, %v3380
      %v3799 = vsel %vm3701, %v3767, %v3446
      %v3800 = vsel %vm3701, %v3768, %v3448
      %v3801 = vsel %vm3701, %v3769, %v3450
      %v3802 = vsel %vm3701, %v3770, %v3452
      %v3803 = vsel %vm3701, %v3771, %v3454
      %v3804 = vsel %vm3701, %v3772, %v3456
      %v3805 = vsel %vm3701, %v3773, %v3458
      %v3806 = vsel %vm3701, %v3774, %v3460
      %v3807 = vsel %vm3701, %v3775, %v3462
      %v3808 = vsel %vm3701, %v3776, %v3464
      %v3809 = vsel %vm3701, %v3777, %v3466
      %v3810 = vsel %vm3701, %v3778, %v3468
      %v3811 = vsel %vm3701, %v3779, %v3470
      %v3812 = vsel %vm3701, %v3780, %v3472
      %v3813 = vsel %vm3701, %v3781, %v3474
      %v3814 = vsel %vm3701, %v3782, %v3476
      %v3815 = vsel %vm3701, %v3783, %v3478
      %v3816 = vsel %vm3701, %v3784, %v3480
      %v3817 = vsel %vm3701, %v3785, %v3482
      %v3818 = vsel %vm3701, %v3786, %v3484
      %v3819 = vsel %vm3701, %v3787, %v3486
      %v3820 = vsel %vm3701, %v3788, %v3488
      %v3821 = vsel %vm3701, %v3789, %v3490
      %v3822 = vsel %vm3701, %v3790, %v3492
      %v3823 = vsel %vm3701, %v3791, %v3494
      %v3824 = vsel %vm3701, %v3792, %v3496
      %v3825 = vsel %vm3701, %v3793, %v3498
      %v3826 = vsel %vm3701, %v3794, %v3500
      %v3827 = vsel %vm3701, %v3795, %v3502
      %v3828 = vsel %vm3701, %v3796, %v3504
      %v3829 = vsel %vm3701, %v3797, %v3506
      %v3830 = vsel %vm3701, %v3798, %v3508
      %v3831 = vsel %vm3734, %v3799, %v3574
      %v3832 = vsel %vm3734, %v3800, %v3576
      %v3833 = vsel %vm3734, %v3801, %v3578
      %v3834 = vsel %vm3734, %v3802, %v3580
      %v3835 = vsel %vm3734, %v3803, %v3582
      %v3836 = vsel %vm3734, %v3804, %v3584
      %v3837 = vsel %vm3734, %v3805, %v3586
      %v3838 = vsel %vm3734, %v3806, %v3588
      %v3839 = vsel %vm3734, %v3807, %v3590
      %v3840 = vsel %vm3734, %v3808, %v3592
      %v3841 = vsel %vm3734, %v3809, %v3594
      %v3842 = vsel %vm3734, %v3810, %v3596
      %v3843 = vsel %vm3734, %v3811, %v3598
      %v3844 = vsel %vm3734, %v3812, %v3600
      %v3845 = vsel %vm3734, %v3813, %v3602
      %v3846 = vsel %vm3734, %v3814, %v3604
      %v3847 = vsel %vm3734, %v3815, %v3606
      %v3848 = vsel %vm3734, %v3816, %v3608
      %v3849 = vsel %vm3734, %v3817, %v3610
      %v3850 = vsel %vm3734, %v3818, %v3612
      %v3851 = vsel %vm3734, %v3819, %v3614
      %v3852 = vsel %vm3734, %v3820, %v3616
      %v3853 = vsel %vm3734, %v3821, %v3618
      %v3854 = vsel %vm3734, %v3822, %v3620
      %v3855 = vsel %vm3734, %v3823, %v3622
      %v3856 = vsel %vm3734, %v3824, %v3624
      %v3857 = vsel %vm3734, %v3825, %v3626
      %v3858 = vsel %vm3734, %v3826, %v3628
      %v3859 = vsel %vm3734, %v3827, %v3630
      %v3860 = vsel %vm3734, %v3828, %v3632
      %v3861 = vsel %vm3734, %v3829, %v3634
      %v3862 = vsel %vm3734, %v3830, %v3636
      %v3863 = vpack.c.bf16 %v3736, %v3735
      %v3864 = vpack.c.bf16 %v3832, %v3831
      %v3865 = vpack.c.bf16 %v2870, %v2869
      %v3866 = vpack.c.bf16 %v3738, %v3737
      %v3867 = vpack.c.bf16 %v3834, %v3833
      %v3868 = vpack.c.bf16 %v2872, %v2871
      %v3869 = vpack.c.bf16 %v3740, %v3739
      %v3870 = vpack.c.bf16 %v3836, %v3835
      %v3871 = vpack.c.bf16 %v2874, %v2873
      %v3872 = vpack.c.bf16 %v3742, %v3741
      %v3873 = vpack.c.bf16 %v3838, %v3837
      %v3874 = vpack.c.bf16 %v2876, %v2875
      %v3875 = vpack.c.bf16 %v3744, %v3743
      %v3876 = vpack.c.bf16 %v3840, %v3839
      %v3877 = vpack.c.bf16 %v2878, %v2877
      %v3878 = vpack.c.bf16 %v3746, %v3745
      %v3879 = vpack.c.bf16 %v3842, %v3841
      %v3880 = vpack.c.bf16 %v2880, %v2879
      %v3881 = vpack.c.bf16 %v3748, %v3747
      %v3882 = vpack.c.bf16 %v3844, %v3843
      %v3883 = vpack.c.bf16 %v2882, %v2881
      %v3884 = vpack.c.bf16 %v3750, %v3749
      %v3885 = vpack.c.bf16 %v3846, %v3845
      %v3886 = vpack.c.bf16 %v2884, %v2883
      %v3887 = vpack.c.bf16 %v3752, %v3751
      %v3888 = vpack.c.bf16 %v3848, %v3847
      %v3889 = vpack.c.bf16 %v2886, %v2885
      %v3890 = vpack.c.bf16 %v3754, %v3753
      %v3891 = vpack.c.bf16 %v3850, %v3849
      %v3892 = vpack.c.bf16 %v2888, %v2887
      %v3893 = vpack.c.bf16 %v3756, %v3755
      %v3894 = vpack.c.bf16 %v3852, %v3851
      %v3895 = vpack.c.bf16 %v2890, %v2889
      %v3896 = vpack.c.bf16 %v3758, %v3757
      %v3897 = vpack.c.bf16 %v3854, %v3853
      %v3898 = vpack.c.bf16 %v2892, %v2891
      %v3899 = vpack.c.bf16 %v3760, %v3759
      %v3900 = vpack.c.bf16 %v3856, %v3855
      %v3901 = vpack.c.bf16 %v2894, %v2893
      %v3902 = vpack.c.bf16 %v3762, %v3761
      %v3903 = vpack.c.bf16 %v3858, %v3857
      %v3904 = vpack.c.bf16 %v2896, %v2895
      %v3905 = vpack.c.bf16 %v3764, %v3763
      %v3906 = vpack.c.bf16 %v3860, %v3859
      %v3907 = vpack.c.bf16 %v2898, %v2897
      %v3908 = vpack.c.bf16 %v3766, %v3765
      %v3909 = vpack.c.bf16 %v3862, %v3861
      %v3910 = vpack.c.bf16 %v2900, %v2899
      %v3911 = vld [vmem:[%s4] sm:$0xf]
      %v3912 = vld [vmem:[%s4 + $0x4] sm:$0xf]
      %v3913 = vld [vmem:[%s4 + $0x8] sm:$0xf]
      %v3914 = vld [vmem:[%s4 + $0xc] sm:$0xf]
      %v3915 = vld [vmem:[%s4 + $0x10] sm:$0xf]
      %v3916 = vld [vmem:[%s4 + $0x14] sm:$0xf]
      %v3917 = vld [vmem:[%s4 + $0x18] sm:$0xf]
      %v3918 = vld [vmem:[%s4 + $0x1c] sm:$0xf]
      %v3919 = vld [vmem:[%s4 + $0x20] sm:$0xf]
      %v3920 = vld [vmem:[%s4 + $0x24] sm:$0xf]
      %v3921 = vld [vmem:[%s4 + $0x28] sm:$0xf]
      %v3922 = vld [vmem:[%s4 + $0x2c] sm:$0xf]
      %v3923 = vld [vmem:[%s4 + $0x30] sm:$0xf]
      %v3924 = vld [vmem:[%s4 + $0x34] sm:$0xf]
      %v3925 = vld [vmem:[%s4 + $0x38] sm:$0xf]
      %v3926 = vld [vmem:[%s4 + $0x3c] sm:$0xf]
      %v3927 = vld [vmem:[%s4 + $0x40] sm:$0xf]
      %v3928 = vld [vmem:[%s4 + $0x44] sm:$0xf]
      %v3929 = vld [vmem:[%s4 + $0x48] sm:$0xf]
      %v3930 = vld [vmem:[%s4 + $0x4c] sm:$0xf]
      %v3931 = vld [vmem:[%s4 + $0x50] sm:$0xf]
      %v3932 = vld [vmem:[%s4 + $0x54] sm:$0xf]
      %v3933 = vld [vmem:[%s4 + $0x58] sm:$0xf]
      %v3934 = vld [vmem:[%s4 + $0x5c] sm:$0xf]
      %v3935 = vld [vmem:[%s4 + $0x60] sm:$0xf]
      %v3936 = vld [vmem:[%s4 + $0x64] sm:$0xf]
      %v3937 = vld [vmem:[%s4 + $0x68] sm:$0xf]
      %v3938 = vld [vmem:[%s4 + $0x6c] sm:$0xf]
      %v3939 = vld [vmem:[%s4 + $0x70] sm:$0xf]
      %v3940 = vld [vmem:[%s4 + $0x74] sm:$0xf]
      %v3941 = vld [vmem:[%s4 + $0x78] sm:$0xf]
      %v3942 = vld [vmem:[%s4 + $0x7c] sm:$0xf]
      %v3943 = vld [vmem:[%s4 + $0x80] sm:$0xf]
      %v3944 = vld [vmem:[%s4 + $0x84] sm:$0xf]
      %v3945 = vld [vmem:[%s4 + $0x88] sm:$0xf]
      %v3946 = vld [vmem:[%s4 + $0x8c] sm:$0xf]
      %v3947 = vld [vmem:[%s5] sm:$0x1]
      %v3949 = vlaneseq
      %v3950 = vshrl.u32 %v3949, 7
      %v3951 = vsub.s32 0, %v3950
      %v3952 = vrot.slane %v3947, %v3951
      %v3990 = vunpack.c.l.b16 %v3911
      %v3991 = vunpack.c.l.b16 %v3912
      %v3992 = vunpack.c.l.b16 %v3913
      %v3993 = vunpack.c.l.b16 %v3914
      %v3994 = vunpack.c.l.b16 %v3915
      %v3995 = vunpack.c.l.b16 %v3916
      %v3996 = vunpack.c.l.b16 %v3917
      %v3997 = vunpack.c.l.b16 %v3918
      %v3998 = vunpack.c.l.b16 %v3919
      %v3999 = vunpack.c.l.b16 %v3920
      %v4000 = vunpack.c.l.b16 %v3921
      %v4001 = vunpack.c.l.b16 %v3922
      %v4002 = vunpack.c.l.b16 %v3923
      %v4003 = vunpack.c.l.b16 %v3924
      %v4004 = vunpack.c.l.b16 %v3925
      %v4005 = vunpack.c.l.b16 %v3926
      %v4006 = vunpack.c.l.b16 %v3927
      %v4007 = vunpack.c.l.b16 %v3928
      %v4008 = vunpack.c.l.b16 %v3929
      %v4009 = vunpack.c.l.b16 %v3930
      %v4010 = vunpack.c.l.b16 %v3931
      %v4011 = vunpack.c.l.b16 %v3932
      %v4012 = vunpack.c.l.b16 %v3933
      %v4013 = vunpack.c.l.b16 %v3934
      %v4014 = vunpack.c.l.b16 %v3935
      %v4015 = vunpack.c.l.b16 %v3936
      %v4016 = vunpack.c.l.b16 %v3937
      %v4017 = vunpack.c.l.b16 %v3938
      %v4018 = vunpack.c.l.b16 %v3939
      %v4019 = vunpack.c.l.b16 %v3940
      %v4020 = vunpack.c.l.b16 %v3941
      %v4021 = vunpack.c.l.b16 %v3942
      %v4022 = vunpack.c.l.b16 %v3943
      %v4023 = vunpack.c.l.b16 %v3944
      %v4024 = vunpack.c.l.b16 %v3945
      %v4025 = vunpack.c.l.b16 %v3946
      %v4026 = vpack.c.b16 %v3991, %v3990
      %v4027 = vpack.c.b16 %v3993, %v3992
      %v4028 = vpack.c.b16 %v3995, %v3994
      %v4029 = vpack.c.b16 %v3997, %v3996
      %v4030 = vpack.c.b16 %v3999, %v3998
      %v4031 = vpack.c.b16 %v4001, %v4000
      %v4032 = vpack.c.b16 %v4003, %v4002
      %v4033 = vpack.c.b16 %v4005, %v4004
      %v4034 = vpack.c.b16 %v4007, %v4006
      %v4035 = vpack.c.b16 %v4009, %v4008
      %v4036 = vpack.c.b16 %v4011, %v4010
      %v4037 = vpack.c.b16 %v4013, %v4012
      %v4038 = vpack.c.b16 %v4015, %v4014
      %v4039 = vpack.c.b16 %v4017, %v4016
      %v4040 = vpack.c.b16 %v4019, %v4018
      %v4041 = vpack.c.b16 %v4021, %v4020
      %v4042 = vpack.c.b16 %v4023, %v4022
      %v4043 = vpack.c.b16 %v4025, %v4024
      %v4063 = vsel %vm539, %v3865, 0
      %v4066 = vsel %vm539, %v3868, 0
      %v4069 = vsel %vm539, %v3871, 0
      %v4072 = vsel %vm539, %v3874, 0
      %v4075 = vsel %vm539, %v3877, 0
      %v4078 = vsel %vm539, %v3880, 0
      %v4081 = vsel %vm539, %v3883, 0
      %v4084 = vsel %vm539, %v3886, 0
      %v4087 = vsel %vm539, %v3889, 0
      %v4090 = vsel %vm539, %v3892, 0
      %v4093 = vsel %vm539, %v3895, 0
      %v4096 = vsel %vm539, %v3898, 0
      %v4099 = vsel %vm539, %v3901, 0
      %v4102 = vsel %vm539, %v3904, 0
      %v4105 = vsel %vm539, %v3907, 0
      %v4108 = vsel %vm539, %v3910, 0
      %4110 = vmatprep.subr.bf16.mxu0 0
      %4111 = vmatpush1.bf16.msra.mxu0 %v4033
      %4112 = vmatprep.subr.bf16.mxu0 0
      %4113 = vmatpush1.bf16.msra.mxu0 %v4032
      %4114 = vmatprep.subr.bf16.mxu0 0
      %4115 = vmatpush1.bf16.msra.mxu0 %v4031
      %4116 = vmatprep.subr.bf16.mxu0 0
      %4117 = vmatpush1.bf16.msra.mxu0 %v4030
      %4118 = vmatprep.subr.bf16.mxu0 0
      %4119 = vmatpush1.bf16.msra.mxu0 %v4029
      %4120 = vmatprep.subr.bf16.mxu0 0
      %4121 = vmatpush1.bf16.msra.mxu0 %v4028
      %4122 = vmatprep.subr.bf16.mxu0 0
      %4123 = vmatpush1.bf16.msra.mxu0 %v4027
      %4124 = vmatprep.subr.bf16.mxu0 0
      %4125 = vmatpush1.bf16.msra.mxu0 %v4026
      %4126 = vmatprep.subr.bf16.mxu0 0
      %4127 = vmatpush2.bf16.msra.mxu0 %v4041
      %4128 = vmatprep.subr.bf16.mxu0 0
      %4129 = vmatpush2.bf16.msra.mxu0 %v4040
      %4130 = vmatprep.subr.bf16.mxu0 0
      %4131 = vmatpush2.bf16.msra.mxu0 %v4039
      %4132 = vmatprep.subr.bf16.mxu0 0
      %4133 = vmatpush2.bf16.msra.mxu0 %v4038
      %4134 = vmatprep.subr.bf16.mxu0 0
      %4135 = vmatpush2.bf16.msra.mxu0 %v4037
      %4136 = vmatprep.subr.bf16.mxu0 0
      %4137 = vmatpush2.bf16.msra.mxu0 %v4036
      %4138 = vmatprep.subr.bf16.mxu0 0
      %4139 = vmatpush2.bf16.msra.mxu0 %v4035
      %4140 = vmatprep.subr.bf16.mxu0 0
      %4141 = vmatpush2.bf16.msra.mxu0 %v4034
      %4142 = vmatprep.mubr.bf16.mxu0 %v3864
      %4143 = vmatmul.mubr.bf16.gmra.mxu0 %v3863
      %v4144 = vpop.f32.mrf.mxu0
      %v4145 = vadd.f32 %v3952, %v4144
      %v4146 = vpop.f32.mrf.mxu0
      %v4147 = vpop.f32.mrf.mxu0
      %v4148 = vadd.f32 %v3952, %v4147
      %v4149 = vpop.f32.mrf.mxu0
      %4150 = vmatprep.mubr.bf16.mxu0 %v3867
      %4151 = vmatmul.mubr.bf16.gmra.mxu0 %v3866
      %v4152 = vpop.f32.mrf.mxu0
      %v4153 = vadd.f32 %v3952, %v4152
      %v4154 = vpop.f32.mrf.mxu0
      %v4155 = vpop.f32.mrf.mxu0
      %v4156 = vadd.f32 %v3952, %v4155
      %v4157 = vpop.f32.mrf.mxu0
      %4158 = vmatprep.mubr.bf16.mxu0 %v3870
      %4159 = vmatmul.mubr.bf16.gmra.mxu0 %v3869
      %v4160 = vpop.f32.mrf.mxu0
      %v4161 = vadd.f32 %v3952, %v4160
      %v4162 = vpop.f32.mrf.mxu0
      %v4163 = vpop.f32.mrf.mxu0
      %v4164 = vadd.f32 %v3952, %v4163
      %v4165 = vpop.f32.mrf.mxu0
      %4166 = vmatprep.mubr.bf16.mxu0 %v3873
      %4167 = vmatmul.mubr.bf16.gmra.mxu0 %v3872
      %v4168 = vpop.f32.mrf.mxu0
      %v4169 = vadd.f32 %v3952, %v4168
      %v4170 = vpop.f32.mrf.mxu0
      %v4171 = vpop.f32.mrf.mxu0
      %v4172 = vadd.f32 %v3952, %v4171
      %v4173 = vpop.f32.mrf.mxu0
      %4174 = vmatprep.mubr.bf16.mxu0 %v3876
      %4175 = vmatmul.mubr.bf16.gmra.mxu0 %v3875
      %v4176 = vpop.f32.mrf.mxu0
      %v4177 = vadd.f32 %v3952, %v4176
      %v4178 = vpop.f32.mrf.mxu0
      %v4179 = vpop.f32.mrf.mxu0
      %v4180 = vadd.f32 %v3952, %v4179
      %v4181 = vpop.f32.mrf.mxu0
      %4182 = vmatprep.mubr.bf16.mxu0 %v3879
      %4183 = vmatmul.mubr.bf16.gmra.mxu0 %v3878
      %v4184 = vpop.f32.mrf.mxu0
      %v4185 = vadd.f32 %v3952, %v4184
      %v4186 = vpop.f32.mrf.mxu0
      %v4187 = vpop.f32.mrf.mxu0
      %v4188 = vadd.f32 %v3952, %v4187
      %v4189 = vpop.f32.mrf.mxu0
      %4190 = vmatprep.mubr.bf16.mxu0 %v3882
      %4191 = vmatmul.mubr.bf16.gmra.mxu0 %v3881
      %v4192 = vpop.f32.mrf.mxu0
      %v4193 = vadd.f32 %v3952, %v4192
      %v4194 = vpop.f32.mrf.mxu0
      %v4195 = vpop.f32.mrf.mxu0
      %v4196 = vadd.f32 %v3952, %v4195
      %v4197 = vpop.f32.mrf.mxu0
      %4198 = vmatprep.mubr.bf16.mxu0 %v3885
      %4199 = vmatmul.mubr.bf16.gmra.mxu0 %v3884
      %v4200 = vpop.f32.mrf.mxu0
      %v4201 = vadd.f32 %v3952, %v4200
      %v4202 = vpop.f32.mrf.mxu0
      %v4203 = vpop.f32.mrf.mxu0
      %v4204 = vadd.f32 %v3952, %v4203
      %v4205 = vpop.f32.mrf.mxu0
      %4206 = vmatprep.mubr.bf16.mxu0 %v3888
      %4207 = vmatmul.mubr.bf16.gmra.mxu0 %v3887
      %v4208 = vpop.f32.mrf.mxu0
      %v4209 = vadd.f32 %v3952, %v4208
      %v4210 = vpop.f32.mrf.mxu0
      %v4211 = vpop.f32.mrf.mxu0
      %v4212 = vadd.f32 %v3952, %v4211
      %v4213 = vpop.f32.mrf.mxu0
      %4214 = vmatprep.mubr.bf16.mxu0 %v3891
      %4215 = vmatmul.mubr.bf16.gmra.mxu0 %v3890
      %v4216 = vpop.f32.mrf.mxu0
      %v4217 = vadd.f32 %v3952, %v4216
      %v4218 = vpop.f32.mrf.mxu0
      %v4219 = vpop.f32.mrf.mxu0
      %v4220 = vadd.f32 %v3952, %v4219
      %v4221 = vpop.f32.mrf.mxu0
      %4222 = vmatprep.mubr.bf16.mxu0 %v3894
      %4223 = vmatmul.mubr.bf16.gmra.mxu0 %v3893
      %v4224 = vpop.f32.mrf.mxu0
      %v4225 = vadd.f32 %v3952, %v4224
      %v4226 = vpop.f32.mrf.mxu0
      %v4227 = vpop.f32.mrf.mxu0
      %v4228 = vadd.f32 %v3952, %v4227
      %v4229 = vpop.f32.mrf.mxu0
      %4230 = vmatprep.mubr.bf16.mxu0 %v3897
      %4231 = vmatmul.mubr.bf16.gmra.mxu0 %v3896
      %v4232 = vpop.f32.mrf.mxu0
      %v4233 = vadd.f32 %v3952, %v4232
      %v4234 = vpop.f32.mrf.mxu0
      %v4235 = vpop.f32.mrf.mxu0
      %v4236 = vadd.f32 %v3952, %v4235
      %v4237 = vpop.f32.mrf.mxu0
      %4238 = vmatprep.mubr.bf16.mxu0 %v3900
      %4239 = vmatmul.mubr.bf16.gmra.mxu0 %v3899
      %v4240 = vpop.f32.mrf.mxu0
      %v4241 = vadd.f32 %v3952, %v4240
      %v4242 = vpop.f32.mrf.mxu0
      %v4243 = vpop.f32.mrf.mxu0
      %v4244 = vadd.f32 %v3952, %v4243
      %v4245 = vpop.f32.mrf.mxu0
      %4246 = vmatprep.mubr.bf16.mxu0 %v3903
      %4247 = vmatmul.mubr.bf16.gmra.mxu0 %v3902
      %v4248 = vpop.f32.mrf.mxu0
      %v4249 = vadd.f32 %v3952, %v4248
      %v4250 = vpop.f32.mrf.mxu0
      %v4251 = vpop.f32.mrf.mxu0
      %v4252 = vadd.f32 %v3952, %v4251
      %v4253 = vpop.f32.mrf.mxu0
      %4254 = vmatprep.mubr.bf16.mxu0 %v3906
      %4255 = vmatmul.mubr.bf16.gmra.mxu0 %v3905
      %v4256 = vpop.f32.mrf.mxu0
      %v4257 = vadd.f32 %v3952, %v4256
      %v4258 = vpop.f32.mrf.mxu0
      %v4259 = vpop.f32.mrf.mxu0
      %v4260 = vadd.f32 %v3952, %v4259
      %v4261 = vpop.f32.mrf.mxu0
      %4262 = vmatprep.mubr.bf16.mxu0 %v3909
      %4263 = vmatmul.mubr.bf16.gmra.mxu0 %v3908
      %v4264 = vpop.f32.mrf.mxu0
      %v4265 = vadd.f32 %v3952, %v4264
      %v4266 = vpop.f32.mrf.mxu0
      %v4267 = vpop.f32.mrf.mxu0
      %v4268 = vadd.f32 %v3952, %v4267
      %v4269 = vpop.f32.mrf.mxu0
      %4270 = vdwg.mxu0
      %4271 = vmatprep.subr.bf16.mxu0 0
      %4272 = vmatpush1.bf16.msra.mxu0 0
      %4273 = vmatprep.subr.bf16.mxu0 0
      %4274 = vmatpush1.bf16.msra.mxu0 0
      %4275 = vmatprep.subr.bf16.mxu0 0
      %4276 = vmatpush1.bf16.msra.mxu0 0
      %4277 = vmatprep.subr.bf16.mxu0 0
      %4278 = vmatpush1.bf16.msra.mxu0 0
      %4279 = vmatprep.subr.bf16.mxu0 0
      %4280 = vmatpush1.bf16.msra.mxu0 0
      %4281 = vmatprep.subr.bf16.mxu0 0
      %4282 = vmatpush1.bf16.msra.mxu0 0
      %4283 = vmatprep.subr.bf16.mxu0 0
      %4284 = vmatpush1.bf16.msra.mxu0 %v4043
      %4285 = vmatprep.subr.bf16.mxu0 0
      %4286 = vmatpush1.bf16.msra.mxu0 %v4042
      %4287 = vmatprep.subr.bf16.mxu0 0
      %4288 = vmatpush2.bf16.msra.mxu0 0
      %4289 = vmatprep.subr.bf16.mxu0 0
      %4290 = vmatpush2.bf16.msra.mxu0 0
      %4291 = vmatprep.subr.bf16.mxu0 0
      %4292 = vmatpush2.bf16.msra.mxu0 0
      %4293 = vmatprep.subr.bf16.mxu0 0
      %4294 = vmatpush2.bf16.msra.mxu0 0
      %4295 = vmatprep.subr.bf16.mxu0 0
      %4296 = vmatpush2.bf16.msra.mxu0 0
      %4297 = vmatprep.subr.bf16.mxu0 0
      %4298 = vmatpush2.bf16.msra.mxu0 0
      %4299 = vmatprep.subr.bf16.mxu0 0
      %4300 = vmatpush2.bf16.msra.mxu0 0
      %4301 = vmatprep.subr.bf16.mxu0 0
      %4302 = vmatpush2.bf16.msra.mxu0 0
      %4303 = vmatprep.mubr.bf16.mxu0 0
      %4304 = vmatmul.mubr.bf16.gmra.mxu0 %v4063
      %v4305 = vpop.f32.mrf.mxu0
      %v4306 = vadd.f32 %v4145, %v4305
      %v4307 = vpop.f32.mrf.mxu0
      %v4308 = vpop.f32.mrf.mxu0
      %v4309 = vadd.f32 %v4148, %v4308
      %v4310 = vpop.f32.mrf.mxu0
      %4311 = vmatprep.mubr.bf16.mxu0 0
      %4312 = vmatmul.mubr.bf16.gmra.mxu0 %v4066
      %v4313 = vpop.f32.mrf.mxu0
      %v4314 = vadd.f32 %v4153, %v4313
      %v4315 = vpop.f32.mrf.mxu0
      %v4316 = vpop.f32.mrf.mxu0
      %v4317 = vadd.f32 %v4156, %v4316
      %v4318 = vpop.f32.mrf.mxu0
      %4319 = vmatprep.mubr.bf16.mxu0 0
      %4320 = vmatmul.mubr.bf16.gmra.mxu0 %v4069
      %v4321 = vpop.f32.mrf.mxu0
      %v4322 = vadd.f32 %v4161, %v4321
      %v4323 = vpop.f32.mrf.mxu0
      %v4324 = vpop.f32.mrf.mxu0
      %v4325 = vadd.f32 %v4164, %v4324
      %v4326 = vpop.f32.mrf.mxu0
      %4327 = vmatprep.mubr.bf16.mxu0 0
      %4328 = vmatmul.mubr.bf16.gmra.mxu0 %v4072
      %v4329 = vpop.f32.mrf.mxu0
      %v4330 = vadd.f32 %v4169, %v4329
      %v4331 = vpop.f32.mrf.mxu0
      %v4332 = vpop.f32.mrf.mxu0
      %v4333 = vadd.f32 %v4172, %v4332
      %v4334 = vpop.f32.mrf.mxu0
      %4335 = vmatprep.mubr.bf16.mxu0 0
      %4336 = vmatmul.mubr.bf16.gmra.mxu0 %v4075
      %v4337 = vpop.f32.mrf.mxu0
      %v4338 = vadd.f32 %v4177, %v4337
      %v4339 = vpop.f32.mrf.mxu0
      %v4340 = vpop.f32.mrf.mxu0
      %v4341 = vadd.f32 %v4180, %v4340
      %v4342 = vpop.f32.mrf.mxu0
      %4343 = vmatprep.mubr.bf16.mxu0 0
      %4344 = vmatmul.mubr.bf16.gmra.mxu0 %v4078
      %v4345 = vpop.f32.mrf.mxu0
      %v4346 = vadd.f32 %v4185, %v4345
      %v4347 = vpop.f32.mrf.mxu0
      %v4348 = vpop.f32.mrf.mxu0
      %v4349 = vadd.f32 %v4188, %v4348
      %v4350 = vpop.f32.mrf.mxu0
      %4351 = vmatprep.mubr.bf16.mxu0 0
      %4352 = vmatmul.mubr.bf16.gmra.mxu0 %v4081
      %v4353 = vpop.f32.mrf.mxu0
      %v4354 = vadd.f32 %v4193, %v4353
      %v4355 = vpop.f32.mrf.mxu0
      %v4356 = vpop.f32.mrf.mxu0
      %v4357 = vadd.f32 %v4196, %v4356
      %v4358 = vpop.f32.mrf.mxu0
      %4359 = vmatprep.mubr.bf16.mxu0 0
      %4360 = vmatmul.mubr.bf16.gmra.mxu0 %v4084
      %v4361 = vpop.f32.mrf.mxu0
      %v4362 = vadd.f32 %v4201, %v4361
      %v4363 = vpop.f32.mrf.mxu0
      %v4364 = vpop.f32.mrf.mxu0
      %v4365 = vadd.f32 %v4204, %v4364
      %v4366 = vpop.f32.mrf.mxu0
      %4367 = vmatprep.mubr.bf16.mxu0 0
      %4368 = vmatmul.mubr.bf16.gmra.mxu0 %v4087
      %v4369 = vpop.f32.mrf.mxu0
      %v4370 = vadd.f32 %v4209, %v4369
      %v4371 = vpop.f32.mrf.mxu0
      %v4372 = vpop.f32.mrf.mxu0
      %v4373 = vadd.f32 %v4212, %v4372
      %v4374 = vpop.f32.mrf.mxu0
      %4375 = vmatprep.mubr.bf16.mxu0 0
      %4376 = vmatmul.mubr.bf16.gmra.mxu0 %v4090
      %v4377 = vpop.f32.mrf.mxu0
      %v4378 = vadd.f32 %v4217, %v4377
      %v4379 = vpop.f32.mrf.mxu0
      %v4380 = vpop.f32.mrf.mxu0
      %v4381 = vadd.f32 %v4220, %v4380
      %v4382 = vpop.f32.mrf.mxu0
      %4383 = vmatprep.mubr.bf16.mxu0 0
      %4384 = vmatmul.mubr.bf16.gmra.mxu0 %v4093
      %v4385 = vpop.f32.mrf.mxu0
      %v4386 = vadd.f32 %v4225, %v4385
      %v4387 = vpop.f32.mrf.mxu0
      %v4388 = vpop.f32.mrf.mxu0
      %v4389 = vadd.f32 %v4228, %v4388
      %v4390 = vpop.f32.mrf.mxu0
      %4391 = vmatprep.mubr.bf16.mxu0 0
      %4392 = vmatmul.mubr.bf16.gmra.mxu0 %v4096
      %v4393 = vpop.f32.mrf.mxu0
      %v4394 = vadd.f32 %v4233, %v4393
      %v4395 = vpop.f32.mrf.mxu0
      %v4396 = vpop.f32.mrf.mxu0
      %v4397 = vadd.f32 %v4236, %v4396
      %v4398 = vpop.f32.mrf.mxu0
      %4399 = vmatprep.mubr.bf16.mxu0 0
      %4400 = vmatmul.mubr.bf16.gmra.mxu0 %v4099
      %v4401 = vpop.f32.mrf.mxu0
      %v4402 = vadd.f32 %v4241, %v4401
      %v4403 = vpop.f32.mrf.mxu0
      %v4404 = vpop.f32.mrf.mxu0
      %v4405 = vadd.f32 %v4244, %v4404
      %v4406 = vpop.f32.mrf.mxu0
      %4407 = vmatprep.mubr.bf16.mxu0 0
      %4408 = vmatmul.mubr.bf16.gmra.mxu0 %v4102
      %v4409 = vpop.f32.mrf.mxu0
      %v4410 = vadd.f32 %v4249, %v4409
      %v4411 = vpop.f32.mrf.mxu0
      %v4412 = vpop.f32.mrf.mxu0
      %v4413 = vadd.f32 %v4252, %v4412
      %v4414 = vpop.f32.mrf.mxu0
      %4415 = vmatprep.mubr.bf16.mxu0 0
      %4416 = vmatmul.mubr.bf16.gmra.mxu0 %v4105
      %v4417 = vpop.f32.mrf.mxu0
      %v4418 = vadd.f32 %v4257, %v4417
      %v4419 = vpop.f32.mrf.mxu0
      %v4420 = vpop.f32.mrf.mxu0
      %v4421 = vadd.f32 %v4260, %v4420
      %v4422 = vpop.f32.mrf.mxu0
      %4423 = vmatprep.mubr.bf16.mxu0 0
      %4424 = vmatmul.mubr.bf16.gmra.mxu0 %v4108
      %v4425 = vpop.f32.mrf.mxu0
      %v4426 = vadd.f32 %v4265, %v4425
      %v4427 = vpop.f32.mrf.mxu0
      %v4428 = vpop.f32.mrf.mxu0
      %v4429 = vadd.f32 %v4268, %v4428
      %v4430 = vpop.f32.mrf.mxu0
      %4431 = vdwg.mxu0
      %v4432 = vmax.f32 %v4306, 0.0
      %v4433 = vmax.f32 %v4309, 0.0
      %v4434 = vmax.f32 %v4314, 0.0
      %v4435 = vmax.f32 %v4317, 0.0
      %v4436 = vmax.f32 %v4322, 0.0
      %v4437 = vmax.f32 %v4325, 0.0
      %v4438 = vmax.f32 %v4330, 0.0
      %v4439 = vmax.f32 %v4333, 0.0
      %v4440 = vmax.f32 %v4338, 0.0
      %v4441 = vmax.f32 %v4341, 0.0
      %v4442 = vmax.f32 %v4346, 0.0
      %v4443 = vmax.f32 %v4349, 0.0
      %v4444 = vmax.f32 %v4354, 0.0
      %v4445 = vmax.f32 %v4357, 0.0
      %v4446 = vmax.f32 %v4362, 0.0
      %v4447 = vmax.f32 %v4365, 0.0
      %v4448 = vmax.f32 %v4370, 0.0
      %v4449 = vmax.f32 %v4373, 0.0
      %v4450 = vmax.f32 %v4378, 0.0
      %v4451 = vmax.f32 %v4381, 0.0
      %v4452 = vmax.f32 %v4386, 0.0
      %v4453 = vmax.f32 %v4389, 0.0
      %v4454 = vmax.f32 %v4394, 0.0
      %v4455 = vmax.f32 %v4397, 0.0
      %v4456 = vmax.f32 %v4402, 0.0
      %v4457 = vmax.f32 %v4405, 0.0
      %v4458 = vmax.f32 %v4410, 0.0
      %v4459 = vmax.f32 %v4413, 0.0
      %v4460 = vmax.f32 %v4418, 0.0
      %v4461 = vmax.f32 %v4421, 0.0
      %v4462 = vmax.f32 %v4426, 0.0
      %v4463 = vmax.f32 %v4429, 0.0
      %4464 = vst.msk [vmem:[%s2579 + $0x1] sm:$0xff] %vm539, %v4432
      %4465 = vst.msk [vmem:[%s2579 + $0x9] sm:$0xff] %vm539, %v4433
      %4466 = vst.msk [vmem:[%s2579 + $0x19] sm:$0xff] %vm539, %v4434
      %4467 = vst.msk [vmem:[%s2579 + $0x21] sm:$0xff] %vm539, %v4435
      %4468 = vst.msk [vmem:[%s2579 + $0x31] sm:$0xff] %vm539, %v4436
      %4469 = vst.msk [vmem:[%s2579 + $0x39] sm:$0xff] %vm539, %v4437
      %4470 = vst.msk [vmem:[%s2579 + $0x49] sm:$0xff] %vm539, %v4438
      %4471 = vst.msk [vmem:[%s2579 + $0x51] sm:$0xff] %vm539, %v4439
      %4472 = vst.msk [vmem:[%s2579 + $0x61] sm:$0xff] %vm539, %v4440
      %4473 = vst.msk [vmem:[%s2579 + $0x69] sm:$0xff] %vm539, %v4441
      %4474 = vst.msk [vmem:[%s2579 + $0x79] sm:$0xff] %vm539, %v4442
      %4475 = vst.msk [vmem:[%s2579 + $0x81] sm:$0xff] %vm539, %v4443
      %4476 = vst.msk [vmem:[%s2579 + $0x91] sm:$0xff] %vm539, %v4444
      %4477 = vst.msk [vmem:[%s2579 + $0x99] sm:$0xff] %vm539, %v4445
      %4478 = vst.msk [vmem:[%s2579 + $0xa9] sm:$0xff] %vm539, %v4446
      %4479 = vst.msk [vmem:[%s2579 + $0xb1] sm:$0xff] %vm539, %v4447
      %4480 = vst.msk [vmem:[%s2579 + $0xc1] sm:$0xff] %vm539, %v4448
      %4481 = vst.msk [vmem:[%s2579 + $0xc9] sm:$0xff] %vm539, %v4449
      %4482 = vst.msk [vmem:[%s2579 + $0xd9] sm:$0xff] %vm539, %v4450
      %4483 = vst.msk [vmem:[%s2579 + $0xe1] sm:$0xff] %vm539, %v4451
      %4484 = vst.msk [vmem:[%s2579 + $0xf1] sm:$0xff] %vm539, %v4452
      %4485 = vst.msk [vmem:[%s2579 + $0xf9] sm:$0xff] %vm539, %v4453
      %4486 = vst.msk [vmem:[%s2579 + $0x109] sm:$0xff] %vm539, %v4454
      %4487 = vst.msk [vmem:[%s2579 + $0x111] sm:$0xff] %vm539, %v4455
      %4488 = vst.msk [vmem:[%s2579 + $0x121] sm:$0xff] %vm539, %v4456
      %4489 = vst.msk [vmem:[%s2579 + $0x129] sm:$0xff] %vm539, %v4457
      %4490 = vst.msk [vmem:[%s2579 + $0x139] sm:$0xff] %vm539, %v4458
      %4491 = vst.msk [vmem:[%s2579 + $0x141] sm:$0xff] %vm539, %v4459
      %4492 = vst.msk [vmem:[%s2579 + $0x151] sm:$0xff] %vm539, %v4460
      %4493 = vst.msk [vmem:[%s2579 + $0x159] sm:$0xff] %vm539, %v4461
      %4494 = vst.msk [vmem:[%s2579 + $0x169] sm:$0xff] %vm539, %v4462
      %4495 = vst.msk [vmem:[%s2579 + $0x171] sm:$0xff] %vm539, %v4463
      %v4496 = vld [vmem:[#allocation3] sm:$0xff]
      %v4497 = vld [vmem:[#allocation3 + $0x8] sm:$0xff]
      %v4498 = vld [vmem:[#allocation3 + $0x18] sm:$0xff]
      %v4499 = vld [vmem:[#allocation3 + $0x20] sm:$0xff]
      %v4500 = vld [vmem:[#allocation3 + $0x30] sm:$0xff]
      %v4501 = vld [vmem:[#allocation3 + $0x38] sm:$0xff]
      %v4502 = vld [vmem:[#allocation3 + $0x48] sm:$0xff]
      %v4503 = vld [vmem:[#allocation3 + $0x50] sm:$0xff]
      %v4504 = vld [vmem:[#allocation3 + $0x60] sm:$0xff]
      %v4505 = vld [vmem:[#allocation3 + $0x68] sm:$0xff]
      %v4506 = vld [vmem:[#allocation3 + $0x78] sm:$0xff]
      %v4507 = vld [vmem:[#allocation3 + $0x80] sm:$0xff]
      %v4508 = vld [vmem:[#allocation3 + $0x90] sm:$0xff]
      %v4509 = vld [vmem:[#allocation3 + $0x98] sm:$0xff]
      %v4510 = vld [vmem:[#allocation3 + $0xa8] sm:$0xff]
      %v4511 = vld [vmem:[#allocation3 + $0xb0] sm:$0xff]
      %v4512 = vld [vmem:[#allocation3 + $0xc0] sm:$0xff]
      %v4513 = vld [vmem:[#allocation3 + $0xc8] sm:$0xff]
      %v4514 = vld [vmem:[#allocation3 + $0xd8] sm:$0xff]
      %v4515 = vld [vmem:[#allocation3 + $0xe0] sm:$0xff]
      %v4516 = vld [vmem:[#allocation3 + $0xf0] sm:$0xff]
      %v4517 = vld [vmem:[#allocation3 + $0xf8] sm:$0xff]
      %v4518 = vld [vmem:[#allocation3 + $0x108] sm:$0xff]
      %v4519 = vld [vmem:[#allocation3 + $0x110] sm:$0xff]
      %v4520 = vld [vmem:[#allocation3 + $0x120] sm:$0xff]
      %v4521 = vld [vmem:[#allocation3 + $0x128] sm:$0xff]
      %v4522 = vld [vmem:[#allocation3 + $0x138] sm:$0xff]
      %v4523 = vld [vmem:[#allocation3 + $0x140] sm:$0xff]
      %v4524 = vld [vmem:[#allocation3 + $0x150] sm:$0xff]
      %v4525 = vld [vmem:[#allocation3 + $0x158] sm:$0xff]
      %v4526 = vld [vmem:[#allocation3 + $0x168] sm:$0xff]
      %v4527 = vld [vmem:[#allocation3 + $0x170] sm:$0xff]
      %v4528 = vld [vmem:[%s2579] sm:$0xff]
      %v4529 = vld [vmem:[%s2579 + $0x8] sm:$0xff]
      %v4530 = vld [vmem:[%s2579 + $0x18] sm:$0xff]
      %v4531 = vld [vmem:[%s2579 + $0x20] sm:$0xff]
      %v4532 = vld [vmem:[%s2579 + $0x30] sm:$0xff]
      %v4533 = vld [vmem:[%s2579 + $0x38] sm:$0xff]
      %v4534 = vld [vmem:[%s2579 + $0x48] sm:$0xff]
      %v4535 = vld [vmem:[%s2579 + $0x50] sm:$0xff]
      %v4536 = vld [vmem:[%s2579 + $0x60] sm:$0xff]
      %v4537 = vld [vmem:[%s2579 + $0x68] sm:$0xff]
      %v4538 = vld [vmem:[%s2579 + $0x78] sm:$0xff]
      %v4539 = vld [vmem:[%s2579 + $0x80] sm:$0xff]
      %v4540 = vld [vmem:[%s2579 + $0x90] sm:$0xff]
      %v4541 = vld [vmem:[%s2579 + $0x98] sm:$0xff]
      %v4542 = vld [vmem:[%s2579 + $0xa8] sm:$0xff]
      %v4543 = vld [vmem:[%s2579 + $0xb0] sm:$0xff]
      %v4544 = vld [vmem:[%s2579 + $0xc0] sm:$0xff]
      %v4545 = vld [vmem:[%s2579 + $0xc8] sm:$0xff]
      %v4546 = vld [vmem:[%s2579 + $0xd8] sm:$0xff]
      %v4547 = vld [vmem:[%s2579 + $0xe0] sm:$0xff]
      %v4548 = vld [vmem:[%s2579 + $0xf0] sm:$0xff]
      %v4549 = vld [vmem:[%s2579 + $0xf8] sm:$0xff]
      %v4550 = vld [vmem:[%s2579 + $0x108] sm:$0xff]
      %v4551 = vld [vmem:[%s2579 + $0x110] sm:$0xff]
      %v4552 = vld [vmem:[%s2579 + $0x120] sm:$0xff]
      %v4553 = vld [vmem:[%s2579 + $0x128] sm:$0xff]
      %v4554 = vld [vmem:[%s2579 + $0x138] sm:$0xff]
      %v4555 = vld [vmem:[%s2579 + $0x140] sm:$0xff]
      %v4556 = vld [vmem:[%s2579 + $0x150] sm:$0xff]
      %v4557 = vld [vmem:[%s2579 + $0x158] sm:$0xff]
      %v4558 = vld [vmem:[%s2579 + $0x168] sm:$0xff]
      %v4559 = vld [vmem:[%s2579 + $0x170] sm:$0xff]
      %v4560 = vld [vmem:[%s2676] sm:$0xff]
      %v4561 = vld [vmem:[%s2676 + $0x8] sm:$0xff]
      %v4562 = vld [vmem:[%s2676 + $0x18] sm:$0xff]
      %v4563 = vld [vmem:[%s2676 + $0x20] sm:$0xff]
      %v4564 = vld [vmem:[%s2676 + $0x30] sm:$0xff]
      %v4565 = vld [vmem:[%s2676 + $0x38] sm:$0xff]
      %v4566 = vld [vmem:[%s2676 + $0x48] sm:$0xff]
      %v4567 = vld [vmem:[%s2676 + $0x50] sm:$0xff]
      %v4568 = vld [vmem:[%s2676 + $0x60] sm:$0xff]
      %v4569 = vld [vmem:[%s2676 + $0x68] sm:$0xff]
      %v4570 = vld [vmem:[%s2676 + $0x78] sm:$0xff]
      %v4571 = vld [vmem:[%s2676 + $0x80] sm:$0xff]
      %v4572 = vld [vmem:[%s2676 + $0x90] sm:$0xff]
      %v4573 = vld [vmem:[%s2676 + $0x98] sm:$0xff]
      %v4574 = vld [vmem:[%s2676 + $0xa8] sm:$0xff]
      %v4575 = vld [vmem:[%s2676 + $0xb0] sm:$0xff]
      %v4576 = vld [vmem:[%s2676 + $0xc0] sm:$0xff]
      %v4577 = vld [vmem:[%s2676 + $0xc8] sm:$0xff]
      %v4578 = vld [vmem:[%s2676 + $0xd8] sm:$0xff]
      %v4579 = vld [vmem:[%s2676 + $0xe0] sm:$0xff]
      %v4580 = vld [vmem:[%s2676 + $0xf0] sm:$0xff]
      %v4581 = vld [vmem:[%s2676 + $0xf8] sm:$0xff]
      %v4582 = vld [vmem:[%s2676 + $0x108] sm:$0xff]
      %v4583 = vld [vmem:[%s2676 + $0x110] sm:$0xff]
      %v4584 = vld [vmem:[%s2676 + $0x120] sm:$0xff]
      %v4585 = vld [vmem:[%s2676 + $0x128] sm:$0xff]
      %v4586 = vld [vmem:[%s2676 + $0x138] sm:$0xff]
      %v4587 = vld [vmem:[%s2676 + $0x140] sm:$0xff]
      %v4588 = vld [vmem:[%s2676 + $0x150] sm:$0xff]
      %v4589 = vld [vmem:[%s2676 + $0x158] sm:$0xff]
      %v4590 = vld [vmem:[%s2676 + $0x168] sm:$0xff]
      %v4591 = vld [vmem:[%s2676 + $0x170] sm:$0xff]
      %v4592 = vld [vmem:[#allocation3 + $0x1] sm:$0xff]
      %v4593 = vld [vmem:[#allocation3 + $0x9] sm:$0xff]
      %v4594 = vld [vmem:[#allocation3 + $0x19] sm:$0xff]
      %v4595 = vld [vmem:[#allocation3 + $0x21] sm:$0xff]
      %v4596 = vld [vmem:[#allocation3 + $0x31] sm:$0xff]
      %v4597 = vld [vmem:[#allocation3 + $0x39] sm:$0xff]
      %v4598 = vld [vmem:[#allocation3 + $0x49] sm:$0xff]
      %v4599 = vld [vmem:[#allocation3 + $0x51] sm:$0xff]
      %v4600 = vld [vmem:[#allocation3 + $0x61] sm:$0xff]
      %v4601 = vld [vmem:[#allocation3 + $0x69] sm:$0xff]
      %v4602 = vld [vmem:[#allocation3 + $0x79] sm:$0xff]
      %v4603 = vld [vmem:[#allocation3 + $0x81] sm:$0xff]
      %v4604 = vld [vmem:[#allocation3 + $0x91] sm:$0xff]
      %v4605 = vld [vmem:[#allocation3 + $0x99] sm:$0xff]
      %v4606 = vld [vmem:[#allocation3 + $0xa9] sm:$0xff]
      %v4607 = vld [vmem:[#allocation3 + $0xb1] sm:$0xff]
      %v4608 = vld [vmem:[#allocation3 + $0xc1] sm:$0xff]
      %v4609 = vld [vmem:[#allocation3 + $0xc9] sm:$0xff]
      %v4610 = vld [vmem:[#allocation3 + $0xd9] sm:$0xff]
      %v4611 = vld [vmem:[#allocation3 + $0xe1] sm:$0xff]
      %v4612 = vld [vmem:[#allocation3 + $0xf1] sm:$0xff]
      %v4613 = vld [vmem:[#allocation3 + $0xf9] sm:$0xff]
      %v4614 = vld [vmem:[#allocation3 + $0x109] sm:$0xff]
      %v4615 = vld [vmem:[#allocation3 + $0x111] sm:$0xff]
      %v4616 = vld [vmem:[#allocation3 + $0x121] sm:$0xff]
      %v4617 = vld [vmem:[#allocation3 + $0x129] sm:$0xff]
      %v4618 = vld [vmem:[#allocation3 + $0x139] sm:$0xff]
      %v4619 = vld [vmem:[#allocation3 + $0x141] sm:$0xff]
      %v4620 = vld [vmem:[#allocation3 + $0x151] sm:$0xff]
      %v4621 = vld [vmem:[#allocation3 + $0x159] sm:$0xff]
      %v4622 = vld [vmem:[#allocation3 + $0x169] sm:$0xff]
      %v4623 = vld [vmem:[#allocation3 + $0x171] sm:$0xff]
      %v4624 = vld [vmem:[%s2579 + $0x1] sm:$0xff]
      %v4625 = vld [vmem:[%s2579 + $0x9] sm:$0xff]
      %v4626 = vld [vmem:[%s2579 + $0x19] sm:$0xff]
      %v4627 = vld [vmem:[%s2579 + $0x21] sm:$0xff]
      %v4628 = vld [vmem:[%s2579 + $0x31] sm:$0xff]
      %v4629 = vld [vmem:[%s2579 + $0x39] sm:$0xff]
      %v4630 = vld [vmem:[%s2579 + $0x49] sm:$0xff]
      %v4631 = vld [vmem:[%s2579 + $0x51] sm:$0xff]
      %v4632 = vld [vmem:[%s2579 + $0x61] sm:$0xff]
      %v4633 = vld [vmem:[%s2579 + $0x69] sm:$0xff]
      %v4634 = vld [vmem:[%s2579 + $0x79] sm:$0xff]
      %v4635 = vld [vmem:[%s2579 + $0x81] sm:$0xff]
      %v4636 = vld [vmem:[%s2579 + $0x91] sm:$0xff]
      %v4637 = vld [vmem:[%s2579 + $0x99] sm:$0xff]
      %v4638 = vld [vmem:[%s2579 + $0xa9] sm:$0xff]
      %v4639 = vld [vmem:[%s2579 + $0xb1] sm:$0xff]
      %v4640 = vld [vmem:[%s2579 + $0xc1] sm:$0xff]
      %v4641 = vld [vmem:[%s2579 + $0xc9] sm:$0xff]
      %v4642 = vld [vmem:[%s2579 + $0xd9] sm:$0xff]
      %v4643 = vld [vmem:[%s2579 + $0xe1] sm:$0xff]
      %v4644 = vld [vmem:[%s2579 + $0xf1] sm:$0xff]
      %v4645 = vld [vmem:[%s2579 + $0xf9] sm:$0xff]
      %v4646 = vld [vmem:[%s2579 + $0x109] sm:$0xff]
      %v4647 = vld [vmem:[%s2579 + $0x111] sm:$0xff]
      %v4648 = vld [vmem:[%s2579 + $0x121] sm:$0xff]
      %v4649 = vld [vmem:[%s2579 + $0x129] sm:$0xff]
      %v4650 = vld [vmem:[%s2579 + $0x139] sm:$0xff]
      %v4651 = vld [vmem:[%s2579 + $0x141] sm:$0xff]
      %v4652 = vld [vmem:[%s2579 + $0x151] sm:$0xff]
      %v4653 = vld [vmem:[%s2579 + $0x159] sm:$0xff]
      %v4654 = vld [vmem:[%s2579 + $0x169] sm:$0xff]
      %v4655 = vld [vmem:[%s2579 + $0x171] sm:$0xff]
      %v4656 = vld [vmem:[%s2676 + $0x1] sm:$0xff]
      %v4657 = vld [vmem:[%s2676 + $0x9] sm:$0xff]
      %v4658 = vld [vmem:[%s2676 + $0x19] sm:$0xff]
      %v4659 = vld [vmem:[%s2676 + $0x21] sm:$0xff]
      %v4660 = vld [vmem:[%s2676 + $0x31] sm:$0xff]
      %v4661 = vld [vmem:[%s2676 + $0x39] sm:$0xff]
      %v4662 = vld [vmem:[%s2676 + $0x49] sm:$0xff]
      %v4663 = vld [vmem:[%s2676 + $0x51] sm:$0xff]
      %v4664 = vld [vmem:[%s2676 + $0x61] sm:$0xff]
      %v4665 = vld [vmem:[%s2676 + $0x69] sm:$0xff]
      %v4666 = vld [vmem:[%s2676 + $0x79] sm:$0xff]
      %v4667 = vld [vmem:[%s2676 + $0x81] sm:$0xff]
      %v4668 = vld [vmem:[%s2676 + $0x91] sm:$0xff]
      %v4669 = vld [vmem:[%s2676 + $0x99] sm:$0xff]
      %v4670 = vld [vmem:[%s2676 + $0xa9] sm:$0xff]
      %v4671 = vld [vmem:[%s2676 + $0xb1] sm:$0xff]
      %v4672 = vld [vmem:[%s2676 + $0xc1] sm:$0xff]
      %v4673 = vld [vmem:[%s2676 + $0xc9] sm:$0xff]
      %v4674 = vld [vmem:[%s2676 + $0xd9] sm:$0xff]
      %v4675 = vld [vmem:[%s2676 + $0xe1] sm:$0xff]
      %v4676 = vld [vmem:[%s2676 + $0xf1] sm:$0xff]
      %v4677 = vld [vmem:[%s2676 + $0xf9] sm:$0xff]
      %v4678 = vld [vmem:[%s2676 + $0x109] sm:$0xff]
      %v4679 = vld [vmem:[%s2676 + $0x111] sm:$0xff]
      %v4680 = vld [vmem:[%s2676 + $0x121] sm:$0xff]
      %v4681 = vld [vmem:[%s2676 + $0x129] sm:$0xff]
      %v4682 = vld [vmem:[%s2676 + $0x139] sm:$0xff]
      %v4683 = vld [vmem:[%s2676 + $0x141] sm:$0xff]
      %v4684 = vld [vmem:[%s2676 + $0x151] sm:$0xff]
      %v4685 = vld [vmem:[%s2676 + $0x159] sm:$0xff]
      %v4686 = vld [vmem:[%s2676 + $0x169] sm:$0xff]
      %v4687 = vld [vmem:[%s2676 + $0x171] sm:$0xff]
      %v4688 = vld [vmem:[#allocation3 + $0x2] sm:$0xff]
      %v4689 = vld [vmem:[#allocation3 + $0xa] sm:$0xff]
      %v4690 = vld [vmem:[#allocation3 + $0x1a] sm:$0xff]
      %v4691 = vld [vmem:[#allocation3 + $0x22] sm:$0xff]
      %v4692 = vld [vmem:[#allocation3 + $0x32] sm:$0xff]
      %v4693 = vld [vmem:[#allocation3 + $0x3a] sm:$0xff]
      %v4694 = vld [vmem:[#allocation3 + $0x4a] sm:$0xff]
      %v4695 = vld [vmem:[#allocation3 + $0x52] sm:$0xff]
      %v4696 = vld [vmem:[#allocation3 + $0x62] sm:$0xff]
      %v4697 = vld [vmem:[#allocation3 + $0x6a] sm:$0xff]
      %v4698 = vld [vmem:[#allocation3 + $0x7a] sm:$0xff]
      %v4699 = vld [vmem:[#allocation3 + $0x82] sm:$0xff]
      %v4700 = vld [vmem:[#allocation3 + $0x92] sm:$0xff]
      %v4701 = vld [vmem:[#allocation3 + $0x9a] sm:$0xff]
      %v4702 = vld [vmem:[#allocation3 + $0xaa] sm:$0xff]
      %v4703 = vld [vmem:[#allocation3 + $0xb2] sm:$0xff]
      %v4704 = vld [vmem:[#allocation3 + $0xc2] sm:$0xff]
      %v4705 = vld [vmem:[#allocation3 + $0xca] sm:$0xff]
      %v4706 = vld [vmem:[#allocation3 + $0xda] sm:$0xff]
      %v4707 = vld [vmem:[#allocation3 + $0xe2] sm:$0xff]
      %v4708 = vld [vmem:[#allocation3 + $0xf2] sm:$0xff]
      %v4709 = vld [vmem:[#allocation3 + $0xfa] sm:$0xff]
      %v4710 = vld [vmem:[#allocation3 + $0x10a] sm:$0xff]
      %v4711 = vld [vmem:[#allocation3 + $0x112] sm:$0xff]
      %v4712 = vld [vmem:[#allocation3 + $0x122] sm:$0xff]
      %v4713 = vld [vmem:[#allocation3 + $0x12a] sm:$0xff]
      %v4714 = vld [vmem:[#allocation3 + $0x13a] sm:$0xff]
      %v4715 = vld [vmem:[#allocation3 + $0x142] sm:$0xff]
      %v4716 = vld [vmem:[#allocation3 + $0x152] sm:$0xff]
      %v4717 = vld [vmem:[#allocation3 + $0x15a] sm:$0xff]
      %v4718 = vld [vmem:[#allocation3 + $0x16a] sm:$0xff]
      %v4719 = vld [vmem:[#allocation3 + $0x172] sm:$0xff]
      %v4720 = vld [vmem:[%s2579 + $0x2] sm:$0xff]
      %v4721 = vld [vmem:[%s2579 + $0xa] sm:$0xff]
      %v4722 = vld [vmem:[%s2579 + $0x1a] sm:$0xff]
      %v4723 = vld [vmem:[%s2579 + $0x22] sm:$0xff]
      %v4724 = vld [vmem:[%s2579 + $0x32] sm:$0xff]
      %v4725 = vld [vmem:[%s2579 + $0x3a] sm:$0xff]
      %v4726 = vld [vmem:[%s2579 + $0x4a] sm:$0xff]
      %v4727 = vld [vmem:[%s2579 + $0x52] sm:$0xff]
      %v4728 = vld [vmem:[%s2579 + $0x62] sm:$0xff]
      %v4729 = vld [vmem:[%s2579 + $0x6a] sm:$0xff]
      %v4730 = vld [vmem:[%s2579 + $0x7a] sm:$0xff]
      %v4731 = vld [vmem:[%s2579 + $0x82] sm:$0xff]
      %v4732 = vld [vmem:[%s2579 + $0x92] sm:$0xff]
      %v4733 = vld [vmem:[%s2579 + $0x9a] sm:$0xff]
      %v4734 = vld [vmem:[%s2579 + $0xaa] sm:$0xff]
      %v4735 = vld [vmem:[%s2579 + $0xb2] sm:$0xff]
      %v4736 = vld [vmem:[%s2579 + $0xc2] sm:$0xff]
      %v4737 = vld [vmem:[%s2579 + $0xca] sm:$0xff]
      %v4738 = vld [vmem:[%s2579 + $0xda] sm:$0xff]
      %v4739 = vld [vmem:[%s2579 + $0xe2] sm:$0xff]
      %v4740 = vld [vmem:[%s2579 + $0xf2] sm:$0xff]
      %v4741 = vld [vmem:[%s2579 + $0xfa] sm:$0xff]
      %v4742 = vld [vmem:[%s2579 + $0x10a] sm:$0xff]
      %v4743 = vld [vmem:[%s2579 + $0x112] sm:$0xff]
      %v4744 = vld [vmem:[%s2579 + $0x122] sm:$0xff]
      %v4745 = vld [vmem:[%s2579 + $0x12a] sm:$0xff]
      %v4746 = vld [vmem:[%s2579 + $0x13a] sm:$0xff]
      %v4747 = vld [vmem:[%s2579 + $0x142] sm:$0xff]
      %v4748 = vld [vmem:[%s2579 + $0x152] sm:$0xff]
      %v4749 = vld [vmem:[%s2579 + $0x15a] sm:$0xff]
      %v4750 = vld [vmem:[%s2579 + $0x16a] sm:$0xff]
      %v4751 = vld [vmem:[%s2579 + $0x172] sm:$0xff]
      %v4752 = vld [vmem:[%s2676 + $0x2] sm:$0xff]
      %v4753 = vld [vmem:[%s2676 + $0xa] sm:$0xff]
      %v4754 = vld [vmem:[%s2676 + $0x1a] sm:$0xff]
      %v4755 = vld [vmem:[%s2676 + $0x22] sm:$0xff]
      %v4756 = vld [vmem:[%s2676 + $0x32] sm:$0xff]
      %v4757 = vld [vmem:[%s2676 + $0x3a] sm:$0xff]
      %v4758 = vld [vmem:[%s2676 + $0x4a] sm:$0xff]
      %v4759 = vld [vmem:[%s2676 + $0x52] sm:$0xff]
      %v4760 = vld [vmem:[%s2676 + $0x62] sm:$0xff]
      %v4761 = vld [vmem:[%s2676 + $0x6a] sm:$0xff]
      %v4762 = vld [vmem:[%s2676 + $0x7a] sm:$0xff]
      %v4763 = vld [vmem:[%s2676 + $0x82] sm:$0xff]
      %v4764 = vld [vmem:[%s2676 + $0x92] sm:$0xff]
      %v4765 = vld [vmem:[%s2676 + $0x9a] sm:$0xff]
      %v4766 = vld [vmem:[%s2676 + $0xaa] sm:$0xff]
      %v4767 = vld [vmem:[%s2676 + $0xb2] sm:$0xff]
      %v4768 = vld [vmem:[%s2676 + $0xc2] sm:$0xff]
      %v4769 = vld [vmem:[%s2676 + $0xca] sm:$0xff]
      %v4770 = vld [vmem:[%s2676 + $0xda] sm:$0xff]
      %v4771 = vld [vmem:[%s2676 + $0xe2] sm:$0xff]
      %v4772 = vld [vmem:[%s2676 + $0xf2] sm:$0xff]
      %v4773 = vld [vmem:[%s2676 + $0xfa] sm:$0xff]
      %v4774 = vld [vmem:[%s2676 + $0x10a] sm:$0xff]
      %v4775 = vld [vmem:[%s2676 + $0x112] sm:$0xff]
      %v4776 = vld [vmem:[%s2676 + $0x122] sm:$0xff]
      %v4777 = vld [vmem:[%s2676 + $0x12a] sm:$0xff]
      %v4778 = vld [vmem:[%s2676 + $0x13a] sm:$0xff]
      %v4779 = vld [vmem:[%s2676 + $0x142] sm:$0xff]
      %v4780 = vld [vmem:[%s2676 + $0x152] sm:$0xff]
      %v4781 = vld [vmem:[%s2676 + $0x15a] sm:$0xff]
      %v4782 = vld [vmem:[%s2676 + $0x16a] sm:$0xff]
      %v4783 = vld [vmem:[%s2676 + $0x172] sm:$0xff]
      %4816 = vrot.lane.b32.xlu0 %v4528, 32
      %v4817 = vpop.permute.xlu0 %4816
      %4818 = vrot.lane.b32.xlu0 %v4529, 32
      %v4819 = vpop.permute.xlu0 %4818
      %4820 = vrot.lane.b32.xlu0 %v4530, 32
      %v4821 = vpop.permute.xlu0 %4820
      %4822 = vrot.lane.b32.xlu0 %v4531, 32
      %v4823 = vpop.permute.xlu0 %4822
      %4824 = vrot.lane.b32.xlu0 %v4532, 32
      %v4825 = vpop.permute.xlu0 %4824
      %4826 = vrot.lane.b32.xlu0 %v4533, 32
      %v4827 = vpop.permute.xlu0 %4826
      %4828 = vrot.lane.b32.xlu0 %v4534, 32
      %v4829 = vpop.permute.xlu0 %4828
      %4830 = vrot.lane.b32.xlu0 %v4535, 32
      %v4831 = vpop.permute.xlu0 %4830
      %4832 = vrot.lane.b32.xlu0 %v4536, 32
      %v4833 = vpop.permute.xlu0 %4832
      %4834 = vrot.lane.b32.xlu0 %v4537, 32
      %v4835 = vpop.permute.xlu0 %4834
      %4836 = vrot.lane.b32.xlu0 %v4538, 32
      %v4837 = vpop.permute.xlu0 %4836
      %4838 = vrot.lane.b32.xlu0 %v4539, 32
      %v4839 = vpop.permute.xlu0 %4838
      %4840 = vrot.lane.b32.xlu0 %v4540, 32
      %v4841 = vpop.permute.xlu0 %4840
      %4842 = vrot.lane.b32.xlu0 %v4541, 32
      %v4843 = vpop.permute.xlu0 %4842
      %4844 = vrot.lane.b32.xlu0 %v4542, 32
      %v4845 = vpop.permute.xlu0 %4844
      %4846 = vrot.lane.b32.xlu0 %v4543, 32
      %v4847 = vpop.permute.xlu0 %4846
      %4848 = vrot.lane.b32.xlu0 %v4544, 32
      %v4849 = vpop.permute.xlu0 %4848
      %4850 = vrot.lane.b32.xlu0 %v4545, 32
      %v4851 = vpop.permute.xlu0 %4850
      %4852 = vrot.lane.b32.xlu0 %v4546, 32
      %v4853 = vpop.permute.xlu0 %4852
      %4854 = vrot.lane.b32.xlu0 %v4547, 32
      %v4855 = vpop.permute.xlu0 %4854
      %4856 = vrot.lane.b32.xlu0 %v4548, 32
      %v4857 = vpop.permute.xlu0 %4856
      %4858 = vrot.lane.b32.xlu0 %v4549, 32
      %v4859 = vpop.permute.xlu0 %4858
      %4860 = vrot.lane.b32.xlu0 %v4550, 32
      %v4861 = vpop.permute.xlu0 %4860
      %4862 = vrot.lane.b32.xlu0 %v4551, 32
      %v4863 = vpop.permute.xlu0 %4862
      %4864 = vrot.lane.b32.xlu0 %v4552, 32
      %v4865 = vpop.permute.xlu0 %4864
      %4866 = vrot.lane.b32.xlu0 %v4553, 32
      %v4867 = vpop.permute.xlu0 %4866
      %4868 = vrot.lane.b32.xlu0 %v4554, 32
      %v4869 = vpop.permute.xlu0 %4868
      %4870 = vrot.lane.b32.xlu0 %v4555, 32
      %v4871 = vpop.permute.xlu0 %4870
      %4872 = vrot.lane.b32.xlu0 %v4556, 32
      %v4873 = vpop.permute.xlu0 %4872
      %4874 = vrot.lane.b32.xlu0 %v4557, 32
      %v4875 = vpop.permute.xlu0 %4874
      %4876 = vrot.lane.b32.xlu0 %v4558, 32
      %v4877 = vpop.permute.xlu0 %4876
      %4878 = vrot.lane.b32.xlu0 %v4559, 32
      %v4879 = vpop.permute.xlu0 %4878
      %4944 = vrot.lane.b32.xlu0 %v4560, 64
      %v4945 = vpop.permute.xlu0 %4944
      %4946 = vrot.lane.b32.xlu0 %v4561, 64
      %v4947 = vpop.permute.xlu0 %4946
      %4948 = vrot.lane.b32.xlu0 %v4562, 64
      %v4949 = vpop.permute.xlu0 %4948
      %4950 = vrot.lane.b32.xlu0 %v4563, 64
      %v4951 = vpop.permute.xlu0 %4950
      %4952 = vrot.lane.b32.xlu0 %v4564, 64
      %v4953 = vpop.permute.xlu0 %4952
      %4954 = vrot.lane.b32.xlu0 %v4565, 64
      %v4955 = vpop.permute.xlu0 %4954
      %4956 = vrot.lane.b32.xlu0 %v4566, 64
      %v4957 = vpop.permute.xlu0 %4956
      %4958 = vrot.lane.b32.xlu0 %v4567, 64
      %v4959 = vpop.permute.xlu0 %4958
      %4960 = vrot.lane.b32.xlu0 %v4568, 64
      %v4961 = vpop.permute.xlu0 %4960
      %4962 = vrot.lane.b32.xlu0 %v4569, 64
      %v4963 = vpop.permute.xlu0 %4962
      %4964 = vrot.lane.b32.xlu0 %v4570, 64
      %v4965 = vpop.permute.xlu0 %4964
      %4966 = vrot.lane.b32.xlu0 %v4571, 64
      %v4967 = vpop.permute.xlu0 %4966
      %4968 = vrot.lane.b32.xlu0 %v4572, 64
      %v4969 = vpop.permute.xlu0 %4968
      %4970 = vrot.lane.b32.xlu0 %v4573, 64
      %v4971 = vpop.permute.xlu0 %4970
      %4972 = vrot.lane.b32.xlu0 %v4574, 64
      %v4973 = vpop.permute.xlu0 %4972
      %4974 = vrot.lane.b32.xlu0 %v4575, 64
      %v4975 = vpop.permute.xlu0 %4974
      %4976 = vrot.lane.b32.xlu0 %v4576, 64
      %v4977 = vpop.permute.xlu0 %4976
      %4978 = vrot.lane.b32.xlu0 %v4577, 64
      %v4979 = vpop.permute.xlu0 %4978
      %4980 = vrot.lane.b32.xlu0 %v4578, 64
      %v4981 = vpop.permute.xlu0 %4980
      %4982 = vrot.lane.b32.xlu0 %v4579, 64
      %v4983 = vpop.permute.xlu0 %4982
      %4984 = vrot.lane.b32.xlu0 %v4580, 64
      %v4985 = vpop.permute.xlu0 %4984
      %4986 = vrot.lane.b32.xlu0 %v4581, 64
      %v4987 = vpop.permute.xlu0 %4986
      %4988 = vrot.lane.b32.xlu0 %v4582, 64
      %v4989 = vpop.permute.xlu0 %4988
      %4990 = vrot.lane.b32.xlu0 %v4583, 64
      %v4991 = vpop.permute.xlu0 %4990
      %4992 = vrot.lane.b32.xlu0 %v4584, 64
      %v4993 = vpop.permute.xlu0 %4992
      %4994 = vrot.lane.b32.xlu0 %v4585, 64
      %v4995 = vpop.permute.xlu0 %4994
      %4996 = vrot.lane.b32.xlu0 %v4586, 64
      %v4997 = vpop.permute.xlu0 %4996
      %4998 = vrot.lane.b32.xlu0 %v4587, 64
      %v4999 = vpop.permute.xlu0 %4998
      %5000 = vrot.lane.b32.xlu0 %v4588, 64
      %v5001 = vpop.permute.xlu0 %5000
      %5002 = vrot.lane.b32.xlu0 %v4589, 64
      %v5003 = vpop.permute.xlu0 %5002
      %5004 = vrot.lane.b32.xlu0 %v4590, 64
      %v5005 = vpop.permute.xlu0 %5004
      %5006 = vrot.lane.b32.xlu0 %v4591, 64
      %v5007 = vpop.permute.xlu0 %5006
      %5072 = vrot.lane.b32.xlu0 %v4592, 96
      %v5073 = vpop.permute.xlu0 %5072
      %5074 = vrot.lane.b32.xlu0 %v4593, 96
      %v5075 = vpop.permute.xlu0 %5074
      %5076 = vrot.lane.b32.xlu0 %v4594, 96
      %v5077 = vpop.permute.xlu0 %5076
      %5078 = vrot.lane.b32.xlu0 %v4595, 96
      %v5079 = vpop.permute.xlu0 %5078
      %5080 = vrot.lane.b32.xlu0 %v4596, 96
      %v5081 = vpop.permute.xlu0 %5080
      %5082 = vrot.lane.b32.xlu0 %v4597, 96
      %v5083 = vpop.permute.xlu0 %5082
      %5084 = vrot.lane.b32.xlu0 %v4598, 96
      %v5085 = vpop.permute.xlu0 %5084
      %5086 = vrot.lane.b32.xlu0 %v4599, 96
      %v5087 = vpop.permute.xlu0 %5086
      %5088 = vrot.lane.b32.xlu0 %v4600, 96
      %v5089 = vpop.permute.xlu0 %5088
      %5090 = vrot.lane.b32.xlu0 %v4601, 96
      %v5091 = vpop.permute.xlu0 %5090
      %5092 = vrot.lane.b32.xlu0 %v4602, 96
      %v5093 = vpop.permute.xlu0 %5092
      %5094 = vrot.lane.b32.xlu0 %v4603, 96
      %v5095 = vpop.permute.xlu0 %5094
      %5096 = vrot.lane.b32.xlu0 %v4604, 96
      %v5097 = vpop.permute.xlu0 %5096
      %5098 = vrot.lane.b32.xlu0 %v4605, 96
      %v5099 = vpop.permute.xlu0 %5098
      %5100 = vrot.lane.b32.xlu0 %v4606, 96
      %v5101 = vpop.permute.xlu0 %5100
      %5102 = vrot.lane.b32.xlu0 %v4607, 96
      %v5103 = vpop.permute.xlu0 %5102
      %5104 = vrot.lane.b32.xlu0 %v4608, 96
      %v5105 = vpop.permute.xlu0 %5104
      %5106 = vrot.lane.b32.xlu0 %v4609, 96
      %v5107 = vpop.permute.xlu0 %5106
      %5108 = vrot.lane.b32.xlu0 %v4610, 96
      %v5109 = vpop.permute.xlu0 %5108
      %5110 = vrot.lane.b32.xlu0 %v4611, 96
      %v5111 = vpop.permute.xlu0 %5110
      %5112 = vrot.lane.b32.xlu0 %v4612, 96
      %v5113 = vpop.permute.xlu0 %5112
      %5114 = vrot.lane.b32.xlu0 %v4613, 96
      %v5115 = vpop.permute.xlu0 %5114
      %5116 = vrot.lane.b32.xlu0 %v4614, 96
      %v5117 = vpop.permute.xlu0 %5116
      %5118 = vrot.lane.b32.xlu0 %v4615, 96
      %v5119 = vpop.permute.xlu0 %5118
      %5120 = vrot.lane.b32.xlu0 %v4616, 96
      %v5121 = vpop.permute.xlu0 %5120
      %5122 = vrot.lane.b32.xlu0 %v4617, 96
      %v5123 = vpop.permute.xlu0 %5122
      %5124 = vrot.lane.b32.xlu0 %v4618, 96
      %v5125 = vpop.permute.xlu0 %5124
      %5126 = vrot.lane.b32.xlu0 %v4619, 96
      %v5127 = vpop.permute.xlu0 %5126
      %5128 = vrot.lane.b32.xlu0 %v4620, 96
      %v5129 = vpop.permute.xlu0 %5128
      %5130 = vrot.lane.b32.xlu0 %v4621, 96
      %v5131 = vpop.permute.xlu0 %5130
      %5132 = vrot.lane.b32.xlu0 %v4622, 96
      %v5133 = vpop.permute.xlu0 %5132
      %5134 = vrot.lane.b32.xlu0 %v4623, 96
      %v5135 = vpop.permute.xlu0 %5134
      %5200 = vrot.lane.b32.xlu0 %v4656, 32
      %v5201 = vpop.permute.xlu0 %5200
      %5202 = vrot.lane.b32.xlu0 %v4657, 32
      %v5203 = vpop.permute.xlu0 %5202
      %5204 = vrot.lane.b32.xlu0 %v4658, 32
      %v5205 = vpop.permute.xlu0 %5204
      %5206 = vrot.lane.b32.xlu0 %v4659, 32
      %v5207 = vpop.permute.xlu0 %5206
      %5208 = vrot.lane.b32.xlu0 %v4660, 32
      %v5209 = vpop.permute.xlu0 %5208
      %5210 = vrot.lane.b32.xlu0 %v4661, 32
      %v5211 = vpop.permute.xlu0 %5210
      %5212 = vrot.lane.b32.xlu0 %v4662, 32
      %v5213 = vpop.permute.xlu0 %5212
      %5214 = vrot.lane.b32.xlu0 %v4663, 32
      %v5215 = vpop.permute.xlu0 %5214
      %5216 = vrot.lane.b32.xlu0 %v4664, 32
      %v5217 = vpop.permute.xlu0 %5216
      %5218 = vrot.lane.b32.xlu0 %v4665, 32
      %v5219 = vpop.permute.xlu0 %5218
      %5220 = vrot.lane.b32.xlu0 %v4666, 32
      %v5221 = vpop.permute.xlu0 %5220
      %5222 = vrot.lane.b32.xlu0 %v4667, 32
      %v5223 = vpop.permute.xlu0 %5222
      %5224 = vrot.lane.b32.xlu0 %v4668, 32
      %v5225 = vpop.permute.xlu0 %5224
      %5226 = vrot.lane.b32.xlu0 %v4669, 32
      %v5227 = vpop.permute.xlu0 %5226
      %5228 = vrot.lane.b32.xlu0 %v4670, 32
      %v5229 = vpop.permute.xlu0 %5228
      %5230 = vrot.lane.b32.xlu0 %v4671, 32
      %v5231 = vpop.permute.xlu0 %5230
      %5232 = vrot.lane.b32.xlu0 %v4672, 32
      %v5233 = vpop.permute.xlu0 %5232
      %5234 = vrot.lane.b32.xlu0 %v4673, 32
      %v5235 = vpop.permute.xlu0 %5234
      %5236 = vrot.lane.b32.xlu0 %v4674, 32
      %v5237 = vpop.permute.xlu0 %5236
      %5238 = vrot.lane.b32.xlu0 %v4675, 32
      %v5239 = vpop.permute.xlu0 %5238
      %5240 = vrot.lane.b32.xlu0 %v4676, 32
      %v5241 = vpop.permute.xlu0 %5240
      %5242 = vrot.lane.b32.xlu0 %v4677, 32
      %v5243 = vpop.permute.xlu0 %5242
      %5244 = vrot.lane.b32.xlu0 %v4678, 32
      %v5245 = vpop.permute.xlu0 %5244
      %5246 = vrot.lane.b32.xlu0 %v4679, 32
      %v5247 = vpop.permute.xlu0 %5246
      %5248 = vrot.lane.b32.xlu0 %v4680, 32
      %v5249 = vpop.permute.xlu0 %5248
      %5250 = vrot.lane.b32.xlu0 %v4681, 32
      %v5251 = vpop.permute.xlu0 %5250
      %5252 = vrot.lane.b32.xlu0 %v4682, 32
      %v5253 = vpop.permute.xlu0 %5252
      %5254 = vrot.lane.b32.xlu0 %v4683, 32
      %v5255 = vpop.permute.xlu0 %5254
      %5256 = vrot.lane.b32.xlu0 %v4684, 32
      %v5257 = vpop.permute.xlu0 %5256
      %5258 = vrot.lane.b32.xlu0 %v4685, 32
      %v5259 = vpop.permute.xlu0 %5258
      %5260 = vrot.lane.b32.xlu0 %v4686, 32
      %v5261 = vpop.permute.xlu0 %5260
      %5262 = vrot.lane.b32.xlu0 %v4687, 32
      %v5263 = vpop.permute.xlu0 %5262
      %5328 = vrot.lane.b32.xlu0 %v4688, 64
      %v5329 = vpop.permute.xlu0 %5328
      %5330 = vrot.lane.b32.xlu0 %v4689, 64
      %v5331 = vpop.permute.xlu0 %5330
      %5332 = vrot.lane.b32.xlu0 %v4690, 64
      %v5333 = vpop.permute.xlu0 %5332
      %5334 = vrot.lane.b32.xlu0 %v4691, 64
      %v5335 = vpop.permute.xlu0 %5334
      %5336 = vrot.lane.b32.xlu0 %v4692, 64
      %v5337 = vpop.permute.xlu0 %5336
      %5338 = vrot.lane.b32.xlu0 %v4693, 64
      %v5339 = vpop.permute.xlu0 %5338
      %5340 = vrot.lane.b32.xlu0 %v4694, 64
      %v5341 = vpop.permute.xlu0 %5340
      %5342 = vrot.lane.b32.xlu0 %v4695, 64
      %v5343 = vpop.permute.xlu0 %5342
      %5344 = vrot.lane.b32.xlu0 %v4696, 64
      %v5345 = vpop.permute.xlu0 %5344
      %5346 = vrot.lane.b32.xlu0 %v4697, 64
      %v5347 = vpop.permute.xlu0 %5346
      %5348 = vrot.lane.b32.xlu0 %v4698, 64
      %v5349 = vpop.permute.xlu0 %5348
      %5350 = vrot.lane.b32.xlu0 %v4699, 64
      %v5351 = vpop.permute.xlu0 %5350
      %5352 = vrot.lane.b32.xlu0 %v4700, 64
      %v5353 = vpop.permute.xlu0 %5352
      %5354 = vrot.lane.b32.xlu0 %v4701, 64
      %v5355 = vpop.permute.xlu0 %5354
      %5356 = vrot.lane.b32.xlu0 %v4702, 64
      %v5357 = vpop.permute.xlu0 %5356
      %5358 = vrot.lane.b32.xlu0 %v4703, 64
      %v5359 = vpop.permute.xlu0 %5358
      %5360 = vrot.lane.b32.xlu0 %v4704, 64
      %v5361 = vpop.permute.xlu0 %5360
      %5362 = vrot.lane.b32.xlu0 %v4705, 64
      %v5363 = vpop.permute.xlu0 %5362
      %5364 = vrot.lane.b32.xlu0 %v4706, 64
      %v5365 = vpop.permute.xlu0 %5364
      %5366 = vrot.lane.b32.xlu0 %v4707, 64
      %v5367 = vpop.permute.xlu0 %5366
      %5368 = vrot.lane.b32.xlu0 %v4708, 64
      %v5369 = vpop.permute.xlu0 %5368
      %5370 = vrot.lane.b32.xlu0 %v4709, 64
      %v5371 = vpop.permute.xlu0 %5370
      %5372 = vrot.lane.b32.xlu0 %v4710, 64
      %v5373 = vpop.permute.xlu0 %5372
      %5374 = vrot.lane.b32.xlu0 %v4711, 64
      %v5375 = vpop.permute.xlu0 %5374
      %5376 = vrot.lane.b32.xlu0 %v4712, 64
      %v5377 = vpop.permute.xlu0 %5376
      %5378 = vrot.lane.b32.xlu0 %v4713, 64
      %v5379 = vpop.permute.xlu0 %5378
      %5380 = vrot.lane.b32.xlu0 %v4714, 64
      %v5381 = vpop.permute.xlu0 %5380
      %5382 = vrot.lane.b32.xlu0 %v4715, 64
      %v5383 = vpop.permute.xlu0 %5382
      %5384 = vrot.lane.b32.xlu0 %v4716, 64
      %v5385 = vpop.permute.xlu0 %5384
      %5386 = vrot.lane.b32.xlu0 %v4717, 64
      %v5387 = vpop.permute.xlu0 %5386
      %5388 = vrot.lane.b32.xlu0 %v4718, 64
      %v5389 = vpop.permute.xlu0 %5388
      %5390 = vrot.lane.b32.xlu0 %v4719, 64
      %v5391 = vpop.permute.xlu0 %5390
      %5456 = vrot.lane.b32.xlu0 %v4720, 96
      %v5457 = vpop.permute.xlu0 %5456
      %5458 = vrot.lane.b32.xlu0 %v4721, 96
      %v5459 = vpop.permute.xlu0 %5458
      %5460 = vrot.lane.b32.xlu0 %v4722, 96
      %v5461 = vpop.permute.xlu0 %5460
      %5462 = vrot.lane.b32.xlu0 %v4723, 96
      %v5463 = vpop.permute.xlu0 %5462
      %5464 = vrot.lane.b32.xlu0 %v4724, 96
      %v5465 = vpop.permute.xlu0 %5464
      %5466 = vrot.lane.b32.xlu0 %v4725, 96
      %v5467 = vpop.permute.xlu0 %5466
      %5468 = vrot.lane.b32.xlu0 %v4726, 96
      %v5469 = vpop.permute.xlu0 %5468
      %5470 = vrot.lane.b32.xlu0 %v4727, 96
      %v5471 = vpop.permute.xlu0 %5470
      %5472 = vrot.lane.b32.xlu0 %v4728, 96
      %v5473 = vpop.permute.xlu0 %5472
      %5474 = vrot.lane.b32.xlu0 %v4729, 96
      %v5475 = vpop.permute.xlu0 %5474
      %5476 = vrot.lane.b32.xlu0 %v4730, 96
      %v5477 = vpop.permute.xlu0 %5476
      %5478 = vrot.lane.b32.xlu0 %v4731, 96
      %v5479 = vpop.permute.xlu0 %5478
      %5480 = vrot.lane.b32.xlu0 %v4732, 96
      %v5481 = vpop.permute.xlu0 %5480
      %5482 = vrot.lane.b32.xlu0 %v4733, 96
      %v5483 = vpop.permute.xlu0 %5482
      %5484 = vrot.lane.b32.xlu0 %v4734, 96
      %v5485 = vpop.permute.xlu0 %5484
      %5486 = vrot.lane.b32.xlu0 %v4735, 96
      %v5487 = vpop.permute.xlu0 %5486
      %5488 = vrot.lane.b32.xlu0 %v4736, 96
      %v5489 = vpop.permute.xlu0 %5488
      %5490 = vrot.lane.b32.xlu0 %v4737, 96
      %v5491 = vpop.permute.xlu0 %5490
      %5492 = vrot.lane.b32.xlu0 %v4738, 96
      %v5493 = vpop.permute.xlu0 %5492
      %5494 = vrot.lane.b32.xlu0 %v4739, 96
      %v5495 = vpop.permute.xlu0 %5494
      %5496 = vrot.lane.b32.xlu0 %v4740, 96
      %v5497 = vpop.permute.xlu0 %5496
      %5498 = vrot.lane.b32.xlu0 %v4741, 96
      %v5499 = vpop.permute.xlu0 %5498
      %5500 = vrot.lane.b32.xlu0 %v4742, 96
      %v5501 = vpop.permute.xlu0 %5500
      %5502 = vrot.lane.b32.xlu0 %v4743, 96
      %v5503 = vpop.permute.xlu0 %5502
      %5504 = vrot.lane.b32.xlu0 %v4744, 96
      %v5505 = vpop.permute.xlu0 %5504
      %5506 = vrot.lane.b32.xlu0 %v4745, 96
      %v5507 = vpop.permute.xlu0 %5506
      %5508 = vrot.lane.b32.xlu0 %v4746, 96
      %v5509 = vpop.permute.xlu0 %5508
      %5510 = vrot.lane.b32.xlu0 %v4747, 96
      %v5511 = vpop.permute.xlu0 %5510
      %5512 = vrot.lane.b32.xlu0 %v4748, 96
      %v5513 = vpop.permute.xlu0 %5512
      %5514 = vrot.lane.b32.xlu0 %v4749, 96
      %v5515 = vpop.permute.xlu0 %5514
      %5516 = vrot.lane.b32.xlu0 %v4750, 96
      %v5517 = vpop.permute.xlu0 %5516
      %5518 = vrot.lane.b32.xlu0 %v4751, 96
      %v5519 = vpop.permute.xlu0 %5518
      %v5552 = vsel %vm539, %v4496, %v4817
      %v5553 = vsel %vm539, %v4497, %v4819
      %v5554 = vsel %vm539, %v4498, %v4821
      %v5555 = vsel %vm539, %v4499, %v4823
      %v5556 = vsel %vm539, %v4500, %v4825
      %v5557 = vsel %vm539, %v4501, %v4827
      %v5558 = vsel %vm539, %v4502, %v4829
      %v5559 = vsel %vm539, %v4503, %v4831
      %v5560 = vsel %vm539, %v4504, %v4833
      %v5561 = vsel %vm539, %v4505, %v4835
      %v5562 = vsel %vm539, %v4506, %v4837
      %v5563 = vsel %vm539, %v4507, %v4839
      %v5564 = vsel %vm539, %v4508, %v4841
      %v5565 = vsel %vm539, %v4509, %v4843
      %v5566 = vsel %vm539, %v4510, %v4845
      %v5567 = vsel %vm539, %v4511, %v4847
      %v5568 = vsel %vm539, %v4512, %v4849
      %v5569 = vsel %vm539, %v4513, %v4851
      %v5570 = vsel %vm539, %v4514, %v4853
      %v5571 = vsel %vm539, %v4515, %v4855
      %v5572 = vsel %vm539, %v4516, %v4857
      %v5573 = vsel %vm539, %v4517, %v4859
      %v5574 = vsel %vm539, %v4518, %v4861
      %v5575 = vsel %vm539, %v4519, %v4863
      %v5576 = vsel %vm539, %v4520, %v4865
      %v5577 = vsel %vm539, %v4521, %v4867
      %v5578 = vsel %vm539, %v4522, %v4869
      %v5579 = vsel %vm539, %v4523, %v4871
      %v5580 = vsel %vm539, %v4524, %v4873
      %v5581 = vsel %vm539, %v4525, %v4875
      %v5582 = vsel %vm539, %v4526, %v4877
      %v5583 = vsel %vm539, %v4527, %v4879
      %v5584 = vsel %vm3701, %v5552, %v4945
      %v5585 = vsel %vm3701, %v5553, %v4947
      %v5586 = vsel %vm3701, %v5554, %v4949
      %v5587 = vsel %vm3701, %v5555, %v4951
      %v5588 = vsel %vm3701, %v5556, %v4953
      %v5589 = vsel %vm3701, %v5557, %v4955
      %v5590 = vsel %vm3701, %v5558, %v4957
      %v5591 = vsel %vm3701, %v5559, %v4959
      %v5592 = vsel %vm3701, %v5560, %v4961
      %v5593 = vsel %vm3701, %v5561, %v4963
      %v5594 = vsel %vm3701, %v5562, %v4965
      %v5595 = vsel %vm3701, %v5563, %v4967
      %v5596 = vsel %vm3701, %v5564, %v4969
      %v5597 = vsel %vm3701, %v5565, %v4971
      %v5598 = vsel %vm3701, %v5566, %v4973
      %v5599 = vsel %vm3701, %v5567, %v4975
      %v5600 = vsel %vm3701, %v5568, %v4977
      %v5601 = vsel %vm3701, %v5569, %v4979
      %v5602 = vsel %vm3701, %v5570, %v4981
      %v5603 = vsel %vm3701, %v5571, %v4983
      %v5604 = vsel %vm3701, %v5572, %v4985
      %v5605 = vsel %vm3701, %v5573, %v4987
      %v5606 = vsel %vm3701, %v5574, %v4989
      %v5607 = vsel %vm3701, %v5575, %v4991
      %v5608 = vsel %vm3701, %v5576, %v4993
      %v5609 = vsel %vm3701, %v5577, %v4995
      %v5610 = vsel %vm3701, %v5578, %v4997
      %v5611 = vsel %vm3701, %v5579, %v4999
      %v5612 = vsel %vm3701, %v5580, %v5001
      %v5613 = vsel %vm3701, %v5581, %v5003
      %v5614 = vsel %vm3701, %v5582, %v5005
      %v5615 = vsel %vm3701, %v5583, %v5007
      %v5616 = vsel %vm3734, %v5584, %v5073
      %v5617 = vsel %vm3734, %v5585, %v5075
      %v5618 = vsel %vm3734, %v5586, %v5077
      %v5619 = vsel %vm3734, %v5587, %v5079
      %v5620 = vsel %vm3734, %v5588, %v5081
      %v5621 = vsel %vm3734, %v5589, %v5083
      %v5622 = vsel %vm3734, %v5590, %v5085
      %v5623 = vsel %vm3734, %v5591, %v5087
      %v5624 = vsel %vm3734, %v5592, %v5089
      %v5625 = vsel %vm3734, %v5593, %v5091
      %v5626 = vsel %vm3734, %v5594, %v5093
      %v5627 = vsel %vm3734, %v5595, %v5095
      %v5628 = vsel %vm3734, %v5596, %v5097
      %v5629 = vsel %vm3734, %v5597, %v5099
      %v5630 = vsel %vm3734, %v5598, %v5101
      %v5631 = vsel %vm3734, %v5599, %v5103
      %v5632 = vsel %vm3734, %v5600, %v5105
      %v5633 = vsel %vm3734, %v5601, %v5107
      %v5634 = vsel %vm3734, %v5602, %v5109
      %v5635 = vsel %vm3734, %v5603, %v5111
      %v5636 = vsel %vm3734, %v5604, %v5113
      %v5637 = vsel %vm3734, %v5605, %v5115
      %v5638 = vsel %vm3734, %v5606, %v5117
      %v5639 = vsel %vm3734, %v5607, %v5119
      %v5640 = vsel %vm3734, %v5608, %v5121
      %v5641 = vsel %vm3734, %v5609, %v5123
      %v5642 = vsel %vm3734, %v5610, %v5125
      %v5643 = vsel %vm3734, %v5611, %v5127
      %v5644 = vsel %vm3734, %v5612, %v5129
      %v5645 = vsel %vm3734, %v5613, %v5131
      %v5646 = vsel %vm3734, %v5614, %v5133
      %v5647 = vsel %vm3734, %v5615, %v5135
      %v5648 = vsel %vm539, %v4624, %v5201
      %v5649 = vsel %vm539, %v4625, %v5203
      %v5650 = vsel %vm539, %v4626, %v5205
      %v5651 = vsel %vm539, %v4627, %v5207
      %v5652 = vsel %vm539, %v4628, %v5209
      %v5653 = vsel %vm539, %v4629, %v5211
      %v5654 = vsel %vm539, %v4630, %v5213
      %v5655 = vsel %vm539, %v4631, %v5215
      %v5656 = vsel %vm539, %v4632, %v5217
      %v5657 = vsel %vm539, %v4633, %v5219
      %v5658 = vsel %vm539, %v4634, %v5221
      %v5659 = vsel %vm539, %v4635, %v5223
      %v5660 = vsel %vm539, %v4636, %v5225
      %v5661 = vsel %vm539, %v4637, %v5227
      %v5662 = vsel %vm539, %v4638, %v5229
      %v5663 = vsel %vm539, %v4639, %v5231
      %v5664 = vsel %vm539, %v4640, %v5233
      %v5665 = vsel %vm539, %v4641, %v5235
      %v5666 = vsel %vm539, %v4642, %v5237
      %v5667 = vsel %vm539, %v4643, %v5239
      %v5668 = vsel %vm539, %v4644, %v5241
      %v5669 = vsel %vm539, %v4645, %v5243
      %v5670 = vsel %vm539, %v4646, %v5245
      %v5671 = vsel %vm539, %v4647, %v5247
      %v5672 = vsel %vm539, %v4648, %v5249
      %v5673 = vsel %vm539, %v4649, %v5251
      %v5674 = vsel %vm539, %v4650, %v5253
      %v5675 = vsel %vm539, %v4651, %v5255
      %v5676 = vsel %vm539, %v4652, %v5257
      %v5677 = vsel %vm539, %v4653, %v5259
      %v5678 = vsel %vm539, %v4654, %v5261
      %v5679 = vsel %vm539, %v4655, %v5263
      %v5680 = vsel %vm3701, %v5648, %v5329
      %v5681 = vsel %vm3701, %v5649, %v5331
      %v5682 = vsel %vm3701, %v5650, %v5333
      %v5683 = vsel %vm3701, %v5651, %v5335
      %v5684 = vsel %vm3701, %v5652, %v5337
      %v5685 = vsel %vm3701, %v5653, %v5339
      %v5686 = vsel %vm3701, %v5654, %v5341
      %v5687 = vsel %vm3701, %v5655, %v5343
      %v5688 = vsel %vm3701, %v5656, %v5345
      %v5689 = vsel %vm3701, %v5657, %v5347
      %v5690 = vsel %vm3701, %v5658, %v5349
      %v5691 = vsel %vm3701, %v5659, %v5351
      %v5692 = vsel %vm3701, %v5660, %v5353
      %v5693 = vsel %vm3701, %v5661, %v5355
      %v5694 = vsel %vm3701, %v5662, %v5357
      %v5695 = vsel %vm3701, %v5663, %v5359
      %v5696 = vsel %vm3701, %v5664, %v5361
      %v5697 = vsel %vm3701, %v5665, %v5363
      %v5698 = vsel %vm3701, %v5666, %v5365
      %v5699 = vsel %vm3701, %v5667, %v5367
      %v5700 = vsel %vm3701, %v5668, %v5369
      %v5701 = vsel %vm3701, %v5669, %v5371
      %v5702 = vsel %vm3701, %v5670, %v5373
      %v5703 = vsel %vm3701, %v5671, %v5375
      %v5704 = vsel %vm3701, %v5672, %v5377
      %v5705 = vsel %vm3701, %v5673, %v5379
      %v5706 = vsel %vm3701, %v5674, %v5381
      %v5707 = vsel %vm3701, %v5675, %v5383
      %v5708 = vsel %vm3701, %v5676, %v5385
      %v5709 = vsel %vm3701, %v5677, %v5387
      %v5710 = vsel %vm3701, %v5678, %v5389
      %v5711 = vsel %vm3701, %v5679, %v5391
      %v5712 = vsel %vm3734, %v5680, %v5457
      %v5713 = vsel %vm3734, %v5681, %v5459
      %v5714 = vsel %vm3734, %v5682, %v5461
      %v5715 = vsel %vm3734, %v5683, %v5463
      %v5716 = vsel %vm3734, %v5684, %v5465
      %v5717 = vsel %vm3734, %v5685, %v5467
      %v5718 = vsel %vm3734, %v5686, %v5469
      %v5719 = vsel %vm3734, %v5687, %v5471
      %v5720 = vsel %vm3734, %v5688, %v5473
      %v5721 = vsel %vm3734, %v5689, %v5475
      %v5722 = vsel %vm3734, %v5690, %v5477
      %v5723 = vsel %vm3734, %v5691, %v5479
      %v5724 = vsel %vm3734, %v5692, %v5481
      %v5725 = vsel %vm3734, %v5693, %v5483
      %v5726 = vsel %vm3734, %v5694, %v5485
      %v5727 = vsel %vm3734, %v5695, %v5487
      %v5728 = vsel %vm3734, %v5696, %v5489
      %v5729 = vsel %vm3734, %v5697, %v5491
      %v5730 = vsel %vm3734, %v5698, %v5493
      %v5731 = vsel %vm3734, %v5699, %v5495
      %v5732 = vsel %vm3734, %v5700, %v5497
      %v5733 = vsel %vm3734, %v5701, %v5499
      %v5734 = vsel %vm3734, %v5702, %v5501
      %v5735 = vsel %vm3734, %v5703, %v5503
      %v5736 = vsel %vm3734, %v5704, %v5505
      %v5737 = vsel %vm3734, %v5705, %v5507
      %v5738 = vsel %vm3734, %v5706, %v5509
      %v5739 = vsel %vm3734, %v5707, %v5511
      %v5740 = vsel %vm3734, %v5708, %v5513
      %v5741 = vsel %vm3734, %v5709, %v5515
      %v5742 = vsel %vm3734, %v5710, %v5517
      %v5743 = vsel %vm3734, %v5711, %v5519
      %v5744 = vpack.c.bf16 %v5617, %v5616
      %v5745 = vpack.c.bf16 %v5713, %v5712
      %v5746 = vpack.c.bf16 %v4753, %v4752
      %v5747 = vpack.c.bf16 %v5619, %v5618
      %v5748 = vpack.c.bf16 %v5715, %v5714
      %v5749 = vpack.c.bf16 %v4755, %v4754
      %v5750 = vpack.c.bf16 %v5621, %v5620
      %v5751 = vpack.c.bf16 %v5717, %v5716
      %v5752 = vpack.c.bf16 %v4757, %v4756
      %v5753 = vpack.c.bf16 %v5623, %v5622
      %v5754 = vpack.c.bf16 %v5719, %v5718
      %v5755 = vpack.c.bf16 %v4759, %v4758
      %v5756 = vpack.c.bf16 %v5625, %v5624
      %v5757 = vpack.c.bf16 %v5721, %v5720
      %v5758 = vpack.c.bf16 %v4761, %v4760
      %v5759 = vpack.c.bf16 %v5627, %v5626
      %v5760 = vpack.c.bf16 %v5723, %v5722
      %v5761 = vpack.c.bf16 %v4763, %v4762
      %v5762 = vpack.c.bf16 %v5629, %v5628
      %v5763 = vpack.c.bf16 %v5725, %v5724
      %v5764 = vpack.c.bf16 %v4765, %v4764
      %v5765 = vpack.c.bf16 %v5631, %v5630
      %v5766 = vpack.c.bf16 %v5727, %v5726
      %v5767 = vpack.c.bf16 %v4767, %v4766
      %v5768 = vpack.c.bf16 %v5633, %v5632
      %v5769 = vpack.c.bf16 %v5729, %v5728
      %v5770 = vpack.c.bf16 %v4769, %v4768
      %v5771 = vpack.c.bf16 %v5635, %v5634
      %v5772 = vpack.c.bf16 %v5731, %v5730
      %v5773 = vpack.c.bf16 %v4771, %v4770
      %v5774 = vpack.c.bf16 %v5637, %v5636
      %v5775 = vpack.c.bf16 %v5733, %v5732
      %v5776 = vpack.c.bf16 %v4773, %v4772
      %v5777 = vpack.c.bf16 %v5639, %v5638
      %v5778 = vpack.c.bf16 %v5735, %v5734
      %v5779 = vpack.c.bf16 %v4775, %v4774
      %v5780 = vpack.c.bf16 %v5641, %v5640
      %v5781 = vpack.c.bf16 %v5737, %v5736
      %v5782 = vpack.c.bf16 %v4777, %v4776
      %v5783 = vpack.c.bf16 %v5643, %v5642
      %v5784 = vpack.c.bf16 %v5739, %v5738
      %v5785 = vpack.c.bf16 %v4779, %v4778
      %v5786 = vpack.c.bf16 %v5645, %v5644
      %v5787 = vpack.c.bf16 %v5741, %v5740
      %v5788 = vpack.c.bf16 %v4781, %v4780
      %v5789 = vpack.c.bf16 %v5647, %v5646
      %v5790 = vpack.c.bf16 %v5743, %v5742
      %v5791 = vpack.c.bf16 %v4783, %v4782
      %v5792 = vld [vmem:[%s6] sm:$0xf]
      %v5793 = vld [vmem:[%s6 + $0x4] sm:$0xf]
      %v5794 = vld [vmem:[%s6 + $0x8] sm:$0xf]
      %v5795 = vld [vmem:[%s6 + $0xc] sm:$0xf]
      %v5796 = vld [vmem:[%s6 + $0x10] sm:$0xf]
      %v5797 = vld [vmem:[%s6 + $0x14] sm:$0xf]
      %v5798 = vld [vmem:[%s6 + $0x18] sm:$0xf]
      %v5799 = vld [vmem:[%s6 + $0x1c] sm:$0xf]
      %v5800 = vld [vmem:[%s6 + $0x20] sm:$0xf]
      %v5801 = vld [vmem:[%s6 + $0x24] sm:$0xf]
      %v5802 = vld [vmem:[%s6 + $0x28] sm:$0xf]
      %v5803 = vld [vmem:[%s6 + $0x2c] sm:$0xf]
      %v5804 = vld [vmem:[%s6 + $0x30] sm:$0xf]
      %v5805 = vld [vmem:[%s6 + $0x34] sm:$0xf]
      %v5806 = vld [vmem:[%s6 + $0x38] sm:$0xf]
      %v5807 = vld [vmem:[%s6 + $0x3c] sm:$0xf]
      %v5808 = vld [vmem:[%s6 + $0x40] sm:$0xf]
      %v5809 = vld [vmem:[%s6 + $0x44] sm:$0xf]
      %v5810 = vld [vmem:[%s6 + $0x48] sm:$0xf]
      %v5811 = vld [vmem:[%s6 + $0x4c] sm:$0xf]
      %v5812 = vld [vmem:[%s6 + $0x50] sm:$0xf]
      %v5813 = vld [vmem:[%s6 + $0x54] sm:$0xf]
      %v5814 = vld [vmem:[%s6 + $0x58] sm:$0xf]
      %v5815 = vld [vmem:[%s6 + $0x5c] sm:$0xf]
      %v5816 = vld [vmem:[%s6 + $0x60] sm:$0xf]
      %v5817 = vld [vmem:[%s6 + $0x64] sm:$0xf]
      %v5818 = vld [vmem:[%s6 + $0x68] sm:$0xf]
      %v5819 = vld [vmem:[%s6 + $0x6c] sm:$0xf]
      %v5820 = vld [vmem:[%s6 + $0x70] sm:$0xf]
      %v5821 = vld [vmem:[%s6 + $0x74] sm:$0xf]
      %v5822 = vld [vmem:[%s6 + $0x78] sm:$0xf]
      %v5823 = vld [vmem:[%s6 + $0x7c] sm:$0xf]
      %v5824 = vld [vmem:[%s6 + $0x80] sm:$0xf]
      %v5825 = vld [vmem:[%s6 + $0x84] sm:$0xf]
      %v5826 = vld [vmem:[%s6 + $0x88] sm:$0xf]
      %v5827 = vld [vmem:[%s6 + $0x8c] sm:$0xf]
      %v5828 = vld [vmem:[%s7] sm:$0x1]
      %v5830 = vlaneseq
      %v5831 = vshrl.u32 %v5830, 7
      %v5832 = vsub.s32 0, %v5831
      %v5833 = vrot.slane %v5828, %v5832
      %v5871 = vunpack.c.l.b16 %v5792
      %v5872 = vunpack.c.l.b16 %v5793
      %v5873 = vunpack.c.l.b16 %v5794
      %v5874 = vunpack.c.l.b16 %v5795
      %v5875 = vunpack.c.l.b16 %v5796
      %v5876 = vunpack.c.l.b16 %v5797
      %v5877 = vunpack.c.l.b16 %v5798
      %v5878 = vunpack.c.l.b16 %v5799
      %v5879 = vunpack.c.l.b16 %v5800
      %v5880 = vunpack.c.l.b16 %v5801
      %v5881 = vunpack.c.l.b16 %v5802
      %v5882 = vunpack.c.l.b16 %v5803
      %v5883 = vunpack.c.l.b16 %v5804
      %v5884 = vunpack.c.l.b16 %v5805
      %v5885 = vunpack.c.l.b16 %v5806
      %v5886 = vunpack.c.l.b16 %v5807
      %v5887 = vunpack.c.l.b16 %v5808
      %v5888 = vunpack.c.l.b16 %v5809
      %v5889 = vunpack.c.l.b16 %v5810
      %v5890 = vunpack.c.l.b16 %v5811
      %v5891 = vunpack.c.l.b16 %v5812
      %v5892 = vunpack.c.l.b16 %v5813
      %v5893 = vunpack.c.l.b16 %v5814
      %v5894 = vunpack.c.l.b16 %v5815
      %v5895 = vunpack.c.l.b16 %v5816
      %v5896 = vunpack.c.l.b16 %v5817
      %v5897 = vunpack.c.l.b16 %v5818
      %v5898 = vunpack.c.l.b16 %v5819
      %v5899 = vunpack.c.l.b16 %v5820
      %v5900 = vunpack.c.l.b16 %v5821
      %v5901 = vunpack.c.l.b16 %v5822
      %v5902 = vunpack.c.l.b16 %v5823
      %v5903 = vunpack.c.l.b16 %v5824
      %v5904 = vunpack.c.l.b16 %v5825
      %v5905 = vunpack.c.l.b16 %v5826
      %v5906 = vunpack.c.l.b16 %v5827
      %v5907 = vpack.c.b16 %v5872, %v5871
      %v5908 = vpack.c.b16 %v5874, %v5873
      %v5909 = vpack.c.b16 %v5876, %v5875
      %v5910 = vpack.c.b16 %v5878, %v5877
      %v5911 = vpack.c.b16 %v5880, %v5879
      %v5912 = vpack.c.b16 %v5882, %v5881
      %v5913 = vpack.c.b16 %v5884, %v5883
      %v5914 = vpack.c.b16 %v5886, %v5885
      %v5915 = vpack.c.b16 %v5888, %v5887
      %v5916 = vpack.c.b16 %v5890, %v5889
      %v5917 = vpack.c.b16 %v5892, %v5891
      %v5918 = vpack.c.b16 %v5894, %v5893
      %v5919 = vpack.c.b16 %v5896, %v5895
      %v5920 = vpack.c.b16 %v5898, %v5897
      %v5921 = vpack.c.b16 %v5900, %v5899
      %v5922 = vpack.c.b16 %v5902, %v5901
      %v5923 = vpack.c.b16 %v5904, %v5903
      %v5924 = vpack.c.b16 %v5906, %v5905
      %v5944 = vsel %vm539, %v5746, 0
      %v5947 = vsel %vm539, %v5749, 0
      %v5950 = vsel %vm539, %v5752, 0
      %v5953 = vsel %vm539, %v5755, 0
      %v5956 = vsel %vm539, %v5758, 0
      %v5959 = vsel %vm539, %v5761, 0
      %v5962 = vsel %vm539, %v5764, 0
      %v5965 = vsel %vm539, %v5767, 0
      %v5968 = vsel %vm539, %v5770, 0
      %v5971 = vsel %vm539, %v5773, 0
      %v5974 = vsel %vm539, %v5776, 0
      %v5977 = vsel %vm539, %v5779, 0
      %v5980 = vsel %vm539, %v5782, 0
      %v5983 = vsel %vm539, %v5785, 0
      %v5986 = vsel %vm539, %v5788, 0
      %v5989 = vsel %vm539, %v5791, 0
      %5991 = vmatprep.subr.bf16.mxu0 0
      %5992 = vmatpush1.bf16.msra.mxu0 %v5914
      %5993 = vmatprep.subr.bf16.mxu0 0
      %5994 = vmatpush1.bf16.msra.mxu0 %v5913
      %5995 = vmatprep.subr.bf16.mxu0 0
      %5996 = vmatpush1.bf16.msra.mxu0 %v5912
      %5997 = vmatprep.subr.bf16.mxu0 0
      %5998 = vmatpush1.bf16.msra.mxu0 %v5911
      %5999 = vmatprep.subr.bf16.mxu0 0
      %6000 = vmatpush1.bf16.msra.mxu0 %v5910
      %6001 = vmatprep.subr.bf16.mxu0 0
      %6002 = vmatpush1.bf16.msra.mxu0 %v5909
      %6003 = vmatprep.subr.bf16.mxu0 0
      %6004 = vmatpush1.bf16.msra.mxu0 %v5908
      %6005 = vmatprep.subr.bf16.mxu0 0
      %6006 = vmatpush1.bf16.msra.mxu0 %v5907
      %6007 = vmatprep.subr.bf16.mxu0 0
      %6008 = vmatpush2.bf16.msra.mxu0 %v5922
      %6009 = vmatprep.subr.bf16.mxu0 0
      %6010 = vmatpush2.bf16.msra.mxu0 %v5921
      %6011 = vmatprep.subr.bf16.mxu0 0
      %6012 = vmatpush2.bf16.msra.mxu0 %v5920
      %6013 = vmatprep.subr.bf16.mxu0 0
      %6014 = vmatpush2.bf16.msra.mxu0 %v5919
      %6015 = vmatprep.subr.bf16.mxu0 0
      %6016 = vmatpush2.bf16.msra.mxu0 %v5918
      %6017 = vmatprep.subr.bf16.mxu0 0
      %6018 = vmatpush2.bf16.msra.mxu0 %v5917
      %6019 = vmatprep.subr.bf16.mxu0 0
      %6020 = vmatpush2.bf16.msra.mxu0 %v5916
      %6021 = vmatprep.subr.bf16.mxu0 0
      %6022 = vmatpush2.bf16.msra.mxu0 %v5915
      %6023 = vmatprep.mubr.bf16.mxu0 %v5745
      %6024 = vmatmul.mubr.bf16.gmra.mxu0 %v5744
      %v6025 = vpop.f32.mrf.mxu0
      %v6026 = vadd.f32 %v5833, %v6025
      %v6027 = vpop.f32.mrf.mxu0
      %v6028 = vpop.f32.mrf.mxu0
      %v6029 = vadd.f32 %v5833, %v6028
      %v6030 = vpop.f32.mrf.mxu0
      %6031 = vmatprep.mubr.bf16.mxu0 %v5748
      %6032 = vmatmul.mubr.bf16.gmra.mxu0 %v5747
      %v6033 = vpop.f32.mrf.mxu0
      %v6034 = vadd.f32 %v5833, %v6033
      %v6035 = vpop.f32.mrf.mxu0
      %v6036 = vpop.f32.mrf.mxu0
      %v6037 = vadd.f32 %v5833, %v6036
      %v6038 = vpop.f32.mrf.mxu0
      %6039 = vmatprep.mubr.bf16.mxu0 %v5751
      %6040 = vmatmul.mubr.bf16.gmra.mxu0 %v5750
      %v6041 = vpop.f32.mrf.mxu0
      %v6042 = vadd.f32 %v5833, %v6041
      %v6043 = vpop.f32.mrf.mxu0
      %v6044 = vpop.f32.mrf.mxu0
      %v6045 = vadd.f32 %v5833, %v6044
      %v6046 = vpop.f32.mrf.mxu0
      %6047 = vmatprep.mubr.bf16.mxu0 %v5754
      %6048 = vmatmul.mubr.bf16.gmra.mxu0 %v5753
      %v6049 = vpop.f32.mrf.mxu0
      %v6050 = vadd.f32 %v5833, %v6049
      %v6051 = vpop.f32.mrf.mxu0
      %v6052 = vpop.f32.mrf.mxu0
      %v6053 = vadd.f32 %v5833, %v6052
      %v6054 = vpop.f32.mrf.mxu0
      %6055 = vmatprep.mubr.bf16.mxu0 %v5757
      %6056 = vmatmul.mubr.bf16.gmra.mxu0 %v5756
      %v6057 = vpop.f32.mrf.mxu0
      %v6058 = vadd.f32 %v5833, %v6057
      %v6059 = vpop.f32.mrf.mxu0
      %v6060 = vpop.f32.mrf.mxu0
      %v6061 = vadd.f32 %v5833, %v6060
      %v6062 = vpop.f32.mrf.mxu0
      %6063 = vmatprep.mubr.bf16.mxu0 %v5760
      %6064 = vmatmul.mubr.bf16.gmra.mxu0 %v5759
      %v6065 = vpop.f32.mrf.mxu0
      %v6066 = vadd.f32 %v5833, %v6065
      %v6067 = vpop.f32.mrf.mxu0
      %v6068 = vpop.f32.mrf.mxu0
      %v6069 = vadd.f32 %v5833, %v6068
      %v6070 = vpop.f32.mrf.mxu0
      %6071 = vmatprep.mubr.bf16.mxu0 %v5763
      %6072 = vmatmul.mubr.bf16.gmra.mxu0 %v5762
      %v6073 = vpop.f32.mrf.mxu0
      %v6074 = vadd.f32 %v5833, %v6073
      %v6075 = vpop.f32.mrf.mxu0
      %v6076 = vpop.f32.mrf.mxu0
      %v6077 = vadd.f32 %v5833, %v6076
      %v6078 = vpop.f32.mrf.mxu0
      %6079 = vmatprep.mubr.bf16.mxu0 %v5766
      %6080 = vmatmul.mubr.bf16.gmra.mxu0 %v5765
      %v6081 = vpop.f32.mrf.mxu0
      %v6082 = vadd.f32 %v5833, %v6081
      %v6083 = vpop.f32.mrf.mxu0
      %v6084 = vpop.f32.mrf.mxu0
      %v6085 = vadd.f32 %v5833, %v6084
      %v6086 = vpop.f32.mrf.mxu0
      %6087 = vmatprep.mubr.bf16.mxu0 %v5769
      %6088 = vmatmul.mubr.bf16.gmra.mxu0 %v5768
      %v6089 = vpop.f32.mrf.mxu0
      %v6090 = vadd.f32 %v5833, %v6089
      %v6091 = vpop.f32.mrf.mxu0
      %v6092 = vpop.f32.mrf.mxu0
      %v6093 = vadd.f32 %v5833, %v6092
      %v6094 = vpop.f32.mrf.mxu0
      %6095 = vmatprep.mubr.bf16.mxu0 %v5772
      %6096 = vmatmul.mubr.bf16.gmra.mxu0 %v5771
      %v6097 = vpop.f32.mrf.mxu0
      %v6098 = vadd.f32 %v5833, %v6097
      %v6099 = vpop.f32.mrf.mxu0
      %v6100 = vpop.f32.mrf.mxu0
      %v6101 = vadd.f32 %v5833, %v6100
      %v6102 = vpop.f32.mrf.mxu0
      %6103 = vmatprep.mubr.bf16.mxu0 %v5775
      %6104 = vmatmul.mubr.bf16.gmra.mxu0 %v5774
      %v6105 = vpop.f32.mrf.mxu0
      %v6106 = vadd.f32 %v5833, %v6105
      %v6107 = vpop.f32.mrf.mxu0
      %v6108 = vpop.f32.mrf.mxu0
      %v6109 = vadd.f32 %v5833, %v6108
      %v6110 = vpop.f32.mrf.mxu0
      %6111 = vmatprep.mubr.bf16.mxu0 %v5778
      %6112 = vmatmul.mubr.bf16.gmra.mxu0 %v5777
      %v6113 = vpop.f32.mrf.mxu0
      %v6114 = vadd.f32 %v5833, %v6113
      %v6115 = vpop.f32.mrf.mxu0
      %v6116 = vpop.f32.mrf.mxu0
      %v6117 = vadd.f32 %v5833, %v6116
      %v6118 = vpop.f32.mrf.mxu0
      %6119 = vmatprep.mubr.bf16.mxu0 %v5781
      %6120 = vmatmul.mubr.bf16.gmra.mxu0 %v5780
      %v6121 = vpop.f32.mrf.mxu0
      %v6122 = vadd.f32 %v5833, %v6121
      %v6123 = vpop.f32.mrf.mxu0
      %v6124 = vpop.f32.mrf.mxu0
      %v6125 = vadd.f32 %v5833, %v6124
      %v6126 = vpop.f32.mrf.mxu0
      %6127 = vmatprep.mubr.bf16.mxu0 %v5784
      %6128 = vmatmul.mubr.bf16.gmra.mxu0 %v5783
      %v6129 = vpop.f32.mrf.mxu0
      %v6130 = vadd.f32 %v5833, %v6129
      %v6131 = vpop.f32.mrf.mxu0
      %v6132 = vpop.f32.mrf.mxu0
      %v6133 = vadd.f32 %v5833, %v6132
      %v6134 = vpop.f32.mrf.mxu0
      %6135 = vmatprep.mubr.bf16.mxu0 %v5787
      %6136 = vmatmul.mubr.bf16.gmra.mxu0 %v5786
      %v6137 = vpop.f32.mrf.mxu0
      %v6138 = vadd.f32 %v5833, %v6137
      %v6139 = vpop.f32.mrf.mxu0
      %v6140 = vpop.f32.mrf.mxu0
      %v6141 = vadd.f32 %v5833, %v6140
      %v6142 = vpop.f32.mrf.mxu0
      %6143 = vmatprep.mubr.bf16.mxu0 %v5790
      %6144 = vmatmul.mubr.bf16.gmra.mxu0 %v5789
      %v6145 = vpop.f32.mrf.mxu0
      %v6146 = vadd.f32 %v5833, %v6145
      %v6147 = vpop.f32.mrf.mxu0
      %v6148 = vpop.f32.mrf.mxu0
      %v6149 = vadd.f32 %v5833, %v6148
      %v6150 = vpop.f32.mrf.mxu0
      %6151 = vdwg.mxu0
      %6152 = vmatprep.subr.bf16.mxu0 0
      %6153 = vmatpush1.bf16.msra.mxu0 0
      %6154 = vmatprep.subr.bf16.mxu0 0
      %6155 = vmatpush1.bf16.msra.mxu0 0
      %6156 = vmatprep.subr.bf16.mxu0 0
      %6157 = vmatpush1.bf16.msra.mxu0 0
      %6158 = vmatprep.subr.bf16.mxu0 0
      %6159 = vmatpush1.bf16.msra.mxu0 0
      %6160 = vmatprep.subr.bf16.mxu0 0
      %6161 = vmatpush1.bf16.msra.mxu0 0
      %6162 = vmatprep.subr.bf16.mxu0 0
      %6163 = vmatpush1.bf16.msra.mxu0 0
      %6164 = vmatprep.subr.bf16.mxu0 0
      %6165 = vmatpush1.bf16.msra.mxu0 %v5924
      %6166 = vmatprep.subr.bf16.mxu0 0
      %6167 = vmatpush1.bf16.msra.mxu0 %v5923
      %6168 = vmatprep.subr.bf16.mxu0 0
      %6169 = vmatpush2.bf16.msra.mxu0 0
      %6170 = vmatprep.subr.bf16.mxu0 0
      %6171 = vmatpush2.bf16.msra.mxu0 0
      %6172 = vmatprep.subr.bf16.mxu0 0
      %6173 = vmatpush2.bf16.msra.mxu0 0
      %6174 = vmatprep.subr.bf16.mxu0 0
      %6175 = vmatpush2.bf16.msra.mxu0 0
      %6176 = vmatprep.subr.bf16.mxu0 0
      %6177 = vmatpush2.bf16.msra.mxu0 0
      %6178 = vmatprep.subr.bf16.mxu0 0
      %6179 = vmatpush2.bf16.msra.mxu0 0
      %6180 = vmatprep.subr.bf16.mxu0 0
      %6181 = vmatpush2.bf16.msra.mxu0 0
      %6182 = vmatprep.subr.bf16.mxu0 0
      %6183 = vmatpush2.bf16.msra.mxu0 0
      %6184 = vmatprep.mubr.bf16.mxu0 0
      %6185 = vmatmul.mubr.bf16.gmra.mxu0 %v5944
      %v6186 = vpop.f32.mrf.mxu0
      %v6187 = vadd.f32 %v6026, %v6186
      %v6188 = vpop.f32.mrf.mxu0
      %v6189 = vpop.f32.mrf.mxu0
      %v6190 = vadd.f32 %v6029, %v6189
      %v6191 = vpop.f32.mrf.mxu0
      %6192 = vmatprep.mubr.bf16.mxu0 0
      %6193 = vmatmul.mubr.bf16.gmra.mxu0 %v5947
      %v6194 = vpop.f32.mrf.mxu0
      %v6195 = vadd.f32 %v6034, %v6194
      %v6196 = vpop.f32.mrf.mxu0
      %v6197 = vpop.f32.mrf.mxu0
      %v6198 = vadd.f32 %v6037, %v6197
      %v6199 = vpop.f32.mrf.mxu0
      %6200 = vmatprep.mubr.bf16.mxu0 0
      %6201 = vmatmul.mubr.bf16.gmra.mxu0 %v5950
      %v6202 = vpop.f32.mrf.mxu0
      %v6203 = vadd.f32 %v6042, %v6202
      %v6204 = vpop.f32.mrf.mxu0
      %v6205 = vpop.f32.mrf.mxu0
      %v6206 = vadd.f32 %v6045, %v6205
      %v6207 = vpop.f32.mrf.mxu0
      %6208 = vmatprep.mubr.bf16.mxu0 0
      %6209 = vmatmul.mubr.bf16.gmra.mxu0 %v5953
      %v6210 = vpop.f32.mrf.mxu0
      %v6211 = vadd.f32 %v6050, %v6210
      %v6212 = vpop.f32.mrf.mxu0
      %v6213 = vpop.f32.mrf.mxu0
      %v6214 = vadd.f32 %v6053, %v6213
      %v6215 = vpop.f32.mrf.mxu0
      %6216 = vmatprep.mubr.bf16.mxu0 0
      %6217 = vmatmul.mubr.bf16.gmra.mxu0 %v5956
      %v6218 = vpop.f32.mrf.mxu0
      %v6219 = vadd.f32 %v6058, %v6218
      %v6220 = vpop.f32.mrf.mxu0
      %v6221 = vpop.f32.mrf.mxu0
      %v6222 = vadd.f32 %v6061, %v6221
      %v6223 = vpop.f32.mrf.mxu0
      %6224 = vmatprep.mubr.bf16.mxu0 0
      %6225 = vmatmul.mubr.bf16.gmra.mxu0 %v5959
      %v6226 = vpop.f32.mrf.mxu0
      %v6227 = vadd.f32 %v6066, %v6226
      %v6228 = vpop.f32.mrf.mxu0
      %v6229 = vpop.f32.mrf.mxu0
      %v6230 = vadd.f32 %v6069, %v6229
      %v6231 = vpop.f32.mrf.mxu0
      %6232 = vmatprep.mubr.bf16.mxu0 0
      %6233 = vmatmul.mubr.bf16.gmra.mxu0 %v5962
      %v6234 = vpop.f32.mrf.mxu0
      %v6235 = vadd.f32 %v6074, %v6234
      %v6236 = vpop.f32.mrf.mxu0
      %v6237 = vpop.f32.mrf.mxu0
      %v6238 = vadd.f32 %v6077, %v6237
      %v6239 = vpop.f32.mrf.mxu0
      %6240 = vmatprep.mubr.bf16.mxu0 0
      %6241 = vmatmul.mubr.bf16.gmra.mxu0 %v5965
      %v6242 = vpop.f32.mrf.mxu0
      %v6243 = vadd.f32 %v6082, %v6242
      %v6244 = vpop.f32.mrf.mxu0
      %v6245 = vpop.f32.mrf.mxu0
      %v6246 = vadd.f32 %v6085, %v6245
      %v6247 = vpop.f32.mrf.mxu0
      %6248 = vmatprep.mubr.bf16.mxu0 0
      %6249 = vmatmul.mubr.bf16.gmra.mxu0 %v5968
      %v6250 = vpop.f32.mrf.mxu0
      %v6251 = vadd.f32 %v6090, %v6250
      %v6252 = vpop.f32.mrf.mxu0
      %v6253 = vpop.f32.mrf.mxu0
      %v6254 = vadd.f32 %v6093, %v6253
      %v6255 = vpop.f32.mrf.mxu0
      %6256 = vmatprep.mubr.bf16.mxu0 0
      %6257 = vmatmul.mubr.bf16.gmra.mxu0 %v5971
      %v6258 = vpop.f32.mrf.mxu0
      %v6259 = vadd.f32 %v6098, %v6258
      %v6260 = vpop.f32.mrf.mxu0
      %v6261 = vpop.f32.mrf.mxu0
      %v6262 = vadd.f32 %v6101, %v6261
      %v6263 = vpop.f32.mrf.mxu0
      %6264 = vmatprep.mubr.bf16.mxu0 0
      %6265 = vmatmul.mubr.bf16.gmra.mxu0 %v5974
      %v6266 = vpop.f32.mrf.mxu0
      %v6267 = vadd.f32 %v6106, %v6266
      %v6268 = vpop.f32.mrf.mxu0
      %v6269 = vpop.f32.mrf.mxu0
      %v6270 = vadd.f32 %v6109, %v6269
      %v6271 = vpop.f32.mrf.mxu0
      %6272 = vmatprep.mubr.bf16.mxu0 0
      %6273 = vmatmul.mubr.bf16.gmra.mxu0 %v5977
      %v6274 = vpop.f32.mrf.mxu0
      %v6275 = vadd.f32 %v6114, %v6274
      %v6276 = vpop.f32.mrf.mxu0
      %v6277 = vpop.f32.mrf.mxu0
      %v6278 = vadd.f32 %v6117, %v6277
      %v6279 = vpop.f32.mrf.mxu0
      %6280 = vmatprep.mubr.bf16.mxu0 0
      %6281 = vmatmul.mubr.bf16.gmra.mxu0 %v5980
      %v6282 = vpop.f32.mrf.mxu0
      %v6283 = vadd.f32 %v6122, %v6282
      %v6284 = vpop.f32.mrf.mxu0
      %v6285 = vpop.f32.mrf.mxu0
      %v6286 = vadd.f32 %v6125, %v6285
      %v6287 = vpop.f32.mrf.mxu0
      %6288 = vmatprep.mubr.bf16.mxu0 0
      %6289 = vmatmul.mubr.bf16.gmra.mxu0 %v5983
      %v6290 = vpop.f32.mrf.mxu0
      %v6291 = vadd.f32 %v6130, %v6290
      %v6292 = vpop.f32.mrf.mxu0
      %v6293 = vpop.f32.mrf.mxu0
      %v6294 = vadd.f32 %v6133, %v6293
      %v6295 = vpop.f32.mrf.mxu0
      %6296 = vmatprep.mubr.bf16.mxu0 0
      %6297 = vmatmul.mubr.bf16.gmra.mxu0 %v5986
      %v6298 = vpop.f32.mrf.mxu0
      %v6299 = vadd.f32 %v6138, %v6298
      %v6300 = vpop.f32.mrf.mxu0
      %v6301 = vpop.f32.mrf.mxu0
      %v6302 = vadd.f32 %v6141, %v6301
      %v6303 = vpop.f32.mrf.mxu0
      %6304 = vmatprep.mubr.bf16.mxu0 0
      %6305 = vmatmul.mubr.bf16.gmra.mxu0 %v5989
      %v6306 = vpop.f32.mrf.mxu0
      %v6307 = vadd.f32 %v6146, %v6306
      %v6308 = vpop.f32.mrf.mxu0
      %v6309 = vpop.f32.mrf.mxu0
      %v6310 = vadd.f32 %v6149, %v6309
      %v6311 = vpop.f32.mrf.mxu0
      %6312 = vdwg.mxu0
      %v6313 = vmax.f32 %v6187, 0.0
      %v6314 = vmax.f32 %v6190, 0.0
      %v6315 = vmax.f32 %v6195, 0.0
      %v6316 = vmax.f32 %v6198, 0.0
      %v6317 = vmax.f32 %v6203, 0.0
      %v6318 = vmax.f32 %v6206, 0.0
      %v6319 = vmax.f32 %v6211, 0.0
      %v6320 = vmax.f32 %v6214, 0.0
      %v6321 = vmax.f32 %v6219, 0.0
      %v6322 = vmax.f32 %v6222, 0.0
      %v6323 = vmax.f32 %v6227, 0.0
      %v6324 = vmax.f32 %v6230, 0.0
      %v6325 = vmax.f32 %v6235, 0.0
      %v6326 = vmax.f32 %v6238, 0.0
      %v6327 = vmax.f32 %v6243, 0.0
      %v6328 = vmax.f32 %v6246, 0.0
      %v6329 = vmax.f32 %v6251, 0.0
      %v6330 = vmax.f32 %v6254, 0.0
      %v6331 = vmax.f32 %v6259, 0.0
      %v6332 = vmax.f32 %v6262, 0.0
      %v6333 = vmax.f32 %v6267, 0.0
      %v6334 = vmax.f32 %v6270, 0.0
      %v6335 = vmax.f32 %v6275, 0.0
      %v6336 = vmax.f32 %v6278, 0.0
      %v6337 = vmax.f32 %v6283, 0.0
      %v6338 = vmax.f32 %v6286, 0.0
      %v6339 = vmax.f32 %v6291, 0.0
      %v6340 = vmax.f32 %v6294, 0.0
      %v6341 = vmax.f32 %v6299, 0.0
      %v6342 = vmax.f32 %v6302, 0.0
      %v6343 = vmax.f32 %v6307, 0.0
      %v6344 = vmax.f32 %v6310, 0.0
      %6345 = vst.msk [vmem:[%s2579 + $0x1] sm:$0xff] %vm539, %v6313
      %6346 = vst.msk [vmem:[%s2579 + $0x9] sm:$0xff] %vm539, %v6314
      %6347 = vst.msk [vmem:[%s2579 + $0x19] sm:$0xff] %vm539, %v6315
      %6348 = vst.msk [vmem:[%s2579 + $0x21] sm:$0xff] %vm539, %v6316
      %6349 = vst.msk [vmem:[%s2579 + $0x31] sm:$0xff] %vm539, %v6317
      %6350 = vst.msk [vmem:[%s2579 + $0x39] sm:$0xff] %vm539, %v6318
      %6351 = vst.msk [vmem:[%s2579 + $0x49] sm:$0xff] %vm539, %v6319
      %6352 = vst.msk [vmem:[%s2579 + $0x51] sm:$0xff] %vm539, %v6320
      %6353 = vst.msk [vmem:[%s2579 + $0x61] sm:$0xff] %vm539, %v6321
      %6354 = vst.msk [vmem:[%s2579 + $0x69] sm:$0xff] %vm539, %v6322
      %6355 = vst.msk [vmem:[%s2579 + $0x79] sm:$0xff] %vm539, %v6323
      %6356 = vst.msk [vmem:[%s2579 + $0x81] sm:$0xff] %vm539, %v6324
      %6357 = vst.msk [vmem:[%s2579 + $0x91] sm:$0xff] %vm539, %v6325
      %6358 = vst.msk [vmem:[%s2579 + $0x99] sm:$0xff] %vm539, %v6326
      %6359 = vst.msk [vmem:[%s2579 + $0xa9] sm:$0xff] %vm539, %v6327
      %6360 = vst.msk [vmem:[%s2579 + $0xb1] sm:$0xff] %vm539, %v6328
      %6361 = vst.msk [vmem:[%s2579 + $0xc1] sm:$0xff] %vm539, %v6329
      %6362 = vst.msk [vmem:[%s2579 + $0xc9] sm:$0xff] %vm539, %v6330
      %6363 = vst.msk [vmem:[%s2579 + $0xd9] sm:$0xff] %vm539, %v6331
      %6364 = vst.msk [vmem:[%s2579 + $0xe1] sm:$0xff] %vm539, %v6332
      %6365 = vst.msk [vmem:[%s2579 + $0xf1] sm:$0xff] %vm539, %v6333
      %6366 = vst.msk [vmem:[%s2579 + $0xf9] sm:$0xff] %vm539, %v6334
      %6367 = vst.msk [vmem:[%s2579 + $0x109] sm:$0xff] %vm539, %v6335
      %6368 = vst.msk [vmem:[%s2579 + $0x111] sm:$0xff] %vm539, %v6336
      %6369 = vst.msk [vmem:[%s2579 + $0x121] sm:$0xff] %vm539, %v6337
      %6370 = vst.msk [vmem:[%s2579 + $0x129] sm:$0xff] %vm539, %v6338
      %6371 = vst.msk [vmem:[%s2579 + $0x139] sm:$0xff] %vm539, %v6339
      %6372 = vst.msk [vmem:[%s2579 + $0x141] sm:$0xff] %vm539, %v6340
      %6373 = vst.msk [vmem:[%s2579 + $0x151] sm:$0xff] %vm539, %v6341
      %6374 = vst.msk [vmem:[%s2579 + $0x159] sm:$0xff] %vm539, %v6342
      %6375 = vst.msk [vmem:[%s2579 + $0x169] sm:$0xff] %vm539, %v6343
      %6376 = vst.msk [vmem:[%s2579 + $0x171] sm:$0xff] %vm539, %v6344
      %v6377 = vld [vmem:[#allocation3] sm:$0xff]
      %v6378 = vld [vmem:[#allocation3 + $0x8] sm:$0xff]
      %v6379 = vld [vmem:[#allocation3 + $0x18] sm:$0xff]
      %v6380 = vld [vmem:[#allocation3 + $0x20] sm:$0xff]
      %v6381 = vld [vmem:[#allocation3 + $0x30] sm:$0xff]
      %v6382 = vld [vmem:[#allocation3 + $0x38] sm:$0xff]
      %v6383 = vld [vmem:[#allocation3 + $0x48] sm:$0xff]
      %v6384 = vld [vmem:[#allocation3 + $0x50] sm:$0xff]
      %v6385 = vld [vmem:[#allocation3 + $0x60] sm:$0xff]
      %v6386 = vld [vmem:[#allocation3 + $0x68] sm:$0xff]
      %v6387 = vld [vmem:[#allocation3 + $0x78] sm:$0xff]
      %v6388 = vld [vmem:[#allocation3 + $0x80] sm:$0xff]
      %v6389 = vld [vmem:[#allocation3 + $0x90] sm:$0xff]
      %v6390 = vld [vmem:[#allocation3 + $0x98] sm:$0xff]
      %v6391 = vld [vmem:[#allocation3 + $0xa8] sm:$0xff]
      %v6392 = vld [vmem:[#allocation3 + $0xb0] sm:$0xff]
      %v6393 = vld [vmem:[#allocation3 + $0xc0] sm:$0xff]
      %v6394 = vld [vmem:[#allocation3 + $0xc8] sm:$0xff]
      %v6395 = vld [vmem:[#allocation3 + $0xd8] sm:$0xff]
      %v6396 = vld [vmem:[#allocation3 + $0xe0] sm:$0xff]
      %v6397 = vld [vmem:[#allocation3 + $0xf0] sm:$0xff]
      %v6398 = vld [vmem:[#allocation3 + $0xf8] sm:$0xff]
      %v6399 = vld [vmem:[#allocation3 + $0x108] sm:$0xff]
      %v6400 = vld [vmem:[#allocation3 + $0x110] sm:$0xff]
      %v6401 = vld [vmem:[#allocation3 + $0x120] sm:$0xff]
      %v6402 = vld [vmem:[#allocation3 + $0x128] sm:$0xff]
      %v6403 = vld [vmem:[#allocation3 + $0x138] sm:$0xff]
      %v6404 = vld [vmem:[#allocation3 + $0x140] sm:$0xff]
      %v6405 = vld [vmem:[#allocation3 + $0x150] sm:$0xff]
      %v6406 = vld [vmem:[#allocation3 + $0x158] sm:$0xff]
      %v6407 = vld [vmem:[#allocation3 + $0x168] sm:$0xff]
      %v6408 = vld [vmem:[#allocation3 + $0x170] sm:$0xff]
      %v6409 = vld [vmem:[%s2579] sm:$0xff]
      %v6410 = vld [vmem:[%s2579 + $0x8] sm:$0xff]
      %v6411 = vld [vmem:[%s2579 + $0x18] sm:$0xff]
      %v6412 = vld [vmem:[%s2579 + $0x20] sm:$0xff]
      %v6413 = vld [vmem:[%s2579 + $0x30] sm:$0xff]
      %v6414 = vld [vmem:[%s2579 + $0x38] sm:$0xff]
      %v6415 = vld [vmem:[%s2579 + $0x48] sm:$0xff]
      %v6416 = vld [vmem:[%s2579 + $0x50] sm:$0xff]
      %v6417 = vld [vmem:[%s2579 + $0x60] sm:$0xff]
      %v6418 = vld [vmem:[%s2579 + $0x68] sm:$0xff]
      %v6419 = vld [vmem:[%s2579 + $0x78] sm:$0xff]
      %v6420 = vld [vmem:[%s2579 + $0x80] sm:$0xff]
      %v6421 = vld [vmem:[%s2579 + $0x90] sm:$0xff]
      %v6422 = vld [vmem:[%s2579 + $0x98] sm:$0xff]
      %v6423 = vld [vmem:[%s2579 + $0xa8] sm:$0xff]
      %v6424 = vld [vmem:[%s2579 + $0xb0] sm:$0xff]
      %v6425 = vld [vmem:[%s2579 + $0xc0] sm:$0xff]
      %v6426 = vld [vmem:[%s2579 + $0xc8] sm:$0xff]
      %v6427 = vld [vmem:[%s2579 + $0xd8] sm:$0xff]
      %v6428 = vld [vmem:[%s2579 + $0xe0] sm:$0xff]
      %v6429 = vld [vmem:[%s2579 + $0xf0] sm:$0xff]
      %v6430 = vld [vmem:[%s2579 + $0xf8] sm:$0xff]
      %v6431 = vld [vmem:[%s2579 + $0x108] sm:$0xff]
      %v6432 = vld [vmem:[%s2579 + $0x110] sm:$0xff]
      %v6433 = vld [vmem:[%s2579 + $0x120] sm:$0xff]
      %v6434 = vld [vmem:[%s2579 + $0x128] sm:$0xff]
      %v6435 = vld [vmem:[%s2579 + $0x138] sm:$0xff]
      %v6436 = vld [vmem:[%s2579 + $0x140] sm:$0xff]
      %v6437 = vld [vmem:[%s2579 + $0x150] sm:$0xff]
      %v6438 = vld [vmem:[%s2579 + $0x158] sm:$0xff]
      %v6439 = vld [vmem:[%s2579 + $0x168] sm:$0xff]
      %v6440 = vld [vmem:[%s2579 + $0x170] sm:$0xff]
      %v6441 = vld [vmem:[%s2676] sm:$0xff]
      %v6442 = vld [vmem:[%s2676 + $0x8] sm:$0xff]
      %v6443 = vld [vmem:[%s2676 + $0x18] sm:$0xff]
      %v6444 = vld [vmem:[%s2676 + $0x20] sm:$0xff]
      %v6445 = vld [vmem:[%s2676 + $0x30] sm:$0xff]
      %v6446 = vld [vmem:[%s2676 + $0x38] sm:$0xff]
      %v6447 = vld [vmem:[%s2676 + $0x48] sm:$0xff]
      %v6448 = vld [vmem:[%s2676 + $0x50] sm:$0xff]
      %v6449 = vld [vmem:[%s2676 + $0x60] sm:$0xff]
      %v6450 = vld [vmem:[%s2676 + $0x68] sm:$0xff]
      %v6451 = vld [vmem:[%s2676 + $0x78] sm:$0xff]
      %v6452 = vld [vmem:[%s2676 + $0x80] sm:$0xff]
      %v6453 = vld [vmem:[%s2676 + $0x90] sm:$0xff]
      %v6454 = vld [vmem:[%s2676 + $0x98] sm:$0xff]
      %v6455 = vld [vmem:[%s2676 + $0xa8] sm:$0xff]
      %v6456 = vld [vmem:[%s2676 + $0xb0] sm:$0xff]
      %v6457 = vld [vmem:[%s2676 + $0xc0] sm:$0xff]
      %v6458 = vld [vmem:[%s2676 + $0xc8] sm:$0xff]
      %v6459 = vld [vmem:[%s2676 + $0xd8] sm:$0xff]
      %v6460 = vld [vmem:[%s2676 + $0xe0] sm:$0xff]
      %v6461 = vld [vmem:[%s2676 + $0xf0] sm:$0xff]
      %v6462 = vld [vmem:[%s2676 + $0xf8] sm:$0xff]
      %v6463 = vld [vmem:[%s2676 + $0x108] sm:$0xff]
      %v6464 = vld [vmem:[%s2676 + $0x110] sm:$0xff]
      %v6465 = vld [vmem:[%s2676 + $0x120] sm:$0xff]
      %v6466 = vld [vmem:[%s2676 + $0x128] sm:$0xff]
      %v6467 = vld [vmem:[%s2676 + $0x138] sm:$0xff]
      %v6468 = vld [vmem:[%s2676 + $0x140] sm:$0xff]
      %v6469 = vld [vmem:[%s2676 + $0x150] sm:$0xff]
      %v6470 = vld [vmem:[%s2676 + $0x158] sm:$0xff]
      %v6471 = vld [vmem:[%s2676 + $0x168] sm:$0xff]
      %v6472 = vld [vmem:[%s2676 + $0x170] sm:$0xff]
      %v6473 = vld [vmem:[#allocation3 + $0x1] sm:$0xff]
      %v6474 = vld [vmem:[#allocation3 + $0x9] sm:$0xff]
      %v6475 = vld [vmem:[#allocation3 + $0x19] sm:$0xff]
      %v6476 = vld [vmem:[#allocation3 + $0x21] sm:$0xff]
      %v6477 = vld [vmem:[#allocation3 + $0x31] sm:$0xff]
      %v6478 = vld [vmem:[#allocation3 + $0x39] sm:$0xff]
      %v6479 = vld [vmem:[#allocation3 + $0x49] sm:$0xff]
      %v6480 = vld [vmem:[#allocation3 + $0x51] sm:$0xff]
      %v6481 = vld [vmem:[#allocation3 + $0x61] sm:$0xff]
      %v6482 = vld [vmem:[#allocation3 + $0x69] sm:$0xff]
      %v6483 = vld [vmem:[#allocation3 + $0x79] sm:$0xff]
      %v6484 = vld [vmem:[#allocation3 + $0x81] sm:$0xff]
      %v6485 = vld [vmem:[#allocation3 + $0x91] sm:$0xff]
      %v6486 = vld [vmem:[#allocation3 + $0x99] sm:$0xff]
      %v6487 = vld [vmem:[#allocation3 + $0xa9] sm:$0xff]
      %v6488 = vld [vmem:[#allocation3 + $0xb1] sm:$0xff]
      %v6489 = vld [vmem:[#allocation3 + $0xc1] sm:$0xff]
      %v6490 = vld [vmem:[#allocation3 + $0xc9] sm:$0xff]
      %v6491 = vld [vmem:[#allocation3 + $0xd9] sm:$0xff]
      %v6492 = vld [vmem:[#allocation3 + $0xe1] sm:$0xff]
      %v6493 = vld [vmem:[#allocation3 + $0xf1] sm:$0xff]
      %v6494 = vld [vmem:[#allocation3 + $0xf9] sm:$0xff]
      %v6495 = vld [vmem:[#allocation3 + $0x109] sm:$0xff]
      %v6496 = vld [vmem:[#allocation3 + $0x111] sm:$0xff]
      %v6497 = vld [vmem:[#allocation3 + $0x121] sm:$0xff]
      %v6498 = vld [vmem:[#allocation3 + $0x129] sm:$0xff]
      %v6499 = vld [vmem:[#allocation3 + $0x139] sm:$0xff]
      %v6500 = vld [vmem:[#allocation3 + $0x141] sm:$0xff]
      %v6501 = vld [vmem:[#allocation3 + $0x151] sm:$0xff]
      %v6502 = vld [vmem:[#allocation3 + $0x159] sm:$0xff]
      %v6503 = vld [vmem:[#allocation3 + $0x169] sm:$0xff]
      %v6504 = vld [vmem:[#allocation3 + $0x171] sm:$0xff]
      %v6505 = vld [vmem:[%s2579 + $0x1] sm:$0xff]
      %v6506 = vld [vmem:[%s2579 + $0x9] sm:$0xff]
      %v6507 = vld [vmem:[%s2579 + $0x19] sm:$0xff]
      %v6508 = vld [vmem:[%s2579 + $0x21] sm:$0xff]
      %v6509 = vld [vmem:[%s2579 + $0x31] sm:$0xff]
      %v6510 = vld [vmem:[%s2579 + $0x39] sm:$0xff]
      %v6511 = vld [vmem:[%s2579 + $0x49] sm:$0xff]
      %v6512 = vld [vmem:[%s2579 + $0x51] sm:$0xff]
      %v6513 = vld [vmem:[%s2579 + $0x61] sm:$0xff]
      %v6514 = vld [vmem:[%s2579 + $0x69] sm:$0xff]
      %v6515 = vld [vmem:[%s2579 + $0x79] sm:$0xff]
      %v6516 = vld [vmem:[%s2579 + $0x81] sm:$0xff]
      %v6517 = vld [vmem:[%s2579 + $0x91] sm:$0xff]
      %v6518 = vld [vmem:[%s2579 + $0x99] sm:$0xff]
      %v6519 = vld [vmem:[%s2579 + $0xa9] sm:$0xff]
      %v6520 = vld [vmem:[%s2579 + $0xb1] sm:$0xff]
      %v6521 = vld [vmem:[%s2579 + $0xc1] sm:$0xff]
      %v6522 = vld [vmem:[%s2579 + $0xc9] sm:$0xff]
      %v6523 = vld [vmem:[%s2579 + $0xd9] sm:$0xff]
      %v6524 = vld [vmem:[%s2579 + $0xe1] sm:$0xff]
      %v6525 = vld [vmem:[%s2579 + $0xf1] sm:$0xff]
      %v6526 = vld [vmem:[%s2579 + $0xf9] sm:$0xff]
      %v6527 = vld [vmem:[%s2579 + $0x109] sm:$0xff]
      %v6528 = vld [vmem:[%s2579 + $0x111] sm:$0xff]
      %v6529 = vld [vmem:[%s2579 + $0x121] sm:$0xff]
      %v6530 = vld [vmem:[%s2579 + $0x129] sm:$0xff]
      %v6531 = vld [vmem:[%s2579 + $0x139] sm:$0xff]
      %v6532 = vld [vmem:[%s2579 + $0x141] sm:$0xff]
      %v6533 = vld [vmem:[%s2579 + $0x151] sm:$0xff]
      %v6534 = vld [vmem:[%s2579 + $0x159] sm:$0xff]
      %v6535 = vld [vmem:[%s2579 + $0x169] sm:$0xff]
      %v6536 = vld [vmem:[%s2579 + $0x171] sm:$0xff]
      %v6537 = vld [vmem:[%s2676 + $0x1] sm:$0xff]
      %v6538 = vld [vmem:[%s2676 + $0x9] sm:$0xff]
      %v6539 = vld [vmem:[%s2676 + $0x19] sm:$0xff]
      %v6540 = vld [vmem:[%s2676 + $0x21] sm:$0xff]
      %v6541 = vld [vmem:[%s2676 + $0x31] sm:$0xff]
      %v6542 = vld [vmem:[%s2676 + $0x39] sm:$0xff]
      %v6543 = vld [vmem:[%s2676 + $0x49] sm:$0xff]
      %v6544 = vld [vmem:[%s2676 + $0x51] sm:$0xff]
      %v6545 = vld [vmem:[%s2676 + $0x61] sm:$0xff]
      %v6546 = vld [vmem:[%s2676 + $0x69] sm:$0xff]
      %v6547 = vld [vmem:[%s2676 + $0x79] sm:$0xff]
      %v6548 = vld [vmem:[%s2676 + $0x81] sm:$0xff]
      %v6549 = vld [vmem:[%s2676 + $0x91] sm:$0xff]
      %v6550 = vld [vmem:[%s2676 + $0x99] sm:$0xff]
      %v6551 = vld [vmem:[%s2676 + $0xa9] sm:$0xff]
      %v6552 = vld [vmem:[%s2676 + $0xb1] sm:$0xff]
      %v6553 = vld [vmem:[%s2676 + $0xc1] sm:$0xff]
      %v6554 = vld [vmem:[%s2676 + $0xc9] sm:$0xff]
      %v6555 = vld [vmem:[%s2676 + $0xd9] sm:$0xff]
      %v6556 = vld [vmem:[%s2676 + $0xe1] sm:$0xff]
      %v6557 = vld [vmem:[%s2676 + $0xf1] sm:$0xff]
      %v6558 = vld [vmem:[%s2676 + $0xf9] sm:$0xff]
      %v6559 = vld [vmem:[%s2676 + $0x109] sm:$0xff]
      %v6560 = vld [vmem:[%s2676 + $0x111] sm:$0xff]
      %v6561 = vld [vmem:[%s2676 + $0x121] sm:$0xff]
      %v6562 = vld [vmem:[%s2676 + $0x129] sm:$0xff]
      %v6563 = vld [vmem:[%s2676 + $0x139] sm:$0xff]
      %v6564 = vld [vmem:[%s2676 + $0x141] sm:$0xff]
      %v6565 = vld [vmem:[%s2676 + $0x151] sm:$0xff]
      %v6566 = vld [vmem:[%s2676 + $0x159] sm:$0xff]
      %v6567 = vld [vmem:[%s2676 + $0x169] sm:$0xff]
      %v6568 = vld [vmem:[%s2676 + $0x171] sm:$0xff]
      %v6569 = vld [vmem:[#allocation3 + $0x2] sm:$0xff]
      %v6570 = vld [vmem:[#allocation3 + $0xa] sm:$0xff]
      %v6571 = vld [vmem:[#allocation3 + $0x1a] sm:$0xff]
      %v6572 = vld [vmem:[#allocation3 + $0x22] sm:$0xff]
      %v6573 = vld [vmem:[#allocation3 + $0x32] sm:$0xff]
      %v6574 = vld [vmem:[#allocation3 + $0x3a] sm:$0xff]
      %v6575 = vld [vmem:[#allocation3 + $0x4a] sm:$0xff]
      %v6576 = vld [vmem:[#allocation3 + $0x52] sm:$0xff]
      %v6577 = vld [vmem:[#allocation3 + $0x62] sm:$0xff]
      %v6578 = vld [vmem:[#allocation3 + $0x6a] sm:$0xff]
      %v6579 = vld [vmem:[#allocation3 + $0x7a] sm:$0xff]
      %v6580 = vld [vmem:[#allocation3 + $0x82] sm:$0xff]
      %v6581 = vld [vmem:[#allocation3 + $0x92] sm:$0xff]
      %v6582 = vld [vmem:[#allocation3 + $0x9a] sm:$0xff]
      %v6583 = vld [vmem:[#allocation3 + $0xaa] sm:$0xff]
      %v6584 = vld [vmem:[#allocation3 + $0xb2] sm:$0xff]
      %v6585 = vld [vmem:[#allocation3 + $0xc2] sm:$0xff]
      %v6586 = vld [vmem:[#allocation3 + $0xca] sm:$0xff]
      %v6587 = vld [vmem:[#allocation3 + $0xda] sm:$0xff]
      %v6588 = vld [vmem:[#allocation3 + $0xe2] sm:$0xff]
      %v6589 = vld [vmem:[#allocation3 + $0xf2] sm:$0xff]
      %v6590 = vld [vmem:[#allocation3 + $0xfa] sm:$0xff]
      %v6591 = vld [vmem:[#allocation3 + $0x10a] sm:$0xff]
      %v6592 = vld [vmem:[#allocation3 + $0x112] sm:$0xff]
      %v6593 = vld [vmem:[#allocation3 + $0x122] sm:$0xff]
      %v6594 = vld [vmem:[#allocation3 + $0x12a] sm:$0xff]
      %v6595 = vld [vmem:[#allocation3 + $0x13a] sm:$0xff]
      %v6596 = vld [vmem:[#allocation3 + $0x142] sm:$0xff]
      %v6597 = vld [vmem:[#allocation3 + $0x152] sm:$0xff]
      %v6598 = vld [vmem:[#allocation3 + $0x15a] sm:$0xff]
      %v6599 = vld [vmem:[#allocation3 + $0x16a] sm:$0xff]
      %v6600 = vld [vmem:[#allocation3 + $0x172] sm:$0xff]
      %v6601 = vld [vmem:[%s2579 + $0x2] sm:$0xff]
      %v6602 = vld [vmem:[%s2579 + $0xa] sm:$0xff]
      %v6603 = vld [vmem:[%s2579 + $0x1a] sm:$0xff]
      %v6604 = vld [vmem:[%s2579 + $0x22] sm:$0xff]
      %v6605 = vld [vmem:[%s2579 + $0x32] sm:$0xff]
      %v6606 = vld [vmem:[%s2579 + $0x3a] sm:$0xff]
      %v6607 = vld [vmem:[%s2579 + $0x4a] sm:$0xff]
      %v6608 = vld [vmem:[%s2579 + $0x52] sm:$0xff]
      %v6609 = vld [vmem:[%s2579 + $0x62] sm:$0xff]
      %v6610 = vld [vmem:[%s2579 + $0x6a] sm:$0xff]
      %v6611 = vld [vmem:[%s2579 + $0x7a] sm:$0xff]
      %v6612 = vld [vmem:[%s2579 + $0x82] sm:$0xff]
      %v6613 = vld [vmem:[%s2579 + $0x92] sm:$0xff]
      %v6614 = vld [vmem:[%s2579 + $0x9a] sm:$0xff]
      %v6615 = vld [vmem:[%s2579 + $0xaa] sm:$0xff]
      %v6616 = vld [vmem:[%s2579 + $0xb2] sm:$0xff]
      %v6617 = vld [vmem:[%s2579 + $0xc2] sm:$0xff]
      %v6618 = vld [vmem:[%s2579 + $0xca] sm:$0xff]
      %v6619 = vld [vmem:[%s2579 + $0xda] sm:$0xff]
      %v6620 = vld [vmem:[%s2579 + $0xe2] sm:$0xff]
      %v6621 = vld [vmem:[%s2579 + $0xf2] sm:$0xff]
      %v6622 = vld [vmem:[%s2579 + $0xfa] sm:$0xff]
      %v6623 = vld [vmem:[%s2579 + $0x10a] sm:$0xff]
      %v6624 = vld [vmem:[%s2579 + $0x112] sm:$0xff]
      %v6625 = vld [vmem:[%s2579 + $0x122] sm:$0xff]
      %v6626 = vld [vmem:[%s2579 + $0x12a] sm:$0xff]
      %v6627 = vld [vmem:[%s2579 + $0x13a] sm:$0xff]
      %v6628 = vld [vmem:[%s2579 + $0x142] sm:$0xff]
      %v6629 = vld [vmem:[%s2579 + $0x152] sm:$0xff]
      %v6630 = vld [vmem:[%s2579 + $0x15a] sm:$0xff]
      %v6631 = vld [vmem:[%s2579 + $0x16a] sm:$0xff]
      %v6632 = vld [vmem:[%s2579 + $0x172] sm:$0xff]
      %v6633 = vld [vmem:[%s2676 + $0x2] sm:$0xff]
      %v6634 = vld [vmem:[%s2676 + $0xa] sm:$0xff]
      %v6635 = vld [vmem:[%s2676 + $0x1a] sm:$0xff]
      %v6636 = vld [vmem:[%s2676 + $0x22] sm:$0xff]
      %v6637 = vld [vmem:[%s2676 + $0x32] sm:$0xff]
      %v6638 = vld [vmem:[%s2676 + $0x3a] sm:$0xff]
      %v6639 = vld [vmem:[%s2676 + $0x4a] sm:$0xff]
      %v6640 = vld [vmem:[%s2676 + $0x52] sm:$0xff]
      %v6641 = vld [vmem:[%s2676 + $0x62] sm:$0xff]
      %v6642 = vld [vmem:[%s2676 + $0x6a] sm:$0xff]
      %v6643 = vld [vmem:[%s2676 + $0x7a] sm:$0xff]
      %v6644 = vld [vmem:[%s2676 + $0x82] sm:$0xff]
      %v6645 = vld [vmem:[%s2676 + $0x92] sm:$0xff]
      %v6646 = vld [vmem:[%s2676 + $0x9a] sm:$0xff]
      %v6647 = vld [vmem:[%s2676 + $0xaa] sm:$0xff]
      %v6648 = vld [vmem:[%s2676 + $0xb2] sm:$0xff]
      %v6649 = vld [vmem:[%s2676 + $0xc2] sm:$0xff]
      %v6650 = vld [vmem:[%s2676 + $0xca] sm:$0xff]
      %v6651 = vld [vmem:[%s2676 + $0xda] sm:$0xff]
      %v6652 = vld [vmem:[%s2676 + $0xe2] sm:$0xff]
      %v6653 = vld [vmem:[%s2676 + $0xf2] sm:$0xff]
      %v6654 = vld [vmem:[%s2676 + $0xfa] sm:$0xff]
      %v6655 = vld [vmem:[%s2676 + $0x10a] sm:$0xff]
      %v6656 = vld [vmem:[%s2676 + $0x112] sm:$0xff]
      %v6657 = vld [vmem:[%s2676 + $0x122] sm:$0xff]
      %v6658 = vld [vmem:[%s2676 + $0x12a] sm:$0xff]
      %v6659 = vld [vmem:[%s2676 + $0x13a] sm:$0xff]
      %v6660 = vld [vmem:[%s2676 + $0x142] sm:$0xff]
      %v6661 = vld [vmem:[%s2676 + $0x152] sm:$0xff]
      %v6662 = vld [vmem:[%s2676 + $0x15a] sm:$0xff]
      %v6663 = vld [vmem:[%s2676 + $0x16a] sm:$0xff]
      %v6664 = vld [vmem:[%s2676 + $0x172] sm:$0xff]
      %6697 = vrot.lane.b32.xlu0 %v6409, 32
      %v6698 = vpop.permute.xlu0 %6697
      %6699 = vrot.lane.b32.xlu0 %v6410, 32
      %v6700 = vpop.permute.xlu0 %6699
      %6701 = vrot.lane.b32.xlu0 %v6411, 32
      %v6702 = vpop.permute.xlu0 %6701
      %6703 = vrot.lane.b32.xlu0 %v6412, 32
      %v6704 = vpop.permute.xlu0 %6703
      %6705 = vrot.lane.b32.xlu0 %v6413, 32
      %v6706 = vpop.permute.xlu0 %6705
      %6707 = vrot.lane.b32.xlu0 %v6414, 32
      %v6708 = vpop.permute.xlu0 %6707
      %6709 = vrot.lane.b32.xlu0 %v6415, 32
      %v6710 = vpop.permute.xlu0 %6709
      %6711 = vrot.lane.b32.xlu0 %v6416, 32
      %v6712 = vpop.permute.xlu0 %6711
      %6713 = vrot.lane.b32.xlu0 %v6417, 32
      %v6714 = vpop.permute.xlu0 %6713
      %6715 = vrot.lane.b32.xlu0 %v6418, 32
      %v6716 = vpop.permute.xlu0 %6715
      %6717 = vrot.lane.b32.xlu0 %v6419, 32
      %v6718 = vpop.permute.xlu0 %6717
      %6719 = vrot.lane.b32.xlu0 %v6420, 32
      %v6720 = vpop.permute.xlu0 %6719
      %6721 = vrot.lane.b32.xlu0 %v6421, 32
      %v6722 = vpop.permute.xlu0 %6721
      %6723 = vrot.lane.b32.xlu0 %v6422, 32
      %v6724 = vpop.permute.xlu0 %6723
      %6725 = vrot.lane.b32.xlu0 %v6423, 32
      %v6726 = vpop.permute.xlu0 %6725
      %6727 = vrot.lane.b32.xlu0 %v6424, 32
      %v6728 = vpop.permute.xlu0 %6727
      %6729 = vrot.lane.b32.xlu0 %v6425, 32
      %v6730 = vpop.permute.xlu0 %6729
      %6731 = vrot.lane.b32.xlu0 %v6426, 32
      %v6732 = vpop.permute.xlu0 %6731
      %6733 = vrot.lane.b32.xlu0 %v6427, 32
      %v6734 = vpop.permute.xlu0 %6733
      %6735 = vrot.lane.b32.xlu0 %v6428, 32
      %v6736 = vpop.permute.xlu0 %6735
      %6737 = vrot.lane.b32.xlu0 %v6429, 32
      %v6738 = vpop.permute.xlu0 %6737
      %6739 = vrot.lane.b32.xlu0 %v6430, 32
      %v6740 = vpop.permute.xlu0 %6739
      %6741 = vrot.lane.b32.xlu0 %v6431, 32
      %v6742 = vpop.permute.xlu0 %6741
      %6743 = vrot.lane.b32.xlu0 %v6432, 32
      %v6744 = vpop.permute.xlu0 %6743
      %6745 = vrot.lane.b32.xlu0 %v6433, 32
      %v6746 = vpop.permute.xlu0 %6745
      %6747 = vrot.lane.b32.xlu0 %v6434, 32
      %v6748 = vpop.permute.xlu0 %6747
      %6749 = vrot.lane.b32.xlu0 %v6435, 32
      %v6750 = vpop.permute.xlu0 %6749
      %6751 = vrot.lane.b32.xlu0 %v6436, 32
      %v6752 = vpop.permute.xlu0 %6751
      %6753 = vrot.lane.b32.xlu0 %v6437, 32
      %v6754 = vpop.permute.xlu0 %6753
      %6755 = vrot.lane.b32.xlu0 %v6438, 32
      %v6756 = vpop.permute.xlu0 %6755
      %6757 = vrot.lane.b32.xlu0 %v6439, 32
      %v6758 = vpop.permute.xlu0 %6757
      %6759 = vrot.lane.b32.xlu0 %v6440, 32
      %v6760 = vpop.permute.xlu0 %6759
      %6825 = vrot.lane.b32.xlu0 %v6441, 64
      %v6826 = vpop.permute.xlu0 %6825
      %6827 = vrot.lane.b32.xlu0 %v6442, 64
      %v6828 = vpop.permute.xlu0 %6827
      %6829 = vrot.lane.b32.xlu0 %v6443, 64
      %v6830 = vpop.permute.xlu0 %6829
      %6831 = vrot.lane.b32.xlu0 %v6444, 64
      %v6832 = vpop.permute.xlu0 %6831
      %6833 = vrot.lane.b32.xlu0 %v6445, 64
      %v6834 = vpop.permute.xlu0 %6833
      %6835 = vrot.lane.b32.xlu0 %v6446, 64
      %v6836 = vpop.permute.xlu0 %6835
      %6837 = vrot.lane.b32.xlu0 %v6447, 64
      %v6838 = vpop.permute.xlu0 %6837
      %6839 = vrot.lane.b32.xlu0 %v6448, 64
      %v6840 = vpop.permute.xlu0 %6839
      %6841 = vrot.lane.b32.xlu0 %v6449, 64
      %v6842 = vpop.permute.xlu0 %6841
      %6843 = vrot.lane.b32.xlu0 %v6450, 64
      %v6844 = vpop.permute.xlu0 %6843
      %6845 = vrot.lane.b32.xlu0 %v6451, 64
      %v6846 = vpop.permute.xlu0 %6845
      %6847 = vrot.lane.b32.xlu0 %v6452, 64
      %v6848 = vpop.permute.xlu0 %6847
      %6849 = vrot.lane.b32.xlu0 %v6453, 64
      %v6850 = vpop.permute.xlu0 %6849
      %6851 = vrot.lane.b32.xlu0 %v6454, 64
      %v6852 = vpop.permute.xlu0 %6851
      %6853 = vrot.lane.b32.xlu0 %v6455, 64
      %v6854 = vpop.permute.xlu0 %6853
      %6855 = vrot.lane.b32.xlu0 %v6456, 64
      %v6856 = vpop.permute.xlu0 %6855
      %6857 = vrot.lane.b32.xlu0 %v6457, 64
      %v6858 = vpop.permute.xlu0 %6857
      %6859 = vrot.lane.b32.xlu0 %v6458, 64
      %v6860 = vpop.permute.xlu0 %6859
      %6861 = vrot.lane.b32.xlu0 %v6459, 64
      %v6862 = vpop.permute.xlu0 %6861
      %6863 = vrot.lane.b32.xlu0 %v6460, 64
      %v6864 = vpop.permute.xlu0 %6863
      %6865 = vrot.lane.b32.xlu0 %v6461, 64
      %v6866 = vpop.permute.xlu0 %6865
      %6867 = vrot.lane.b32.xlu0 %v6462, 64
      %v6868 = vpop.permute.xlu0 %6867
      %6869 = vrot.lane.b32.xlu0 %v6463, 64
      %v6870 = vpop.permute.xlu0 %6869
      %6871 = vrot.lane.b32.xlu0 %v6464, 64
      %v6872 = vpop.permute.xlu0 %6871
      %6873 = vrot.lane.b32.xlu0 %v6465, 64
      %v6874 = vpop.permute.xlu0 %6873
      %6875 = vrot.lane.b32.xlu0 %v6466, 64
      %v6876 = vpop.permute.xlu0 %6875
      %6877 = vrot.lane.b32.xlu0 %v6467, 64
      %v6878 = vpop.permute.xlu0 %6877
      %6879 = vrot.lane.b32.xlu0 %v6468, 64
      %v6880 = vpop.permute.xlu0 %6879
      %6881 = vrot.lane.b32.xlu0 %v6469, 64
      %v6882 = vpop.permute.xlu0 %6881
      %6883 = vrot.lane.b32.xlu0 %v6470, 64
      %v6884 = vpop.permute.xlu0 %6883
      %6885 = vrot.lane.b32.xlu0 %v6471, 64
      %v6886 = vpop.permute.xlu0 %6885
      %6887 = vrot.lane.b32.xlu0 %v6472, 64
      %v6888 = vpop.permute.xlu0 %6887
      %6953 = vrot.lane.b32.xlu0 %v6473, 96
      %v6954 = vpop.permute.xlu0 %6953
      %6955 = vrot.lane.b32.xlu0 %v6474, 96
      %v6956 = vpop.permute.xlu0 %6955
      %6957 = vrot.lane.b32.xlu0 %v6475, 96
      %v6958 = vpop.permute.xlu0 %6957
      %6959 = vrot.lane.b32.xlu0 %v6476, 96
      %v6960 = vpop.permute.xlu0 %6959
      %6961 = vrot.lane.b32.xlu0 %v6477, 96
      %v6962 = vpop.permute.xlu0 %6961
      %6963 = vrot.lane.b32.xlu0 %v6478, 96
      %v6964 = vpop.permute.xlu0 %6963
      %6965 = vrot.lane.b32.xlu0 %v6479, 96
      %v6966 = vpop.permute.xlu0 %6965
      %6967 = vrot.lane.b32.xlu0 %v6480, 96
      %v6968 = vpop.permute.xlu0 %6967
      %6969 = vrot.lane.b32.xlu0 %v6481, 96
      %v6970 = vpop.permute.xlu0 %6969
      %6971 = vrot.lane.b32.xlu0 %v6482, 96
      %v6972 = vpop.permute.xlu0 %6971
      %6973 = vrot.lane.b32.xlu0 %v6483, 96
      %v6974 = vpop.permute.xlu0 %6973
      %6975 = vrot.lane.b32.xlu0 %v6484, 96
      %v6976 = vpop.permute.xlu0 %6975
      %6977 = vrot.lane.b32.xlu0 %v6485, 96
      %v6978 = vpop.permute.xlu0 %6977
      %6979 = vrot.lane.b32.xlu0 %v6486, 96
      %v6980 = vpop.permute.xlu0 %6979
      %6981 = vrot.lane.b32.xlu0 %v6487, 96
      %v6982 = vpop.permute.xlu0 %6981
      %6983 = vrot.lane.b32.xlu0 %v6488, 96
      %v6984 = vpop.permute.xlu0 %6983
      %6985 = vrot.lane.b32.xlu0 %v6489, 96
      %v6986 = vpop.permute.xlu0 %6985
      %6987 = vrot.lane.b32.xlu0 %v6490, 96
      %v6988 = vpop.permute.xlu0 %6987
      %6989 = vrot.lane.b32.xlu0 %v6491, 96
      %v6990 = vpop.permute.xlu0 %6989
      %6991 = vrot.lane.b32.xlu0 %v6492, 96
      %v6992 = vpop.permute.xlu0 %6991
      %6993 = vrot.lane.b32.xlu0 %v6493, 96
      %v6994 = vpop.permute.xlu0 %6993
      %6995 = vrot.lane.b32.xlu0 %v6494, 96
      %v6996 = vpop.permute.xlu0 %6995
      %6997 = vrot.lane.b32.xlu0 %v6495, 96
      %v6998 = vpop.permute.xlu0 %6997
      %6999 = vrot.lane.b32.xlu0 %v6496, 96
      %v7000 = vpop.permute.xlu0 %6999
      %7001 = vrot.lane.b32.xlu0 %v6497, 96
      %v7002 = vpop.permute.xlu0 %7001
      %7003 = vrot.lane.b32.xlu0 %v6498, 96
      %v7004 = vpop.permute.xlu0 %7003
      %7005 = vrot.lane.b32.xlu0 %v6499, 96
      %v7006 = vpop.permute.xlu0 %7005
      %7007 = vrot.lane.b32.xlu0 %v6500, 96
      %v7008 = vpop.permute.xlu0 %7007
      %7009 = vrot.lane.b32.xlu0 %v6501, 96
      %v7010 = vpop.permute.xlu0 %7009
      %7011 = vrot.lane.b32.xlu0 %v6502, 96
      %v7012 = vpop.permute.xlu0 %7011
      %7013 = vrot.lane.b32.xlu0 %v6503, 96
      %v7014 = vpop.permute.xlu0 %7013
      %7015 = vrot.lane.b32.xlu0 %v6504, 96
      %v7016 = vpop.permute.xlu0 %7015
      %7081 = vrot.lane.b32.xlu0 %v6537, 32
      %v7082 = vpop.permute.xlu0 %7081
      %7083 = vrot.lane.b32.xlu0 %v6538, 32
      %v7084 = vpop.permute.xlu0 %7083
      %7085 = vrot.lane.b32.xlu0 %v6539, 32
      %v7086 = vpop.permute.xlu0 %7085
      %7087 = vrot.lane.b32.xlu0 %v6540, 32
      %v7088 = vpop.permute.xlu0 %7087
      %7089 = vrot.lane.b32.xlu0 %v6541, 32
      %v7090 = vpop.permute.xlu0 %7089
      %7091 = vrot.lane.b32.xlu0 %v6542, 32
      %v7092 = vpop.permute.xlu0 %7091
      %7093 = vrot.lane.b32.xlu0 %v6543, 32
      %v7094 = vpop.permute.xlu0 %7093
      %7095 = vrot.lane.b32.xlu0 %v6544, 32
      %v7096 = vpop.permute.xlu0 %7095
      %7097 = vrot.lane.b32.xlu0 %v6545, 32
      %v7098 = vpop.permute.xlu0 %7097
      %7099 = vrot.lane.b32.xlu0 %v6546, 32
      %v7100 = vpop.permute.xlu0 %7099
      %7101 = vrot.lane.b32.xlu0 %v6547, 32
      %v7102 = vpop.permute.xlu0 %7101
      %7103 = vrot.lane.b32.xlu0 %v6548, 32
      %v7104 = vpop.permute.xlu0 %7103
      %7105 = vrot.lane.b32.xlu0 %v6549, 32
      %v7106 = vpop.permute.xlu0 %7105
      %7107 = vrot.lane.b32.xlu0 %v6550, 32
      %v7108 = vpop.permute.xlu0 %7107
      %7109 = vrot.lane.b32.xlu0 %v6551, 32
      %v7110 = vpop.permute.xlu0 %7109
      %7111 = vrot.lane.b32.xlu0 %v6552, 32
      %v7112 = vpop.permute.xlu0 %7111
      %7113 = vrot.lane.b32.xlu0 %v6553, 32
      %v7114 = vpop.permute.xlu0 %7113
      %7115 = vrot.lane.b32.xlu0 %v6554, 32
      %v7116 = vpop.permute.xlu0 %7115
      %7117 = vrot.lane.b32.xlu0 %v6555, 32
      %v7118 = vpop.permute.xlu0 %7117
      %7119 = vrot.lane.b32.xlu0 %v6556, 32
      %v7120 = vpop.permute.xlu0 %7119
      %7121 = vrot.lane.b32.xlu0 %v6557, 32
      %v7122 = vpop.permute.xlu0 %7121
      %7123 = vrot.lane.b32.xlu0 %v6558, 32
      %v7124 = vpop.permute.xlu0 %7123
      %7125 = vrot.lane.b32.xlu0 %v6559, 32
      %v7126 = vpop.permute.xlu0 %7125
      %7127 = vrot.lane.b32.xlu0 %v6560, 32
      %v7128 = vpop.permute.xlu0 %7127
      %7129 = vrot.lane.b32.xlu0 %v6561, 32
      %v7130 = vpop.permute.xlu0 %7129
      %7131 = vrot.lane.b32.xlu0 %v6562, 32
      %v7132 = vpop.permute.xlu0 %7131
      %7133 = vrot.lane.b32.xlu0 %v6563, 32
      %v7134 = vpop.permute.xlu0 %7133
      %7135 = vrot.lane.b32.xlu0 %v6564, 32
      %v7136 = vpop.permute.xlu0 %7135
      %7137 = vrot.lane.b32.xlu0 %v6565, 32
      %v7138 = vpop.permute.xlu0 %7137
      %7139 = vrot.lane.b32.xlu0 %v6566, 32
      %v7140 = vpop.permute.xlu0 %7139
      %7141 = vrot.lane.b32.xlu0 %v6567, 32
      %v7142 = vpop.permute.xlu0 %7141
      %7143 = vrot.lane.b32.xlu0 %v6568, 32
      %v7144 = vpop.permute.xlu0 %7143
      %7209 = vrot.lane.b32.xlu0 %v6569, 64
      %v7210 = vpop.permute.xlu0 %7209
      %7211 = vrot.lane.b32.xlu0 %v6570, 64
      %v7212 = vpop.permute.xlu0 %7211
      %7213 = vrot.lane.b32.xlu0 %v6571, 64
      %v7214 = vpop.permute.xlu0 %7213
      %7215 = vrot.lane.b32.xlu0 %v6572, 64
      %v7216 = vpop.permute.xlu0 %7215
      %7217 = vrot.lane.b32.xlu0 %v6573, 64
      %v7218 = vpop.permute.xlu0 %7217
      %7219 = vrot.lane.b32.xlu0 %v6574, 64
      %v7220 = vpop.permute.xlu0 %7219
      %7221 = vrot.lane.b32.xlu0 %v6575, 64
      %v7222 = vpop.permute.xlu0 %7221
      %7223 = vrot.lane.b32.xlu0 %v6576, 64
      %v7224 = vpop.permute.xlu0 %7223
      %7225 = vrot.lane.b32.xlu0 %v6577, 64
      %v7226 = vpop.permute.xlu0 %7225
      %7227 = vrot.lane.b32.xlu0 %v6578, 64
      %v7228 = vpop.permute.xlu0 %7227
      %7229 = vrot.lane.b32.xlu0 %v6579, 64
      %v7230 = vpop.permute.xlu0 %7229
      %7231 = vrot.lane.b32.xlu0 %v6580, 64
      %v7232 = vpop.permute.xlu0 %7231
      %7233 = vrot.lane.b32.xlu0 %v6581, 64
      %v7234 = vpop.permute.xlu0 %7233
      %7235 = vrot.lane.b32.xlu0 %v6582, 64
      %v7236 = vpop.permute.xlu0 %7235
      %7237 = vrot.lane.b32.xlu0 %v6583, 64
      %v7238 = vpop.permute.xlu0 %7237
      %7239 = vrot.lane.b32.xlu0 %v6584, 64
      %v7240 = vpop.permute.xlu0 %7239
      %7241 = vrot.lane.b32.xlu0 %v6585, 64
      %v7242 = vpop.permute.xlu0 %7241
      %7243 = vrot.lane.b32.xlu0 %v6586, 64
      %v7244 = vpop.permute.xlu0 %7243
      %7245 = vrot.lane.b32.xlu0 %v6587, 64
      %v7246 = vpop.permute.xlu0 %7245
      %7247 = vrot.lane.b32.xlu0 %v6588, 64
      %v7248 = vpop.permute.xlu0 %7247
      %7249 = vrot.lane.b32.xlu0 %v6589, 64
      %v7250 = vpop.permute.xlu0 %7249
      %7251 = vrot.lane.b32.xlu0 %v6590, 64
      %v7252 = vpop.permute.xlu0 %7251
      %7253 = vrot.lane.b32.xlu0 %v6591, 64
      %v7254 = vpop.permute.xlu0 %7253
      %7255 = vrot.lane.b32.xlu0 %v6592, 64
      %v7256 = vpop.permute.xlu0 %7255
      %7257 = vrot.lane.b32.xlu0 %v6593, 64
      %v7258 = vpop.permute.xlu0 %7257
      %7259 = vrot.lane.b32.xlu0 %v6594, 64
      %v7260 = vpop.permute.xlu0 %7259
      %7261 = vrot.lane.b32.xlu0 %v6595, 64
      %v7262 = vpop.permute.xlu0 %7261
      %7263 = vrot.lane.b32.xlu0 %v6596, 64
      %v7264 = vpop.permute.xlu0 %7263
      %7265 = vrot.lane.b32.xlu0 %v6597, 64
      %v7266 = vpop.permute.xlu0 %7265
      %7267 = vrot.lane.b32.xlu0 %v6598, 64
      %v7268 = vpop.permute.xlu0 %7267
      %7269 = vrot.lane.b32.xlu0 %v6599, 64
      %v7270 = vpop.permute.xlu0 %7269
      %7271 = vrot.lane.b32.xlu0 %v6600, 64
      %v7272 = vpop.permute.xlu0 %7271
      %7337 = vrot.lane.b32.xlu0 %v6601, 96
      %v7338 = vpop.permute.xlu0 %7337
      %7339 = vrot.lane.b32.xlu0 %v6602, 96
      %v7340 = vpop.permute.xlu0 %7339
      %7341 = vrot.lane.b32.xlu0 %v6603, 96
      %v7342 = vpop.permute.xlu0 %7341
      %7343 = vrot.lane.b32.xlu0 %v6604, 96
      %v7344 = vpop.permute.xlu0 %7343
      %7345 = vrot.lane.b32.xlu0 %v6605, 96
      %v7346 = vpop.permute.xlu0 %7345
      %7347 = vrot.lane.b32.xlu0 %v6606, 96
      %v7348 = vpop.permute.xlu0 %7347
      %7349 = vrot.lane.b32.xlu0 %v6607, 96
      %v7350 = vpop.permute.xlu0 %7349
      %7351 = vrot.lane.b32.xlu0 %v6608, 96
      %v7352 = vpop.permute.xlu0 %7351
      %7353 = vrot.lane.b32.xlu0 %v6609, 96
      %v7354 = vpop.permute.xlu0 %7353
      %7355 = vrot.lane.b32.xlu0 %v6610, 96
      %v7356 = vpop.permute.xlu0 %7355
      %7357 = vrot.lane.b32.xlu0 %v6611, 96
      %v7358 = vpop.permute.xlu0 %7357
      %7359 = vrot.lane.b32.xlu0 %v6612, 96
      %v7360 = vpop.permute.xlu0 %7359
      %7361 = vrot.lane.b32.xlu0 %v6613, 96
      %v7362 = vpop.permute.xlu0 %7361
      %7363 = vrot.lane.b32.xlu0 %v6614, 96
      %v7364 = vpop.permute.xlu0 %7363
      %7365 = vrot.lane.b32.xlu0 %v6615, 96
      %v7366 = vpop.permute.xlu0 %7365
      %7367 = vrot.lane.b32.xlu0 %v6616, 96
      %v7368 = vpop.permute.xlu0 %7367
      %7369 = vrot.lane.b32.xlu0 %v6617, 96
      %v7370 = vpop.permute.xlu0 %7369
      %7371 = vrot.lane.b32.xlu0 %v6618, 96
      %v7372 = vpop.permute.xlu0 %7371
      %7373 = vrot.lane.b32.xlu0 %v6619, 96
      %v7374 = vpop.permute.xlu0 %7373
      %7375 = vrot.lane.b32.xlu0 %v6620, 96
      %v7376 = vpop.permute.xlu0 %7375
      %7377 = vrot.lane.b32.xlu0 %v6621, 96
      %v7378 = vpop.permute.xlu0 %7377
      %7379 = vrot.lane.b32.xlu0 %v6622, 96
      %v7380 = vpop.permute.xlu0 %7379
      %7381 = vrot.lane.b32.xlu0 %v6623, 96
      %v7382 = vpop.permute.xlu0 %7381
      %7383 = vrot.lane.b32.xlu0 %v6624, 96
      %v7384 = vpop.permute.xlu0 %7383
      %7385 = vrot.lane.b32.xlu0 %v6625, 96
      %v7386 = vpop.permute.xlu0 %7385
      %7387 = vrot.lane.b32.xlu0 %v6626, 96
      %v7388 = vpop.permute.xlu0 %7387
      %7389 = vrot.lane.b32.xlu0 %v6627, 96
      %v7390 = vpop.permute.xlu0 %7389
      %7391 = vrot.lane.b32.xlu0 %v6628, 96
      %v7392 = vpop.permute.xlu0 %7391
      %7393 = vrot.lane.b32.xlu0 %v6629, 96
      %v7394 = vpop.permute.xlu0 %7393
      %7395 = vrot.lane.b32.xlu0 %v6630, 96
      %v7396 = vpop.permute.xlu0 %7395
      %7397 = vrot.lane.b32.xlu0 %v6631, 96
      %v7398 = vpop.permute.xlu0 %7397
      %7399 = vrot.lane.b32.xlu0 %v6632, 96
      %v7400 = vpop.permute.xlu0 %7399
      %v7433 = vsel %vm539, %v6377, %v6698
      %v7434 = vsel %vm539, %v6378, %v6700
      %v7435 = vsel %vm539, %v6379, %v6702
      %v7436 = vsel %vm539, %v6380, %v6704
      %v7437 = vsel %vm539, %v6381, %v6706
      %v7438 = vsel %vm539, %v6382, %v6708
      %v7439 = vsel %vm539, %v6383, %v6710
      %v7440 = vsel %vm539, %v6384, %v6712
      %v7441 = vsel %vm539, %v6385, %v6714
      %v7442 = vsel %vm539, %v6386, %v6716
      %v7443 = vsel %vm539, %v6387, %v6718
      %v7444 = vsel %vm539, %v6388, %v6720
      %v7445 = vsel %vm539, %v6389, %v6722
      %v7446 = vsel %vm539, %v6390, %v6724
      %v7447 = vsel %vm539, %v6391, %v6726
      %v7448 = vsel %vm539, %v6392, %v6728
      %v7449 = vsel %vm539, %v6393, %v6730
      %v7450 = vsel %vm539, %v6394, %v6732
      %v7451 = vsel %vm539, %v6395, %v6734
      %v7452 = vsel %vm539, %v6396, %v6736
      %v7453 = vsel %vm539, %v6397, %v6738
      %v7454 = vsel %vm539, %v6398, %v6740
      %v7455 = vsel %vm539, %v6399, %v6742
      %v7456 = vsel %vm539, %v6400, %v6744
      %v7457 = vsel %vm539, %v6401, %v6746
      %v7458 = vsel %vm539, %v6402, %v6748
      %v7459 = vsel %vm539, %v6403, %v6750
      %v7460 = vsel %vm539, %v6404, %v6752
      %v7461 = vsel %vm539, %v6405, %v6754
      %v7462 = vsel %vm539, %v6406, %v6756
      %v7463 = vsel %vm539, %v6407, %v6758
      %v7464 = vsel %vm539, %v6408, %v6760
      %v7465 = vsel %vm3701, %v7433, %v6826
      %v7466 = vsel %vm3701, %v7434, %v6828
      %v7467 = vsel %vm3701, %v7435, %v6830
      %v7468 = vsel %vm3701, %v7436, %v6832
      %v7469 = vsel %vm3701, %v7437, %v6834
      %v7470 = vsel %vm3701, %v7438, %v6836
      %v7471 = vsel %vm3701, %v7439, %v6838
      %v7472 = vsel %vm3701, %v7440, %v6840
      %v7473 = vsel %vm3701, %v7441, %v6842
      %v7474 = vsel %vm3701, %v7442, %v6844
      %v7475 = vsel %vm3701, %v7443, %v6846
      %v7476 = vsel %vm3701, %v7444, %v6848
      %v7477 = vsel %vm3701, %v7445, %v6850
      %v7478 = vsel %vm3701, %v7446, %v6852
      %v7479 = vsel %vm3701, %v7447, %v6854
      %v7480 = vsel %vm3701, %v7448, %v6856
      %v7481 = vsel %vm3701, %v7449, %v6858
      %v7482 = vsel %vm3701, %v7450, %v6860
      %v7483 = vsel %vm3701, %v7451, %v6862
      %v7484 = vsel %vm3701, %v7452, %v6864
      %v7485 = vsel %vm3701, %v7453, %v6866
      %v7486 = vsel %vm3701, %v7454, %v6868
      %v7487 = vsel %vm3701, %v7455, %v6870
      %v7488 = vsel %vm3701, %v7456, %v6872
      %v7489 = vsel %vm3701, %v7457, %v6874
      %v7490 = vsel %vm3701, %v7458, %v6876
      %v7491 = vsel %vm3701, %v7459, %v6878
      %v7492 = vsel %vm3701, %v7460, %v6880
      %v7493 = vsel %vm3701, %v7461, %v6882
      %v7494 = vsel %vm3701, %v7462, %v6884
      %v7495 = vsel %vm3701, %v7463, %v6886
      %v7496 = vsel %vm3701, %v7464, %v6888
      %v7497 = vsel %vm3734, %v7465, %v6954
      %v7498 = vsel %vm3734, %v7466, %v6956
      %v7499 = vsel %vm3734, %v7467, %v6958
      %v7500 = vsel %vm3734, %v7468, %v6960
      %v7501 = vsel %vm3734, %v7469, %v6962
      %v7502 = vsel %vm3734, %v7470, %v6964
      %v7503 = vsel %vm3734, %v7471, %v6966
      %v7504 = vsel %vm3734, %v7472, %v6968
      %v7505 = vsel %vm3734, %v7473, %v6970
      %v7506 = vsel %vm3734, %v7474, %v6972
      %v7507 = vsel %vm3734, %v7475, %v6974
      %v7508 = vsel %vm3734, %v7476, %v6976
      %v7509 = vsel %vm3734, %v7477, %v6978
      %v7510 = vsel %vm3734, %v7478, %v6980
      %v7511 = vsel %vm3734, %v7479, %v6982
      %v7512 = vsel %vm3734, %v7480, %v6984
      %v7513 = vsel %vm3734, %v7481, %v6986
      %v7514 = vsel %vm3734, %v7482, %v6988
      %v7515 = vsel %vm3734, %v7483, %v6990
      %v7516 = vsel %vm3734, %v7484, %v6992
      %v7517 = vsel %vm3734, %v7485, %v6994
      %v7518 = vsel %vm3734, %v7486, %v6996
      %v7519 = vsel %vm3734, %v7487, %v6998
      %v7520 = vsel %vm3734, %v7488, %v7000
      %v7521 = vsel %vm3734, %v7489, %v7002
      %v7522 = vsel %vm3734, %v7490, %v7004
      %v7523 = vsel %vm3734, %v7491, %v7006
      %v7524 = vsel %vm3734, %v7492, %v7008
      %v7525 = vsel %vm3734, %v7493, %v7010
      %v7526 = vsel %vm3734, %v7494, %v7012
      %v7527 = vsel %vm3734, %v7495, %v7014
      %v7528 = vsel %vm3734, %v7496, %v7016
      %v7529 = vsel %vm539, %v6505, %v7082
      %v7530 = vsel %vm539, %v6506, %v7084
      %v7531 = vsel %vm539, %v6507, %v7086
      %v7532 = vsel %vm539, %v6508, %v7088
      %v7533 = vsel %vm539, %v6509, %v7090
      %v7534 = vsel %vm539, %v6510, %v7092
      %v7535 = vsel %vm539, %v6511, %v7094
      %v7536 = vsel %vm539, %v6512, %v7096
      %v7537 = vsel %vm539, %v6513, %v7098
      %v7538 = vsel %vm539, %v6514, %v7100
      %v7539 = vsel %vm539, %v6515, %v7102
      %v7540 = vsel %vm539, %v6516, %v7104
      %v7541 = vsel %vm539, %v6517, %v7106
      %v7542 = vsel %vm539, %v6518, %v7108
      %v7543 = vsel %vm539, %v6519, %v7110
      %v7544 = vsel %vm539, %v6520, %v7112
      %v7545 = vsel %vm539, %v6521, %v7114
      %v7546 = vsel %vm539, %v6522, %v7116
      %v7547 = vsel %vm539, %v6523, %v7118
      %v7548 = vsel %vm539, %v6524, %v7120
      %v7549 = vsel %vm539, %v6525, %v7122
      %v7550 = vsel %vm539, %v6526, %v7124
      %v7551 = vsel %vm539, %v6527, %v7126
      %v7552 = vsel %vm539, %v6528, %v7128
      %v7553 = vsel %vm539, %v6529, %v7130
      %v7554 = vsel %vm539, %v6530, %v7132
      %v7555 = vsel %vm539, %v6531, %v7134
      %v7556 = vsel %vm539, %v6532, %v7136
      %v7557 = vsel %vm539, %v6533, %v7138
      %v7558 = vsel %vm539, %v6534, %v7140
      %v7559 = vsel %vm539, %v6535, %v7142
      %v7560 = vsel %vm539, %v6536, %v7144
      %v7561 = vsel %vm3701, %v7529, %v7210
      %v7562 = vsel %vm3701, %v7530, %v7212
      %v7563 = vsel %vm3701, %v7531, %v7214
      %v7564 = vsel %vm3701, %v7532, %v7216
      %v7565 = vsel %vm3701, %v7533, %v7218
      %v7566 = vsel %vm3701, %v7534, %v7220
      %v7567 = vsel %vm3701, %v7535, %v7222
      %v7568 = vsel %vm3701, %v7536, %v7224
      %v7569 = vsel %vm3701, %v7537, %v7226
      %v7570 = vsel %vm3701, %v7538, %v7228
      %v7571 = vsel %vm3701, %v7539, %v7230
      %v7572 = vsel %vm3701, %v7540, %v7232
      %v7573 = vsel %vm3701, %v7541, %v7234
      %v7574 = vsel %vm3701, %v7542, %v7236
      %v7575 = vsel %vm3701, %v7543, %v7238
      %v7576 = vsel %vm3701, %v7544, %v7240
      %v7577 = vsel %vm3701, %v7545, %v7242
      %v7578 = vsel %vm3701, %v7546, %v7244
      %v7579 = vsel %vm3701, %v7547, %v7246
      %v7580 = vsel %vm3701, %v7548, %v7248
      %v7581 = vsel %vm3701, %v7549, %v7250
      %v7582 = vsel %vm3701, %v7550, %v7252
      %v7583 = vsel %vm3701, %v7551, %v7254
      %v7584 = vsel %vm3701, %v7552, %v7256
      %v7585 = vsel %vm3701, %v7553, %v7258
      %v7586 = vsel %vm3701, %v7554, %v7260
      %v7587 = vsel %vm3701, %v7555, %v7262
      %v7588 = vsel %vm3701, %v7556, %v7264
      %v7589 = vsel %vm3701, %v7557, %v7266
      %v7590 = vsel %vm3701, %v7558, %v7268
      %v7591 = vsel %vm3701, %v7559, %v7270
      %v7592 = vsel %vm3701, %v7560, %v7272
      %v7593 = vsel %vm3734, %v7561, %v7338
      %v7594 = vsel %vm3734, %v7562, %v7340
      %v7595 = vsel %vm3734, %v7563, %v7342
      %v7596 = vsel %vm3734, %v7564, %v7344
      %v7597 = vsel %vm3734, %v7565, %v7346
      %v7598 = vsel %vm3734, %v7566, %v7348
      %v7599 = vsel %vm3734, %v7567, %v7350
      %v7600 = vsel %vm3734, %v7568, %v7352
      %v7601 = vsel %vm3734, %v7569, %v7354
      %v7602 = vsel %vm3734, %v7570, %v7356
      %v7603 = vsel %vm3734, %v7571, %v7358
      %v7604 = vsel %vm3734, %v7572, %v7360
      %v7605 = vsel %vm3734, %v7573, %v7362
      %v7606 = vsel %vm3734, %v7574, %v7364
      %v7607 = vsel %vm3734, %v7575, %v7366
      %v7608 = vsel %vm3734, %v7576, %v7368
      %v7609 = vsel %vm3734, %v7577, %v7370
      %v7610 = vsel %vm3734, %v7578, %v7372
      %v7611 = vsel %vm3734, %v7579, %v7374
      %v7612 = vsel %vm3734, %v7580, %v7376
      %v7613 = vsel %vm3734, %v7581, %v7378
      %v7614 = vsel %vm3734, %v7582, %v7380
      %v7615 = vsel %vm3734, %v7583, %v7382
      %v7616 = vsel %vm3734, %v7584, %v7384
      %v7617 = vsel %vm3734, %v7585, %v7386
      %v7618 = vsel %vm3734, %v7586, %v7388
      %v7619 = vsel %vm3734, %v7587, %v7390
      %v7620 = vsel %vm3734, %v7588, %v7392
      %v7621 = vsel %vm3734, %v7589, %v7394
      %v7622 = vsel %vm3734, %v7590, %v7396
      %v7623 = vsel %vm3734, %v7591, %v7398
      %v7624 = vsel %vm3734, %v7592, %v7400
      %v7625 = vpack.c.bf16 %v7498, %v7497
      %v7626 = vpack.c.bf16 %v7594, %v7593
      %v7627 = vpack.c.bf16 %v6634, %v6633
      %v7628 = vpack.c.bf16 %v7500, %v7499
      %v7629 = vpack.c.bf16 %v7596, %v7595
      %v7630 = vpack.c.bf16 %v6636, %v6635
      %v7631 = vpack.c.bf16 %v7502, %v7501
      %v7632 = vpack.c.bf16 %v7598, %v7597
      %v7633 = vpack.c.bf16 %v6638, %v6637
      %v7634 = vpack.c.bf16 %v7504, %v7503
      %v7635 = vpack.c.bf16 %v7600, %v7599
      %v7636 = vpack.c.bf16 %v6640, %v6639
      %v7637 = vpack.c.bf16 %v7506, %v7505
      %v7638 = vpack.c.bf16 %v7602, %v7601
      %v7639 = vpack.c.bf16 %v6642, %v6641
      %v7640 = vpack.c.bf16 %v7508, %v7507
      %v7641 = vpack.c.bf16 %v7604, %v7603
      %v7642 = vpack.c.bf16 %v6644, %v6643
      %v7643 = vpack.c.bf16 %v7510, %v7509
      %v7644 = vpack.c.bf16 %v7606, %v7605
      %v7645 = vpack.c.bf16 %v6646, %v6645
      %v7646 = vpack.c.bf16 %v7512, %v7511
      %v7647 = vpack.c.bf16 %v7608, %v7607
      %v7648 = vpack.c.bf16 %v6648, %v6647
      %v7649 = vpack.c.bf16 %v7514, %v7513
      %v7650 = vpack.c.bf16 %v7610, %v7609
      %v7651 = vpack.c.bf16 %v6650, %v6649
      %v7652 = vpack.c.bf16 %v7516, %v7515
      %v7653 = vpack.c.bf16 %v7612, %v7611
      %v7654 = vpack.c.bf16 %v6652, %v6651
      %v7655 = vpack.c.bf16 %v7518, %v7517
      %v7656 = vpack.c.bf16 %v7614, %v7613
      %v7657 = vpack.c.bf16 %v6654, %v6653
      %v7658 = vpack.c.bf16 %v7520, %v7519
      %v7659 = vpack.c.bf16 %v7616, %v7615
      %v7660 = vpack.c.bf16 %v6656, %v6655
      %v7661 = vpack.c.bf16 %v7522, %v7521
      %v7662 = vpack.c.bf16 %v7618, %v7617
      %v7663 = vpack.c.bf16 %v6658, %v6657
      %v7664 = vpack.c.bf16 %v7524, %v7523
      %v7665 = vpack.c.bf16 %v7620, %v7619
      %v7666 = vpack.c.bf16 %v6660, %v6659
      %v7667 = vpack.c.bf16 %v7526, %v7525
      %v7668 = vpack.c.bf16 %v7622, %v7621
      %v7669 = vpack.c.bf16 %v6662, %v6661
      %v7670 = vpack.c.bf16 %v7528, %v7527
      %v7671 = vpack.c.bf16 %v7624, %v7623
      %v7672 = vpack.c.bf16 %v6664, %v6663
      %v7673 = vld [vmem:[%s476] sm:$0x1]
      %v7675 = vlaneseq
      %v7676 = vshrl.u32 %v7675, 7
      %v7677 = vsub.s32 0, %v7676
      %v7678 = vrot.slane %v7673, %v7677
      %s7680 = scalar_lea.vmem [#allocation4], 24
      %7681 = vst.msk [vmem:[%s7680 + $0x1] sm:$0xff] %vm595, %v7678
      %7682 = vst.msk [vmem:[%s7680 + $0x9] sm:$0xff] %vm595, %v7678
      %7683 = vst.msk [vmem:[%s7680 + $0x19] sm:$0xff] %vm595, %v7678
      %7684 = vst.msk [vmem:[%s7680 + $0x21] sm:$0xff] %vm595, %v7678
      %7685 = vst.msk [vmem:[%s7680 + $0x31] sm:$0xff] %vm595, %v7678
      %7686 = vst.msk [vmem:[%s7680 + $0x39] sm:$0xff] %vm595, %v7678
      %7687 = vst.msk [vmem:[%s7680 + $0x49] sm:$0xff] %vm595, %v7678
      %7688 = vst.msk [vmem:[%s7680 + $0x51] sm:$0xff] %vm595, %v7678
      %7689 = vst.msk [vmem:[%s7680 + $0x61] sm:$0xff] %vm595, %v7678
      %7690 = vst.msk [vmem:[%s7680 + $0x69] sm:$0xff] %vm595, %v7678
      %7691 = vst.msk [vmem:[%s7680 + $0x79] sm:$0xff] %vm595, %v7678
      %7692 = vst.msk [vmem:[%s7680 + $0x81] sm:$0xff] %vm595, %v7678
      %7693 = vst.msk [vmem:[%s7680 + $0x91] sm:$0xff] %vm595, %v7678
      %7694 = vst.msk [vmem:[%s7680 + $0x99] sm:$0xff] %vm595, %v7678
      %7695 = vst.msk [vmem:[%s7680 + $0xa9] sm:$0xff] %vm595, %v7678
      %7696 = vst.msk [vmem:[%s7680 + $0xb1] sm:$0xff] %vm595, %v7678
      %7697 = vst.msk [vmem:[%s7680 + $0xc1] sm:$0xff] %vm595, %v7678
      %7698 = vst.msk [vmem:[%s7680 + $0xc9] sm:$0xff] %vm595, %v7678
      %7699 = vst.msk [vmem:[%s7680 + $0xd9] sm:$0xff] %vm595, %v7678
      %7700 = vst.msk [vmem:[%s7680 + $0xe1] sm:$0xff] %vm595, %v7678
      %7701 = vst.msk [vmem:[%s7680 + $0xf1] sm:$0xff] %vm595, %v7678
      %7702 = vst.msk [vmem:[%s7680 + $0xf9] sm:$0xff] %vm595, %v7678
      %7703 = vst.msk [vmem:[%s7680 + $0x109] sm:$0xff] %vm595, %v7678
      %7704 = vst.msk [vmem:[%s7680 + $0x111] sm:$0xff] %vm595, %v7678
      %7705 = vst.msk [vmem:[%s7680 + $0x121] sm:$0xff] %vm595, %v7678
      %7706 = vst.msk [vmem:[%s7680 + $0x129] sm:$0xff] %vm595, %v7678
      %7707 = vst.msk [vmem:[%s7680 + $0x139] sm:$0xff] %vm595, %v7678
      %7708 = vst.msk [vmem:[%s7680 + $0x141] sm:$0xff] %vm595, %v7678
      %7709 = vst.msk [vmem:[%s7680 + $0x151] sm:$0xff] %vm595, %v7678
      %7710 = vst.msk [vmem:[%s7680 + $0x159] sm:$0xff] %vm595, %v7678
      %7711 = vst.msk [vmem:[%s7680 + $0x169] sm:$0xff] %vm595, %v7678
      %7712 = vst.msk [vmem:[%s7680 + $0x171] sm:$0xff] %vm595, %v7678
      %v7713 = vld [vmem:[#allocation4] sm:$0xff]
      %v7714 = vld [vmem:[#allocation4 + $0x8] sm:$0xff]
      %v7715 = vld [vmem:[#allocation4 + $0x18] sm:$0xff]
      %v7716 = vld [vmem:[#allocation4 + $0x20] sm:$0xff]
      %v7717 = vld [vmem:[#allocation4 + $0x30] sm:$0xff]
      %v7718 = vld [vmem:[#allocation4 + $0x38] sm:$0xff]
      %v7719 = vld [vmem:[#allocation4 + $0x48] sm:$0xff]
      %v7720 = vld [vmem:[#allocation4 + $0x50] sm:$0xff]
      %v7721 = vld [vmem:[#allocation4 + $0x60] sm:$0xff]
      %v7722 = vld [vmem:[#allocation4 + $0x68] sm:$0xff]
      %v7723 = vld [vmem:[#allocation4 + $0x78] sm:$0xff]
      %v7724 = vld [vmem:[#allocation4 + $0x80] sm:$0xff]
      %v7725 = vld [vmem:[#allocation4 + $0x90] sm:$0xff]
      %v7726 = vld [vmem:[#allocation4 + $0x98] sm:$0xff]
      %v7727 = vld [vmem:[#allocation4 + $0xa8] sm:$0xff]
      %v7728 = vld [vmem:[#allocation4 + $0xb0] sm:$0xff]
      %v7729 = vld [vmem:[#allocation4 + $0xc0] sm:$0xff]
      %v7730 = vld [vmem:[#allocation4 + $0xc8] sm:$0xff]
      %v7731 = vld [vmem:[#allocation4 + $0xd8] sm:$0xff]
      %v7732 = vld [vmem:[#allocation4 + $0xe0] sm:$0xff]
      %v7733 = vld [vmem:[#allocation4 + $0xf0] sm:$0xff]
      %v7734 = vld [vmem:[#allocation4 + $0xf8] sm:$0xff]
      %v7735 = vld [vmem:[#allocation4 + $0x108] sm:$0xff]
      %v7736 = vld [vmem:[#allocation4 + $0x110] sm:$0xff]
      %v7737 = vld [vmem:[#allocation4 + $0x120] sm:$0xff]
      %v7738 = vld [vmem:[#allocation4 + $0x128] sm:$0xff]
      %v7739 = vld [vmem:[#allocation4 + $0x138] sm:$0xff]
      %v7740 = vld [vmem:[#allocation4 + $0x140] sm:$0xff]
      %v7741 = vld [vmem:[#allocation4 + $0x150] sm:$0xff]
      %v7742 = vld [vmem:[#allocation4 + $0x158] sm:$0xff]
      %v7743 = vld [vmem:[#allocation4 + $0x168] sm:$0xff]
      %v7744 = vld [vmem:[#allocation4 + $0x170] sm:$0xff]
      %v7745 = vld [vmem:[%s7680] sm:$0xff]
      %v7746 = vld [vmem:[%s7680 + $0x8] sm:$0xff]
      %v7747 = vld [vmem:[%s7680 + $0x18] sm:$0xff]
      %v7748 = vld [vmem:[%s7680 + $0x20] sm:$0xff]
      %v7749 = vld [vmem:[%s7680 + $0x30] sm:$0xff]
      %v7750 = vld [vmem:[%s7680 + $0x38] sm:$0xff]
      %v7751 = vld [vmem:[%s7680 + $0x48] sm:$0xff]
      %v7752 = vld [vmem:[%s7680 + $0x50] sm:$0xff]
      %v7753 = vld [vmem:[%s7680 + $0x60] sm:$0xff]
      %v7754 = vld [vmem:[%s7680 + $0x68] sm:$0xff]
      %v7755 = vld [vmem:[%s7680 + $0x78] sm:$0xff]
      %v7756 = vld [vmem:[%s7680 + $0x80] sm:$0xff]
      %v7757 = vld [vmem:[%s7680 + $0x90] sm:$0xff]
      %v7758 = vld [vmem:[%s7680 + $0x98] sm:$0xff]
      %v7759 = vld [vmem:[%s7680 + $0xa8] sm:$0xff]
      %v7760 = vld [vmem:[%s7680 + $0xb0] sm:$0xff]
      %v7761 = vld [vmem:[%s7680 + $0xc0] sm:$0xff]
      %v7762 = vld [vmem:[%s7680 + $0xc8] sm:$0xff]
      %v7763 = vld [vmem:[%s7680 + $0xd8] sm:$0xff]
      %v7764 = vld [vmem:[%s7680 + $0xe0] sm:$0xff]
      %v7765 = vld [vmem:[%s7680 + $0xf0] sm:$0xff]
      %v7766 = vld [vmem:[%s7680 + $0xf8] sm:$0xff]
      %v7767 = vld [vmem:[%s7680 + $0x108] sm:$0xff]
      %v7768 = vld [vmem:[%s7680 + $0x110] sm:$0xff]
      %v7769 = vld [vmem:[%s7680 + $0x120] sm:$0xff]
      %v7770 = vld [vmem:[%s7680 + $0x128] sm:$0xff]
      %v7771 = vld [vmem:[%s7680 + $0x138] sm:$0xff]
      %v7772 = vld [vmem:[%s7680 + $0x140] sm:$0xff]
      %v7773 = vld [vmem:[%s7680 + $0x150] sm:$0xff]
      %v7774 = vld [vmem:[%s7680 + $0x158] sm:$0xff]
      %v7775 = vld [vmem:[%s7680 + $0x168] sm:$0xff]
      %v7776 = vld [vmem:[%s7680 + $0x170] sm:$0xff]
      %s7777 = scalar_lea.vmem [#allocation4], 48
      %v7778 = vld [vmem:[%s7777] sm:$0xff]
      %v7779 = vld [vmem:[%s7777 + $0x8] sm:$0xff]
      %v7780 = vld [vmem:[%s7777 + $0x18] sm:$0xff]
      %v7781 = vld [vmem:[%s7777 + $0x20] sm:$0xff]
      %v7782 = vld [vmem:[%s7777 + $0x30] sm:$0xff]
      %v7783 = vld [vmem:[%s7777 + $0x38] sm:$0xff]
      %v7784 = vld [vmem:[%s7777 + $0x48] sm:$0xff]
      %v7785 = vld [vmem:[%s7777 + $0x50] sm:$0xff]
      %v7786 = vld [vmem:[%s7777 + $0x60] sm:$0xff]
      %v7787 = vld [vmem:[%s7777 + $0x68] sm:$0xff]
      %v7788 = vld [vmem:[%s7777 + $0x78] sm:$0xff]
      %v7789 = vld [vmem:[%s7777 + $0x80] sm:$0xff]
      %v7790 = vld [vmem:[%s7777 + $0x90] sm:$0xff]
      %v7791 = vld [vmem:[%s7777 + $0x98] sm:$0xff]
      %v7792 = vld [vmem:[%s7777 + $0xa8] sm:$0xff]
      %v7793 = vld [vmem:[%s7777 + $0xb0] sm:$0xff]
      %v7794 = vld [vmem:[%s7777 + $0xc0] sm:$0xff]
      %v7795 = vld [vmem:[%s7777 + $0xc8] sm:$0xff]
      %v7796 = vld [vmem:[%s7777 + $0xd8] sm:$0xff]
      %v7797 = vld [vmem:[%s7777 + $0xe0] sm:$0xff]
      %v7798 = vld [vmem:[%s7777 + $0xf0] sm:$0xff]
      %v7799 = vld [vmem:[%s7777 + $0xf8] sm:$0xff]
      %v7800 = vld [vmem:[%s7777 + $0x108] sm:$0xff]
      %v7801 = vld [vmem:[%s7777 + $0x110] sm:$0xff]
      %v7802 = vld [vmem:[%s7777 + $0x120] sm:$0xff]
      %v7803 = vld [vmem:[%s7777 + $0x128] sm:$0xff]
      %v7804 = vld [vmem:[%s7777 + $0x138] sm:$0xff]
      %v7805 = vld [vmem:[%s7777 + $0x140] sm:$0xff]
      %v7806 = vld [vmem:[%s7777 + $0x150] sm:$0xff]
      %v7807 = vld [vmem:[%s7777 + $0x158] sm:$0xff]
      %v7808 = vld [vmem:[%s7777 + $0x168] sm:$0xff]
      %v7809 = vld [vmem:[%s7777 + $0x170] sm:$0xff]
      %v7810 = vld [vmem:[#allocation4 + $0x1] sm:$0xff]
      %v7811 = vld [vmem:[#allocation4 + $0x9] sm:$0xff]
      %v7812 = vld [vmem:[#allocation4 + $0x19] sm:$0xff]
      %v7813 = vld [vmem:[#allocation4 + $0x21] sm:$0xff]
      %v7814 = vld [vmem:[#allocation4 + $0x31] sm:$0xff]
      %v7815 = vld [vmem:[#allocation4 + $0x39] sm:$0xff]
      %v7816 = vld [vmem:[#allocation4 + $0x49] sm:$0xff]
      %v7817 = vld [vmem:[#allocation4 + $0x51] sm:$0xff]
      %v7818 = vld [vmem:[#allocation4 + $0x61] sm:$0xff]
      %v7819 = vld [vmem:[#allocation4 + $0x69] sm:$0xff]
      %v7820 = vld [vmem:[#allocation4 + $0x79] sm:$0xff]
      %v7821 = vld [vmem:[#allocation4 + $0x81] sm:$0xff]
      %v7822 = vld [vmem:[#allocation4 + $0x91] sm:$0xff]
      %v7823 = vld [vmem:[#allocation4 + $0x99] sm:$0xff]
      %v7824 = vld [vmem:[#allocation4 + $0xa9] sm:$0xff]
      %v7825 = vld [vmem:[#allocation4 + $0xb1] sm:$0xff]
      %v7826 = vld [vmem:[#allocation4 + $0xc1] sm:$0xff]
      %v7827 = vld [vmem:[#allocation4 + $0xc9] sm:$0xff]
      %v7828 = vld [vmem:[#allocation4 + $0xd9] sm:$0xff]
      %v7829 = vld [vmem:[#allocation4 + $0xe1] sm:$0xff]
      %v7830 = vld [vmem:[#allocation4 + $0xf1] sm:$0xff]
      %v7831 = vld [vmem:[#allocation4 + $0xf9] sm:$0xff]
      %v7832 = vld [vmem:[#allocation4 + $0x109] sm:$0xff]
      %v7833 = vld [vmem:[#allocation4 + $0x111] sm:$0xff]
      %v7834 = vld [vmem:[#allocation4 + $0x121] sm:$0xff]
      %v7835 = vld [vmem:[#allocation4 + $0x129] sm:$0xff]
      %v7836 = vld [vmem:[#allocation4 + $0x139] sm:$0xff]
      %v7837 = vld [vmem:[#allocation4 + $0x141] sm:$0xff]
      %v7838 = vld [vmem:[#allocation4 + $0x151] sm:$0xff]
      %v7839 = vld [vmem:[#allocation4 + $0x159] sm:$0xff]
      %v7840 = vld [vmem:[#allocation4 + $0x169] sm:$0xff]
      %v7841 = vld [vmem:[#allocation4 + $0x171] sm:$0xff]
      %v7842 = vld [vmem:[%s7680 + $0x1] sm:$0xff]
      %v7843 = vld [vmem:[%s7680 + $0x9] sm:$0xff]
      %v7844 = vld [vmem:[%s7680 + $0x19] sm:$0xff]
      %v7845 = vld [vmem:[%s7680 + $0x21] sm:$0xff]
      %v7846 = vld [vmem:[%s7680 + $0x31] sm:$0xff]
      %v7847 = vld [vmem:[%s7680 + $0x39] sm:$0xff]
      %v7848 = vld [vmem:[%s7680 + $0x49] sm:$0xff]
      %v7849 = vld [vmem:[%s7680 + $0x51] sm:$0xff]
      %v7850 = vld [vmem:[%s7680 + $0x61] sm:$0xff]
      %v7851 = vld [vmem:[%s7680 + $0x69] sm:$0xff]
      %v7852 = vld [vmem:[%s7680 + $0x79] sm:$0xff]
      %v7853 = vld [vmem:[%s7680 + $0x81] sm:$0xff]
      %v7854 = vld [vmem:[%s7680 + $0x91] sm:$0xff]
      %v7855 = vld [vmem:[%s7680 + $0x99] sm:$0xff]
      %v7856 = vld [vmem:[%s7680 + $0xa9] sm:$0xff]
      %v7857 = vld [vmem:[%s7680 + $0xb1] sm:$0xff]
      %v7858 = vld [vmem:[%s7680 + $0xc1] sm:$0xff]
      %v7859 = vld [vmem:[%s7680 + $0xc9] sm:$0xff]
      %v7860 = vld [vmem:[%s7680 + $0xd9] sm:$0xff]
      %v7861 = vld [vmem:[%s7680 + $0xe1] sm:$0xff]
      %v7862 = vld [vmem:[%s7680 + $0xf1] sm:$0xff]
      %v7863 = vld [vmem:[%s7680 + $0xf9] sm:$0xff]
      %v7864 = vld [vmem:[%s7680 + $0x109] sm:$0xff]
      %v7865 = vld [vmem:[%s7680 + $0x111] sm:$0xff]
      %v7866 = vld [vmem:[%s7680 + $0x121] sm:$0xff]
      %v7867 = vld [vmem:[%s7680 + $0x129] sm:$0xff]
      %v7868 = vld [vmem:[%s7680 + $0x139] sm:$0xff]
      %v7869 = vld [vmem:[%s7680 + $0x141] sm:$0xff]
      %v7870 = vld [vmem:[%s7680 + $0x151] sm:$0xff]
      %v7871 = vld [vmem:[%s7680 + $0x159] sm:$0xff]
      %v7872 = vld [vmem:[%s7680 + $0x169] sm:$0xff]
      %v7873 = vld [vmem:[%s7680 + $0x171] sm:$0xff]
      %v7874 = vld [vmem:[%s7777 + $0x1] sm:$0xff]
      %v7875 = vld [vmem:[%s7777 + $0x9] sm:$0xff]
      %v7876 = vld [vmem:[%s7777 + $0x19] sm:$0xff]
      %v7877 = vld [vmem:[%s7777 + $0x21] sm:$0xff]
      %v7878 = vld [vmem:[%s7777 + $0x31] sm:$0xff]
      %v7879 = vld [vmem:[%s7777 + $0x39] sm:$0xff]
      %v7880 = vld [vmem:[%s7777 + $0x49] sm:$0xff]
      %v7881 = vld [vmem:[%s7777 + $0x51] sm:$0xff]
      %v7882 = vld [vmem:[%s7777 + $0x61] sm:$0xff]
      %v7883 = vld [vmem:[%s7777 + $0x69] sm:$0xff]
      %v7884 = vld [vmem:[%s7777 + $0x79] sm:$0xff]
      %v7885 = vld [vmem:[%s7777 + $0x81] sm:$0xff]
      %v7886 = vld [vmem:[%s7777 + $0x91] sm:$0xff]
      %v7887 = vld [vmem:[%s7777 + $0x99] sm:$0xff]
      %v7888 = vld [vmem:[%s7777 + $0xa9] sm:$0xff]
      %v7889 = vld [vmem:[%s7777 + $0xb1] sm:$0xff]
      %v7890 = vld [vmem:[%s7777 + $0xc1] sm:$0xff]
      %v7891 = vld [vmem:[%s7777 + $0xc9] sm:$0xff]
      %v7892 = vld [vmem:[%s7777 + $0xd9] sm:$0xff]
      %v7893 = vld [vmem:[%s7777 + $0xe1] sm:$0xff]
      %v7894 = vld [vmem:[%s7777 + $0xf1] sm:$0xff]
      %v7895 = vld [vmem:[%s7777 + $0xf9] sm:$0xff]
      %v7896 = vld [vmem:[%s7777 + $0x109] sm:$0xff]
      %v7897 = vld [vmem:[%s7777 + $0x111] sm:$0xff]
      %v7898 = vld [vmem:[%s7777 + $0x121] sm:$0xff]
      %v7899 = vld [vmem:[%s7777 + $0x129] sm:$0xff]
      %v7900 = vld [vmem:[%s7777 + $0x139] sm:$0xff]
      %v7901 = vld [vmem:[%s7777 + $0x141] sm:$0xff]
      %v7902 = vld [vmem:[%s7777 + $0x151] sm:$0xff]
      %v7903 = vld [vmem:[%s7777 + $0x159] sm:$0xff]
      %v7904 = vld [vmem:[%s7777 + $0x169] sm:$0xff]
      %v7905 = vld [vmem:[%s7777 + $0x171] sm:$0xff]
      %v7906 = vld [vmem:[#allocation4 + $0x2] sm:$0xff]
      %v7907 = vld [vmem:[#allocation4 + $0xa] sm:$0xff]
      %v7908 = vld [vmem:[#allocation4 + $0x1a] sm:$0xff]
      %v7909 = vld [vmem:[#allocation4 + $0x22] sm:$0xff]
      %v7910 = vld [vmem:[#allocation4 + $0x32] sm:$0xff]
      %v7911 = vld [vmem:[#allocation4 + $0x3a] sm:$0xff]
      %v7912 = vld [vmem:[#allocation4 + $0x4a] sm:$0xff]
      %v7913 = vld [vmem:[#allocation4 + $0x52] sm:$0xff]
      %v7914 = vld [vmem:[#allocation4 + $0x62] sm:$0xff]
      %v7915 = vld [vmem:[#allocation4 + $0x6a] sm:$0xff]
      %v7916 = vld [vmem:[#allocation4 + $0x7a] sm:$0xff]
      %v7917 = vld [vmem:[#allocation4 + $0x82] sm:$0xff]
      %v7918 = vld [vmem:[#allocation4 + $0x92] sm:$0xff]
      %v7919 = vld [vmem:[#allocation4 + $0x9a] sm:$0xff]
      %v7920 = vld [vmem:[#allocation4 + $0xaa] sm:$0xff]
      %v7921 = vld [vmem:[#allocation4 + $0xb2] sm:$0xff]
      %v7922 = vld [vmem:[#allocation4 + $0xc2] sm:$0xff]
      %v7923 = vld [vmem:[#allocation4 + $0xca] sm:$0xff]
      %v7924 = vld [vmem:[#allocation4 + $0xda] sm:$0xff]
      %v7925 = vld [vmem:[#allocation4 + $0xe2] sm:$0xff]
      %v7926 = vld [vmem:[#allocation4 + $0xf2] sm:$0xff]
      %v7927 = vld [vmem:[#allocation4 + $0xfa] sm:$0xff]
      %v7928 = vld [vmem:[#allocation4 + $0x10a] sm:$0xff]
      %v7929 = vld [vmem:[#allocation4 + $0x112] sm:$0xff]
      %v7930 = vld [vmem:[#allocation4 + $0x122] sm:$0xff]
      %v7931 = vld [vmem:[#allocation4 + $0x12a] sm:$0xff]
      %v7932 = vld [vmem:[#allocation4 + $0x13a] sm:$0xff]
      %v7933 = vld [vmem:[#allocation4 + $0x142] sm:$0xff]
      %v7934 = vld [vmem:[#allocation4 + $0x152] sm:$0xff]
      %v7935 = vld [vmem:[#allocation4 + $0x15a] sm:$0xff]
      %v7936 = vld [vmem:[#allocation4 + $0x16a] sm:$0xff]
      %v7937 = vld [vmem:[#allocation4 + $0x172] sm:$0xff]
      %v7938 = vld [vmem:[%s7680 + $0x2] sm:$0xff]
      %v7939 = vld [vmem:[%s7680 + $0xa] sm:$0xff]
      %v7940 = vld [vmem:[%s7680 + $0x1a] sm:$0xff]
      %v7941 = vld [vmem:[%s7680 + $0x22] sm:$0xff]
      %v7942 = vld [vmem:[%s7680 + $0x32] sm:$0xff]
      %v7943 = vld [vmem:[%s7680 + $0x3a] sm:$0xff]
      %v7944 = vld [vmem:[%s7680 + $0x4a] sm:$0xff]
      %v7945 = vld [vmem:[%s7680 + $0x52] sm:$0xff]
      %v7946 = vld [vmem:[%s7680 + $0x62] sm:$0xff]
      %v7947 = vld [vmem:[%s7680 + $0x6a] sm:$0xff]
      %v7948 = vld [vmem:[%s7680 + $0x7a] sm:$0xff]
      %v7949 = vld [vmem:[%s7680 + $0x82] sm:$0xff]
      %v7950 = vld [vmem:[%s7680 + $0x92] sm:$0xff]
      %v7951 = vld [vmem:[%s7680 + $0x9a] sm:$0xff]
      %v7952 = vld [vmem:[%s7680 + $0xaa] sm:$0xff]
      %v7953 = vld [vmem:[%s7680 + $0xb2] sm:$0xff]
      %v7954 = vld [vmem:[%s7680 + $0xc2] sm:$0xff]
      %v7955 = vld [vmem:[%s7680 + $0xca] sm:$0xff]
      %v7956 = vld [vmem:[%s7680 + $0xda] sm:$0xff]
      %v7957 = vld [vmem:[%s7680 + $0xe2] sm:$0xff]
      %v7958 = vld [vmem:[%s7680 + $0xf2] sm:$0xff]
      %v7959 = vld [vmem:[%s7680 + $0xfa] sm:$0xff]
      %v7960 = vld [vmem:[%s7680 + $0x10a] sm:$0xff]
      %v7961 = vld [vmem:[%s7680 + $0x112] sm:$0xff]
      %v7962 = vld [vmem:[%s7680 + $0x122] sm:$0xff]
      %v7963 = vld [vmem:[%s7680 + $0x12a] sm:$0xff]
      %v7964 = vld [vmem:[%s7680 + $0x13a] sm:$0xff]
      %v7965 = vld [vmem:[%s7680 + $0x142] sm:$0xff]
      %v7966 = vld [vmem:[%s7680 + $0x152] sm:$0xff]
      %v7967 = vld [vmem:[%s7680 + $0x15a] sm:$0xff]
      %v7968 = vld [vmem:[%s7680 + $0x16a] sm:$0xff]
      %v7969 = vld [vmem:[%s7680 + $0x172] sm:$0xff]
      %v7970 = vld [vmem:[%s7777 + $0x2] sm:$0xff]
      %v7971 = vld [vmem:[%s7777 + $0xa] sm:$0xff]
      %v7972 = vld [vmem:[%s7777 + $0x1a] sm:$0xff]
      %v7973 = vld [vmem:[%s7777 + $0x22] sm:$0xff]
      %v7974 = vld [vmem:[%s7777 + $0x32] sm:$0xff]
      %v7975 = vld [vmem:[%s7777 + $0x3a] sm:$0xff]
      %v7976 = vld [vmem:[%s7777 + $0x4a] sm:$0xff]
      %v7977 = vld [vmem:[%s7777 + $0x52] sm:$0xff]
      %v7978 = vld [vmem:[%s7777 + $0x62] sm:$0xff]
      %v7979 = vld [vmem:[%s7777 + $0x6a] sm:$0xff]
      %v7980 = vld [vmem:[%s7777 + $0x7a] sm:$0xff]
      %v7981 = vld [vmem:[%s7777 + $0x82] sm:$0xff]
      %v7982 = vld [vmem:[%s7777 + $0x92] sm:$0xff]
      %v7983 = vld [vmem:[%s7777 + $0x9a] sm:$0xff]
      %v7984 = vld [vmem:[%s7777 + $0xaa] sm:$0xff]
      %v7985 = vld [vmem:[%s7777 + $0xb2] sm:$0xff]
      %v7986 = vld [vmem:[%s7777 + $0xc2] sm:$0xff]
      %v7987 = vld [vmem:[%s7777 + $0xca] sm:$0xff]
      %v7988 = vld [vmem:[%s7777 + $0xda] sm:$0xff]
      %v7989 = vld [vmem:[%s7777 + $0xe2] sm:$0xff]
      %v7990 = vld [vmem:[%s7777 + $0xf2] sm:$0xff]
      %v7991 = vld [vmem:[%s7777 + $0xfa] sm:$0xff]
      %v7992 = vld [vmem:[%s7777 + $0x10a] sm:$0xff]
      %v7993 = vld [vmem:[%s7777 + $0x112] sm:$0xff]
      %v7994 = vld [vmem:[%s7777 + $0x122] sm:$0xff]
      %v7995 = vld [vmem:[%s7777 + $0x12a] sm:$0xff]
      %v7996 = vld [vmem:[%s7777 + $0x13a] sm:$0xff]
      %v7997 = vld [vmem:[%s7777 + $0x142] sm:$0xff]
      %v7998 = vld [vmem:[%s7777 + $0x152] sm:$0xff]
      %v7999 = vld [vmem:[%s7777 + $0x15a] sm:$0xff]
      %v8000 = vld [vmem:[%s7777 + $0x16a] sm:$0xff]
      %v8001 = vld [vmem:[%s7777 + $0x172] sm:$0xff]
      %8034 = vrot.lane.b32.xlu0 %v7745, 8
      %v8035 = vpop.permute.xlu0 %8034
      %8036 = vrot.lane.b32.xlu0 %v7746, 8
      %v8037 = vpop.permute.xlu0 %8036
      %8038 = vrot.lane.b32.xlu0 %v7747, 8
      %v8039 = vpop.permute.xlu0 %8038
      %8040 = vrot.lane.b32.xlu0 %v7748, 8
      %v8041 = vpop.permute.xlu0 %8040
      %8042 = vrot.lane.b32.xlu0 %v7749, 8
      %v8043 = vpop.permute.xlu0 %8042
      %8044 = vrot.lane.b32.xlu0 %v7750, 8
      %v8045 = vpop.permute.xlu0 %8044
      %8046 = vrot.lane.b32.xlu0 %v7751, 8
      %v8047 = vpop.permute.xlu0 %8046
      %8048 = vrot.lane.b32.xlu0 %v7752, 8
      %v8049 = vpop.permute.xlu0 %8048
      %8050 = vrot.lane.b32.xlu0 %v7753, 8
      %v8051 = vpop.permute.xlu0 %8050
      %8052 = vrot.lane.b32.xlu0 %v7754, 8
      %v8053 = vpop.permute.xlu0 %8052
      %8054 = vrot.lane.b32.xlu0 %v7755, 8
      %v8055 = vpop.permute.xlu0 %8054
      %8056 = vrot.lane.b32.xlu0 %v7756, 8
      %v8057 = vpop.permute.xlu0 %8056
      %8058 = vrot.lane.b32.xlu0 %v7757, 8
      %v8059 = vpop.permute.xlu0 %8058
      %8060 = vrot.lane.b32.xlu0 %v7758, 8
      %v8061 = vpop.permute.xlu0 %8060
      %8062 = vrot.lane.b32.xlu0 %v7759, 8
      %v8063 = vpop.permute.xlu0 %8062
      %8064 = vrot.lane.b32.xlu0 %v7760, 8
      %v8065 = vpop.permute.xlu0 %8064
      %8066 = vrot.lane.b32.xlu0 %v7761, 8
      %v8067 = vpop.permute.xlu0 %8066
      %8068 = vrot.lane.b32.xlu0 %v7762, 8
      %v8069 = vpop.permute.xlu0 %8068
      %8070 = vrot.lane.b32.xlu0 %v7763, 8
      %v8071 = vpop.permute.xlu0 %8070
      %8072 = vrot.lane.b32.xlu0 %v7764, 8
      %v8073 = vpop.permute.xlu0 %8072
      %8074 = vrot.lane.b32.xlu0 %v7765, 8
      %v8075 = vpop.permute.xlu0 %8074
      %8076 = vrot.lane.b32.xlu0 %v7766, 8
      %v8077 = vpop.permute.xlu0 %8076
      %8078 = vrot.lane.b32.xlu0 %v7767, 8
      %v8079 = vpop.permute.xlu0 %8078
      %8080 = vrot.lane.b32.xlu0 %v7768, 8
      %v8081 = vpop.permute.xlu0 %8080
      %8082 = vrot.lane.b32.xlu0 %v7769, 8
      %v8083 = vpop.permute.xlu0 %8082
      %8084 = vrot.lane.b32.xlu0 %v7770, 8
      %v8085 = vpop.permute.xlu0 %8084
      %8086 = vrot.lane.b32.xlu0 %v7771, 8
      %v8087 = vpop.permute.xlu0 %8086
      %8088 = vrot.lane.b32.xlu0 %v7772, 8
      %v8089 = vpop.permute.xlu0 %8088
      %8090 = vrot.lane.b32.xlu0 %v7773, 8
      %v8091 = vpop.permute.xlu0 %8090
      %8092 = vrot.lane.b32.xlu0 %v7774, 8
      %v8093 = vpop.permute.xlu0 %8092
      %8094 = vrot.lane.b32.xlu0 %v7775, 8
      %v8095 = vpop.permute.xlu0 %8094
      %8096 = vrot.lane.b32.xlu0 %v7776, 8
      %v8097 = vpop.permute.xlu0 %8096
      %8162 = vrot.lane.b32.xlu0 %v7778, 16
      %v8163 = vpop.permute.xlu0 %8162
      %8164 = vrot.lane.b32.xlu0 %v7779, 16
      %v8165 = vpop.permute.xlu0 %8164
      %8166 = vrot.lane.b32.xlu0 %v7780, 16
      %v8167 = vpop.permute.xlu0 %8166
      %8168 = vrot.lane.b32.xlu0 %v7781, 16
      %v8169 = vpop.permute.xlu0 %8168
      %8170 = vrot.lane.b32.xlu0 %v7782, 16
      %v8171 = vpop.permute.xlu0 %8170
      %8172 = vrot.lane.b32.xlu0 %v7783, 16
      %v8173 = vpop.permute.xlu0 %8172
      %8174 = vrot.lane.b32.xlu0 %v7784, 16
      %v8175 = vpop.permute.xlu0 %8174
      %8176 = vrot.lane.b32.xlu0 %v7785, 16
      %v8177 = vpop.permute.xlu0 %8176
      %8178 = vrot.lane.b32.xlu0 %v7786, 16
      %v8179 = vpop.permute.xlu0 %8178
      %8180 = vrot.lane.b32.xlu0 %v7787, 16
      %v8181 = vpop.permute.xlu0 %8180
      %8182 = vrot.lane.b32.xlu0 %v7788, 16
      %v8183 = vpop.permute.xlu0 %8182
      %8184 = vrot.lane.b32.xlu0 %v7789, 16
      %v8185 = vpop.permute.xlu0 %8184
      %8186 = vrot.lane.b32.xlu0 %v7790, 16
      %v8187 = vpop.permute.xlu0 %8186
      %8188 = vrot.lane.b32.xlu0 %v7791, 16
      %v8189 = vpop.permute.xlu0 %8188
      %8190 = vrot.lane.b32.xlu0 %v7792, 16
      %v8191 = vpop.permute.xlu0 %8190
      %8192 = vrot.lane.b32.xlu0 %v7793, 16
      %v8193 = vpop.permute.xlu0 %8192
      %8194 = vrot.lane.b32.xlu0 %v7794, 16
      %v8195 = vpop.permute.xlu0 %8194
      %8196 = vrot.lane.b32.xlu0 %v7795, 16
      %v8197 = vpop.permute.xlu0 %8196
      %8198 = vrot.lane.b32.xlu0 %v7796, 16
      %v8199 = vpop.permute.xlu0 %8198
      %8200 = vrot.lane.b32.xlu0 %v7797, 16
      %v8201 = vpop.permute.xlu0 %8200
      %8202 = vrot.lane.b32.xlu0 %v7798, 16
      %v8203 = vpop.permute.xlu0 %8202
      %8204 = vrot.lane.b32.xlu0 %v7799, 16
      %v8205 = vpop.permute.xlu0 %8204
      %8206 = vrot.lane.b32.xlu0 %v7800, 16
      %v8207 = vpop.permute.xlu0 %8206
      %8208 = vrot.lane.b32.xlu0 %v7801, 16
      %v8209 = vpop.permute.xlu0 %8208
      %8210 = vrot.lane.b32.xlu0 %v7802, 16
      %v8211 = vpop.permute.xlu0 %8210
      %8212 = vrot.lane.b32.xlu0 %v7803, 16
      %v8213 = vpop.permute.xlu0 %8212
      %8214 = vrot.lane.b32.xlu0 %v7804, 16
      %v8215 = vpop.permute.xlu0 %8214
      %8216 = vrot.lane.b32.xlu0 %v7805, 16
      %v8217 = vpop.permute.xlu0 %8216
      %8218 = vrot.lane.b32.xlu0 %v7806, 16
      %v8219 = vpop.permute.xlu0 %8218
      %8220 = vrot.lane.b32.xlu0 %v7807, 16
      %v8221 = vpop.permute.xlu0 %8220
      %8222 = vrot.lane.b32.xlu0 %v7808, 16
      %v8223 = vpop.permute.xlu0 %8222
      %8224 = vrot.lane.b32.xlu0 %v7809, 16
      %v8225 = vpop.permute.xlu0 %8224
      %8290 = vrot.lane.b32.xlu0 %v7810, 24
      %v8291 = vpop.permute.xlu0 %8290
      %8292 = vrot.lane.b32.xlu0 %v7811, 24
      %v8293 = vpop.permute.xlu0 %8292
      %8294 = vrot.lane.b32.xlu0 %v7812, 24
      %v8295 = vpop.permute.xlu0 %8294
      %8296 = vrot.lane.b32.xlu0 %v7813, 24
      %v8297 = vpop.permute.xlu0 %8296
      %8298 = vrot.lane.b32.xlu0 %v7814, 24
      %v8299 = vpop.permute.xlu0 %8298
      %8300 = vrot.lane.b32.xlu0 %v7815, 24
      %v8301 = vpop.permute.xlu0 %8300
      %8302 = vrot.lane.b32.xlu0 %v7816, 24
      %v8303 = vpop.permute.xlu0 %8302
      %8304 = vrot.lane.b32.xlu0 %v7817, 24
      %v8305 = vpop.permute.xlu0 %8304
      %8306 = vrot.lane.b32.xlu0 %v7818, 24
      %v8307 = vpop.permute.xlu0 %8306
      %8308 = vrot.lane.b32.xlu0 %v7819, 24
      %v8309 = vpop.permute.xlu0 %8308
      %8310 = vrot.lane.b32.xlu0 %v7820, 24
      %v8311 = vpop.permute.xlu0 %8310
      %8312 = vrot.lane.b32.xlu0 %v7821, 24
      %v8313 = vpop.permute.xlu0 %8312
      %8314 = vrot.lane.b32.xlu0 %v7822, 24
      %v8315 = vpop.permute.xlu0 %8314
      %8316 = vrot.lane.b32.xlu0 %v7823, 24
      %v8317 = vpop.permute.xlu0 %8316
      %8318 = vrot.lane.b32.xlu0 %v7824, 24
      %v8319 = vpop.permute.xlu0 %8318
      %8320 = vrot.lane.b32.xlu0 %v7825, 24
      %v8321 = vpop.permute.xlu0 %8320
      %8322 = vrot.lane.b32.xlu0 %v7826, 24
      %v8323 = vpop.permute.xlu0 %8322
      %8324 = vrot.lane.b32.xlu0 %v7827, 24
      %v8325 = vpop.permute.xlu0 %8324
      %8326 = vrot.lane.b32.xlu0 %v7828, 24
      %v8327 = vpop.permute.xlu0 %8326
      %8328 = vrot.lane.b32.xlu0 %v7829, 24
      %v8329 = vpop.permute.xlu0 %8328
      %8330 = vrot.lane.b32.xlu0 %v7830, 24
      %v8331 = vpop.permute.xlu0 %8330
      %8332 = vrot.lane.b32.xlu0 %v7831, 24
      %v8333 = vpop.permute.xlu0 %8332
      %8334 = vrot.lane.b32.xlu0 %v7832, 24
      %v8335 = vpop.permute.xlu0 %8334
      %8336 = vrot.lane.b32.xlu0 %v7833, 24
      %v8337 = vpop.permute.xlu0 %8336
      %8338 = vrot.lane.b32.xlu0 %v7834, 24
      %v8339 = vpop.permute.xlu0 %8338
      %8340 = vrot.lane.b32.xlu0 %v7835, 24
      %v8341 = vpop.permute.xlu0 %8340
      %8342 = vrot.lane.b32.xlu0 %v7836, 24
      %v8343 = vpop.permute.xlu0 %8342
      %8344 = vrot.lane.b32.xlu0 %v7837, 24
      %v8345 = vpop.permute.xlu0 %8344
      %8346 = vrot.lane.b32.xlu0 %v7838, 24
      %v8347 = vpop.permute.xlu0 %8346
      %8348 = vrot.lane.b32.xlu0 %v7839, 24
      %v8349 = vpop.permute.xlu0 %8348
      %8350 = vrot.lane.b32.xlu0 %v7840, 24
      %v8351 = vpop.permute.xlu0 %8350
      %8352 = vrot.lane.b32.xlu0 %v7841, 24
      %v8353 = vpop.permute.xlu0 %8352
      %8418 = vrot.lane.b32.xlu0 %v7842, 32
      %v8419 = vpop.permute.xlu0 %8418
      %8420 = vrot.lane.b32.xlu0 %v7843, 32
      %v8421 = vpop.permute.xlu0 %8420
      %8422 = vrot.lane.b32.xlu0 %v7844, 32
      %v8423 = vpop.permute.xlu0 %8422
      %8424 = vrot.lane.b32.xlu0 %v7845, 32
      %v8425 = vpop.permute.xlu0 %8424
      %8426 = vrot.lane.b32.xlu0 %v7846, 32
      %v8427 = vpop.permute.xlu0 %8426
      %8428 = vrot.lane.b32.xlu0 %v7847, 32
      %v8429 = vpop.permute.xlu0 %8428
      %8430 = vrot.lane.b32.xlu0 %v7848, 32
      %v8431 = vpop.permute.xlu0 %8430
      %8432 = vrot.lane.b32.xlu0 %v7849, 32
      %v8433 = vpop.permute.xlu0 %8432
      %8434 = vrot.lane.b32.xlu0 %v7850, 32
      %v8435 = vpop.permute.xlu0 %8434
      %8436 = vrot.lane.b32.xlu0 %v7851, 32
      %v8437 = vpop.permute.xlu0 %8436
      %8438 = vrot.lane.b32.xlu0 %v7852, 32
      %v8439 = vpop.permute.xlu0 %8438
      %8440 = vrot.lane.b32.xlu0 %v7853, 32
      %v8441 = vpop.permute.xlu0 %8440
      %8442 = vrot.lane.b32.xlu0 %v7854, 32
      %v8443 = vpop.permute.xlu0 %8442
      %8444 = vrot.lane.b32.xlu0 %v7855, 32
      %v8445 = vpop.permute.xlu0 %8444
      %8446 = vrot.lane.b32.xlu0 %v7856, 32
      %v8447 = vpop.permute.xlu0 %8446
      %8448 = vrot.lane.b32.xlu0 %v7857, 32
      %v8449 = vpop.permute.xlu0 %8448
      %8450 = vrot.lane.b32.xlu0 %v7858, 32
      %v8451 = vpop.permute.xlu0 %8450
      %8452 = vrot.lane.b32.xlu0 %v7859, 32
      %v8453 = vpop.permute.xlu0 %8452
      %8454 = vrot.lane.b32.xlu0 %v7860, 32
      %v8455 = vpop.permute.xlu0 %8454
      %8456 = vrot.lane.b32.xlu0 %v7861, 32
      %v8457 = vpop.permute.xlu0 %8456
      %8458 = vrot.lane.b32.xlu0 %v7862, 32
      %v8459 = vpop.permute.xlu0 %8458
      %8460 = vrot.lane.b32.xlu0 %v7863, 32
      %v8461 = vpop.permute.xlu0 %8460
      %8462 = vrot.lane.b32.xlu0 %v7864, 32
      %v8463 = vpop.permute.xlu0 %8462
      %8464 = vrot.lane.b32.xlu0 %v7865, 32
      %v8465 = vpop.permute.xlu0 %8464
      %8466 = vrot.lane.b32.xlu0 %v7866, 32
      %v8467 = vpop.permute.xlu0 %8466
      %8468 = vrot.lane.b32.xlu0 %v7867, 32
      %v8469 = vpop.permute.xlu0 %8468
      %8470 = vrot.lane.b32.xlu0 %v7868, 32
      %v8471 = vpop.permute.xlu0 %8470
      %8472 = vrot.lane.b32.xlu0 %v7869, 32
      %v8473 = vpop.permute.xlu0 %8472
      %8474 = vrot.lane.b32.xlu0 %v7870, 32
      %v8475 = vpop.permute.xlu0 %8474
      %8476 = vrot.lane.b32.xlu0 %v7871, 32
      %v8477 = vpop.permute.xlu0 %8476
      %8478 = vrot.lane.b32.xlu0 %v7872, 32
      %v8479 = vpop.permute.xlu0 %8478
      %8480 = vrot.lane.b32.xlu0 %v7873, 32
      %v8481 = vpop.permute.xlu0 %8480
      %8546 = vrot.lane.b32.xlu0 %v7874, 40
      %v8547 = vpop.permute.xlu0 %8546
      %8548 = vrot.lane.b32.xlu0 %v7875, 40
      %v8549 = vpop.permute.xlu0 %8548
      %8550 = vrot.lane.b32.xlu0 %v7876, 40
      %v8551 = vpop.permute.xlu0 %8550
      %8552 = vrot.lane.b32.xlu0 %v7877, 40
      %v8553 = vpop.permute.xlu0 %8552
      %8554 = vrot.lane.b32.xlu0 %v7878, 40
      %v8555 = vpop.permute.xlu0 %8554
      %8556 = vrot.lane.b32.xlu0 %v7879, 40
      %v8557 = vpop.permute.xlu0 %8556
      %8558 = vrot.lane.b32.xlu0 %v7880, 40
      %v8559 = vpop.permute.xlu0 %8558
      %8560 = vrot.lane.b32.xlu0 %v7881, 40
      %v8561 = vpop.permute.xlu0 %8560
      %8562 = vrot.lane.b32.xlu0 %v7882, 40
      %v8563 = vpop.permute.xlu0 %8562
      %8564 = vrot.lane.b32.xlu0 %v7883, 40
      %v8565 = vpop.permute.xlu0 %8564
      %8566 = vrot.lane.b32.xlu0 %v7884, 40
      %v8567 = vpop.permute.xlu0 %8566
      %8568 = vrot.lane.b32.xlu0 %v7885, 40
      %v8569 = vpop.permute.xlu0 %8568
      %8570 = vrot.lane.b32.xlu0 %v7886, 40
      %v8571 = vpop.permute.xlu0 %8570
      %8572 = vrot.lane.b32.xlu0 %v7887, 40
      %v8573 = vpop.permute.xlu0 %8572
      %8574 = vrot.lane.b32.xlu0 %v7888, 40
      %v8575 = vpop.permute.xlu0 %8574
      %8576 = vrot.lane.b32.xlu0 %v7889, 40
      %v8577 = vpop.permute.xlu0 %8576
      %8578 = vrot.lane.b32.xlu0 %v7890, 40
      %v8579 = vpop.permute.xlu0 %8578
      %8580 = vrot.lane.b32.xlu0 %v7891, 40
      %v8581 = vpop.permute.xlu0 %8580
      %8582 = vrot.lane.b32.xlu0 %v7892, 40
      %v8583 = vpop.permute.xlu0 %8582
      %8584 = vrot.lane.b32.xlu0 %v7893, 40
      %v8585 = vpop.permute.xlu0 %8584
      %8586 = vrot.lane.b32.xlu0 %v7894, 40
      %v8587 = vpop.permute.xlu0 %8586
      %8588 = vrot.lane.b32.xlu0 %v7895, 40
      %v8589 = vpop.permute.xlu0 %8588
      %8590 = vrot.lane.b32.xlu0 %v7896, 40
      %v8591 = vpop.permute.xlu0 %8590
      %8592 = vrot.lane.b32.xlu0 %v7897, 40
      %v8593 = vpop.permute.xlu0 %8592
      %8594 = vrot.lane.b32.xlu0 %v7898, 40
      %v8595 = vpop.permute.xlu0 %8594
      %8596 = vrot.lane.b32.xlu0 %v7899, 40
      %v8597 = vpop.permute.xlu0 %8596
      %8598 = vrot.lane.b32.xlu0 %v7900, 40
      %v8599 = vpop.permute.xlu0 %8598
      %8600 = vrot.lane.b32.xlu0 %v7901, 40
      %v8601 = vpop.permute.xlu0 %8600
      %8602 = vrot.lane.b32.xlu0 %v7902, 40
      %v8603 = vpop.permute.xlu0 %8602
      %8604 = vrot.lane.b32.xlu0 %v7903, 40
      %v8605 = vpop.permute.xlu0 %8604
      %8606 = vrot.lane.b32.xlu0 %v7904, 40
      %v8607 = vpop.permute.xlu0 %8606
      %8608 = vrot.lane.b32.xlu0 %v7905, 40
      %v8609 = vpop.permute.xlu0 %8608
      %8674 = vrot.lane.b32.xlu0 %v7906, 48
      %v8675 = vpop.permute.xlu0 %8674
      %8676 = vrot.lane.b32.xlu0 %v7907, 48
      %v8677 = vpop.permute.xlu0 %8676
      %8678 = vrot.lane.b32.xlu0 %v7908, 48
      %v8679 = vpop.permute.xlu0 %8678
      %8680 = vrot.lane.b32.xlu0 %v7909, 48
      %v8681 = vpop.permute.xlu0 %8680
      %8682 = vrot.lane.b32.xlu0 %v7910, 48
      %v8683 = vpop.permute.xlu0 %8682
      %8684 = vrot.lane.b32.xlu0 %v7911, 48
      %v8685 = vpop.permute.xlu0 %8684
      %8686 = vrot.lane.b32.xlu0 %v7912, 48
      %v8687 = vpop.permute.xlu0 %8686
      %8688 = vrot.lane.b32.xlu0 %v7913, 48
      %v8689 = vpop.permute.xlu0 %8688
      %8690 = vrot.lane.b32.xlu0 %v7914, 48
      %v8691 = vpop.permute.xlu0 %8690
      %8692 = vrot.lane.b32.xlu0 %v7915, 48
      %v8693 = vpop.permute.xlu0 %8692
      %8694 = vrot.lane.b32.xlu0 %v7916, 48
      %v8695 = vpop.permute.xlu0 %8694
      %8696 = vrot.lane.b32.xlu0 %v7917, 48
      %v8697 = vpop.permute.xlu0 %8696
      %8698 = vrot.lane.b32.xlu0 %v7918, 48
      %v8699 = vpop.permute.xlu0 %8698
      %8700 = vrot.lane.b32.xlu0 %v7919, 48
      %v8701 = vpop.permute.xlu0 %8700
      %8702 = vrot.lane.b32.xlu0 %v7920, 48
      %v8703 = vpop.permute.xlu0 %8702
      %8704 = vrot.lane.b32.xlu0 %v7921, 48
      %v8705 = vpop.permute.xlu0 %8704
      %8706 = vrot.lane.b32.xlu0 %v7922, 48
      %v8707 = vpop.permute.xlu0 %8706
      %8708 = vrot.lane.b32.xlu0 %v7923, 48
      %v8709 = vpop.permute.xlu0 %8708
      %8710 = vrot.lane.b32.xlu0 %v7924, 48
      %v8711 = vpop.permute.xlu0 %8710
      %8712 = vrot.lane.b32.xlu0 %v7925, 48
      %v8713 = vpop.permute.xlu0 %8712
      %8714 = vrot.lane.b32.xlu0 %v7926, 48
      %v8715 = vpop.permute.xlu0 %8714
      %8716 = vrot.lane.b32.xlu0 %v7927, 48
      %v8717 = vpop.permute.xlu0 %8716
      %8718 = vrot.lane.b32.xlu0 %v7928, 48
      %v8719 = vpop.permute.xlu0 %8718
      %8720 = vrot.lane.b32.xlu0 %v7929, 48
      %v8721 = vpop.permute.xlu0 %8720
      %8722 = vrot.lane.b32.xlu0 %v7930, 48
      %v8723 = vpop.permute.xlu0 %8722
      %8724 = vrot.lane.b32.xlu0 %v7931, 48
      %v8725 = vpop.permute.xlu0 %8724
      %8726 = vrot.lane.b32.xlu0 %v7932, 48
      %v8727 = vpop.permute.xlu0 %8726
      %8728 = vrot.lane.b32.xlu0 %v7933, 48
      %v8729 = vpop.permute.xlu0 %8728
      %8730 = vrot.lane.b32.xlu0 %v7934, 48
      %v8731 = vpop.permute.xlu0 %8730
      %8732 = vrot.lane.b32.xlu0 %v7935, 48
      %v8733 = vpop.permute.xlu0 %8732
      %8734 = vrot.lane.b32.xlu0 %v7936, 48
      %v8735 = vpop.permute.xlu0 %8734
      %8736 = vrot.lane.b32.xlu0 %v7937, 48
      %v8737 = vpop.permute.xlu0 %8736
      %8802 = vrot.lane.b32.xlu0 %v7938, 56
      %v8803 = vpop.permute.xlu0 %8802
      %8804 = vrot.lane.b32.xlu0 %v7939, 56
      %v8805 = vpop.permute.xlu0 %8804
      %8806 = vrot.lane.b32.xlu0 %v7940, 56
      %v8807 = vpop.permute.xlu0 %8806
      %8808 = vrot.lane.b32.xlu0 %v7941, 56
      %v8809 = vpop.permute.xlu0 %8808
      %8810 = vrot.lane.b32.xlu0 %v7942, 56
      %v8811 = vpop.permute.xlu0 %8810
      %8812 = vrot.lane.b32.xlu0 %v7943, 56
      %v8813 = vpop.permute.xlu0 %8812
      %8814 = vrot.lane.b32.xlu0 %v7944, 56
      %v8815 = vpop.permute.xlu0 %8814
      %8816 = vrot.lane.b32.xlu0 %v7945, 56
      %v8817 = vpop.permute.xlu0 %8816
      %8818 = vrot.lane.b32.xlu0 %v7946, 56
      %v8819 = vpop.permute.xlu0 %8818
      %8820 = vrot.lane.b32.xlu0 %v7947, 56
      %v8821 = vpop.permute.xlu0 %8820
      %8822 = vrot.lane.b32.xlu0 %v7948, 56
      %v8823 = vpop.permute.xlu0 %8822
      %8824 = vrot.lane.b32.xlu0 %v7949, 56
      %v8825 = vpop.permute.xlu0 %8824
      %8826 = vrot.lane.b32.xlu0 %v7950, 56
      %v8827 = vpop.permute.xlu0 %8826
      %8828 = vrot.lane.b32.xlu0 %v7951, 56
      %v8829 = vpop.permute.xlu0 %8828
      %8830 = vrot.lane.b32.xlu0 %v7952, 56
      %v8831 = vpop.permute.xlu0 %8830
      %8832 = vrot.lane.b32.xlu0 %v7953, 56
      %v8833 = vpop.permute.xlu0 %8832
      %8834 = vrot.lane.b32.xlu0 %v7954, 56
      %v8835 = vpop.permute.xlu0 %8834
      %8836 = vrot.lane.b32.xlu0 %v7955, 56
      %v8837 = vpop.permute.xlu0 %8836
      %8838 = vrot.lane.b32.xlu0 %v7956, 56
      %v8839 = vpop.permute.xlu0 %8838
      %8840 = vrot.lane.b32.xlu0 %v7957, 56
      %v8841 = vpop.permute.xlu0 %8840
      %8842 = vrot.lane.b32.xlu0 %v7958, 56
      %v8843 = vpop.permute.xlu0 %8842
      %8844 = vrot.lane.b32.xlu0 %v7959, 56
      %v8845 = vpop.permute.xlu0 %8844
      %8846 = vrot.lane.b32.xlu0 %v7960, 56
      %v8847 = vpop.permute.xlu0 %8846
      %8848 = vrot.lane.b32.xlu0 %v7961, 56
      %v8849 = vpop.permute.xlu0 %8848
      %8850 = vrot.lane.b32.xlu0 %v7962, 56
      %v8851 = vpop.permute.xlu0 %8850
      %8852 = vrot.lane.b32.xlu0 %v7963, 56
      %v8853 = vpop.permute.xlu0 %8852
      %8854 = vrot.lane.b32.xlu0 %v7964, 56
      %v8855 = vpop.permute.xlu0 %8854
      %8856 = vrot.lane.b32.xlu0 %v7965, 56
      %v8857 = vpop.permute.xlu0 %8856
      %8858 = vrot.lane.b32.xlu0 %v7966, 56
      %v8859 = vpop.permute.xlu0 %8858
      %8860 = vrot.lane.b32.xlu0 %v7967, 56
      %v8861 = vpop.permute.xlu0 %8860
      %8862 = vrot.lane.b32.xlu0 %v7968, 56
      %v8863 = vpop.permute.xlu0 %8862
      %8864 = vrot.lane.b32.xlu0 %v7969, 56
      %v8865 = vpop.permute.xlu0 %8864
      %8930 = vrot.lane.b32.xlu0 %v7970, 64
      %v8931 = vpop.permute.xlu0 %8930
      %8932 = vrot.lane.b32.xlu0 %v7971, 64
      %v8933 = vpop.permute.xlu0 %8932
      %8934 = vrot.lane.b32.xlu0 %v7972, 64
      %v8935 = vpop.permute.xlu0 %8934
      %8936 = vrot.lane.b32.xlu0 %v7973, 64
      %v8937 = vpop.permute.xlu0 %8936
      %8938 = vrot.lane.b32.xlu0 %v7974, 64
      %v8939 = vpop.permute.xlu0 %8938
      %8940 = vrot.lane.b32.xlu0 %v7975, 64
      %v8941 = vpop.permute.xlu0 %8940
      %8942 = vrot.lane.b32.xlu0 %v7976, 64
      %v8943 = vpop.permute.xlu0 %8942
      %8944 = vrot.lane.b32.xlu0 %v7977, 64
      %v8945 = vpop.permute.xlu0 %8944
      %8946 = vrot.lane.b32.xlu0 %v7978, 64
      %v8947 = vpop.permute.xlu0 %8946
      %8948 = vrot.lane.b32.xlu0 %v7979, 64
      %v8949 = vpop.permute.xlu0 %8948
      %8950 = vrot.lane.b32.xlu0 %v7980, 64
      %v8951 = vpop.permute.xlu0 %8950
      %8952 = vrot.lane.b32.xlu0 %v7981, 64
      %v8953 = vpop.permute.xlu0 %8952
      %8954 = vrot.lane.b32.xlu0 %v7982, 64
      %v8955 = vpop.permute.xlu0 %8954
      %8956 = vrot.lane.b32.xlu0 %v7983, 64
      %v8957 = vpop.permute.xlu0 %8956
      %8958 = vrot.lane.b32.xlu0 %v7984, 64
      %v8959 = vpop.permute.xlu0 %8958
      %8960 = vrot.lane.b32.xlu0 %v7985, 64
      %v8961 = vpop.permute.xlu0 %8960
      %8962 = vrot.lane.b32.xlu0 %v7986, 64
      %v8963 = vpop.permute.xlu0 %8962
      %8964 = vrot.lane.b32.xlu0 %v7987, 64
      %v8965 = vpop.permute.xlu0 %8964
      %8966 = vrot.lane.b32.xlu0 %v7988, 64
      %v8967 = vpop.permute.xlu0 %8966
      %8968 = vrot.lane.b32.xlu0 %v7989, 64
      %v8969 = vpop.permute.xlu0 %8968
      %8970 = vrot.lane.b32.xlu0 %v7990, 64
      %v8971 = vpop.permute.xlu0 %8970
      %8972 = vrot.lane.b32.xlu0 %v7991, 64
      %v8973 = vpop.permute.xlu0 %8972
      %8974 = vrot.lane.b32.xlu0 %v7992, 64
      %v8975 = vpop.permute.xlu0 %8974
      %8976 = vrot.lane.b32.xlu0 %v7993, 64
      %v8977 = vpop.permute.xlu0 %8976
      %8978 = vrot.lane.b32.xlu0 %v7994, 64
      %v8979 = vpop.permute.xlu0 %8978
      %8980 = vrot.lane.b32.xlu0 %v7995, 64
      %v8981 = vpop.permute.xlu0 %8980
      %8982 = vrot.lane.b32.xlu0 %v7996, 64
      %v8983 = vpop.permute.xlu0 %8982
      %8984 = vrot.lane.b32.xlu0 %v7997, 64
      %v8985 = vpop.permute.xlu0 %8984
      %8986 = vrot.lane.b32.xlu0 %v7998, 64
      %v8987 = vpop.permute.xlu0 %8986
      %8988 = vrot.lane.b32.xlu0 %v7999, 64
      %v8989 = vpop.permute.xlu0 %8988
      %8990 = vrot.lane.b32.xlu0 %v8000, 64
      %v8991 = vpop.permute.xlu0 %8990
      %8992 = vrot.lane.b32.xlu0 %v8001, 64
      %v8993 = vpop.permute.xlu0 %8992
      %v9026 = vsel %vm595, %v7713, %v8035
      %v9027 = vsel %vm595, %v7714, %v8037
      %v9028 = vsel %vm595, %v7715, %v8039
      %v9029 = vsel %vm595, %v7716, %v8041
      %v9030 = vsel %vm595, %v7717, %v8043
      %v9031 = vsel %vm595, %v7718, %v8045
      %v9032 = vsel %vm595, %v7719, %v8047
      %v9033 = vsel %vm595, %v7720, %v8049
      %v9034 = vsel %vm595, %v7721, %v8051
      %v9035 = vsel %vm595, %v7722, %v8053
      %v9036 = vsel %vm595, %v7723, %v8055
      %v9037 = vsel %vm595, %v7724, %v8057
      %v9038 = vsel %vm595, %v7725, %v8059
      %v9039 = vsel %vm595, %v7726, %v8061
      %v9040 = vsel %vm595, %v7727, %v8063
      %v9041 = vsel %vm595, %v7728, %v8065
      %v9042 = vsel %vm595, %v7729, %v8067
      %v9043 = vsel %vm595, %v7730, %v8069
      %v9044 = vsel %vm595, %v7731, %v8071
      %v9045 = vsel %vm595, %v7732, %v8073
      %v9046 = vsel %vm595, %v7733, %v8075
      %v9047 = vsel %vm595, %v7734, %v8077
      %v9048 = vsel %vm595, %v7735, %v8079
      %v9049 = vsel %vm595, %v7736, %v8081
      %v9050 = vsel %vm595, %v7737, %v8083
      %v9051 = vsel %vm595, %v7738, %v8085
      %v9052 = vsel %vm595, %v7739, %v8087
      %v9053 = vsel %vm595, %v7740, %v8089
      %v9054 = vsel %vm595, %v7741, %v8091
      %v9055 = vsel %vm595, %v7742, %v8093
      %v9056 = vsel %vm595, %v7743, %v8095
      %v9057 = vsel %vm595, %v7744, %v8097
      %vm9058 = vcmask 130048
      %v9059 = vsel %vm9058, %v9026, %v8163
      %v9060 = vsel %vm9058, %v9027, %v8165
      %v9061 = vsel %vm9058, %v9028, %v8167
      %v9062 = vsel %vm9058, %v9029, %v8169
      %v9063 = vsel %vm9058, %v9030, %v8171
      %v9064 = vsel %vm9058, %v9031, %v8173
      %v9065 = vsel %vm9058, %v9032, %v8175
      %v9066 = vsel %vm9058, %v9033, %v8177
      %v9067 = vsel %vm9058, %v9034, %v8179
      %v9068 = vsel %vm9058, %v9035, %v8181
      %v9069 = vsel %vm9058, %v9036, %v8183
      %v9070 = vsel %vm9058, %v9037, %v8185
      %v9071 = vsel %vm9058, %v9038, %v8187
      %v9072 = vsel %vm9058, %v9039, %v8189
      %v9073 = vsel %vm9058, %v9040, %v8191
      %v9074 = vsel %vm9058, %v9041, %v8193
      %v9075 = vsel %vm9058, %v9042, %v8195
      %v9076 = vsel %vm9058, %v9043, %v8197
      %v9077 = vsel %vm9058, %v9044, %v8199
      %v9078 = vsel %vm9058, %v9045, %v8201
      %v9079 = vsel %vm9058, %v9046, %v8203
      %v9080 = vsel %vm9058, %v9047, %v8205
      %v9081 = vsel %vm9058, %v9048, %v8207
      %v9082 = vsel %vm9058, %v9049, %v8209
      %v9083 = vsel %vm9058, %v9050, %v8211
      %v9084 = vsel %vm9058, %v9051, %v8213
      %v9085 = vsel %vm9058, %v9052, %v8215
      %v9086 = vsel %vm9058, %v9053, %v8217
      %v9087 = vsel %vm9058, %v9054, %v8219
      %v9088 = vsel %vm9058, %v9055, %v8221
      %v9089 = vsel %vm9058, %v9056, %v8223
      %v9090 = vsel %vm9058, %v9057, %v8225
      %v9091 = vsel %vm2259, %v9059, %v8291
      %v9092 = vsel %vm2259, %v9060, %v8293
      %v9093 = vsel %vm2259, %v9061, %v8295
      %v9094 = vsel %vm2259, %v9062, %v8297
      %v9095 = vsel %vm2259, %v9063, %v8299
      %v9096 = vsel %vm2259, %v9064, %v8301
      %v9097 = vsel %vm2259, %v9065, %v8303
      %v9098 = vsel %vm2259, %v9066, %v8305
      %v9099 = vsel %vm2259, %v9067, %v8307
      %v9100 = vsel %vm2259, %v9068, %v8309
      %v9101 = vsel %vm2259, %v9069, %v8311
      %v9102 = vsel %vm2259, %v9070, %v8313
      %v9103 = vsel %vm2259, %v9071, %v8315
      %v9104 = vsel %vm2259, %v9072, %v8317
      %v9105 = vsel %vm2259, %v9073, %v8319
      %v9106 = vsel %vm2259, %v9074, %v8321
      %v9107 = vsel %vm2259, %v9075, %v8323
      %v9108 = vsel %vm2259, %v9076, %v8325
      %v9109 = vsel %vm2259, %v9077, %v8327
      %v9110 = vsel %vm2259, %v9078, %v8329
      %v9111 = vsel %vm2259, %v9079, %v8331
      %v9112 = vsel %vm2259, %v9080, %v8333
      %v9113 = vsel %vm2259, %v9081, %v8335
      %v9114 = vsel %vm2259, %v9082, %v8337
      %v9115 = vsel %vm2259, %v9083, %v8339
      %v9116 = vsel %vm2259, %v9084, %v8341
      %v9117 = vsel %vm2259, %v9085, %v8343
      %v9118 = vsel %vm2259, %v9086, %v8345
      %v9119 = vsel %vm2259, %v9087, %v8347
      %v9120 = vsel %vm2259, %v9088, %v8349
      %v9121 = vsel %vm2259, %v9089, %v8351
      %v9122 = vsel %vm2259, %v9090, %v8353
      %v9123 = vsel %vm539, %v9091, %v8419
      %v9124 = vsel %vm539, %v9092, %v8421
      %v9125 = vsel %vm539, %v9093, %v8423
      %v9126 = vsel %vm539, %v9094, %v8425
      %v9127 = vsel %vm539, %v9095, %v8427
      %v9128 = vsel %vm539, %v9096, %v8429
      %v9129 = vsel %vm539, %v9097, %v8431
      %v9130 = vsel %vm539, %v9098, %v8433
      %v9131 = vsel %vm539, %v9099, %v8435
      %v9132 = vsel %vm539, %v9100, %v8437
      %v9133 = vsel %vm539, %v9101, %v8439
      %v9134 = vsel %vm539, %v9102, %v8441
      %v9135 = vsel %vm539, %v9103, %v8443
      %v9136 = vsel %vm539, %v9104, %v8445
      %v9137 = vsel %vm539, %v9105, %v8447
      %v9138 = vsel %vm539, %v9106, %v8449
      %v9139 = vsel %vm539, %v9107, %v8451
      %v9140 = vsel %vm539, %v9108, %v8453
      %v9141 = vsel %vm539, %v9109, %v8455
      %v9142 = vsel %vm539, %v9110, %v8457
      %v9143 = vsel %vm539, %v9111, %v8459
      %v9144 = vsel %vm539, %v9112, %v8461
      %v9145 = vsel %vm539, %v9113, %v8463
      %v9146 = vsel %vm539, %v9114, %v8465
      %v9147 = vsel %vm539, %v9115, %v8467
      %v9148 = vsel %vm539, %v9116, %v8469
      %v9149 = vsel %vm539, %v9117, %v8471
      %v9150 = vsel %vm539, %v9118, %v8473
      %v9151 = vsel %vm539, %v9119, %v8475
      %v9152 = vsel %vm539, %v9120, %v8477
      %v9153 = vsel %vm539, %v9121, %v8479
      %v9154 = vsel %vm539, %v9122, %v8481
      %vm9155 = vcmask 326656
      %v9156 = vsel %vm9155, %v9123, %v8547
      %v9157 = vsel %vm9155, %v9124, %v8549
      %v9158 = vsel %vm9155, %v9125, %v8551
      %v9159 = vsel %vm9155, %v9126, %v8553
      %v9160 = vsel %vm9155, %v9127, %v8555
      %v9161 = vsel %vm9155, %v9128, %v8557
      %v9162 = vsel %vm9155, %v9129, %v8559
      %v9163 = vsel %vm9155, %v9130, %v8561
      %v9164 = vsel %vm9155, %v9131, %v8563
      %v9165 = vsel %vm9155, %v9132, %v8565
      %v9166 = vsel %vm9155, %v9133, %v8567
      %v9167 = vsel %vm9155, %v9134, %v8569
      %v9168 = vsel %vm9155, %v9135, %v8571
      %v9169 = vsel %vm9155, %v9136, %v8573
      %v9170 = vsel %vm9155, %v9137, %v8575
      %v9171 = vsel %vm9155, %v9138, %v8577
      %v9172 = vsel %vm9155, %v9139, %v8579
      %v9173 = vsel %vm9155, %v9140, %v8581
      %v9174 = vsel %vm9155, %v9141, %v8583
      %v9175 = vsel %vm9155, %v9142, %v8585
      %v9176 = vsel %vm9155, %v9143, %v8587
      %v9177 = vsel %vm9155, %v9144, %v8589
      %v9178 = vsel %vm9155, %v9145, %v8591
      %v9179 = vsel %vm9155, %v9146, %v8593
      %v9180 = vsel %vm9155, %v9147, %v8595
      %v9181 = vsel %vm9155, %v9148, %v8597
      %v9182 = vsel %vm9155, %v9149, %v8599
      %v9183 = vsel %vm9155, %v9150, %v8601
      %v9184 = vsel %vm9155, %v9151, %v8603
      %v9185 = vsel %vm9155, %v9152, %v8605
      %v9186 = vsel %vm9155, %v9153, %v8607
      %v9187 = vsel %vm9155, %v9154, %v8609
      %vm9188 = vcmask 392192
      %v9189 = vsel %vm9188, %v9156, %v8675
      %v9190 = vsel %vm9188, %v9157, %v8677
      %v9191 = vsel %vm9188, %v9158, %v8679
      %v9192 = vsel %vm9188, %v9159, %v8681
      %v9193 = vsel %vm9188, %v9160, %v8683
      %v9194 = vsel %vm9188, %v9161, %v8685
      %v9195 = vsel %vm9188, %v9162, %v8687
      %v9196 = vsel %vm9188, %v9163, %v8689
      %v9197 = vsel %vm9188, %v9164, %v8691
      %v9198 = vsel %vm9188, %v9165, %v8693
      %v9199 = vsel %vm9188, %v9166, %v8695
      %v9200 = vsel %vm9188, %v9167, %v8697
      %v9201 = vsel %vm9188, %v9168, %v8699
      %v9202 = vsel %vm9188, %v9169, %v8701
      %v9203 = vsel %vm9188, %v9170, %v8703
      %v9204 = vsel %vm9188, %v9171, %v8705
      %v9205 = vsel %vm9188, %v9172, %v8707
      %v9206 = vsel %vm9188, %v9173, %v8709
      %v9207 = vsel %vm9188, %v9174, %v8711
      %v9208 = vsel %vm9188, %v9175, %v8713
      %v9209 = vsel %vm9188, %v9176, %v8715
      %v9210 = vsel %vm9188, %v9177, %v8717
      %v9211 = vsel %vm9188, %v9178, %v8719
      %v9212 = vsel %vm9188, %v9179, %v8721
      %v9213 = vsel %vm9188, %v9180, %v8723
      %v9214 = vsel %vm9188, %v9181, %v8725
      %v9215 = vsel %vm9188, %v9182, %v8727
      %v9216 = vsel %vm9188, %v9183, %v8729
      %v9217 = vsel %vm9188, %v9184, %v8731
      %v9218 = vsel %vm9188, %v9185, %v8733
      %v9219 = vsel %vm9188, %v9186, %v8735
      %v9220 = vsel %vm9188, %v9187, %v8737
      %vm9221 = vcmask 457728
      %v9222 = vsel %vm9221, %v9189, %v8803
      %v9223 = vsel %vm9221, %v9190, %v8805
      %v9224 = vsel %vm9221, %v9191, %v8807
      %v9225 = vsel %vm9221, %v9192, %v8809
      %v9226 = vsel %vm9221, %v9193, %v8811
      %v9227 = vsel %vm9221, %v9194, %v8813
      %v9228 = vsel %vm9221, %v9195, %v8815
      %v9229 = vsel %vm9221, %v9196, %v8817
      %v9230 = vsel %vm9221, %v9197, %v8819
      %v9231 = vsel %vm9221, %v9198, %v8821
      %v9232 = vsel %vm9221, %v9199, %v8823
      %v9233 = vsel %vm9221, %v9200, %v8825
      %v9234 = vsel %vm9221, %v9201, %v8827
      %v9235 = vsel %vm9221, %v9202, %v8829
      %v9236 = vsel %vm9221, %v9203, %v8831
      %v9237 = vsel %vm9221, %v9204, %v8833
      %v9238 = vsel %vm9221, %v9205, %v8835
      %v9239 = vsel %vm9221, %v9206, %v8837
      %v9240 = vsel %vm9221, %v9207, %v8839
      %v9241 = vsel %vm9221, %v9208, %v8841
      %v9242 = vsel %vm9221, %v9209, %v8843
      %v9243 = vsel %vm9221, %v9210, %v8845
      %v9244 = vsel %vm9221, %v9211, %v8847
      %v9245 = vsel %vm9221, %v9212, %v8849
      %v9246 = vsel %vm9221, %v9213, %v8851
      %v9247 = vsel %vm9221, %v9214, %v8853
      %v9248 = vsel %vm9221, %v9215, %v8855
      %v9249 = vsel %vm9221, %v9216, %v8857
      %v9250 = vsel %vm9221, %v9217, %v8859
      %v9251 = vsel %vm9221, %v9218, %v8861
      %v9252 = vsel %vm9221, %v9219, %v8863
      %v9253 = vsel %vm9221, %v9220, %v8865
      %v9254 = vsel %vm3701, %v9222, %v8931
      %v9255 = vsel %vm3701, %v9223, %v8933
      %v9256 = vsel %vm3701, %v9224, %v8935
      %v9257 = vsel %vm3701, %v9225, %v8937
      %v9258 = vsel %vm3701, %v9226, %v8939
      %v9259 = vsel %vm3701, %v9227, %v8941
      %v9260 = vsel %vm3701, %v9228, %v8943
      %v9261 = vsel %vm3701, %v9229, %v8945
      %v9262 = vsel %vm3701, %v9230, %v8947
      %v9263 = vsel %vm3701, %v9231, %v8949
      %v9264 = vsel %vm3701, %v9232, %v8951
      %v9265 = vsel %vm3701, %v9233, %v8953
      %v9266 = vsel %vm3701, %v9234, %v8955
      %v9267 = vsel %vm3701, %v9235, %v8957
      %v9268 = vsel %vm3701, %v9236, %v8959
      %v9269 = vsel %vm3701, %v9237, %v8961
      %v9270 = vsel %vm3701, %v9238, %v8963
      %v9271 = vsel %vm3701, %v9239, %v8965
      %v9272 = vsel %vm3701, %v9240, %v8967
      %v9273 = vsel %vm3701, %v9241, %v8969
      %v9274 = vsel %vm3701, %v9242, %v8971
      %v9275 = vsel %vm3701, %v9243, %v8973
      %v9276 = vsel %vm3701, %v9244, %v8975
      %v9277 = vsel %vm3701, %v9245, %v8977
      %v9278 = vsel %vm3701, %v9246, %v8979
      %v9279 = vsel %vm3701, %v9247, %v8981
      %v9280 = vsel %vm3701, %v9248, %v8983
      %v9281 = vsel %vm3701, %v9249, %v8985
      %v9282 = vsel %vm3701, %v9250, %v8987
      %v9283 = vsel %vm3701, %v9251, %v8989
      %v9284 = vsel %vm3701, %v9252, %v8991
      %v9285 = vsel %vm3701, %v9253, %v8993
      %v9286 = vpack.c.bf16 %v9255, %v9254
      %v9287 = vpack.c.bf16 %v9257, %v9256
      %v9288 = vpack.c.bf16 %v9259, %v9258
      %v9289 = vpack.c.bf16 %v9261, %v9260
      %v9290 = vpack.c.bf16 %v9263, %v9262
      %v9291 = vpack.c.bf16 %v9265, %v9264
      %v9292 = vpack.c.bf16 %v9267, %v9266
      %v9293 = vpack.c.bf16 %v9269, %v9268
      %v9294 = vpack.c.bf16 %v9271, %v9270
      %v9295 = vpack.c.bf16 %v9273, %v9272
      %v9296 = vpack.c.bf16 %v9275, %v9274
      %v9297 = vpack.c.bf16 %v9277, %v9276
      %v9298 = vpack.c.bf16 %v9279, %v9278
      %v9299 = vpack.c.bf16 %v9281, %v9280
      %v9300 = vpack.c.bf16 %v9283, %v9282
      %v9301 = vpack.c.bf16 %v9285, %v9284
      %v9302 = vld [vmem:[%s8] sm:$0xf]
      %v9303 = vld [vmem:[%s8 + $0x4] sm:$0xf]
      %v9304 = vld [vmem:[%s8 + $0x8] sm:$0xf]
      %v9305 = vld [vmem:[%s8 + $0xc] sm:$0xf]
      %v9306 = vld [vmem:[%s8 + $0x10] sm:$0xf]
      %v9307 = vld [vmem:[%s8 + $0x14] sm:$0xf]
      %v9308 = vld [vmem:[%s8 + $0x18] sm:$0xf]
      %v9309 = vld [vmem:[%s8 + $0x1c] sm:$0xf]
      %v9310 = vld [vmem:[%s8 + $0x20] sm:$0xf]
      %v9311 = vld [vmem:[%s9] sm:$0xf]
      %v9312 = vld [vmem:[%s9 + $0x4] sm:$0xf]
      %v9313 = vld [vmem:[%s9 + $0x8] sm:$0xf]
      %v9314 = vld [vmem:[%s9 + $0xc] sm:$0xf]
      %v9315 = vld [vmem:[%s9 + $0x10] sm:$0xf]
      %v9316 = vld [vmem:[%s9 + $0x14] sm:$0xf]
      %v9317 = vld [vmem:[%s9 + $0x18] sm:$0xf]
      %v9318 = vld [vmem:[%s9 + $0x1c] sm:$0xf]
      %v9319 = vld [vmem:[%s9 + $0x20] sm:$0xf]
      %v9320 = vld [vmem:[%s9 + $0x24] sm:$0xf]
      %v9321 = vld [vmem:[%s9 + $0x28] sm:$0xf]
      %v9322 = vld [vmem:[%s9 + $0x2c] sm:$0xf]
      %v9323 = vld [vmem:[%s9 + $0x30] sm:$0xf]
      %v9324 = vld [vmem:[%s9 + $0x34] sm:$0xf]
      %v9325 = vld [vmem:[%s9 + $0x38] sm:$0xf]
      %v9326 = vld [vmem:[%s9 + $0x3c] sm:$0xf]
      %v9327 = vld [vmem:[%s9 + $0x40] sm:$0xf]
      %v9328 = vld [vmem:[%s9 + $0x44] sm:$0xf]
      %v9329 = vld [vmem:[%s9 + $0x48] sm:$0xf]
      %v9330 = vld [vmem:[%s9 + $0x4c] sm:$0xf]
      %v9331 = vld [vmem:[%s9 + $0x50] sm:$0xf]
      %v9332 = vld [vmem:[%s9 + $0x54] sm:$0xf]
      %v9333 = vld [vmem:[%s9 + $0x58] sm:$0xf]
      %v9334 = vld [vmem:[%s9 + $0x5c] sm:$0xf]
      %v9335 = vld [vmem:[%s9 + $0x60] sm:$0xf]
      %v9336 = vld [vmem:[%s9 + $0x64] sm:$0xf]
      %v9337 = vld [vmem:[%s9 + $0x68] sm:$0xf]
      %v9338 = vld [vmem:[%s9 + $0x6c] sm:$0xf]
      %v9339 = vld [vmem:[%s9 + $0x70] sm:$0xf]
      %v9340 = vld [vmem:[%s9 + $0x74] sm:$0xf]
      %v9341 = vld [vmem:[%s9 + $0x78] sm:$0xf]
      %v9342 = vld [vmem:[%s9 + $0x7c] sm:$0xf]
      %v9343 = vld [vmem:[%s9 + $0x80] sm:$0xf]
      %v9344 = vld [vmem:[%s9 + $0x84] sm:$0xf]
      %v9345 = vld [vmem:[%s9 + $0x88] sm:$0xf]
      %v9346 = vld [vmem:[%s9 + $0x8c] sm:$0xf]
      %v9383 = vunpack.c.l.b16 %v9311
      %v9384 = vunpack.c.l.b16 %v9312
      %v9385 = vunpack.c.l.b16 %v9313
      %v9386 = vunpack.c.l.b16 %v9314
      %v9387 = vunpack.c.l.b16 %v9315
      %v9388 = vunpack.c.l.b16 %v9316
      %v9389 = vunpack.c.l.b16 %v9317
      %v9390 = vunpack.c.l.b16 %v9318
      %v9391 = vunpack.c.l.b16 %v9319
      %v9392 = vunpack.c.l.b16 %v9320
      %v9393 = vunpack.c.l.b16 %v9321
      %v9394 = vunpack.c.l.b16 %v9322
      %v9395 = vunpack.c.l.b16 %v9323
      %v9396 = vunpack.c.l.b16 %v9324
      %v9397 = vunpack.c.l.b16 %v9325
      %v9398 = vunpack.c.l.b16 %v9326
      %v9399 = vunpack.c.l.b16 %v9327
      %v9400 = vunpack.c.l.b16 %v9328
      %v9401 = vunpack.c.l.b16 %v9329
      %v9402 = vunpack.c.l.b16 %v9330
      %v9403 = vunpack.c.l.b16 %v9331
      %v9404 = vunpack.c.l.b16 %v9332
      %v9405 = vunpack.c.l.b16 %v9333
      %v9406 = vunpack.c.l.b16 %v9334
      %v9407 = vunpack.c.l.b16 %v9335
      %v9408 = vunpack.c.l.b16 %v9336
      %v9409 = vunpack.c.l.b16 %v9337
      %v9410 = vunpack.c.l.b16 %v9338
      %v9411 = vunpack.c.l.b16 %v9339
      %v9412 = vunpack.c.l.b16 %v9340
      %v9413 = vunpack.c.l.b16 %v9341
      %v9414 = vunpack.c.l.b16 %v9342
      %v9415 = vunpack.c.l.b16 %v9343
      %v9416 = vunpack.c.l.b16 %v9344
      %v9417 = vunpack.c.l.b16 %v9345
      %v9418 = vunpack.c.l.b16 %v9346
      %v9419 = vpack.c.b16 %v9384, %v9383
      %v9420 = vpack.c.b16 %v9386, %v9385
      %v9421 = vpack.c.b16 %v9388, %v9387
      %v9422 = vpack.c.b16 %v9390, %v9389
      %v9423 = vpack.c.b16 %v9392, %v9391
      %v9424 = vpack.c.b16 %v9394, %v9393
      %v9425 = vpack.c.b16 %v9396, %v9395
      %v9426 = vpack.c.b16 %v9398, %v9397
      %v9427 = vpack.c.b16 %v9400, %v9399
      %v9428 = vpack.c.b16 %v9402, %v9401
      %v9429 = vpack.c.b16 %v9404, %v9403
      %v9430 = vpack.c.b16 %v9406, %v9405
      %v9431 = vpack.c.b16 %v9408, %v9407
      %v9432 = vpack.c.b16 %v9410, %v9409
      %v9433 = vpack.c.b16 %v9412, %v9411
      %v9434 = vpack.c.b16 %v9414, %v9413
      %v9435 = vpack.c.b16 %v9416, %v9415
      %v9436 = vpack.c.b16 %v9418, %v9417
      %v9456 = vsel %vm539, %v7627, 0
      %v9459 = vsel %vm539, %v7630, 0
      %v9462 = vsel %vm539, %v7633, 0
      %v9465 = vsel %vm539, %v7636, 0
      %v9468 = vsel %vm539, %v7639, 0
      %v9471 = vsel %vm539, %v7642, 0
      %v9474 = vsel %vm539, %v7645, 0
      %v9477 = vsel %vm539, %v7648, 0
      %v9480 = vsel %vm539, %v7651, 0
      %v9483 = vsel %vm539, %v7654, 0
      %v9486 = vsel %vm539, %v7657, 0
      %v9489 = vsel %vm539, %v7660, 0
      %v9492 = vsel %vm539, %v7663, 0
      %v9495 = vsel %vm539, %v7666, 0
      %v9498 = vsel %vm539, %v7669, 0
      %v9501 = vsel %vm539, %v7672, 0
      %9503 = vmatprep.subr.bf16.mxu0 0
      %9504 = vmatpush1.bf16.msra.mxu0 %v9426
      %9505 = vmatprep.subr.bf16.mxu0 0
      %9506 = vmatpush1.bf16.msra.mxu0 %v9425
      %9507 = vmatprep.subr.bf16.mxu0 0
      %9508 = vmatpush1.bf16.msra.mxu0 %v9424
      %9509 = vmatprep.subr.bf16.mxu0 0
      %9510 = vmatpush1.bf16.msra.mxu0 %v9423
      %9511 = vmatprep.subr.bf16.mxu0 0
      %9512 = vmatpush1.bf16.msra.mxu0 %v9422
      %9513 = vmatprep.subr.bf16.mxu0 0
      %9514 = vmatpush1.bf16.msra.mxu0 %v9421
      %9515 = vmatprep.subr.bf16.mxu0 0
      %9516 = vmatpush1.bf16.msra.mxu0 %v9420
      %9517 = vmatprep.subr.bf16.mxu0 0
      %9518 = vmatpush1.bf16.msra.mxu0 %v9419
      %9519 = vmatprep.subr.bf16.mxu0 0
      %9520 = vmatpush2.bf16.msra.mxu0 %v9434
      %9521 = vmatprep.subr.bf16.mxu0 0
      %9522 = vmatpush2.bf16.msra.mxu0 %v9433
      %9523 = vmatprep.subr.bf16.mxu0 0
      %9524 = vmatpush2.bf16.msra.mxu0 %v9432
      %9525 = vmatprep.subr.bf16.mxu0 0
      %9526 = vmatpush2.bf16.msra.mxu0 %v9431
      %9527 = vmatprep.subr.bf16.mxu0 0
      %9528 = vmatpush2.bf16.msra.mxu0 %v9430
      %9529 = vmatprep.subr.bf16.mxu0 0
      %9530 = vmatpush2.bf16.msra.mxu0 %v9429
      %9531 = vmatprep.subr.bf16.mxu0 0
      %9532 = vmatpush2.bf16.msra.mxu0 %v9428
      %9533 = vmatprep.subr.bf16.mxu0 0
      %9534 = vmatpush2.bf16.msra.mxu0 %v9427
      %9535 = vmatprep.mubr.bf16.mxu0 %v7626
      %9536 = vmatmul.mubr.bf16.gmra.mxu0 %v7625
      %v9537 = vpop.f32.mrf.mxu0
      %v9538 = vadd.f32 0.0, %v9537
      %v9539 = vpop.f32.mrf.mxu0
      %v9540 = vpop.f32.mrf.mxu0
      %v9541 = vadd.f32 0.0, %v9540
      %v9542 = vpop.f32.mrf.mxu0
      %9543 = vmatprep.mubr.bf16.mxu0 %v7629
      %9544 = vmatmul.mubr.bf16.gmra.mxu0 %v7628
      %v9545 = vpop.f32.mrf.mxu0
      %v9546 = vadd.f32 0.0, %v9545
      %v9547 = vpop.f32.mrf.mxu0
      %v9548 = vpop.f32.mrf.mxu0
      %v9549 = vadd.f32 0.0, %v9548
      %v9550 = vpop.f32.mrf.mxu0
      %9551 = vmatprep.mubr.bf16.mxu0 %v7632
      %9552 = vmatmul.mubr.bf16.gmra.mxu0 %v7631
      %v9553 = vpop.f32.mrf.mxu0
      %v9554 = vadd.f32 0.0, %v9553
      %v9555 = vpop.f32.mrf.mxu0
      %v9556 = vpop.f32.mrf.mxu0
      %v9557 = vadd.f32 0.0, %v9556
      %v9558 = vpop.f32.mrf.mxu0
      %9559 = vmatprep.mubr.bf16.mxu0 %v7635
      %9560 = vmatmul.mubr.bf16.gmra.mxu0 %v7634
      %v9561 = vpop.f32.mrf.mxu0
      %v9562 = vadd.f32 0.0, %v9561
      %v9563 = vpop.f32.mrf.mxu0
      %v9564 = vpop.f32.mrf.mxu0
      %v9565 = vadd.f32 0.0, %v9564
      %v9566 = vpop.f32.mrf.mxu0
      %9567 = vmatprep.mubr.bf16.mxu0 %v7638
      %9568 = vmatmul.mubr.bf16.gmra.mxu0 %v7637
      %v9569 = vpop.f32.mrf.mxu0
      %v9570 = vadd.f32 0.0, %v9569
      %v9571 = vpop.f32.mrf.mxu0
      %v9572 = vpop.f32.mrf.mxu0
      %v9573 = vadd.f32 0.0, %v9572
      %v9574 = vpop.f32.mrf.mxu0
      %9575 = vmatprep.mubr.bf16.mxu0 %v7641
      %9576 = vmatmul.mubr.bf16.gmra.mxu0 %v7640
      %v9577 = vpop.f32.mrf.mxu0
      %v9578 = vadd.f32 0.0, %v9577
      %v9579 = vpop.f32.mrf.mxu0
      %v9580 = vpop.f32.mrf.mxu0
      %v9581 = vadd.f32 0.0, %v9580
      %v9582 = vpop.f32.mrf.mxu0
      %9583 = vmatprep.mubr.bf16.mxu0 %v7644
      %9584 = vmatmul.mubr.bf16.gmra.mxu0 %v7643
      %v9585 = vpop.f32.mrf.mxu0
      %v9586 = vadd.f32 0.0, %v9585
      %v9587 = vpop.f32.mrf.mxu0
      %v9588 = vpop.f32.mrf.mxu0
      %v9589 = vadd.f32 0.0, %v9588
      %v9590 = vpop.f32.mrf.mxu0
      %9591 = vmatprep.mubr.bf16.mxu0 %v7647
      %9592 = vmatmul.mubr.bf16.gmra.mxu0 %v7646
      %v9593 = vpop.f32.mrf.mxu0
      %v9594 = vadd.f32 0.0, %v9593
      %v9595 = vpop.f32.mrf.mxu0
      %v9596 = vpop.f32.mrf.mxu0
      %v9597 = vadd.f32 0.0, %v9596
      %v9598 = vpop.f32.mrf.mxu0
      %9599 = vmatprep.mubr.bf16.mxu0 %v7650
      %9600 = vmatmul.mubr.bf16.gmra.mxu0 %v7649
      %v9601 = vpop.f32.mrf.mxu0
      %v9602 = vadd.f32 0.0, %v9601
      %v9603 = vpop.f32.mrf.mxu0
      %v9604 = vpop.f32.mrf.mxu0
      %v9605 = vadd.f32 0.0, %v9604
      %v9606 = vpop.f32.mrf.mxu0
      %9607 = vmatprep.mubr.bf16.mxu0 %v7653
      %9608 = vmatmul.mubr.bf16.gmra.mxu0 %v7652
      %v9609 = vpop.f32.mrf.mxu0
      %v9610 = vadd.f32 0.0, %v9609
      %v9611 = vpop.f32.mrf.mxu0
      %v9612 = vpop.f32.mrf.mxu0
      %v9613 = vadd.f32 0.0, %v9612
      %v9614 = vpop.f32.mrf.mxu0
      %9615 = vmatprep.mubr.bf16.mxu0 %v7656
      %9616 = vmatmul.mubr.bf16.gmra.mxu0 %v7655
      %v9617 = vpop.f32.mrf.mxu0
      %v9618 = vadd.f32 0.0, %v9617
      %v9619 = vpop.f32.mrf.mxu0
      %v9620 = vpop.f32.mrf.mxu0
      %v9621 = vadd.f32 0.0, %v9620
      %v9622 = vpop.f32.mrf.mxu0
      %9623 = vmatprep.mubr.bf16.mxu0 %v7659
      %9624 = vmatmul.mubr.bf16.gmra.mxu0 %v7658
      %v9625 = vpop.f32.mrf.mxu0
      %v9626 = vadd.f32 0.0, %v9625
      %v9627 = vpop.f32.mrf.mxu0
      %v9628 = vpop.f32.mrf.mxu0
      %v9629 = vadd.f32 0.0, %v9628
      %v9630 = vpop.f32.mrf.mxu0
      %9631 = vmatprep.mubr.bf16.mxu0 %v7662
      %9632 = vmatmul.mubr.bf16.gmra.mxu0 %v7661
      %v9633 = vpop.f32.mrf.mxu0
      %v9634 = vadd.f32 0.0, %v9633
      %v9635 = vpop.f32.mrf.mxu0
      %v9636 = vpop.f32.mrf.mxu0
      %v9637 = vadd.f32 0.0, %v9636
      %v9638 = vpop.f32.mrf.mxu0
      %9639 = vmatprep.mubr.bf16.mxu0 %v7665
      %9640 = vmatmul.mubr.bf16.gmra.mxu0 %v7664
      %v9641 = vpop.f32.mrf.mxu0
      %v9642 = vadd.f32 0.0, %v9641
      %v9643 = vpop.f32.mrf.mxu0
      %v9644 = vpop.f32.mrf.mxu0
      %v9645 = vadd.f32 0.0, %v9644
      %v9646 = vpop.f32.mrf.mxu0
      %9647 = vmatprep.mubr.bf16.mxu0 %v7668
      %9648 = vmatmul.mubr.bf16.gmra.mxu0 %v7667
      %v9649 = vpop.f32.mrf.mxu0
      %v9650 = vadd.f32 0.0, %v9649
      %v9651 = vpop.f32.mrf.mxu0
      %v9652 = vpop.f32.mrf.mxu0
      %v9653 = vadd.f32 0.0, %v9652
      %v9654 = vpop.f32.mrf.mxu0
      %9655 = vmatprep.mubr.bf16.mxu0 %v7671
      %9656 = vmatmul.mubr.bf16.gmra.mxu0 %v7670
      %v9657 = vpop.f32.mrf.mxu0
      %v9658 = vadd.f32 0.0, %v9657
      %v9659 = vpop.f32.mrf.mxu0
      %v9660 = vpop.f32.mrf.mxu0
      %v9661 = vadd.f32 0.0, %v9660
      %v9662 = vpop.f32.mrf.mxu0
      %9663 = vdwg.mxu0
      %9664 = vmatprep.subr.bf16.mxu0 0
      %9665 = vmatpush1.bf16.msra.mxu0 0
      %9666 = vmatprep.subr.bf16.mxu0 0
      %9667 = vmatpush1.bf16.msra.mxu0 0
      %9668 = vmatprep.subr.bf16.mxu0 0
      %9669 = vmatpush1.bf16.msra.mxu0 0
      %9670 = vmatprep.subr.bf16.mxu0 0
      %9671 = vmatpush1.bf16.msra.mxu0 0
      %9672 = vmatprep.subr.bf16.mxu0 0
      %9673 = vmatpush1.bf16.msra.mxu0 0
      %9674 = vmatprep.subr.bf16.mxu0 0
      %9675 = vmatpush1.bf16.msra.mxu0 0
      %9676 = vmatprep.subr.bf16.mxu0 0
      %9677 = vmatpush1.bf16.msra.mxu0 %v9436
      %9678 = vmatprep.subr.bf16.mxu0 0
      %9679 = vmatpush1.bf16.msra.mxu0 %v9435
      %9680 = vmatprep.subr.bf16.mxu0 0
      %9681 = vmatpush2.bf16.msra.mxu0 0
      %9682 = vmatprep.subr.bf16.mxu0 0
      %9683 = vmatpush2.bf16.msra.mxu0 0
      %9684 = vmatprep.subr.bf16.mxu0 0
      %9685 = vmatpush2.bf16.msra.mxu0 0
      %9686 = vmatprep.subr.bf16.mxu0 0
      %9687 = vmatpush2.bf16.msra.mxu0 0
      %9688 = vmatprep.subr.bf16.mxu0 0
      %9689 = vmatpush2.bf16.msra.mxu0 0
      %9690 = vmatprep.subr.bf16.mxu0 0
      %9691 = vmatpush2.bf16.msra.mxu0 0
      %9692 = vmatprep.subr.bf16.mxu0 0
      %9693 = vmatpush2.bf16.msra.mxu0 0
      %9694 = vmatprep.subr.bf16.mxu0 0
      %9695 = vmatpush2.bf16.msra.mxu0 0
      %9696 = vmatprep.mubr.bf16.mxu0 0
      %9697 = vmatmul.mubr.bf16.gmra.mxu0 %v9456
      %v9698 = vpop.f32.mrf.mxu0
      %v9699 = vadd.f32 %v9538, %v9698
      %v9700 = vpop.f32.mrf.mxu0
      %v9701 = vpop.f32.mrf.mxu0
      %v9702 = vadd.f32 %v9541, %v9701
      %v9703 = vpop.f32.mrf.mxu0
      %9704 = vmatprep.mubr.bf16.mxu0 0
      %9705 = vmatmul.mubr.bf16.gmra.mxu0 %v9459
      %v9706 = vpop.f32.mrf.mxu0
      %v9707 = vadd.f32 %v9546, %v9706
      %v9708 = vpop.f32.mrf.mxu0
      %v9709 = vpop.f32.mrf.mxu0
      %v9710 = vadd.f32 %v9549, %v9709
      %v9711 = vpop.f32.mrf.mxu0
      %9712 = vmatprep.mubr.bf16.mxu0 0
      %9713 = vmatmul.mubr.bf16.gmra.mxu0 %v9462
      %v9714 = vpop.f32.mrf.mxu0
      %v9715 = vadd.f32 %v9554, %v9714
      %v9716 = vpop.f32.mrf.mxu0
      %v9717 = vpop.f32.mrf.mxu0
      %v9718 = vadd.f32 %v9557, %v9717
      %v9719 = vpop.f32.mrf.mxu0
      %9720 = vmatprep.mubr.bf16.mxu0 0
      %9721 = vmatmul.mubr.bf16.gmra.mxu0 %v9465
      %v9722 = vpop.f32.mrf.mxu0
      %v9723 = vadd.f32 %v9562, %v9722
      %v9724 = vpop.f32.mrf.mxu0
      %v9725 = vpop.f32.mrf.mxu0
      %v9726 = vadd.f32 %v9565, %v9725
      %v9727 = vpop.f32.mrf.mxu0
      %9728 = vmatprep.mubr.bf16.mxu0 0
      %9729 = vmatmul.mubr.bf16.gmra.mxu0 %v9468
      %v9730 = vpop.f32.mrf.mxu0
      %v9731 = vadd.f32 %v9570, %v9730
      %v9732 = vpop.f32.mrf.mxu0
      %v9733 = vpop.f32.mrf.mxu0
      %v9734 = vadd.f32 %v9573, %v9733
      %v9735 = vpop.f32.mrf.mxu0
      %9736 = vmatprep.mubr.bf16.mxu0 0
      %9737 = vmatmul.mubr.bf16.gmra.mxu0 %v9471
      %v9738 = vpop.f32.mrf.mxu0
      %v9739 = vadd.f32 %v9578, %v9738
      %v9740 = vpop.f32.mrf.mxu0
      %v9741 = vpop.f32.mrf.mxu0
      %v9742 = vadd.f32 %v9581, %v9741
      %v9743 = vpop.f32.mrf.mxu0
      %9744 = vmatprep.mubr.bf16.mxu0 0
      %9745 = vmatmul.mubr.bf16.gmra.mxu0 %v9474
      %v9746 = vpop.f32.mrf.mxu0
      %v9747 = vadd.f32 %v9586, %v9746
      %v9748 = vpop.f32.mrf.mxu0
      %v9749 = vpop.f32.mrf.mxu0
      %v9750 = vadd.f32 %v9589, %v9749
      %v9751 = vpop.f32.mrf.mxu0
      %9752 = vmatprep.mubr.bf16.mxu0 0
      %9753 = vmatmul.mubr.bf16.gmra.mxu0 %v9477
      %v9754 = vpop.f32.mrf.mxu0
      %v9755 = vadd.f32 %v9594, %v9754
      %v9756 = vpop.f32.mrf.mxu0
      %v9757 = vpop.f32.mrf.mxu0
      %v9758 = vadd.f32 %v9597, %v9757
      %v9759 = vpop.f32.mrf.mxu0
      %9760 = vmatprep.mubr.bf16.mxu0 0
      %9761 = vmatmul.mubr.bf16.gmra.mxu0 %v9480
      %v9762 = vpop.f32.mrf.mxu0
      %v9763 = vadd.f32 %v9602, %v9762
      %v9764 = vpop.f32.mrf.mxu0
      %v9765 = vpop.f32.mrf.mxu0
      %v9766 = vadd.f32 %v9605, %v9765
      %v9767 = vpop.f32.mrf.mxu0
      %9768 = vmatprep.mubr.bf16.mxu0 0
      %9769 = vmatmul.mubr.bf16.gmra.mxu0 %v9483
      %v9770 = vpop.f32.mrf.mxu0
      %v9771 = vadd.f32 %v9610, %v9770
      %v9772 = vpop.f32.mrf.mxu0
      %v9773 = vpop.f32.mrf.mxu0
      %v9774 = vadd.f32 %v9613, %v9773
      %v9775 = vpop.f32.mrf.mxu0
      %9776 = vmatprep.mubr.bf16.mxu0 0
      %9777 = vmatmul.mubr.bf16.gmra.mxu0 %v9486
      %v9778 = vpop.f32.mrf.mxu0
      %v9779 = vadd.f32 %v9618, %v9778
      %v9780 = vpop.f32.mrf.mxu0
      %v9781 = vpop.f32.mrf.mxu0
      %v9782 = vadd.f32 %v9621, %v9781
      %v9783 = vpop.f32.mrf.mxu0
      %9784 = vmatprep.mubr.bf16.mxu0 0
      %9785 = vmatmul.mubr.bf16.gmra.mxu0 %v9489
      %v9786 = vpop.f32.mrf.mxu0
      %v9787 = vadd.f32 %v9626, %v9786
      %v9788 = vpop.f32.mrf.mxu0
      %v9789 = vpop.f32.mrf.mxu0
      %v9790 = vadd.f32 %v9629, %v9789
      %v9791 = vpop.f32.mrf.mxu0
      %9792 = vmatprep.mubr.bf16.mxu0 0
      %9793 = vmatmul.mubr.bf16.gmra.mxu0 %v9492
      %v9794 = vpop.f32.mrf.mxu0
      %v9795 = vadd.f32 %v9634, %v9794
      %v9796 = vpop.f32.mrf.mxu0
      %v9797 = vpop.f32.mrf.mxu0
      %v9798 = vadd.f32 %v9637, %v9797
      %v9799 = vpop.f32.mrf.mxu0
      %9800 = vmatprep.mubr.bf16.mxu0 0
      %9801 = vmatmul.mubr.bf16.gmra.mxu0 %v9495
      %v9802 = vpop.f32.mrf.mxu0
      %v9803 = vadd.f32 %v9642, %v9802
      %v9804 = vpop.f32.mrf.mxu0
      %v9805 = vpop.f32.mrf.mxu0
      %v9806 = vadd.f32 %v9645, %v9805
      %v9807 = vpop.f32.mrf.mxu0
      %9808 = vmatprep.mubr.bf16.mxu0 0
      %9809 = vmatmul.mubr.bf16.gmra.mxu0 %v9498
      %v9810 = vpop.f32.mrf.mxu0
      %v9811 = vadd.f32 %v9650, %v9810
      %v9812 = vpop.f32.mrf.mxu0
      %v9813 = vpop.f32.mrf.mxu0
      %v9814 = vadd.f32 %v9653, %v9813
      %v9815 = vpop.f32.mrf.mxu0
      %9816 = vmatprep.mubr.bf16.mxu0 0
      %9817 = vmatmul.mubr.bf16.gmra.mxu0 %v9501
      %v9818 = vpop.f32.mrf.mxu0
      %v9819 = vadd.f32 %v9658, %v9818
      %v9820 = vpop.f32.mrf.mxu0
      %v9821 = vpop.f32.mrf.mxu0
      %v9822 = vadd.f32 %v9661, %v9821
      %v9823 = vpop.f32.mrf.mxu0
      %9824 = vdwg.mxu0
      %v9834 = vunpack.c.l.b16 %v9302
      %v9835 = vunpack.c.l.b16 %v9303
      %v9836 = vunpack.c.l.b16 %v9304
      %v9837 = vunpack.c.l.b16 %v9305
      %v9838 = vunpack.c.l.b16 %v9306
      %v9839 = vunpack.c.l.b16 %v9307
      %v9840 = vunpack.c.l.b16 %v9308
      %v9841 = vunpack.c.l.b16 %v9309
      %v9842 = vunpack.c.l.b16 %v9310
      %v9843 = vpack.c.b16 %v9835, %v9834
      %v9844 = vpack.c.b16 %v9837, %v9836
      %v9845 = vpack.c.b16 %v9839, %v9838
      %v9846 = vpack.c.b16 %v9841, %v9840
      %v9847 = vpack.c.b16 %v9842, %v9842
      %vm9852 = vcmask 588800
      %v9854 = vsel %vm9852, %v9286, 0
      %v9857 = vsel %vm9852, %v9287, 0
      %v9860 = vsel %vm9852, %v9288, 0
      %v9863 = vsel %vm9852, %v9289, 0
      %v9866 = vsel %vm9852, %v9290, 0
      %v9869 = vsel %vm9852, %v9291, 0
      %v9872 = vsel %vm9852, %v9292, 0
      %v9875 = vsel %vm9852, %v9293, 0
      %v9878 = vsel %vm9852, %v9294, 0
      %v9881 = vsel %vm9852, %v9295, 0
      %v9884 = vsel %vm9852, %v9296, 0
      %v9887 = vsel %vm9852, %v9297, 0
      %v9890 = vsel %vm9852, %v9298, 0
      %v9893 = vsel %vm9852, %v9299, 0
      %v9896 = vsel %vm9852, %v9300, 0
      %v9899 = vsel %vm9852, %v9301, 0
      %vm9901 = vcmask 1043456
      %v9903 = vsel %vm9901, %v9847, 0
      %9905 = vmatprep.subr.bf16.mxu0 0
      %9906 = vmatpush1.bf16.msra.mxu0 0
      %9907 = vmatprep.subr.bf16.mxu0 0
      %9908 = vmatpush1.bf16.msra.mxu0 0
      %9909 = vmatprep.subr.bf16.mxu0 0
      %9910 = vmatpush1.bf16.msra.mxu0 0
      %9911 = vmatprep.subr.bf16.mxu0 0
      %9912 = vmatpush1.bf16.msra.mxu0 %v9903
      %9913 = vmatprep.subr.bf16.mxu0 0
      %9914 = vmatpush1.bf16.msra.mxu0 %v9846
      %9915 = vmatprep.subr.bf16.mxu0 0
      %9916 = vmatpush1.bf16.msra.mxu0 %v9845
      %9917 = vmatprep.subr.bf16.mxu0 0
      %9918 = vmatpush1.bf16.msra.mxu0 %v9844
      %9919 = vmatprep.subr.bf16.mxu0 0
      %9920 = vmatpush1.bf16.msra.mxu0 %v9843
      %9921 = vmatprep.subr.bf16.mxu0 0
      %9922 = vmatpush2.bf16.msra.mxu0 0
      %9923 = vmatprep.subr.bf16.mxu0 0
      %9924 = vmatpush2.bf16.msra.mxu0 0
      %9925 = vmatprep.subr.bf16.mxu0 0
      %9926 = vmatpush2.bf16.msra.mxu0 0
      %9927 = vmatprep.subr.bf16.mxu0 0
      %9928 = vmatpush2.bf16.msra.mxu0 0
      %9929 = vmatprep.subr.bf16.mxu0 0
      %9930 = vmatpush2.bf16.msra.mxu0 0
      %9931 = vmatprep.subr.bf16.mxu0 0
      %9932 = vmatpush2.bf16.msra.mxu0 0
      %9933 = vmatprep.subr.bf16.mxu0 0
      %9934 = vmatpush2.bf16.msra.mxu0 0
      %9935 = vmatprep.subr.bf16.mxu0 0
      %9936 = vmatpush2.bf16.msra.mxu0 0
      %9937 = vmatprep.mubr.bf16.mxu0 0
      %9938 = vmatmul.mubr.bf16.gmra.mxu0 %v9854
      %v9939 = vpop.f32.mrf.mxu0
      %v9940 = vadd.f32 %v9699, %v9939
      %v9941 = vpop.f32.mrf.mxu0
      %v9942 = vpop.f32.mrf.mxu0
      %v9943 = vadd.f32 %v9702, %v9942
      %v9944 = vpop.f32.mrf.mxu0
      %9945 = vmatprep.mubr.bf16.mxu0 0
      %9946 = vmatmul.mubr.bf16.gmra.mxu0 %v9857
      %v9947 = vpop.f32.mrf.mxu0
      %v9948 = vadd.f32 %v9707, %v9947
      %v9949 = vpop.f32.mrf.mxu0
      %v9950 = vpop.f32.mrf.mxu0
      %v9951 = vadd.f32 %v9710, %v9950
      %v9952 = vpop.f32.mrf.mxu0
      %9953 = vmatprep.mubr.bf16.mxu0 0
      %9954 = vmatmul.mubr.bf16.gmra.mxu0 %v9860
      %v9955 = vpop.f32.mrf.mxu0
      %v9956 = vadd.f32 %v9715, %v9955
      %v9957 = vpop.f32.mrf.mxu0
      %v9958 = vpop.f32.mrf.mxu0
      %v9959 = vadd.f32 %v9718, %v9958
      %v9960 = vpop.f32.mrf.mxu0
      %9961 = vmatprep.mubr.bf16.mxu0 0
      %9962 = vmatmul.mubr.bf16.gmra.mxu0 %v9863
      %v9963 = vpop.f32.mrf.mxu0
      %v9964 = vadd.f32 %v9723, %v9963
      %v9965 = vpop.f32.mrf.mxu0
      %v9966 = vpop.f32.mrf.mxu0
      %v9967 = vadd.f32 %v9726, %v9966
      %v9968 = vpop.f32.mrf.mxu0
      %9969 = vmatprep.mubr.bf16.mxu0 0
      %9970 = vmatmul.mubr.bf16.gmra.mxu0 %v9866
      %v9971 = vpop.f32.mrf.mxu0
      %v9972 = vadd.f32 %v9731, %v9971
      %v9973 = vpop.f32.mrf.mxu0
      %v9974 = vpop.f32.mrf.mxu0
      %v9975 = vadd.f32 %v9734, %v9974
      %v9976 = vpop.f32.mrf.mxu0
      %9977 = vmatprep.mubr.bf16.mxu0 0
      %9978 = vmatmul.mubr.bf16.gmra.mxu0 %v9869
      %v9979 = vpop.f32.mrf.mxu0
      %v9980 = vadd.f32 %v9739, %v9979
      %v9981 = vpop.f32.mrf.mxu0
      %v9982 = vpop.f32.mrf.mxu0
      %v9983 = vadd.f32 %v9742, %v9982
      %v9984 = vpop.f32.mrf.mxu0
      %9985 = vmatprep.mubr.bf16.mxu0 0
      %9986 = vmatmul.mubr.bf16.gmra.mxu0 %v9872
      %v9987 = vpop.f32.mrf.mxu0
      %v9988 = vadd.f32 %v9747, %v9987
      %v9989 = vpop.f32.mrf.mxu0
      %v9990 = vpop.f32.mrf.mxu0
      %v9991 = vadd.f32 %v9750, %v9990
      %v9992 = vpop.f32.mrf.mxu0
      %9993 = vmatprep.mubr.bf16.mxu0 0
      %9994 = vmatmul.mubr.bf16.gmra.mxu0 %v9875
      %v9995 = vpop.f32.mrf.mxu0
      %v9996 = vadd.f32 %v9755, %v9995
      %v9997 = vpop.f32.mrf.mxu0
      %v9998 = vpop.f32.mrf.mxu0
      %v9999 = vadd.f32 %v9758, %v9998
      %v10000 = vpop.f32.mrf.mxu0
      %10001 = vmatprep.mubr.bf16.mxu0 0
      %10002 = vmatmul.mubr.bf16.gmra.mxu0 %v9878
      %v10003 = vpop.f32.mrf.mxu0
      %v10004 = vadd.f32 %v9763, %v10003
      %v10005 = vpop.f32.mrf.mxu0
      %v10006 = vpop.f32.mrf.mxu0
      %v10007 = vadd.f32 %v9766, %v10006
      %v10008 = vpop.f32.mrf.mxu0
      %10009 = vmatprep.mubr.bf16.mxu0 0
      %10010 = vmatmul.mubr.bf16.gmra.mxu0 %v9881
      %v10011 = vpop.f32.mrf.mxu0
      %v10012 = vadd.f32 %v9771, %v10011
      %v10013 = vpop.f32.mrf.mxu0
      %v10014 = vpop.f32.mrf.mxu0
      %v10015 = vadd.f32 %v9774, %v10014
      %v10016 = vpop.f32.mrf.mxu0
      %10017 = vmatprep.mubr.bf16.mxu0 0
      %10018 = vmatmul.mubr.bf16.gmra.mxu0 %v9884
      %v10019 = vpop.f32.mrf.mxu0
      %v10020 = vadd.f32 %v9779, %v10019
      %v10021 = vpop.f32.mrf.mxu0
      %v10022 = vpop.f32.mrf.mxu0
      %v10023 = vadd.f32 %v9782, %v10022
      %v10024 = vpop.f32.mrf.mxu0
      %10025 = vmatprep.mubr.bf16.mxu0 0
      %10026 = vmatmul.mubr.bf16.gmra.mxu0 %v9887
      %v10027 = vpop.f32.mrf.mxu0
      %v10028 = vadd.f32 %v9787, %v10027
      %v10029 = vpop.f32.mrf.mxu0
      %v10030 = vpop.f32.mrf.mxu0
      %v10031 = vadd.f32 %v9790, %v10030
      %v10032 = vpop.f32.mrf.mxu0
      %10033 = vmatprep.mubr.bf16.mxu0 0
      %10034 = vmatmul.mubr.bf16.gmra.mxu0 %v9890
      %v10035 = vpop.f32.mrf.mxu0
      %v10036 = vadd.f32 %v9795, %v10035
      %v10037 = vpop.f32.mrf.mxu0
      %v10038 = vpop.f32.mrf.mxu0
      %v10039 = vadd.f32 %v9798, %v10038
      %v10040 = vpop.f32.mrf.mxu0
      %10041 = vmatprep.mubr.bf16.mxu0 0
      %10042 = vmatmul.mubr.bf16.gmra.mxu0 %v9893
      %v10043 = vpop.f32.mrf.mxu0
      %v10044 = vadd.f32 %v9803, %v10043
      %v10045 = vpop.f32.mrf.mxu0
      %v10046 = vpop.f32.mrf.mxu0
      %v10047 = vadd.f32 %v9806, %v10046
      %v10048 = vpop.f32.mrf.mxu0
      %10049 = vmatprep.mubr.bf16.mxu0 0
      %10050 = vmatmul.mubr.bf16.gmra.mxu0 %v9896
      %v10051 = vpop.f32.mrf.mxu0
      %v10052 = vadd.f32 %v9811, %v10051
      %v10053 = vpop.f32.mrf.mxu0
      %v10054 = vpop.f32.mrf.mxu0
      %v10055 = vadd.f32 %v9814, %v10054
      %v10056 = vpop.f32.mrf.mxu0
      %10057 = vmatprep.mubr.bf16.mxu0 0
      %10058 = vmatmul.mubr.bf16.gmra.mxu0 %v9899
      %v10059 = vpop.f32.mrf.mxu0
      %v10060 = vadd.f32 %v9819, %v10059
      %v10061 = vpop.f32.mrf.mxu0
      %v10062 = vpop.f32.mrf.mxu0
      %v10063 = vadd.f32 %v9822, %v10062
      %v10064 = vpop.f32.mrf.mxu0
      %10065 = vdwg.mxu0
      %v10066 = vld [vmem:[%s10] sm:$0xf]
      %v10067 = vld [vmem:[%s10 + $0x4] sm:$0xf]
      %v10068 = vld [vmem:[%s10 + $0x8] sm:$0xf]
      %v10069 = vld [vmem:[%s10 + $0xc] sm:$0x3]
      %v10074 = vunpack.c.l.b16 %v10066
      %v10075 = vunpack.c.l.b16 %v10067
      %v10076 = vunpack.c.l.b16 %v10068
      %v10077 = vunpack.c.l.b16 %v10069
      %v10078 = vpack.c.b16 %v10075, %v10074
      %v10079 = vpack.c.b16 %v10077, %v10076
      %v10082 = vand.u32 %v10079, %v2382
      %10084 = vmatprep.subr.bf16.mxu0 0
      %10085 = vmatpush1.bf16.msra.mxu0 0
      %10086 = vmatprep.subr.bf16.mxu0 0
      %10087 = vmatpush1.bf16.msra.mxu0 0
      %10088 = vmatprep.subr.bf16.mxu0 0
      %10089 = vmatpush1.bf16.msra.mxu0 0
      %10090 = vmatprep.subr.bf16.mxu0 0
      %10091 = vmatpush1.bf16.msra.mxu0 0
      %10092 = vmatprep.subr.bf16.mxu0 0
      %10093 = vmatpush1.bf16.msra.mxu0 0
      %10094 = vmatprep.subr.bf16.mxu0 0
      %10095 = vmatpush1.bf16.msra.mxu0 0
      %10096 = vmatprep.subr.bf16.mxu0 0
      %10097 = vmatpush1.bf16.msra.mxu0 %v10082
      %10098 = vmatprep.subr.bf16.mxu0 0
      %10099 = vmatpush1.bf16.msra.mxu0 %v10078
      %10100 = vmatprep.subr.bf16.mxu0 0
      %10101 = vmatpush2.bf16.msra.mxu0 0
      %10102 = vmatprep.subr.bf16.mxu0 0
      %10103 = vmatpush2.bf16.msra.mxu0 0
      %10104 = vmatprep.subr.bf16.mxu0 0
      %10105 = vmatpush2.bf16.msra.mxu0 0
      %10106 = vmatprep.subr.bf16.mxu0 0
      %10107 = vmatpush2.bf16.msra.mxu0 0
      %10108 = vmatprep.subr.bf16.mxu0 0
      %10109 = vmatpush2.bf16.msra.mxu0 0
      %10110 = vmatprep.subr.bf16.mxu0 0
      %10111 = vmatpush2.bf16.msra.mxu0 0
      %10112 = vmatprep.subr.bf16.mxu0 0
      %10113 = vmatpush2.bf16.msra.mxu0 0
      %10114 = vmatprep.subr.bf16.mxu0 0
      %10115 = vmatpush2.bf16.msra.mxu0 0
      %10116 = vmatprep.mubr.bf16.mxu0 0
      %10117 = vmatmul.mubr.bf16.gmra.mxu0 %v2332
      %v10118 = vpop.f32.mrf.mxu0
      %v10119 = vadd.f32 0.0, %v10118
      %v10120 = vpop.f32.mrf.mxu0
      %v10121 = vpop.f32.mrf.mxu0
      %v10122 = vadd.f32 0.0, %v10121
      %v10123 = vpop.f32.mrf.mxu0
      %10124 = vmatprep.mubr.bf16.mxu0 0
      %10125 = vmatmul.mubr.bf16.gmra.mxu0 %v2335
      %v10126 = vpop.f32.mrf.mxu0
      %v10127 = vadd.f32 0.0, %v10126
      %v10128 = vpop.f32.mrf.mxu0
      %v10129 = vpop.f32.mrf.mxu0
      %v10130 = vadd.f32 0.0, %v10129
      %v10131 = vpop.f32.mrf.mxu0
      %10132 = vmatprep.mubr.bf16.mxu0 0
      %10133 = vmatmul.mubr.bf16.gmra.mxu0 %v2338
      %v10134 = vpop.f32.mrf.mxu0
      %v10135 = vadd.f32 0.0, %v10134
      %v10136 = vpop.f32.mrf.mxu0
      %v10137 = vpop.f32.mrf.mxu0
      %v10138 = vadd.f32 0.0, %v10137
      %v10139 = vpop.f32.mrf.mxu0
      %10140 = vmatprep.mubr.bf16.mxu0 0
      %10141 = vmatmul.mubr.bf16.gmra.mxu0 %v2341
      %v10142 = vpop.f32.mrf.mxu0
      %v10143 = vadd.f32 0.0, %v10142
      %v10144 = vpop.f32.mrf.mxu0
      %v10145 = vpop.f32.mrf.mxu0
      %v10146 = vadd.f32 0.0, %v10145
      %v10147 = vpop.f32.mrf.mxu0
      %10148 = vmatprep.mubr.bf16.mxu0 0
      %10149 = vmatmul.mubr.bf16.gmra.mxu0 %v2344
      %v10150 = vpop.f32.mrf.mxu0
      %v10151 = vadd.f32 0.0, %v10150
      %v10152 = vpop.f32.mrf.mxu0
      %v10153 = vpop.f32.mrf.mxu0
      %v10154 = vadd.f32 0.0, %v10153
      %v10155 = vpop.f32.mrf.mxu0
      %10156 = vmatprep.mubr.bf16.mxu0 0
      %10157 = vmatmul.mubr.bf16.gmra.mxu0 %v2347
      %v10158 = vpop.f32.mrf.mxu0
      %v10159 = vadd.f32 0.0, %v10158
      %v10160 = vpop.f32.mrf.mxu0
      %v10161 = vpop.f32.mrf.mxu0
      %v10162 = vadd.f32 0.0, %v10161
      %v10163 = vpop.f32.mrf.mxu0
      %10164 = vmatprep.mubr.bf16.mxu0 0
      %10165 = vmatmul.mubr.bf16.gmra.mxu0 %v2350
      %v10166 = vpop.f32.mrf.mxu0
      %v10167 = vadd.f32 0.0, %v10166
      %v10168 = vpop.f32.mrf.mxu0
      %v10169 = vpop.f32.mrf.mxu0
      %v10170 = vadd.f32 0.0, %v10169
      %v10171 = vpop.f32.mrf.mxu0
      %10172 = vmatprep.mubr.bf16.mxu0 0
      %10173 = vmatmul.mubr.bf16.gmra.mxu0 %v2353
      %v10174 = vpop.f32.mrf.mxu0
      %v10175 = vadd.f32 0.0, %v10174
      %v10176 = vpop.f32.mrf.mxu0
      %v10177 = vpop.f32.mrf.mxu0
      %v10178 = vadd.f32 0.0, %v10177
      %v10179 = vpop.f32.mrf.mxu0
      %10180 = vmatprep.mubr.bf16.mxu0 0
      %10181 = vmatmul.mubr.bf16.gmra.mxu0 %v2356
      %v10182 = vpop.f32.mrf.mxu0
      %v10183 = vadd.f32 0.0, %v10182
      %v10184 = vpop.f32.mrf.mxu0
      %v10185 = vpop.f32.mrf.mxu0
      %v10186 = vadd.f32 0.0, %v10185
      %v10187 = vpop.f32.mrf.mxu0
      %10188 = vmatprep.mubr.bf16.mxu0 0
      %10189 = vmatmul.mubr.bf16.gmra.mxu0 %v2359
      %v10190 = vpop.f32.mrf.mxu0
      %v10191 = vadd.f32 0.0, %v10190
      %v10192 = vpop.f32.mrf.mxu0
      %v10193 = vpop.f32.mrf.mxu0
      %v10194 = vadd.f32 0.0, %v10193
      %v10195 = vpop.f32.mrf.mxu0
      %10196 = vmatprep.mubr.bf16.mxu0 0
      %10197 = vmatmul.mubr.bf16.gmra.mxu0 %v2362
      %v10198 = vpop.f32.mrf.mxu0
      %v10199 = vadd.f32 0.0, %v10198
      %v10200 = vpop.f32.mrf.mxu0
      %v10201 = vpop.f32.mrf.mxu0
      %v10202 = vadd.f32 0.0, %v10201
      %v10203 = vpop.f32.mrf.mxu0
      %10204 = vmatprep.mubr.bf16.mxu0 0
      %10205 = vmatmul.mubr.bf16.gmra.mxu0 %v2365
      %v10206 = vpop.f32.mrf.mxu0
      %v10207 = vadd.f32 0.0, %v10206
      %v10208 = vpop.f32.mrf.mxu0
      %v10209 = vpop.f32.mrf.mxu0
      %v10210 = vadd.f32 0.0, %v10209
      %v10211 = vpop.f32.mrf.mxu0
      %10212 = vmatprep.mubr.bf16.mxu0 0
      %10213 = vmatmul.mubr.bf16.gmra.mxu0 %v2368
      %v10214 = vpop.f32.mrf.mxu0
      %v10215 = vadd.f32 0.0, %v10214
      %v10216 = vpop.f32.mrf.mxu0
      %v10217 = vpop.f32.mrf.mxu0
      %v10218 = vadd.f32 0.0, %v10217
      %v10219 = vpop.f32.mrf.mxu0
      %10220 = vmatprep.mubr.bf16.mxu0 0
      %10221 = vmatmul.mubr.bf16.gmra.mxu0 %v2371
      %v10222 = vpop.f32.mrf.mxu0
      %v10223 = vadd.f32 0.0, %v10222
      %v10224 = vpop.f32.mrf.mxu0
      %v10225 = vpop.f32.mrf.mxu0
      %v10226 = vadd.f32 0.0, %v10225
      %v10227 = vpop.f32.mrf.mxu0
      %10228 = vmatprep.mubr.bf16.mxu0 0
      %10229 = vmatmul.mubr.bf16.gmra.mxu0 %v2374
      %v10230 = vpop.f32.mrf.mxu0
      %v10231 = vadd.f32 0.0, %v10230
      %v10232 = vpop.f32.mrf.mxu0
      %v10233 = vpop.f32.mrf.mxu0
      %v10234 = vadd.f32 0.0, %v10233
      %v10235 = vpop.f32.mrf.mxu0
      %10236 = vmatprep.mubr.bf16.mxu0 0
      %10237 = vmatmul.mubr.bf16.gmra.mxu0 %v2377
      %v10238 = vpop.f32.mrf.mxu0
      %v10239 = vadd.f32 0.0, %v10238
      %v10240 = vpop.f32.mrf.mxu0
      %v10241 = vpop.f32.mrf.mxu0
      %v10242 = vadd.f32 0.0, %v10241
      %v10243 = vpop.f32.mrf.mxu0
      %10244 = vdwg.mxu0
      %v10245 = vadd.f32 %v9940, %v10119
      %v10246 = vadd.f32 %v9943, %v10122
      %v10247 = vadd.f32 %v9948, %v10127
      %v10248 = vadd.f32 %v9951, %v10130
      %v10249 = vadd.f32 %v9956, %v10135
      %v10250 = vadd.f32 %v9959, %v10138
      %v10251 = vadd.f32 %v9964, %v10143
      %v10252 = vadd.f32 %v9967, %v10146
      %v10253 = vadd.f32 %v9972, %v10151
      %v10254 = vadd.f32 %v9975, %v10154
      %v10255 = vadd.f32 %v9980, %v10159
      %v10256 = vadd.f32 %v9983, %v10162
      %v10257 = vadd.f32 %v9988, %v10167
      %v10258 = vadd.f32 %v9991, %v10170
      %v10259 = vadd.f32 %v9996, %v10175
      %v10260 = vadd.f32 %v9999, %v10178
      %v10261 = vadd.f32 %v10004, %v10183
      %v10262 = vadd.f32 %v10007, %v10186
      %v10263 = vadd.f32 %v10012, %v10191
      %v10264 = vadd.f32 %v10015, %v10194
      %v10265 = vadd.f32 %v10020, %v10199
      %v10266 = vadd.f32 %v10023, %v10202
      %v10267 = vadd.f32 %v10028, %v10207
      %v10268 = vadd.f32 %v10031, %v10210
      %v10269 = vadd.f32 %v10036, %v10215
      %v10270 = vadd.f32 %v10039, %v10218
      %v10271 = vadd.f32 %v10044, %v10223
      %v10272 = vadd.f32 %v10047, %v10226
      %v10273 = vadd.f32 %v10052, %v10231
      %v10274 = vadd.f32 %v10055, %v10234
      %v10275 = vadd.f32 %v10060, %v10239
      %v10276 = vadd.f32 %v10063, %v10242
      %v10277 = vld [vmem:[%s11] sm:$0x1]
      %v10279 = vlaneseq
      %v10280 = vshrl.u32 %v10279, 7
      %v10281 = vsub.s32 0, %v10280
      %v10282 = vrot.slane %v10277, %v10281
      %v10284 = vadd.f32 %v10245, %v10282
      %v10285 = vadd.f32 %v10246, %v10282
      %v10286 = vadd.f32 %v10247, %v10282
      %v10287 = vadd.f32 %v10248, %v10282
      %v10288 = vadd.f32 %v10249, %v10282
      %v10289 = vadd.f32 %v10250, %v10282
      %v10290 = vadd.f32 %v10251, %v10282
      %v10291 = vadd.f32 %v10252, %v10282
      %v10292 = vadd.f32 %v10253, %v10282
      %v10293 = vadd.f32 %v10254, %v10282
      %v10294 = vadd.f32 %v10255, %v10282
      %v10295 = vadd.f32 %v10256, %v10282
      %v10296 = vadd.f32 %v10257, %v10282
      %v10297 = vadd.f32 %v10258, %v10282
      %v10298 = vadd.f32 %v10259, %v10282
      %v10299 = vadd.f32 %v10260, %v10282
      %v10300 = vadd.f32 %v10261, %v10282
      %v10301 = vadd.f32 %v10262, %v10282
      %v10302 = vadd.f32 %v10263, %v10282
      %v10303 = vadd.f32 %v10264, %v10282
      %v10304 = vadd.f32 %v10265, %v10282
      %v10305 = vadd.f32 %v10266, %v10282
      %v10306 = vadd.f32 %v10267, %v10282
      %v10307 = vadd.f32 %v10268, %v10282
      %v10308 = vadd.f32 %v10269, %v10282
      %v10309 = vadd.f32 %v10270, %v10282
      %v10310 = vadd.f32 %v10271, %v10282
      %v10311 = vadd.f32 %v10272, %v10282
      %v10312 = vadd.f32 %v10273, %v10282
      %v10313 = vadd.f32 %v10274, %v10282
      %v10314 = vadd.f32 %v10275, %v10282
      %v10315 = vadd.f32 %v10276, %v10282
      %v10316 = vmax.f32 %v10284, 0.0
      %v10317 = vmax.f32 %v10285, 0.0
      %v10318 = vmax.f32 %v10286, 0.0
      %v10319 = vmax.f32 %v10287, 0.0
      %v10320 = vmax.f32 %v10288, 0.0
      %v10321 = vmax.f32 %v10289, 0.0
      %v10322 = vmax.f32 %v10290, 0.0
      %v10323 = vmax.f32 %v10291, 0.0
      %v10324 = vmax.f32 %v10292, 0.0
      %v10325 = vmax.f32 %v10293, 0.0
      %v10326 = vmax.f32 %v10294, 0.0
      %v10327 = vmax.f32 %v10295, 0.0
      %v10328 = vmax.f32 %v10296, 0.0
      %v10329 = vmax.f32 %v10297, 0.0
      %v10330 = vmax.f32 %v10298, 0.0
      %v10331 = vmax.f32 %v10299, 0.0
      %v10332 = vmax.f32 %v10300, 0.0
      %v10333 = vmax.f32 %v10301, 0.0
      %v10334 = vmax.f32 %v10302, 0.0
      %v10335 = vmax.f32 %v10303, 0.0
      %v10336 = vmax.f32 %v10304, 0.0
      %v10337 = vmax.f32 %v10305, 0.0
      %v10338 = vmax.f32 %v10306, 0.0
      %v10339 = vmax.f32 %v10307, 0.0
      %v10340 = vmax.f32 %v10308, 0.0
      %v10341 = vmax.f32 %v10309, 0.0
      %v10342 = vmax.f32 %v10310, 0.0
      %v10343 = vmax.f32 %v10311, 0.0
      %v10344 = vmax.f32 %v10312, 0.0
      %v10345 = vmax.f32 %v10313, 0.0
      %v10346 = vmax.f32 %v10314, 0.0
      %v10347 = vmax.f32 %v10315, 0.0
      %v10348 = vld [vmem:[%s12] sm:$0x7]
      %v10349 = vld [vmem:[%s13] sm:$0x7]
      %10351 = vset.pattern.permute.xlu0 0
      %10352 = vperm.xlu0 %10351, %v10349
      %v10353 = vpop.permute.xlu0 %10352
      %v10356 = vsel %vm539, %v10348, 0
      %v10359 = vsel %vm539, %v10316, 0
      %v10362 = vsel %vm539, %v10317, 0
      %v10365 = vsel %vm539, %v10318, 0
      %v10368 = vsel %vm539, %v10319, 0
      %v10371 = vsel %vm539, %v10320, 0
      %v10374 = vsel %vm539, %v10321, 0
      %v10377 = vsel %vm539, %v10322, 0
      %v10380 = vsel %vm539, %v10323, 0
      %v10383 = vsel %vm539, %v10324, 0
      %v10386 = vsel %vm539, %v10325, 0
      %v10389 = vsel %vm539, %v10326, 0
      %v10392 = vsel %vm539, %v10327, 0
      %v10395 = vsel %vm539, %v10328, 0
      %v10398 = vsel %vm539, %v10329, 0
      %v10401 = vsel %vm539, %v10330, 0
      %v10404 = vsel %vm539, %v10331, 0
      %v10407 = vsel %vm539, %v10332, 0
      %v10410 = vsel %vm539, %v10333, 0
      %v10413 = vsel %vm539, %v10334, 0
      %v10416 = vsel %vm539, %v10335, 0
      %v10419 = vsel %vm539, %v10336, 0
      %v10422 = vsel %vm539, %v10337, 0
      %v10425 = vsel %vm539, %v10338, 0
      %v10428 = vsel %vm539, %v10339, 0
      %v10431 = vsel %vm539, %v10340, 0
      %v10434 = vsel %vm539, %v10341, 0
      %v10437 = vsel %vm539, %v10342, 0
      %v10440 = vsel %vm539, %v10343, 0
      %v10443 = vsel %vm539, %v10344, 0
      %v10446 = vsel %vm539, %v10345, 0
      %v10449 = vsel %vm539, %v10346, 0
      %v10452 = vsel %vm539, %v10347, 0
      %10454 = vmatprep.subr.mxu0 0.0
      %10455 = vmatpush1.xpose.msra.mxu0 %v10404
      %10456 = vmatprep.subr.mxu0 0.0
      %10457 = vmatpush1.xpose.msra.mxu0 %v10401
      %10458 = vmatprep.subr.mxu0 0.0
      %10459 = vmatpush1.xpose.msra.mxu0 %v10398
      %10460 = vmatprep.subr.mxu0 0.0
      %10461 = vmatpush1.xpose.msra.mxu0 %v10395
      %10462 = vmatprep.subr.mxu0 0.0
      %10463 = vmatpush1.xpose.msra.mxu0 %v10392
      %10464 = vmatprep.subr.mxu0 0.0
      %10465 = vmatpush1.xpose.msra.mxu0 %v10389
      %10466 = vmatprep.subr.mxu0 0.0
      %10467 = vmatpush1.xpose.msra.mxu0 %v10386
      %10468 = vmatprep.subr.mxu0 0.0
      %10469 = vmatpush1.xpose.msra.mxu0 %v10383
      %10470 = vmatprep.subr.mxu0 0.0
      %10471 = vmatpush1.xpose.msra.mxu0 %v10380
      %10472 = vmatprep.subr.mxu0 0.0
      %10473 = vmatpush1.xpose.msra.mxu0 %v10377
      %10474 = vmatprep.subr.mxu0 0.0
      %10475 = vmatpush1.xpose.msra.mxu0 %v10374
      %10476 = vmatprep.subr.mxu0 0.0
      %10477 = vmatpush1.xpose.msra.mxu0 %v10371
      %10478 = vmatprep.subr.mxu0 0.0
      %10479 = vmatpush1.xpose.msra.mxu0 %v10368
      %10480 = vmatprep.subr.mxu0 0.0
      %10481 = vmatpush1.xpose.msra.mxu0 %v10365
      %10482 = vmatprep.subr.mxu0 0.0
      %10483 = vmatpush1.xpose.msra.mxu0 %v10362
      %10484 = vmatprep.subr.mxu0 0.0
      %10485 = vmatpush1.xpose.msra.mxu0 %v10359
      %10486 = vmatprep.subr.mxu0 0.0
      %10487 = vmatpush2.xpose.msra.mxu0 %v10452
      %10488 = vmatprep.subr.mxu0 0.0
      %10489 = vmatpush2.xpose.msra.mxu0 %v10449
      %10490 = vmatprep.subr.mxu0 0.0
      %10491 = vmatpush2.xpose.msra.mxu0 %v10446
      %10492 = vmatprep.subr.mxu0 0.0
      %10493 = vmatpush2.xpose.msra.mxu0 %v10443
      %10494 = vmatprep.subr.mxu0 0.0
      %10495 = vmatpush2.xpose.msra.mxu0 %v10440
      %10496 = vmatprep.subr.mxu0 0.0
      %10497 = vmatpush2.xpose.msra.mxu0 %v10437
      %10498 = vmatprep.subr.mxu0 0.0
      %10499 = vmatpush2.xpose.msra.mxu0 %v10434
      %10500 = vmatprep.subr.mxu0 0.0
      %10501 = vmatpush2.xpose.msra.mxu0 %v10431
      %10502 = vmatprep.subr.mxu0 0.0
      %10503 = vmatpush2.xpose.msra.mxu0 %v10428
      %10504 = vmatprep.subr.mxu0 0.0
      %10505 = vmatpush2.xpose.msra.mxu0 %v10425
      %10506 = vmatprep.subr.mxu0 0.0
      %10507 = vmatpush2.xpose.msra.mxu0 %v10422
      %10508 = vmatprep.subr.mxu0 0.0
      %10509 = vmatpush2.xpose.msra.mxu0 %v10419
      %10510 = vmatprep.subr.mxu0 0.0
      %10511 = vmatpush2.xpose.msra.mxu0 %v10416
      %10512 = vmatprep.subr.mxu0 0.0
      %10513 = vmatpush2.xpose.msra.mxu0 %v10413
      %10514 = vmatprep.subr.mxu0 0.0
      %10515 = vmatpush2.xpose.msra.mxu0 %v10410
      %10516 = vmatprep.subr.mxu0 0.0
      %10517 = vmatpush2.xpose.msra.mxu0 %v10407
      %10518 = vmatprep.mubr.f32.mxu0 0.0
      %10519 = vmatmul.mubr.f32.gmra.mxu0 %v10356
      %v10520 = vpop.f32.mrf.mxu0
      %v10521 = vadd.f32 %v10353, %v10520
      %v10522 = vpop.f32.mrf.mxu0
      %v10523 = vadd.f32 %v10353, %v10522
      %10524 = vdwg.mxu0
      %v10527 = vcombine.low %v10521, %v10523
      %10529 = vst [vmem:[%s481] sm:$0x77] %v10527
      %p10530 = scmp.lt.s32.totalorder %s25, 1
      %s10531 = scalar_select %p10530, %s25, 1
      %s10532 = smul.addr %s10531, 2
      %s10533 = smul.addr %s10532, 4
      %s10534 = scalar_lea.vmem %s14, %s10533
      // Predicated region
      $region77: #{encoder_forward.1} parent=75 // pred_check
        %p10535 = pneg %p347
      $region78: #{encoder_forward.1} parent=75 // pred_check_branch
        %10537 = sbr.rel (%p10535) target = $region80
      $region79: #{encoder_forward.1} parent=75 // pred_region
        _
      $region80: #{encoder_forward.1} parent=75 // pred_fallthru
        _
    $region76: #{encoder_forward.1} parent=5 // pred_fallthru
      _
    %p10538 = scmp.le.s32.totalorder 2, %s20
    // Predicated region
    $region81: #{encoder_forward.1} parent=5 // pred_check
      %p10539 = pneg %p10538
    $region82: #{encoder_forward.1} parent=5 // pred_check_branch
      %10541 = sbr.rel (%p10539) target = $region84
    $region83: #{encoder_forward.1} parent=5 // pred_region
      %s10542 = ssub.s32 %s20, 2
      // Predicated region
      $region85: #{encoder_forward.1} parent=83 // pred_check
        %p10543 = pneg %p353
      $region86: #{encoder_forward.1} parent=83 // pred_check_branch
        %10545 = sbr.rel (%p10543) target = $region88
      $region87: #{encoder_forward.1} parent=83 // pred_region
        %p10546 = scmp.lt.s32.totalorder %s26, 1
        %s10547 = scalar_select %p10546, %s26, 1
        %s10548 = smul.addr %s10547, 2
        %s10549 = smul.addr %s10548, 4
        %s10550 = scalar_lea.vmem %s14, %s10549
      $region88: #{encoder_forward.1} parent=83 // pred_fallthru
        _
    $region84: #{encoder_forward.1} parent=5 // pred_fallthru
      _
  $region6: #{encoder_forward.1} parent=0 // loop_footer
    %s24 = sadd.s32 1, %s20
  $region7: #{encoder_forward.1} parent=0 // loop_footer_branch
    %19 = sbr.rel target = $region3
  $region8: #{encoder_forward.1} parent=0 // loop_exit
    _

</llo_original>
